<compile_context>
chip_gen: v7x
topology: tpu7x:2x2x1
jax: 0.10.0
libtpu: 0.0.40
codegen_flags: <defaults>
</compile_context>

<pallas_src>
import functools
import numpy as np

import jax
import jax.numpy as jnp
from jax.experimental import pallas as pl
from jax.experimental.pallas import tpu as pltpu


# VMEM working-set budget per GEMM pallas_call (double-buffered tiles + acc).
# Kept <= ~20 MiB so the default 32 MiB scoped VMEM limit is respected on
# v7x (64 MiB physical) as well as v5e / v6e (128 MiB).
_VMEM_BUDGET = 20 * 1024 * 1024


# ----------------------------------------------------------------------------
# Tiling helpers
# ----------------------------------------------------------------------------
def _pick_tile(dim, target, unit):
    """Largest multiple of `unit` that divides `dim` and is <= target;
    the full dimension when `dim` is not unit-aligned."""
    if dim % unit != 0 or dim <= unit:
        return dim
    t = min(target, dim)
    t -= t % unit
    t = max(t, unit)
    while dim % t != 0:
        t -= unit
    return t


def _pad_rows(x, rows):
    if x.shape[0] == rows:
        return x
    return jnp.pad(x, ((0, rows - x.shape[0]), (0, 0)))


def _gemm_tiles(M, N, K, xbytes, wbytes, obytes, budget=_VMEM_BUDGET):
    """Pick (tm, tn, tk).  Preference: large tm (avoid re-streaming W per row
    tile), tn ~512, full K.  Under VMEM pressure shrink tk first, then tn,
    then tm (keeps v7x's 32 MiB scoped budget)."""
    for tm_t in (4096, 2048, 1024, 512, 256, 128, 8):
        tm = _pick_tile(M, tm_t, 8)
        for tn_t in (512, 256, 128):
            tn = _pick_tile(N, tn_t, 128)
            for tk_t in (8192, 4096, 2048, 1024, 512, 256, 128):
                tk = _pick_tile(K, tk_t, 128)
                fp = (2 * (tm * tk * xbytes + tk * tn * wbytes
                           + tm * tn * obytes) + tm * tn * 4)
                if fp <= budget:
                    return tm, tn, tk
    return _pick_tile(M, 8, 8), _pick_tile(N, 128, 128), _pick_tile(K, 128, 128)


def _ln_gemm_tiles(M, N, K, xbytes, wbytes, obytes, budget=_VMEM_BUDGET):
    """LN+GEMM needs the full K resident.  Pick (tm, tn)."""
    for tm_t in (2048, 1024, 512, 256, 128, 64, 8):
        tm = _pick_tile(M, tm_t, 8)
        for tn_t in (512, 256, 128):
            tn = _pick_tile(N, tn_t, 128)
            fp = (2 * (tm * K * xbytes + K * tn * wbytes + tm * tn * obytes)
                  + tm * K * 2)
            if fp <= budget:
                return tm, tn
    return _pick_tile(M, 8, 8), _pick_tile(N, 128, 128)


# ----------------------------------------------------------------------------
# Pallas kernels
# ----------------------------------------------------------------------------
def _linear_kernel(*refs, activation, has_bias, has_res, single_k):
    # y = x @ W (+ b) (+ residual) (optionally QuickGELU).
    x_ref, w_ref = refs[0], refs[1]
    i = 2
    b_ref = r_ref = None
    if has_bias:
        b_ref = refs[i]
        i += 1
    if has_res:
        r_ref = refs[i]
        i += 1
    o_ref = refs[i]

    def finalize(y):
        if has_bias:
            y = y + b_ref[...].astype(jnp.float32)
        if has_res:
            y = y + r_ref[...].astype(jnp.float32)
        if activation == "quick_gelu":
            y = y * jax.nn.sigmoid(1.702 * y)
        return y.astype(o_ref.dtype)

    part = jnp.dot(x_ref[...].astype(jnp.bfloat16),
                   w_ref[...].astype(jnp.bfloat16),
                   preferred_element_type=jnp.float32)

    if single_k:
        # Full K resident in one tile: no accumulator round-trip needed.
        o_ref[...] = finalize(part)
    else:
        acc_ref = refs[i + 1]

        @pl.when(pl.program_id(2) == 0)
        def _():
            acc_ref[...] = jnp.zeros_like(acc_ref)

        acc_ref[...] += part

        @pl.when(pl.program_id(2) == pl.num_programs(2) - 1)
        def _():
            o_ref[...] = finalize(acc_ref[...])


def pallas_linear(x, w, b=None, residual=None, activation=None,
                  out_dtype=jnp.bfloat16):
    M0, K = x.shape
    _, N = w.shape
    # Pad rows to a multiple of 8 (never fall back to one giant M block).
    M = ((M0 + 7) // 8) * 8
    x = _pad_rows(x, M)
    if residual is not None:
        residual = _pad_rows(residual, M)

    tm, tn, tk = _gemm_tiles(M, N, K, x.dtype.itemsize, 2,
                             jnp.dtype(out_dtype).itemsize)
    nk = K // tk
    single_k = nk == 1
    grid = (M // tm, N // tn, nk)

    in_specs = [pl.BlockSpec((tm, tk), lambda i, j, k: (i, k)),
                pl.BlockSpec((tk, tn), lambda i, j, k: (k, j))]
    args = [x, w.astype(jnp.bfloat16)]
    has_bias = b is not None
    has_res = residual is not None
    if has_bias:
        in_specs.append(pl.BlockSpec((1, tn), lambda i, j, k: (0, j)))
        args.append(b.reshape(1, N).astype(jnp.float32))
    if has_res:
        in_specs.append(pl.BlockSpec((tm, tn), lambda i, j, k: (i, j)))
        args.append(residual)

    kernel = functools.partial(_linear_kernel, activation=activation,
                               has_bias=has_bias, has_res=has_res,
                               single_k=single_k)
    out = pl.pallas_call(
        kernel,
        out_shape=jax.ShapeDtypeStruct((M, N), out_dtype),
        grid=grid,
        in_specs=in_specs,
        out_specs=pl.BlockSpec((tm, tn), lambda i, j, k: (i, j)),
        scratch_shapes=[] if single_k else [pltpu.VMEM((tm, tn), jnp.float32)],
        compiler_params=pltpu.CompilerParams(
            dimension_semantics=("parallel", "parallel", "arbitrary")),
    )(*args)
    return out if M == M0 else out[:M0]


def _ln_linear_kernel(*refs, eps, activation, has_bias):
    # y = LayerNorm(x) @ W (+ b) (optionally QuickGELU).  The normalized
    # activations are computed only once per row tile (at j == 0) and cached
    # in a (tm, K) bf16 VMEM scratch for the remaining output-column tiles.
    x_ref, g_ref, bln_ref, w_ref = refs[:4]
    if has_bias:
        b_ref, o_ref, h_ref = refs[4], refs[5], refs[6]
    else:
        b_ref, o_ref, h_ref = None, refs[4], refs[5]

    @pl.when(pl.program_id(1) == 0)
    def _():
        x = x_ref[...].astype(jnp.float32)
        mean = jnp.mean(x, axis=-1, keepdims=True)
        xc = x - mean
        var = jnp.mean(xc * xc, axis=-1, keepdims=True)
        h = (xc * jax.lax.rsqrt(var + eps)) * g_ref[...].astype(jnp.float32) \
            + bln_ref[...].astype(jnp.float32)
        h_ref[...] = h.astype(jnp.bfloat16)

    y = jnp.dot(h_ref[...], w_ref[...].astype(jnp.bfloat16),
                preferred_element_type=jnp.float32)
    if has_bias:
        y = y + b_ref[...].astype(jnp.float32)
    if activation == "quick_gelu":
        y = y * jax.nn.sigmoid(1.702 * y)
    o_ref[...] = y.astype(o_ref.dtype)


def pallas_ln_linear(x, g, bln, w, b=None, activation=None,
                     out_dtype=jnp.bfloat16, eps=1e-5):
    M0, K = x.shape
    _, N = w.shape
    M = ((M0 + 7) // 8) * 8
    x = _pad_rows(x, M)

    tm, tn = _ln_gemm_tiles(M, N, K, x.dtype.itemsize, 2,
                            jnp.dtype(out_dtype).itemsize)
    grid = (M // tm, N // tn)

    in_specs = [pl.BlockSpec((tm, K), lambda i, j: (i, 0)),
                pl.BlockSpec((1, K), lambda i, j: (0, 0)),
                pl.BlockSpec((1, K), lambda i, j: (0, 0)),
                pl.BlockSpec((K, tn), lambda i, j: (0, j))]
    args = [x, g.reshape(1, K).astype(jnp.float32),
            bln.reshape(1, K).astype(jnp.float32), w.astype(jnp.bfloat16)]
    has_bias = b is not None
    if has_bias:
        in_specs.append(pl.BlockSpec((1, tn), lambda i, j: (0, j)))
        args.append(b.reshape(1, N).astype(jnp.float32))

    kernel = functools.partial(_ln_linear_kernel, eps=eps,
                               activation=activation, has_bias=has_bias)
    out = pl.pallas_call(
        kernel,
        out_shape=jax.ShapeDtypeStruct((M, N), out_dtype),
        grid=grid,
        in_specs=in_specs,
        out_specs=pl.BlockSpec((tm, tn), lambda i, j: (i, j)),
        scratch_shapes=[pltpu.VMEM((tm, K), jnp.bfloat16)],
        # j (column) axis carries the cached LN scratch -> "arbitrary".
        compiler_params=pltpu.CompilerParams(
            dimension_semantics=("parallel", "arbitrary")),
    )(*args)
    return out if M == M0 else out[:M0]


def _ln_posadd_kernel(x_ref, pos_ref, g_ref, b_ref, o_ref, *, eps):
    # y = LayerNorm(x + pos_emb); fuses the positional-embedding add.
    x = x_ref[0].astype(jnp.float32) + pos_ref[...].astype(jnp.float32)
    mean = jnp.mean(x, axis=-1, keepdims=True)
    xc = x - mean
    var = jnp.mean(xc * xc, axis=-1, keepdims=True)
    y = xc * jax.lax.rsqrt(var + eps) * g_ref[...] + b_ref[...]
    o_ref[0] = y.astype(o_ref.dtype)


def pallas_ln_posadd(x, pos, g, b, out_dtype=jnp.bfloat16, eps=1e-5):
    B, S, D = x.shape
    return pl.pallas_call(
        functools.partial(_ln_posadd_kernel, eps=eps),
        out_shape=jax.ShapeDtypeStruct((B, S, D), out_dtype),
        grid=(B,),
        in_specs=[pl.BlockSpec((1, S, D), lambda bi: (bi, 0, 0)),
                  pl.BlockSpec((S, D), lambda bi: (0, 0)),
                  pl.BlockSpec((1, D), lambda bi: (0, 0)),
                  pl.BlockSpec((1, D), lambda bi: (0, 0))],
        out_specs=pl.BlockSpec((1, S, D), lambda bi: (bi, 0, 0)),
        compiler_params=pltpu.CompilerParams(dimension_semantics=("parallel",)),
    )(x, pos.astype(jnp.float32),
      g.reshape(1, D).astype(jnp.float32), b.reshape(1, D).astype(jnp.float32))


def _attn_kernel(*refs, dh, scale, causal, packed):
    # One (batch, head-group) slab per grid step.  Slab width is a multiple
    # of 128 lanes when possible -> lane-dense loads and a single lane-dense
    # output store.  Scale folded into q (S*Dh muls instead of S*S).
    o_ref = refs[-1]
    if packed:
        blk = refs[0][0]                              # (S, 3D) bf16
        d = o_ref.shape[-1]
        q_blk, k_blk, v_blk = blk[:, :d], blk[:, d:2 * d], blk[:, 2 * d:]
    else:
        q_blk, k_blk, v_blk = refs[0][0], refs[1][0], refs[2][0]   # (S, PD)

    S = q_blk.shape[0]
    nh = q_blk.shape[-1] // dh

    if causal:
        row = jax.lax.broadcasted_iota(jnp.int32, (S, S), 0)
        col = jax.lax.broadcasted_iota(jnp.int32, (S, S), 1)
        bias = jnp.where(col <= row, 0.0, -1e30).astype(jnp.float32)

    dims = (((1,), (1,)), ((), ()))                   # contract last dims
    outs = []
    for h in range(nh):                               # nh is small (1-2)
        sl = slice(h * dh, (h + 1) * dh)
        q = (q_blk[:, sl].astype(jnp.float32) * scale).astype(jnp.bfloat16)
        k = k_blk[:, sl]
        v = v_blk[:, sl]
        s = jax.lax.dot_general(q, k, dims, preferred_element_type=jnp.float32)
        if causal:
            s = s + bias
        m = jnp.max(s, axis=-1, keepdims=True)
        p = jnp.exp(s - m)
        p = p * pl.reciprocal(jnp.sum(p, axis=-1, keepdims=True), approx=True)
        outs.append(jnp.dot(p.astype(jnp.bfloat16), v,
                            preferred_element_type=jnp.float32))
    o = outs[0] if nh == 1 else jnp.concatenate(outs, axis=-1)
    o_ref[0] = o.astype(o_ref.dtype)                  # lane-dense store


def pallas_attention(qkv, heads, causal):
    # qkv: (B, S, 3D) packed [q | k | v] along last dim -> out (B, S, D)
    B, S, D3 = qkv.shape
    D = D3 // 3
    dh = D // heads

    # Head-group width: smallest multiple of dh that is >= 128 lanes and
    # divides D; otherwise fall back to one packed (S, 3D) block per batch.
    pd = dh
    while pd < 128 and D % (pd * 2) == 0 and pd * 2 <= D:
        pd *= 2
    packed = (pd % 128 != 0)

    kernel = functools.partial(_attn_kernel, dh=dh, scale=dh ** -0.5,
                               causal=causal, packed=packed)
    if packed:
        return pl.pallas_call(
            kernel,
            out_shape=jax.ShapeDtypeStruct((B, S, D), jnp.bfloat16),
            grid=(B,),
            in_specs=[pl.BlockSpec((1, S, D3), lambda bi: (bi, 0, 0))],
            out_specs=pl.BlockSpec((1, S, D), lambda bi: (bi, 0, 0)),
            compiler_params=pltpu.CompilerParams(
                dimension_semantics=("parallel",)),
        )(qkv)

    ng = D // pd                                       # head groups
    return pl.pallas_call(
        kernel,
        out_shape=jax.ShapeDtypeStruct((B, S, D), jnp.bfloat16),
        grid=(B, ng),
        # q / k / v are three aligned views of the same packed tensor.
        in_specs=[pl.BlockSpec((1, S, pd), lambda bi, p: (bi, 0, p)),
                  pl.BlockSpec((1, S, pd), lambda bi, p: (bi, 0, p + ng)),
                  pl.BlockSpec((1, S, pd), lambda bi, p: (bi, 0, p + 2 * ng))],
        out_specs=pl.BlockSpec((1, S, pd), lambda bi, p: (bi, 0, p)),
        compiler_params=pltpu.CompilerParams(
            dimension_semantics=("parallel", "parallel")),
    )(qkv, qkv, qkv)


def _clip_logits_kernel(img_ref, txt_ref, scale_ref, o_ref):
    img = img_ref[...].astype(jnp.float32)
    txt = txt_ref[...].astype(jnp.float32)
    img = img * jax.lax.rsqrt(jnp.sum(img * img, axis=-1, keepdims=True))
    txt = txt * jax.lax.rsqrt(jnp.sum(txt * txt, axis=-1, keepdims=True))
    logits = jax.lax.dot_general(img, txt, (((1,), (1,)), ((), ())),
                                 preferred_element_type=jnp.float32)
    # logit_scale lives in SMEM; exp() done on a (1,1) vector splat.
    scale = jnp.exp(jnp.full((1, 1), scale_ref[0, 0], jnp.float32))
    o_ref[...] = (logits * scale).astype(o_ref.dtype)


def pallas_clip_logits(image_features, text_features, logit_scale):
    B = image_features.shape[0]
    C = text_features.shape[0]
    return pl.pallas_call(
        _clip_logits_kernel,
        out_shape=jax.ShapeDtypeStruct((B, C), jnp.float32),
        in_specs=[pl.BlockSpec(memory_space=pltpu.MemorySpace.VMEM),
                  pl.BlockSpec(memory_space=pltpu.MemorySpace.VMEM),
                  pl.BlockSpec(memory_space=pltpu.MemorySpace.SMEM)],
        out_specs=pl.BlockSpec(memory_space=pltpu.MemorySpace.VMEM),
    )(image_features, text_features,
      logit_scale.reshape(1, 1).astype(jnp.float32))


# ----------------------------------------------------------------------------
# CLIP-style transformer built from the kernels
# ----------------------------------------------------------------------------
def transformer_block(x, p, heads, causal):
    # CLIP ResidualAttentionBlock: x += attn(ln1(x)); x += mlp(ln2(x))
    B, S, D = x.shape
    xf = x.reshape(B * S, D)                                         # bf16

    qkv = pallas_ln_linear(xf, p["ln1_g"], p["ln1_b"],
                           p["qkv_w"], p["qkv_b"])                   # (B*S, 3D)
    a = pallas_attention(qkv.reshape(B, S, 3 * D), heads, causal)    # (B, S, D)
    xf = pallas_linear(a.reshape(B * S, D), p["proj_w"], p["proj_b"],
                       residual=xf)                                  # x + attn

    h = pallas_ln_linear(xf, p["ln2_g"], p["ln2_b"],
                         p["fc1_w"], p["fc1_b"], activation="quick_gelu")
    xf = pallas_linear(h, p["fc2_w"], p["fc2_b"], residual=xf)       # x + mlp
    return xf.reshape(B, S, D)


def image_encoder(image, vp, heads, patch):
    # ViT: patchify (== conv stride=patch) -> cls token -> transformer -> proj
    B, C, H, W = image.shape
    gh, gw = H // patch, W // patch
    x = image.reshape(B, C, gh, patch, gw, patch)
    x = x.transpose(0, 2, 4, 1, 3, 5).reshape(B * gh * gw, C * patch * patch)
    D = vp["conv_w"].shape[1]
    # bf16 activations into the memory-bound patch-embed GEMM (no bias)
    x = pallas_linear(x.astype(jnp.bfloat16), vp["conv_w"])
    x = x.reshape(B, gh * gw, D)
    cls = jnp.broadcast_to(vp["class_emb"].astype(jnp.bfloat16).reshape(1, 1, D),
                           (B, 1, D))
    x = jnp.concatenate([cls, x], axis=1)                            # (B,S,D) bf16
    # fused pos-emb add + ln_pre
    x = pallas_ln_posadd(x, vp["pos_emb"], vp["ln_pre_g"], vp["ln_pre_b"])
    for blk in vp["blocks"]:
        x = transformer_block(x, blk, heads, causal=False)           # no mask
    x0 = x[:, 0, :]                                                  # cls token (B, D)
    # fused ln_post + visual projection (no bias)
    return pallas_ln_linear(x0, vp["ln_post_g"], vp["ln_post_b"], vp["proj"])


def prompt_learner_forward(tp, tokenized_prompts):
    # PromptLearner.forward with class_token_position == 'end'
    # TODO(synk): 'middle'/'front' class-token positions not implemented.
    n_cls = tokenized_prompts.shape[0]
    n_ctx = tp["ctx"].shape[0]
    embedding = jnp.take(tp["token_embedding"], tokenized_prompts, axis=0)
    prefix = embedding[:, :1, :]                                     # SOT
    suffix = embedding[:, 1 + n_ctx:, :]                             # class + EOT + pad
    ctx = jnp.broadcast_to(tp["ctx"][None], (n_cls, n_ctx, tp["ctx"].shape[1]))
    return jnp.concatenate([prefix, ctx, suffix], axis=1)            # (n_cls, S_t, D_t)


def text_encoder(prompts, tokenized_prompts, tp, heads):
    n_cls, S, D = prompts.shape
    x = (prompts + tp["pos_emb"][None, :, :]).astype(jnp.bfloat16)
    for blk in tp["blocks"]:
        x = transformer_block(x, blk, heads, causal=True)
    # gather EOT rows first, then fuse ln_final + text_projection on n_cls rows
    # (EOT is assumed to be the largest token id, as in the CLIP tokenizer)
    eot = jnp.argmax(tokenized_prompts, axis=-1)
    x_eot = x[jnp.arange(n_cls), eot]                                # (n_cls, D)
    return pallas_ln_linear(x_eot, tp["ln_final_g"], tp["ln_final_b"],
                            tp["text_projection"])


def coop_forward(image, vp, tp, tokenized_prompts, logit_scale, *, heads, patch):
    image_features = image_encoder(image, vp, heads, patch)          # (B, E)
    prompts = prompt_learner_forward(tp, tokenized_prompts)
    text_features = text_encoder(prompts, tokenized_prompts, tp, heads)   # (n_cls, E)
    logits = pallas_clip_logits(image_features, text_features, logit_scale)
    return {"logits_per_image": logits}


# ----------------------------------------------------------------------------
# Deterministic parameter construction (synthetic small CLIP)
# ----------------------------------------------------------------------------
def _normal(key, shape, std=0.02, dtype=jnp.float32):
    return (jax.random.normal(key, shape, jnp.float32) * std).astype(dtype)


def init_block(key, D):
    ks = jax.random.split(key, 4)
    bf = jnp.bfloat16
    return dict(
        ln1_g=jnp.ones((D,), jnp.float32), ln1_b=jnp.zeros((D,), jnp.float32),
        qkv_w=_normal(ks[0], (D, 3 * D), dtype=bf),
        qkv_b=jnp.zeros((3 * D,), jnp.float32),
        proj_w=_normal(ks[1], (D, D), dtype=bf),
        proj_b=jnp.zeros((D,), jnp.float32),
        ln2_g=jnp.ones((D,), jnp.float32), ln2_b=jnp.zeros((D,), jnp.float32),
        fc1_w=_normal(ks[2], (D, 4 * D), dtype=bf),
        fc1_b=jnp.zeros((4 * D,), jnp.float32),
        fc2_w=_normal(ks[3], (4 * D, D), dtype=bf),
        fc2_b=jnp.zeros((D,), jnp.float32),
    )


if __name__ == "__main__":
    key = jax.random.PRNGKey(0)

    # Small, shape-consistent config.  Width 128 / head-dim 64 mirrors real
    # CLIP head geometry so the lane-dense attention path is exercised.
    B, C, IMG, PATCH = 2, 3, 16, 8            # image (2,3,16,16), 4 patches + cls
    D_V = 128                                  # vision width
    D_T = 128                                  # text width (ctx_dim)
    E = 128                                    # shared embed dim
    HEADS, LAYERS = 2, 2                       # head dim = 64
    VOCAB, S_T = 64, 16                        # text vocab / context length
    N_CLS, N_CTX = 8, 4                        # classes / learnable context tokens

    keys = jax.random.split(key, 16)
    bf = jnp.bfloat16

    # vision params (PATCH kept static, NOT inside the traced pytree)
    S_V = (IMG // PATCH) ** 2 + 1
    vis_params = dict(
        conv_w=_normal(keys[0], (C * PATCH * PATCH, D_V), dtype=bf),
        class_emb=_normal(keys[1], (D_V,)),
        pos_emb=_normal(keys[2], (S_V, D_V)),
        ln_pre_g=jnp.ones((D_V,), jnp.float32), ln_pre_b=jnp.zeros((D_V,), jnp.float32),
        blocks=[init_block(k, D_V) for k in jax.random.split(keys[3], LAYERS)],
        ln_post_g=jnp.ones((D_V,), jnp.float32), ln_post_b=jnp.zeros((D_V,), jnp.float32),
        proj=_normal(keys[4], (D_V, E), dtype=bf),
    )

    # text params (token embedding frozen in CoOp; ctx is the learnable prompt)
    txt_params = dict(
        token_embedding=_normal(keys[5], (VOCAB, D_T)),
        pos_emb=_normal(keys[6], (S_T, D_T)),
        blocks=[init_block(k, D_T) for k in jax.random.split(keys[7], LAYERS)],
        ln_final_g=jnp.ones((D_T,), jnp.float32), ln_final_b=jnp.zeros((D_T,), jnp.float32),
        text_projection=_normal(keys[8], (D_T, E), dtype=bf),
        ctx=_normal(keys[9], (N_CTX, D_T)),    # generic context (csc=False), std 0.02
    )

    logit_scale = jnp.asarray(np.log(1.0 / 0.07), jnp.float32)

    # Synthetic tokenized prompts: [SOT, X*n_ctx, name tokens, '.', EOT, pad...]
    SOT, EOT, DOT, XTOK = VOCAB - 2, VOCAB - 1, 5, 10
    toks = np.zeros((N_CLS, S_T), dtype=np.int32)
    for i in range(N_CLS):
        name_len = (i % 3) + 1
        pos = 0
        toks[i, pos] = SOT; pos += 1
        for _ in range(N_CTX):
            toks[i, pos] = XTOK; pos += 1
        for j in range(name_len):
            toks[i, pos] = 11 + (i * 3 + j) % 40; pos += 1
        toks[i, pos] = DOT; pos += 1
        toks[i, pos] = EOT                      # EOT = max id -> argmax finds it
    # EOT-as-argmax contract (same as the CLIP tokenizer's guarantee)
    assert np.all(toks[np.arange(N_CLS), toks.argmax(-1)] == EOT)
    tokenized_prompts = jnp.asarray(toks)

    image = jax.random.normal(jax.random.PRNGKey(0), (B, C, IMG, IMG), jnp.float32)

    fwd = jax.jit(functools.partial(coop_forward, heads=HEADS, patch=PATCH))
    out = fwd(image, vis_params, txt_params, tokenized_prompts, logit_scale)
    logits = jax.block_until_ready(out["logits_per_image"])

    assert logits.shape == (B, N_CLS)
    assert bool(jnp.all(jnp.isfinite(logits)))
    print("KERNEL_OK")
</pallas_src>

<mosaic_0001>
module attributes {stable_mosaic.version = 11 : i64} {
  func.func @_linear_kernel(%arg0: i32, %arg1: i32, %arg2: i32, %arg3: memref<128x128xbf16, #tpu.memory_space<vmem>>, %arg4: memref<128x128xbf16, #tpu.memory_space<vmem>>, %arg5: memref<1x128xf32, #tpu.memory_space<vmem>>, %arg6: memref<128x128xbf16, #tpu.memory_space<vmem>>, %arg7: memref<128x128xbf16, #tpu.memory_space<vmem>>) attributes {dimension_semantics = [#tpu.dimension_semantics<parallel>, #tpu.dimension_semantics<parallel>, #tpu.dimension_semantics<arbitrary>], iteration_bounds = array<i64: 1, 1, 1>, scalar_prefetch = 0 : i64, scratch_operands = 0 : i64, tpu.core_type = #tpu.core_type<tc>, window_params = [{transform_indices = @transform_0, window_bounds = array<i64: 128, 128>}, {transform_indices = @transform_1, window_bounds = array<i64: 128, 128>}, {transform_indices = @transform_2, window_bounds = array<i64: 1, 128>}, {transform_indices = @transform_3, window_bounds = array<i64: 128, 128>}, {transform_indices = @transform_4, window_bounds = array<i64: 128, 128>}]} {
    %c0 = arith.constant 0 : index
    %c0_0 = arith.constant 0 : index
    %0 = vector.load %arg3[%c0, %c0_0] : memref<128x128xbf16, #tpu.memory_space<vmem>>, vector<128x128xbf16>
    %c0_1 = arith.constant 0 : index
    %c0_2 = arith.constant 0 : index
    %1 = vector.load %arg4[%c0_1, %c0_2] : memref<128x128xbf16, #tpu.memory_space<vmem>>, vector<128x128xbf16>
    %cst = arith.constant dense<0.000000e+00> : vector<128x128xf32>
    %2 = tpu.matmul %0, %1, %cst {dimension_numbers = #tpu.dot_dimension_numbers<[1], [0], [0], [1], [0, 0, 1, 1], [], []>} : vector<128x128xbf16>, vector<128x128xbf16>, vector<128x128xf32> -> vector<128x128xf32>
    %c0_3 = arith.constant 0 : index
    %c0_4 = arith.constant 0 : index
    %3 = vector.load %arg5[%c0_3, %c0_4] : memref<1x128xf32, #tpu.memory_space<vmem>>, vector<1x128xf32>
    %4 = vector.broadcast %3 : vector<1x128xf32> to vector<128x128xf32>
    %5 = arith.addf %2, %4 : vector<128x128xf32>
    %c0_5 = arith.constant 0 : index
    %c0_6 = arith.constant 0 : index
    %6 = vector.load %arg6[%c0_5, %c0_6] : memref<128x128xbf16, #tpu.memory_space<vmem>>, vector<128x128xbf16>
    %7 = arith.extf %6 : vector<128x128xbf16> to vector<128x128xf32>
    %8 = arith.addf %5, %7 : vector<128x128xf32>
    %9 = arith.truncf %8 : vector<128x128xf32> to vector<128x128xbf16>
    %c0_7 = arith.constant 0 : index
    %c0_8 = arith.constant 0 : index
    %10 = vector.load %arg7[%c0_7, %c0_8] : memref<128x128xbf16, #tpu.memory_space<vmem>>, vector<128x128xbf16>
    tpu.vector_store %arg7[%c0_7, %c0_8], %9 {strides = array<i32>} : memref<128x128xbf16, #tpu.memory_space<vmem>>, vector<128x128xbf16>,
    return
  }
  func.func @transform_0(%arg0: i32, %arg1: i32, %arg2: i32) -> (i32, i32) {
    %c0_i32 = arith.constant 0 : i32
    return %arg0, %arg2 : i32, i32
  }
  func.func @transform_1(%arg0: i32, %arg1: i32, %arg2: i32) -> (i32, i32) {
    %c0_i32 = arith.constant 0 : i32
    return %arg2, %arg1 : i32, i32
  }
  func.func @transform_2(%arg0: i32, %arg1: i32, %arg2: i32) -> (i32, i32) {
    %c0_i32 = arith.constant 0 : i32
    %c0_i32_0 = arith.constant 0 : i32
    return %c0_i32, %arg1 : i32, i32
  }
  func.func @transform_3(%arg0: i32, %arg1: i32, %arg2: i32) -> (i32, i32) {
    %c0_i32 = arith.constant 0 : i32
    return %arg0, %arg1 : i32, i32
  }
  func.func @transform_4(%arg0: i32, %arg1: i32, %arg2: i32) -> (i32, i32) {
    %c0_i32 = arith.constant 0 : i32
    return %arg0, %arg1 : i32, i32
  }
}

module attributes {stable_mosaic.version = 11 : i64} {
  func.func @_attn_kernel(%arg0: i32, %arg1: i32, %arg2: memref<1x16x128xbf16, #tpu.memory_space<vmem>>, %arg3: memref<1x16x128xbf16, #tpu.memory_space<vmem>>, %arg4: memref<1x16x128xbf16, #tpu.memory_space<vmem>>, %arg5: memref<1x16x128xbf16, #tpu.memory_space<vmem>>) attributes {dimension_semantics = [#tpu.dimension_semantics<parallel>, #tpu.dimension_semantics<parallel>], iteration_bounds = array<i64: 8, 1>, scalar_prefetch = 0 : i64, scratch_operands = 0 : i64, tpu.core_type = #tpu.core_type<tc>, window_params = [{transform_indices = @transform_0, window_bounds = array<i64: 1, 16, 128>}, {transform_indices = @transform_1, window_bounds = array<i64: 1, 16, 128>}, {transform_indices = @transform_2, window_bounds = array<i64: 1, 16, 128>}, {transform_indices = @transform_3, window_bounds = array<i64: 1, 16, 128>}]} {
    %c0 = arith.constant 0 : index
    %c0_0 = arith.constant 0 : index
    %c0_1 = arith.constant 0 : index
    %0 = vector.load %arg2[%c0, %c0_0, %c0_1] : memref<1x16x128xbf16, #tpu.memory_space<vmem>>, vector<1x16x128xbf16>
    %1 = vector.shape_cast %0 : vector<1x16x128xbf16> to vector<16x128xbf16>
    %c0_2 = arith.constant 0 : index
    %c0_3 = arith.constant 0 : index
    %c0_4 = arith.constant 0 : index
    %2 = vector.load %arg3[%c0_2, %c0_3, %c0_4] : memref<1x16x128xbf16, #tpu.memory_space<vmem>>, vector<1x16x128xbf16>
    %3 = vector.shape_cast %2 : vector<1x16x128xbf16> to vector<16x128xbf16>
    %c0_5 = arith.constant 0 : index
    %c0_6 = arith.constant 0 : index
    %c0_7 = arith.constant 0 : index
    %4 = vector.load %arg4[%c0_5, %c0_6, %c0_7] : memref<1x16x128xbf16, #tpu.memory_space<vmem>>, vector<1x16x128xbf16>
    %5 = vector.shape_cast %4 : vector<1x16x128xbf16> to vector<16x128xbf16>
    %6 = tpu.iota {dimensions = array<i32: 0>} : vector<16x16xi32>
    %7 = tpu.iota {dimensions = array<i32: 1>} : vector<16x16xi32>
    %8 = arith.cmpi sle, %7, %6 : vector<16x16xi32>
    %cst = arith.constant 0.000000e+00 : f32
    %cst_8 = arith.constant -1.000000e+30 : f32
    %9 = vector.broadcast %cst : f32 to vector<16x16xf32>
    %10 = vector.broadcast %cst_8 : f32 to vector<16x16xf32>
    %11 = arith.select %8, %9, %10 : vector<16x16xi1>, vector<16x16xf32>
    %12 = vector.extract_strided_slice %1 {offsets = [0, 0], sizes = [16, 64], strides = [1, 1]} : vector<16x128xbf16> to vector<16x64xbf16>
    %13 = arith.extf %12 : vector<16x64xbf16> to vector<16x64xf32>
    %cst_9 = arith.constant 1.250000e-01 : f32
    %14 = vector.broadcast %cst_9 : f32 to vector<16x64xf32>
    %15 = arith.mulf %13, %14 : vector<16x64xf32>
    %16 = arith.truncf %15 : vector<16x64xf32> to vector<16x64xbf16>
    %17 = vector.extract_strided_slice %3 {offsets = [0, 0], sizes = [16, 64], strides = [1, 1]} : vector<16x128xbf16> to vector<16x64xbf16>
    %18 = vector.extract_strided_slice %5 {offsets = [0, 0], sizes = [16, 64], strides = [1, 1]} : vector<16x128xbf16> to vector<16x64xbf16>
    %cst_10 = arith.constant dense<0.000000e+00> : vector<16x16xf32>
    %19 = tpu.matmul %16, %17, %cst_10 {dimension_numbers = #tpu.dot_dimension_numbers<[1], [1], [0], [0], [0, 0, 1, 0], [], []>} : vector<16x64xbf16>, vector<16x64xbf16>, vector<16x16xf32> -> vector<16x16xf32>
    %20 = arith.addf %19, %11 : vector<16x16xf32>
    %cst_11 = arith.constant dense<0xFF800000> : vector<16xf32>
    %21 = vector.multi_reduction <maximumf>, %20, %cst_11 [1] : vector<16x16xf32> to vector<16xf32>
    %22 = vector.shape_cast %21 : vector<16xf32> to vector<16x1xf32>
    %23 = vector.broadcast %22 : vector<16x1xf32> to vector<16x16xf32>
    %24 = arith.subf %20, %23 : vector<16x16xf32>
    %25 = math.exp %24 : vector<16x16xf32>
    %cst_12 = arith.constant dense<0.000000e+00> : vector<16xf32>
    %26 = vector.multi_reduction <add>, %25, %cst_12 [1] : vector<16x16xf32> to vector<16xf32>
    %27 = vector.shape_cast %26 : vector<16xf32> to vector<16x1xf32>
    %28 = tpu.reciprocal %27 {approx = true} : vector<16x1xf32> -> vector<16x1xf32>
    %29 = vector.broadcast %28 : vector<16x1xf32> to vector<16x16xf32>
    %30 = arith.mulf %25, %29 : vector<16x16xf32>
    %31 = arith.truncf %30 : vector<16x16xf32> to vector<16x16xbf16>
    %cst_13 = arith.constant dense<0.000000e+00> : vector<16x64xf32>
    %32 = tpu.matmul %31, %18, %cst_13 {dimension_numbers = #tpu.dot_dimension_numbers<[1], [0], [0], [1], [0, 0, 1, 1], [], []>} : vector<16x16xbf16>, vector<16x64xbf16>, vector<16x64xf32> -> vector<16x64xf32>
    %33 = vector.extract_strided_slice %1 {offsets = [0, 64], sizes = [16, 64], strides = [1, 1]} : vector<16x128xbf16> to vector<16x64xbf16>
    %34 = arith.extf %33 : vector<16x64xbf16> to vector<16x64xf32>
    %cst_14 = arith.constant 1.250000e-01 : f32
    %35 = vector.broadcast %cst_14 : f32 to vector<16x64xf32>
    %36 = arith.mulf %34, %35 : vector<16x64xf32>
    %37 = arith.truncf %36 : vector<16x64xf32> to vector<16x64xbf16>
    %38 = vector.extract_strided_slice %3 {offsets = [0, 64], sizes = [16, 64], strides = [1, 1]} : vector<16x128xbf16> to vector<16x64xbf16>
    %39 = vector.extract_strided_slice %5 {offsets = [0, 64], sizes = [16, 64], strides = [1, 1]} : vector<16x128xbf16> to vector<16x64xbf16>
    %cst_15 = arith.constant dense<0.000000e+00> : vector<16x16xf32>
    %40 = tpu.matmul %37, %38, %cst_15 {dimension_numbers = #tpu.dot_dimension_numbers<[1], [1], [0], [0], [0, 0, 1, 0], [], []>} : vector<16x64xbf16>, vector<16x64xbf16>, vector<16x16xf32> -> vector<16x16xf32>
    %41 = arith.addf %40, %11 : vector<16x16xf32>
    %cst_16 = arith.constant dense<0xFF800000> : vector<16xf32>
    %42 = vector.multi_reduction <maximumf>, %41, %cst_16 [1] : vector<16x16xf32> to vector<16xf32>
    %43 = vector.shape_cast %42 : vector<16xf32> to vector<16x1xf32>
    %44 = vector.broadcast %43 : vector<16x1xf32> to vector<16x16xf32>
    %45 = arith.subf %41, %44 : vector<16x16xf32>
    %46 = math.exp %45 : vector<16x16xf32>
    %cst_17 = arith.constant dense<0.000000e+00> : vector<16xf32>
    %47 = vector.multi_reduction <add>, %46, %cst_17 [1] : vector<16x16xf32> to vector<16xf32>
    %48 = vector.shape_cast %47 : vector<16xf32> to vector<16x1xf32>
    %49 = tpu.reciprocal %48 {approx = true} : vector<16x1xf32> -> vector<16x1xf32>
    %50 = vector.broadcast %49 : vector<16x1xf32> to vector<16x16xf32>
    %51 = arith.mulf %46, %50 : vector<16x16xf32>
    %52 = arith.truncf %51 : vector<16x16xf32> to vector<16x16xbf16>
    %cst_18 = arith.constant dense<0.000000e+00> : vector<16x64xf32>
    %53 = tpu.matmul %52, %39, %cst_18 {dimension_numbers = #tpu.dot_dimension_numbers<[1], [0], [0], [1], [0, 0, 1, 1], [], []>} : vector<16x16xbf16>, vector<16x64xbf16>, vector<16x64xf32> -> vector<16x64xf32>
    %54 = tpu.concatenate %32, %53 in 1 : vector<16x64xf32>, vector<16x64xf32> -> vector<16x128xf32>
    %55 = arith.truncf %54 : vector<16x128xf32> to vector<16x128xbf16>
    %c0_19 = arith.constant 0 : index
    %c0_20 = arith.constant 0 : index
    %c0_21 = arith.constant 0 : index
    %56 = vector.load %arg5[%c0_19, %c0_20, %c0_21] : memref<1x16x128xbf16, #tpu.memory_space<vmem>>, vector<1x16x128xbf16>
    %57 = vector.shape_cast %56 : vector<1x16x128xbf16> to vector<16x128xbf16>
    %58 = vector.shape_cast %55 : vector<16x128xbf16> to vector<1x16x128xbf16>
    tpu.vector_store %arg5[%c0_19, %c0_20, %c0_21], %58 {strides = array<i32>} : memref<1x16x128xbf16, #tpu.memory_space<vmem>>, vector<1x16x128xbf16>,
    return
  }
  func.func @transform_0(%arg0: i32, %arg1: i32) -> (i32, i32, i32) {
    %c0_i32 = arith.constant 0 : i32
    %c0_i32_0 = arith.constant 0 : i32
    return %arg0, %c0_i32, %arg1 : i32, i32, i32
  }
  func.func @transform_1(%arg0: i32, %arg1: i32) -> (i32, i32, i32) {
    %c1_i32 = arith.constant 1 : i32
    %0 = arith.addi %arg1, %c1_i32 : i32
    %c0_i32 = arith.constant 0 : i32
    %c0_i32_0 = arith.constant 0 : i32
    return %arg0, %c0_i32, %0 : i32, i32, i32
  }
  func.func @transform_2(%arg0: i32, %arg1: i32) -> (i32, i32, i32) {
    %c2_i32 = arith.constant 2 : i32
    %0 = arith.addi %arg1, %c2_i32 : i32
    %c0_i32 = arith.constant 0 : i32
    %c0_i32_0 = arith.constant 0 : i32
    return %arg0, %c0_i32, %0 : i32, i32, i32
  }
  func.func @transform_3(%arg0: i32, %arg1: i32) -> (i32, i32, i32) {
    %c0_i32 = arith.constant 0 : i32
    %c0_i32_0 = arith.constant 0 : i32
    return %arg0, %c0_i32, %arg1 : i32, i32, i32
  }
}

module attributes {stable_mosaic.version = 11 : i64} {
  func.func @_ln_linear_kernel(%arg0: i32, %arg1: i32, %arg2: memref<128x128xbf16, #tpu.memory_space<vmem>>, %arg3: memref<1x128xf32, #tpu.memory_space<vmem>>, %arg4: memref<1x128xf32, #tpu.memory_space<vmem>>, %arg5: memref<128x384xbf16, #tpu.memory_space<vmem>>, %arg6: memref<1x384xf32, #tpu.memory_space<vmem>>, %arg7: memref<128x384xbf16, #tpu.memory_space<vmem>>, %arg8: memref<128x128xbf16, #tpu.memory_space<vmem>>) attributes {dimension_semantics = [#tpu.dimension_semantics<parallel>, #tpu.dimension_semantics<arbitrary>], iteration_bounds = array<i64: 1, 1>, scalar_prefetch = 0 : i64, scratch_operands = 1 : i64, tpu.core_type = #tpu.core_type<tc>, window_params = [{transform_indices = @transform_0, window_bounds = array<i64: 128, 128>}, {pipeline_mode = #tpu.pipeline_mode<synchronous>, transform_indices = @transform_1, window_bounds = array<i64: 1, 128>}, {pipeline_mode = #tpu.pipeline_mode<synchronous>, transform_indices = @transform_2, window_bounds = array<i64: 1, 128>}, {transform_indices = @transform_3, window_bounds = array<i64: 128, 384>}, {transform_indices = @transform_4, window_bounds = array<i64: 1, 384>}, {transform_indices = @transform_5, window_bounds = array<i64: 128, 384>}]} {
    %c0_i32 = arith.constant 0 : i32
    %0 = arith.cmpi eq, %arg1, %c0_i32 : i32
    %1 = arith.extui %0 : i1 to i32
    %c0_i32_0 = arith.constant 0 : i32
    %2 = arith.cmpi ne, %1, %c0_i32_0 : i32
    scf.if %2 {
      %c0_8 = arith.constant 0 : index
      %c0_9 = arith.constant 0 : index
      %11 = vector.load %arg2[%c0_8, %c0_9] : memref<128x128xbf16, #tpu.memory_space<vmem>>, vector<128x128xbf16>
      %12 = arith.extf %11 : vector<128x128xbf16> to vector<128x128xf32>
      %cst_10 = arith.constant dense<0.000000e+00> : vector<128xf32>
      %13 = vector.multi_reduction <add>, %12, %cst_10 [1] : vector<128x128xf32> to vector<128xf32>
      %14 = vector.shape_cast %13 : vector<128xf32> to vector<128x1xf32>
      %cst_11 = arith.constant 1.280000e+02 : f32
      %15 = vector.broadcast %cst_11 : f32 to vector<128x1xf32>
      %16 = arith.divf %14, %15 : vector<128x1xf32>
      %17 = vector.broadcast %16 : vector<128x1xf32> to vector<128x128xf32>
      %18 = arith.subf %12, %17 : vector<128x128xf32>
      %19 = arith.mulf %18, %18 : vector<128x128xf32>
      %cst_12 = arith.constant dense<0.000000e+00> : vector<128xf32>
      %20 = vector.multi_reduction <add>, %19, %cst_12 [1] : vector<128x128xf32> to vector<128xf32>
      %21 = vector.shape_cast %20 : vector<128xf32> to vector<128x1xf32>
      %cst_13 = arith.constant 1.280000e+02 : f32
      %22 = vector.broadcast %cst_13 : f32 to vector<128x1xf32>
      %23 = arith.divf %21, %22 : vector<128x1xf32>
      %cst_14 = arith.constant 9.99999974E-6 : f32
      %24 = vector.broadcast %cst_14 : f32 to vector<128x1xf32>
      %25 = arith.addf %23, %24 : vector<128x1xf32>
      %26 = math.rsqrt %25 : vector<128x1xf32>
      %27 = vector.broadcast %26 : vector<128x1xf32> to vector<128x128xf32>
      %28 = arith.mulf %18, %27 : vector<128x128xf32>
      %c0_15 = arith.constant 0 : index
      %c0_16 = arith.constant 0 : index
      %29 = vector.load %arg3[%c0_15, %c0_16] : memref<1x128xf32, #tpu.memory_space<vmem>>, vector<1x128xf32>
      %30 = vector.broadcast %29 : vector<1x128xf32> to vector<128x128xf32>
      %31 = arith.mulf %28, %30 : vector<128x128xf32>
      %c0_17 = arith.constant 0 : index
      %c0_18 = arith.constant 0 : index
      %32 = vector.load %arg4[%c0_17, %c0_18] : memref<1x128xf32, #tpu.memory_space<vmem>>, vector<1x128xf32>
      %33 = vector.broadcast %32 : vector<1x128xf32> to vector<128x128xf32>
      %34 = arith.addf %31, %33 : vector<128x128xf32>
      %35 = arith.truncf %34 : vector<128x128xf32> to vector<128x128xbf16>
      %c0_19 = arith.constant 0 : index
      %c0_20 = arith.constant 0 : index
      %36 = vector.load %arg8[%c0_19, %c0_20] : memref<128x128xbf16, #tpu.memory_space<vmem>>, vector<128x128xbf16>
      tpu.vector_store %arg8[%c0_19, %c0_20], %35 {strides = array<i32>} : memref<128x128xbf16, #tpu.memory_space<vmem>>, vector<128x128xbf16>,
    } else {
    }
    %c0 = arith.constant 0 : index
    %c0_1 = arith.constant 0 : index
    %3 = vector.load %arg8[%c0, %c0_1] : memref<128x128xbf16, #tpu.memory_space<vmem>>, vector<128x128xbf16>
    %c0_2 = arith.constant 0 : index
    %c0_3 = arith.constant 0 : index
    %4 = vector.load %arg5[%c0_2, %c0_3] : memref<128x384xbf16, #tpu.memory_space<vmem>>, vector<128x384xbf16>
    %cst = arith.constant dense<0.000000e+00> : vector<128x384xf32>
    %5 = tpu.matmul %3, %4, %cst {dimension_numbers = #tpu.dot_dimension_numbers<[1], [0], [0], [1], [0, 0, 1, 1], [], []>} : vector<128x128xbf16>, vector<128x384xbf16>, vector<128x384xf32> -> vector<128x384xf32>
    %c0_4 = arith.constant 0 : index
    %c0_5 = arith.constant 0 : index
    %6 = vector.load %arg6[%c0_4, %c0_5] : memref<1x384xf32, #tpu.memory_space<vmem>>, vector<1x384xf32>
    %7 = vector.broadcast %6 : vector<1x384xf32> to vector<128x384xf32>
    %8 = arith.addf %5, %7 : vector<128x384xf32>
    %9 = arith.truncf %8 : vector<128x384xf32> to vector<128x384xbf16>
    %c0_6 = arith.constant 0 : index
    %c0_7 = arith.constant 0 : index
    %10 = vector.load %arg7[%c0_6, %c0_7] : memref<128x384xbf16, #tpu.memory_space<vmem>>, vector<128x384xbf16>
    tpu.vector_store %arg7[%c0_6, %c0_7], %9 {strides = array<i32>} : memref<128x384xbf16, #tpu.memory_space<vmem>>, vector<128x384xbf16>,
    return
  }
  func.func @transform_0(%arg0: i32, %arg1: i32) -> (i32, i32) {
    %c0_i32 = arith.constant 0 : i32
    %c0_i32_0 = arith.constant 0 : i32
    return %arg0, %c0_i32 : i32, i32
  }
  func.func @transform_1(%arg0: i32, %arg1: i32) -> (i32, i32) {
    %c0_i32 = arith.constant 0 : i32
    %c0_i32_0 = arith.constant 0 : i32
    %c0_i32_1 = arith.constant 0 : i32
    return %c0_i32, %c0_i32_0 : i32, i32
  }
  func.func @transform_2(%arg0: i32, %arg1: i32) -> (i32, i32) {
    %c0_i32 = arith.constant 0 : i32
    %c0_i32_0 = arith.constant 0 : i32
    %c0_i32_1 = arith.constant 0 : i32
    return %c0_i32, %c0_i32_0 : i32, i32
  }
  func.func @transform_3(%arg0: i32, %arg1: i32) -> (i32, i32) {
    %c0_i32 = arith.constant 0 : i32
    %c0_i32_0 = arith.constant 0 : i32
    return %c0_i32, %arg1 : i32, i32
  }
  func.func @transform_4(%arg0: i32, %arg1: i32) -> (i32, i32) {
    %c0_i32 = arith.constant 0 : i32
    %c0_i32_0 = arith.constant 0 : i32
    return %c0_i32, %arg1 : i32, i32
  }
  func.func @transform_5(%arg0: i32, %arg1: i32) -> (i32, i32) {
    %c0_i32 = arith.constant 0 : i32
    return %arg0, %arg1 : i32, i32
  }
}

module attributes {stable_mosaic.version = 11 : i64} {
  func.func @_ln_linear_kernel(%arg0: i32, %arg1: i32, %arg2: memref<128x128xbf16, #tpu.memory_space<vmem>>, %arg3: memref<1x128xf32, #tpu.memory_space<vmem>>, %arg4: memref<1x128xf32, #tpu.memory_space<vmem>>, %arg5: memref<128x512xbf16, #tpu.memory_space<vmem>>, %arg6: memref<1x512xf32, #tpu.memory_space<vmem>>, %arg7: memref<128x512xbf16, #tpu.memory_space<vmem>>, %arg8: memref<128x128xbf16, #tpu.memory_space<vmem>>) attributes {dimension_semantics = [#tpu.dimension_semantics<parallel>, #tpu.dimension_semantics<arbitrary>], iteration_bounds = array<i64: 1, 1>, scalar_prefetch = 0 : i64, scratch_operands = 1 : i64, tpu.core_type = #tpu.core_type<tc>, window_params = [{transform_indices = @transform_0, window_bounds = array<i64: 128, 128>}, {pipeline_mode = #tpu.pipeline_mode<synchronous>, transform_indices = @transform_1, window_bounds = array<i64: 1, 128>}, {pipeline_mode = #tpu.pipeline_mode<synchronous>, transform_indices = @transform_2, window_bounds = array<i64: 1, 128>}, {transform_indices = @transform_3, window_bounds = array<i64: 128, 512>}, {transform_indices = @transform_4, window_bounds = array<i64: 1, 512>}, {transform_indices = @transform_5, window_bounds = array<i64: 128, 512>}]} {
    %c0_i32 = arith.constant 0 : i32
    %0 = arith.cmpi eq, %arg1, %c0_i32 : i32
    %1 = arith.extui %0 : i1 to i32
    %c0_i32_0 = arith.constant 0 : i32
    %2 = arith.cmpi ne, %1, %c0_i32_0 : i32
    scf.if %2 {
      %c0_10 = arith.constant 0 : index
      %c0_11 = arith.constant 0 : index
      %19 = vector.load %arg2[%c0_10, %c0_11] : memref<128x128xbf16, #tpu.memory_space<vmem>>, vector<128x128xbf16>
      %20 = arith.extf %19 : vector<128x128xbf16> to vector<128x128xf32>
      %cst_12 = arith.constant dense<0.000000e+00> : vector<128xf32>
      %21 = vector.multi_reduction <add>, %20, %cst_12 [1] : vector<128x128xf32> to vector<128xf32>
      %22 = vector.shape_cast %21 : vector<128xf32> to vector<128x1xf32>
      %cst_13 = arith.constant 1.280000e+02 : f32
      %23 = vector.broadcast %cst_13 : f32 to vector<128x1xf32>
      %24 = arith.divf %22, %23 : vector<128x1xf32>
      %25 = vector.broadcast %24 : vector<128x1xf32> to vector<128x128xf32>
      %26 = arith.subf %20, %25 : vector<128x128xf32>
      %27 = arith.mulf %26, %26 : vector<128x128xf32>
      %cst_14 = arith.constant dense<0.000000e+00> : vector<128xf32>
      %28 = vector.multi_reduction <add>, %27, %cst_14 [1] : vector<128x128xf32> to vector<128xf32>
      %29 = vector.shape_cast %28 : vector<128xf32> to vector<128x1xf32>
      %cst_15 = arith.constant 1.280000e+02 : f32
      %30 = vector.broadcast %cst_15 : f32 to vector<128x1xf32>
      %31 = arith.divf %29, %30 : vector<128x1xf32>
      %cst_16 = arith.constant 9.99999974E-6 : f32
      %32 = vector.broadcast %cst_16 : f32 to vector<128x1xf32>
      %33 = arith.addf %31, %32 : vector<128x1xf32>
      %34 = math.rsqrt %33 : vector<128x1xf32>
      %35 = vector.broadcast %34 : vector<128x1xf32> to vector<128x128xf32>
      %36 = arith.mulf %26, %35 : vector<128x128xf32>
      %c0_17 = arith.constant 0 : index
      %c0_18 = arith.constant 0 : index
      %37 = vector.load %arg3[%c0_17, %c0_18] : memref<1x128xf32, #tpu.memory_space<vmem>>, vector<1x128xf32>
      %38 = vector.broadcast %37 : vector<1x128xf32> to vector<128x128xf32>
      %39 = arith.mulf %36, %38 : vector<128x128xf32>
      %c0_19 = arith.constant 0 : index
      %c0_20 = arith.constant 0 : index
      %40 = vector.load %arg4[%c0_19, %c0_20] : memref<1x128xf32, #tpu.memory_space<vmem>>, vector<1x128xf32>
      %41 = vector.broadcast %40 : vector<1x128xf32> to vector<128x128xf32>
      %42 = arith.addf %39, %41 : vector<128x128xf32>
      %43 = arith.truncf %42 : vector<128x128xf32> to vector<128x128xbf16>
      %c0_21 = arith.constant 0 : index
      %c0_22 = arith.constant 0 : index
      %44 = vector.load %arg8[%c0_21, %c0_22] : memref<128x128xbf16, #tpu.memory_space<vmem>>, vector<128x128xbf16>
      tpu.vector_store %arg8[%c0_21, %c0_22], %43 {strides = array<i32>} : memref<128x128xbf16, #tpu.memory_space<vmem>>, vector<128x128xbf16>,
    } else {
    }
    %c0 = arith.constant 0 : index
    %c0_1 = arith.constant 0 : index
    %3 = vector.load %arg8[%c0, %c0_1] : memref<128x128xbf16, #tpu.memory_space<vmem>>, vector<128x128xbf16>
    %c0_2 = arith.constant 0 : index
    %c0_3 = arith.constant 0 : index
    %4 = vector.load %arg5[%c0_2, %c0_3] : memref<128x512xbf16, #tpu.memory_space<vmem>>, vector<128x512xbf16>
    %cst = arith.constant dense<0.000000e+00> : vector<128x512xf32>
    %5 = tpu.matmul %3, %4, %cst {dimension_numbers = #tpu.dot_dimension_numbers<[1], [0], [0], [1], [0, 0, 1, 1], [], []>} : vector<128x128xbf16>, vector<128x512xbf16>, vector<128x512xf32> -> vector<128x512xf32>
    %c0_4 = arith.constant 0 : index
    %c0_5 = arith.constant 0 : index
    %6 = vector.load %arg6[%c0_4, %c0_5] : memref<1x512xf32, #tpu.memory_space<vmem>>, vector<1x512xf32>
    %7 = vector.broadcast %6 : vector<1x512xf32> to vector<128x512xf32>
    %8 = arith.addf %5, %7 : vector<128x512xf32>
    %cst_6 = arith.constant 1.702000e+00 : f32
    %9 = vector.broadcast %cst_6 : f32 to vector<128x512xf32>
    %10 = arith.mulf %9, %8 : vector<128x512xf32>
    %11 = arith.negf %10 : vector<128x512xf32>
    %12 = math.exp %11 : vector<128x512xf32>
    %cst_7 = arith.constant 1.000000e+00 : f32
    %13 = vector.broadcast %cst_7 : f32 to vector<128x512xf32>
    %14 = arith.addf %13, %12 : vector<128x512xf32>
    %15 = arith.divf %13, %14 : vector<128x512xf32>
    %16 = arith.mulf %8, %15 : vector<128x512xf32>
    %17 = arith.truncf %16 : vector<128x512xf32> to vector<128x512xbf16>
    %c0_8 = arith.constant 0 : index
    %c0_9 = arith.constant 0 : index
    %18 = vector.load %arg7[%c0_8, %c0_9] : memref<128x512xbf16, #tpu.memory_space<vmem>>, vector<128x512xbf16>
    tpu.vector_store %arg7[%c0_8, %c0_9], %17 {strides = array<i32>} : memref<128x512xbf16, #tpu.memory_space<vmem>>, vector<128x512xbf16>,
    return
  }
  func.func @transform_0(%arg0: i32, %arg1: i32) -> (i32, i32) {
    %c0_i32 = arith.constant 0 : i32
    %c0_i32_0 = arith.constant 0 : i32
    return %arg0, %c0_i32 : i32, i32
  }
  func.func @transform_1(%arg0: i32, %arg1: i32) -> (i32, i32) {
    %c0_i32 = arith.constant 0 : i32
    %c0_i32_0 = arith.constant 0 : i32
    %c0_i32_1 = arith.constant 0 : i32
    return %c0_i32, %c0_i32_0 : i32, i32
  }
  func.func @transform_2(%arg0: i32, %arg1: i32) -> (i32, i32) {
    %c0_i32 = arith.constant 0 : i32
    %c0_i32_0 = arith.constant 0 : i32
    %c0_i32_1 = arith.constant 0 : i32
    return %c0_i32, %c0_i32_0 : i32, i32
  }
  func.func @transform_3(%arg0: i32, %arg1: i32) -> (i32, i32) {
    %c0_i32 = arith.constant 0 : i32
    %c0_i32_0 = arith.constant 0 : i32
    return %c0_i32, %arg1 : i32, i32
  }
  func.func @transform_4(%arg0: i32, %arg1: i32) -> (i32, i32) {
    %c0_i32 = arith.constant 0 : i32
    %c0_i32_0 = arith.constant 0 : i32
    return %c0_i32, %arg1 : i32, i32
  }
  func.func @transform_5(%arg0: i32, %arg1: i32) -> (i32, i32) {
    %c0_i32 = arith.constant 0 : i32
    return %arg0, %arg1 : i32, i32
  }
}

module attributes {stable_mosaic.version = 11 : i64} {
  func.func @_linear_kernel(%arg0: i32, %arg1: i32, %arg2: i32, %arg3: memref<128x512xbf16, #tpu.memory_space<vmem>>, %arg4: memref<512x128xbf16, #tpu.memory_space<vmem>>, %arg5: memref<1x128xf32, #tpu.memory_space<vmem>>, %arg6: memref<128x128xbf16, #tpu.memory_space<vmem>>, %arg7: memref<128x128xbf16, #tpu.memory_space<vmem>>) attributes {dimension_semantics = [#tpu.dimension_semantics<parallel>, #tpu.dimension_semantics<parallel>, #tpu.dimension_semantics<arbitrary>], iteration_bounds = array<i64: 1, 1, 1>, scalar_prefetch = 0 : i64, scratch_operands = 0 : i64, tpu.core_type = #tpu.core_type<tc>, window_params = [{transform_indices = @transform_0, window_bounds = array<i64: 128, 512>}, {transform_indices = @transform_1, window_bounds = array<i64: 512, 128>}, {transform_indices = @transform_2, window_bounds = array<i64: 1, 128>}, {transform_indices = @transform_3, window_bounds = array<i64: 128, 128>}, {transform_indices = @transform_4, window_bounds = array<i64: 128, 128>}]} {
    %c0 = arith.constant 0 : index
    %c0_0 = arith.constant 0 : index
    %0 = vector.load %arg3[%c0, %c0_0] : memref<128x512xbf16, #tpu.memory_space<vmem>>, vector<128x512xbf16>
    %c0_1 = arith.constant 0 : index
    %c0_2 = arith.constant 0 : index
    %1 = vector.load %arg4[%c0_1, %c0_2] : memref<512x128xbf16, #tpu.memory_space<vmem>>, vector<512x128xbf16>
    %cst = arith.constant dense<0.000000e+00> : vector<128x128xf32>
    %2 = tpu.matmul %0, %1, %cst {dimension_numbers = #tpu.dot_dimension_numbers<[1], [0], [0], [1], [0, 0, 1, 1], [], []>} : vector<128x512xbf16>, vector<512x128xbf16>, vector<128x128xf32> -> vector<128x128xf32>
    %c0_3 = arith.constant 0 : index
    %c0_4 = arith.constant 0 : index
    %3 = vector.load %arg5[%c0_3, %c0_4] : memref<1x128xf32, #tpu.memory_space<vmem>>, vector<1x128xf32>
    %4 = vector.broadcast %3 : vector<1x128xf32> to vector<128x128xf32>
    %5 = arith.addf %2, %4 : vector<128x128xf32>
    %c0_5 = arith.constant 0 : index
    %c0_6 = arith.constant 0 : index
    %6 = vector.load %arg6[%c0_5, %c0_6] : memref<128x128xbf16, #tpu.memory_space<vmem>>, vector<128x128xbf16>
    %7 = arith.extf %6 : vector<128x128xbf16> to vector<128x128xf32>
    %8 = arith.addf %5, %7 : vector<128x128xf32>
    %9 = arith.truncf %8 : vector<128x128xf32> to vector<128x128xbf16>
    %c0_7 = arith.constant 0 : index
    %c0_8 = arith.constant 0 : index
    %10 = vector.load %arg7[%c0_7, %c0_8] : memref<128x128xbf16, #tpu.memory_space<vmem>>, vector<128x128xbf16>
    tpu.vector_store %arg7[%c0_7, %c0_8], %9 {strides = array<i32>} : memref<128x128xbf16, #tpu.memory_space<vmem>>, vector<128x128xbf16>,
    return
  }
  func.func @transform_0(%arg0: i32, %arg1: i32, %arg2: i32) -> (i32, i32) {
    %c0_i32 = arith.constant 0 : i32
    return %arg0, %arg2 : i32, i32
  }
  func.func @transform_1(%arg0: i32, %arg1: i32, %arg2: i32) -> (i32, i32) {
    %c0_i32 = arith.constant 0 : i32
    return %arg2, %arg1 : i32, i32
  }
  func.func @transform_2(%arg0: i32, %arg1: i32, %arg2: i32) -> (i32, i32) {
    %c0_i32 = arith.constant 0 : i32
    %c0_i32_0 = arith.constant 0 : i32
    return %c0_i32, %arg1 : i32, i32
  }
  func.func @transform_3(%arg0: i32, %arg1: i32, %arg2: i32) -> (i32, i32) {
    %c0_i32 = arith.constant 0 : i32
    return %arg0, %arg1 : i32, i32
  }
  func.func @transform_4(%arg0: i32, %arg1: i32, %arg2: i32) -> (i32, i32) {
    %c0_i32 = arith.constant 0 : i32
    return %arg0, %arg1 : i32, i32
  }
}

module attributes {stable_mosaic.version = 11 : i64} {
  func.func @_ln_linear_kernel(%arg0: i32, %arg1: i32, %arg2: memref<8x128xbf16, #tpu.memory_space<vmem>>, %arg3: memref<1x128xf32, #tpu.memory_space<vmem>>, %arg4: memref<1x128xf32, #tpu.memory_space<vmem>>, %arg5: memref<128x128xbf16, #tpu.memory_space<vmem>>, %arg6: memref<8x128xbf16, #tpu.memory_space<vmem>>, %arg7: memref<8x128xbf16, #tpu.memory_space<vmem>>) attributes {dimension_semantics = [#tpu.dimension_semantics<parallel>, #tpu.dimension_semantics<arbitrary>], iteration_bounds = array<i64: 1, 1>, scalar_prefetch = 0 : i64, scratch_operands = 1 : i64, tpu.core_type = #tpu.core_type<tc>, window_params = [{transform_indices = @transform_0, window_bounds = array<i64: 8, 128>}, {pipeline_mode = #tpu.pipeline_mode<synchronous>, transform_indices = @transform_1, window_bounds = array<i64: 1, 128>}, {pipeline_mode = #tpu.pipeline_mode<synchronous>, transform_indices = @transform_2, window_bounds = array<i64: 1, 128>}, {transform_indices = @transform_3, window_bounds = array<i64: 128, 128>}, {transform_indices = @transform_4, window_bounds = array<i64: 8, 128>}]} {
    %c0_i32 = arith.constant 0 : i32
    %0 = arith.cmpi eq, %arg1, %c0_i32 : i32
    %1 = arith.extui %0 : i1 to i32
    %c0_i32_0 = arith.constant 0 : i32
    %2 = arith.cmpi ne, %1, %c0_i32_0 : i32
    scf.if %2 {
      %c0_6 = arith.constant 0 : index
      %c0_7 = arith.constant 0 : index
      %8 = vector.load %arg2[%c0_6, %c0_7] : memref<8x128xbf16, #tpu.memory_space<vmem>>, vector<8x128xbf16>
      %9 = arith.extf %8 : vector<8x128xbf16> to vector<8x128xf32>
      %cst_8 = arith.constant dense<0.000000e+00> : vector<8xf32>
      %10 = vector.multi_reduction <add>, %9, %cst_8 [1] : vector<8x128xf32> to vector<8xf32>
      %11 = vector.shape_cast %10 : vector<8xf32> to vector<8x1xf32>
      %cst_9 = arith.constant 1.280000e+02 : f32
      %12 = vector.broadcast %cst_9 : f32 to vector<8x1xf32>
      %13 = arith.divf %11, %12 : vector<8x1xf32>
      %14 = vector.broadcast %13 : vector<8x1xf32> to vector<8x128xf32>
      %15 = arith.subf %9, %14 : vector<8x128xf32>
      %16 = arith.mulf %15, %15 : vector<8x128xf32>
      %cst_10 = arith.constant dense<0.000000e+00> : vector<8xf32>
      %17 = vector.multi_reduction <add>, %16, %cst_10 [1] : vector<8x128xf32> to vector<8xf32>
      %18 = vector.shape_cast %17 : vector<8xf32> to vector<8x1xf32>
      %cst_11 = arith.constant 1.280000e+02 : f32
      %19 = vector.broadcast %cst_11 : f32 to vector<8x1xf32>
      %20 = arith.divf %18, %19 : vector<8x1xf32>
      %cst_12 = arith.constant 9.99999974E-6 : f32
      %21 = vector.broadcast %cst_12 : f32 to vector<8x1xf32>
      %22 = arith.addf %20, %21 : vector<8x1xf32>
      %23 = math.rsqrt %22 : vector<8x1xf32>
      %24 = vector.broadcast %23 : vector<8x1xf32> to vector<8x128xf32>
      %25 = arith.mulf %15, %24 : vector<8x128xf32>
      %c0_13 = arith.constant 0 : index
      %c0_14 = arith.constant 0 : index
      %26 = vector.load %arg3[%c0_13, %c0_14] : memref<1x128xf32, #tpu.memory_space<vmem>>, vector<1x128xf32>
      %27 = vector.broadcast %26 : vector<1x128xf32> to vector<8x128xf32>
      %28 = arith.mulf %25, %27 : vector<8x128xf32>
      %c0_15 = arith.constant 0 : index
      %c0_16 = arith.constant 0 : index
      %29 = vector.load %arg4[%c0_15, %c0_16] : memref<1x128xf32, #tpu.memory_space<vmem>>, vector<1x128xf32>
      %30 = vector.broadcast %29 : vector<1x128xf32> to vector<8x128xf32>
      %31 = arith.addf %28, %30 : vector<8x128xf32>
      %32 = arith.truncf %31 : vector<8x128xf32> to vector<8x128xbf16>
      %c0_17 = arith.constant 0 : index
      %c0_18 = arith.constant 0 : index
      %33 = vector.load %arg7[%c0_17, %c0_18] : memref<8x128xbf16, #tpu.memory_space<vmem>>, vector<8x128xbf16>
      tpu.vector_store %arg7[%c0_17, %c0_18], %32 {strides = array<i32>} : memref<8x128xbf16, #tpu.memory_space<vmem>>, vector<8x128xbf16>,
    } else {
    }
    %c0 = arith.constant 0 : index
    %c0_1 = arith.constant 0 : index
    %3 = vector.load %arg7[%c0, %c0_1] : memref<8x128xbf16, #tpu.memory_space<vmem>>, vector<8x128xbf16>
    %c0_2 = arith.constant 0 : index
    %c0_3 = arith.constant 0 : index
    %4 = vector.load %arg5[%c0_2, %c0_3] : memref<128x128xbf16, #tpu.memory_space<vmem>>, vector<128x128xbf16>
    %cst = arith.constant dense<0.000000e+00> : vector<8x128xf32>
    %5 = tpu.matmul %3, %4, %cst {dimension_numbers = #tpu.dot_dimension_numbers<[1], [0], [0], [1], [0, 0, 1, 1], [], []>} : vector<8x128xbf16>, vector<128x128xbf16>, vector<8x128xf32> -> vector<8x128xf32>
    %6 = arith.truncf %5 : vector<8x128xf32> to vector<8x128xbf16>
    %c0_4 = arith.constant 0 : index
    %c0_5 = arith.constant 0 : index
    %7 = vector.load %arg6[%c0_4, %c0_5] : memref<8x128xbf16, #tpu.memory_space<vmem>>, vector<8x128xbf16>
    tpu.vector_store %arg6[%c0_4, %c0_5], %6 {strides = array<i32>} : memref<8x128xbf16, #tpu.memory_space<vmem>>, vector<8x128xbf16>,
    return
  }
  func.func @transform_0(%arg0: i32, %arg1: i32) -> (i32, i32) {
    %c0_i32 = arith.constant 0 : i32
    %c0_i32_0 = arith.constant 0 : i32
    return %arg0, %c0_i32 : i32, i32
  }
  func.func @transform_1(%arg0: i32, %arg1: i32) -> (i32, i32) {
    %c0_i32 = arith.constant 0 : i32
    %c0_i32_0 = arith.constant 0 : i32
    %c0_i32_1 = arith.constant 0 : i32
    return %c0_i32, %c0_i32_0 : i32, i32
  }
  func.func @transform_2(%arg0: i32, %arg1: i32) -> (i32, i32) {
    %c0_i32 = arith.constant 0 : i32
    %c0_i32_0 = arith.constant 0 : i32
    %c0_i32_1 = arith.constant 0 : i32
    return %c0_i32, %c0_i32_0 : i32, i32
  }
  func.func @transform_3(%arg0: i32, %arg1: i32) -> (i32, i32) {
    %c0_i32 = arith.constant 0 : i32
    %c0_i32_0 = arith.constant 0 : i32
    return %c0_i32, %arg1 : i32, i32
  }
  func.func @transform_4(%arg0: i32, %arg1: i32) -> (i32, i32) {
    %c0_i32 = arith.constant 0 : i32
    return %arg0, %arg1 : i32, i32
  }
}

module attributes {stable_mosaic.version = 11 : i64} {
  func.func @_ln_posadd_kernel(%arg0: i32, %arg1: memref<1x5x128xbf16, #tpu.memory_space<vmem>>, %arg2: memref<5x128xf32, #tpu.memory_space<vmem>>, %arg3: memref<1x128xf32, #tpu.memory_space<vmem>>, %arg4: memref<1x128xf32, #tpu.memory_space<vmem>>, %arg5: memref<1x5x128xbf16, #tpu.memory_space<vmem>>) attributes {dimension_semantics = [#tpu.dimension_semantics<parallel>], iteration_bounds = array<i64: 2>, scalar_prefetch = 0 : i64, scratch_operands = 0 : i64, tpu.core_type = #tpu.core_type<tc>, window_params = [{transform_indices = @transform_0, window_bounds = array<i64: 1, 5, 128>}, {pipeline_mode = #tpu.pipeline_mode<synchronous>, transform_indices = @transform_1, window_bounds = array<i64: 5, 128>}, {pipeline_mode = #tpu.pipeline_mode<synchronous>, transform_indices = @transform_2, window_bounds = array<i64: 1, 128>}, {pipeline_mode = #tpu.pipeline_mode<synchronous>, transform_indices = @transform_3, window_bounds = array<i64: 1, 128>}, {transform_indices = @transform_4, window_bounds = array<i64: 1, 5, 128>}]} {
    %c0 = arith.constant 0 : index
    %c0_0 = arith.constant 0 : index
    %c0_1 = arith.constant 0 : index
    %0 = vector.load %arg1[%c0, %c0_0, %c0_1] : memref<1x5x128xbf16, #tpu.memory_space<vmem>>, vector<1x5x128xbf16>
    %1 = vector.shape_cast %0 : vector<1x5x128xbf16> to vector<5x128xbf16>
    %2 = arith.extf %1 : vector<5x128xbf16> to vector<5x128xf32>
    %c0_2 = arith.constant 0 : index
    %c0_3 = arith.constant 0 : index
    %3 = vector.load %arg2[%c0_2, %c0_3] : memref<5x128xf32, #tpu.memory_space<vmem>>, vector<5x128xf32>
    %4 = arith.addf %2, %3 : vector<5x128xf32>
    %cst = arith.constant dense<0.000000e+00> : vector<5xf32>
    %5 = vector.multi_reduction <add>, %4, %cst [1] : vector<5x128xf32> to vector<5xf32>
    %6 = vector.shape_cast %5 : vector<5xf32> to vector<5x1xf32>
    %cst_4 = arith.constant 1.280000e+02 : f32
    %7 = vector.broadcast %cst_4 : f32 to vector<5x1xf32>
    %8 = arith.divf %6, %7 : vector<5x1xf32>
    %9 = vector.broadcast %8 : vector<5x1xf32> to vector<5x128xf32>
    %10 = arith.subf %4, %9 : vector<5x128xf32>
    %11 = arith.mulf %10, %10 : vector<5x128xf32>
    %cst_5 = arith.constant dense<0.000000e+00> : vector<5xf32>
    %12 = vector.multi_reduction <add>, %11, %cst_5 [1] : vector<5x128xf32> to vector<5xf32>
    %13 = vector.shape_cast %12 : vector<5xf32> to vector<5x1xf32>
    %cst_6 = arith.constant 1.280000e+02 : f32
    %14 = vector.broadcast %cst_6 : f32 to vector<5x1xf32>
    %15 = arith.divf %13, %14 : vector<5x1xf32>
    %cst_7 = arith.constant 9.99999974E-6 : f32
    %16 = vector.broadcast %cst_7 : f32 to vector<5x1xf32>
    %17 = arith.addf %15, %16 : vector<5x1xf32>
    %18 = math.rsqrt %17 : vector<5x1xf32>
    %19 = vector.broadcast %18 : vector<5x1xf32> to vector<5x128xf32>
    %20 = arith.mulf %10, %19 : vector<5x128xf32>
    %c0_8 = arith.constant 0 : index
    %c0_9 = arith.constant 0 : index
    %21 = vector.load %arg3[%c0_8, %c0_9] : memref<1x128xf32, #tpu.memory_space<vmem>>, vector<1x128xf32>
    %22 = vector.broadcast %21 : vector<1x128xf32> to vector<5x128xf32>
    %23 = arith.mulf %20, %22 : vector<5x128xf32>
    %c0_10 = arith.constant 0 : index
    %c0_11 = arith.constant 0 : index
    %24 = vector.load %arg4[%c0_10, %c0_11] : memref<1x128xf32, #tpu.memory_space<vmem>>, vector<1x128xf32>
    %25 = vector.broadcast %24 : vector<1x128xf32> to vector<5x128xf32>
    %26 = arith.addf %23, %25 : vector<5x128xf32>
    %27 = arith.truncf %26 : vector<5x128xf32> to vector<5x128xbf16>
    %c0_12 = arith.constant 0 : index
    %c0_13 = arith.constant 0 : index
    %c0_14 = arith.constant 0 : index
    %28 = vector.load %arg5[%c0_12, %c0_13, %c0_14] : memref<1x5x128xbf16, #tpu.memory_space<vmem>>, vector<1x5x128xbf16>
    %29 = vector.shape_cast %28 : vector<1x5x128xbf16> to vector<5x128xbf16>
    %30 = vector.shape_cast %27 : vector<5x128xbf16> to vector<1x5x128xbf16>
    tpu.vector_store %arg5[%c0_12, %c0_13, %c0_14], %30 {strides = array<i32>} : memref<1x5x128xbf16, #tpu.memory_space<vmem>>, vector<1x5x128xbf16>,
    return
  }
  func.func @transform_0(%arg0: i32) -> (i32, i32, i32) {
    %c0_i32 = arith.constant 0 : i32
    %c0_i32_0 = arith.constant 0 : i32
    %c0_i32_1 = arith.constant 0 : i32
    return %arg0, %c0_i32, %c0_i32_0 : i32, i32, i32
  }
  func.func @transform_1(%arg0: i32) -> (i32, i32) {
    %c0_i32 = arith.constant 0 : i32
    %c0_i32_0 = arith.constant 0 : i32
    %c0_i32_1 = arith.constant 0 : i32
    return %c0_i32, %c0_i32_0 : i32, i32
  }
  func.func @transform_2(%arg0: i32) -> (i32, i32) {
    %c0_i32 = arith.constant 0 : i32
    %c0_i32_0 = arith.constant 0 : i32
    %c0_i32_1 = arith.constant 0 : i32
    return %c0_i32, %c0_i32_0 : i32, i32
  }
  func.func @transform_3(%arg0: i32) -> (i32, i32) {
    %c0_i32 = arith.constant 0 : i32
    %c0_i32_0 = arith.constant 0 : i32
    %c0_i32_1 = arith.constant 0 : i32
    return %c0_i32, %c0_i32_0 : i32, i32
  }
  func.func @transform_4(%arg0: i32) -> (i32, i32, i32) {
    %c0_i32 = arith.constant 0 : i32
    %c0_i32_0 = arith.constant 0 : i32
    %c0_i32_1 = arith.constant 0 : i32
    return %arg0, %c0_i32, %c0_i32_0 : i32, i32, i32
  }
}

module attributes {stable_mosaic.version = 11 : i64} {
  func.func @_linear_kernel(%arg0: i32, %arg1: i32, %arg2: i32, %arg3: memref<8x192xbf16, #tpu.memory_space<vmem>>, %arg4: memref<192x128xbf16, #tpu.memory_space<vmem>>, %arg5: memref<8x128xbf16, #tpu.memory_space<vmem>>) attributes {dimension_semantics = [#tpu.dimension_semantics<parallel>, #tpu.dimension_semantics<parallel>, #tpu.dimension_semantics<arbitrary>], iteration_bounds = array<i64: 1, 1, 1>, scalar_prefetch = 0 : i64, scratch_operands = 0 : i64, tpu.core_type = #tpu.core_type<tc>, window_params = [{transform_indices = @transform_0, window_bounds = array<i64: 8, 192>}, {transform_indices = @transform_1, window_bounds = array<i64: 192, 128>}, {transform_indices = @transform_2, window_bounds = array<i64: 8, 128>}]} {
    %c0 = arith.constant 0 : index
    %c0_0 = arith.constant 0 : index
    %0 = vector.load %arg3[%c0, %c0_0] : memref<8x192xbf16, #tpu.memory_space<vmem>>, vector<8x192xbf16>
    %c0_1 = arith.constant 0 : index
    %c0_2 = arith.constant 0 : index
    %1 = vector.load %arg4[%c0_1, %c0_2] : memref<192x128xbf16, #tpu.memory_space<vmem>>, vector<192x128xbf16>
    %cst = arith.constant dense<0.000000e+00> : vector<8x128xf32>
    %2 = tpu.matmul %0, %1, %cst {dimension_numbers = #tpu.dot_dimension_numbers<[1], [0], [0], [1], [0, 0, 1, 1], [], []>} : vector<8x192xbf16>, vector<192x128xbf16>, vector<8x128xf32> -> vector<8x128xf32>
    %3 = arith.truncf %2 : vector<8x128xf32> to vector<8x128xbf16>
    %c0_3 = arith.constant 0 : index
    %c0_4 = arith.constant 0 : index
    %4 = vector.load %arg5[%c0_3, %c0_4] : memref<8x128xbf16, #tpu.memory_space<vmem>>, vector<8x128xbf16>
    tpu.vector_store %arg5[%c0_3, %c0_4], %3 {strides = array<i32>} : memref<8x128xbf16, #tpu.memory_space<vmem>>, vector<8x128xbf16>,
    return
  }
  func.func @transform_0(%arg0: i32, %arg1: i32, %arg2: i32) -> (i32, i32) {
    %c0_i32 = arith.constant 0 : i32
    return %arg0, %arg2 : i32, i32
  }
  func.func @transform_1(%arg0: i32, %arg1: i32, %arg2: i32) -> (i32, i32) {
    %c0_i32 = arith.constant 0 : i32
    return %arg2, %arg1 : i32, i32
  }
  func.func @transform_2(%arg0: i32, %arg1: i32, %arg2: i32) -> (i32, i32) {
    %c0_i32 = arith.constant 0 : i32
    return %arg0, %arg1 : i32, i32
  }
}

module attributes {stable_mosaic.version = 11 : i64} {
  func.func @_ln_linear_kernel(%arg0: i32, %arg1: i32, %arg2: memref<16x128xbf16, #tpu.memory_space<vmem>>, %arg3: memref<1x128xf32, #tpu.memory_space<vmem>>, %arg4: memref<1x128xf32, #tpu.memory_space<vmem>>, %arg5: memref<128x384xbf16, #tpu.memory_space<vmem>>, %arg6: memref<1x384xf32, #tpu.memory_space<vmem>>, %arg7: memref<16x384xbf16, #tpu.memory_space<vmem>>, %arg8: memref<16x128xbf16, #tpu.memory_space<vmem>>) attributes {dimension_semantics = [#tpu.dimension_semantics<parallel>, #tpu.dimension_semantics<arbitrary>], iteration_bounds = array<i64: 1, 1>, scalar_prefetch = 0 : i64, scratch_operands = 1 : i64, tpu.core_type = #tpu.core_type<tc>, window_params = [{transform_indices = @transform_0, window_bounds = array<i64: 16, 128>}, {pipeline_mode = #tpu.pipeline_mode<synchronous>, transform_indices = @transform_1, window_bounds = array<i64: 1, 128>}, {pipeline_mode = #tpu.pipeline_mode<synchronous>, transform_indices = @transform_2, window_bounds = array<i64: 1, 128>}, {transform_indices = @transform_3, window_bounds = array<i64: 128, 384>}, {transform_indices = @transform_4, window_bounds = array<i64: 1, 384>}, {transform_indices = @transform_5, window_bounds = array<i64: 16, 384>}]} {
    %c0_i32 = arith.constant 0 : i32
    %0 = arith.cmpi eq, %arg1, %c0_i32 : i32
    %1 = arith.extui %0 : i1 to i32
    %c0_i32_0 = arith.constant 0 : i32
    %2 = arith.cmpi ne, %1, %c0_i32_0 : i32
    scf.if %2 {
      %c0_8 = arith.constant 0 : index
      %c0_9 = arith.constant 0 : index
      %11 = vector.load %arg2[%c0_8, %c0_9] : memref<16x128xbf16, #tpu.memory_space<vmem>>, vector<16x128xbf16>
      %12 = arith.extf %11 : vector<16x128xbf16> to vector<16x128xf32>
      %cst_10 = arith.constant dense<0.000000e+00> : vector<16xf32>
      %13 = vector.multi_reduction <add>, %12, %cst_10 [1] : vector<16x128xf32> to vector<16xf32>
      %14 = vector.shape_cast %13 : vector<16xf32> to vector<16x1xf32>
      %cst_11 = arith.constant 1.280000e+02 : f32
      %15 = vector.broadcast %cst_11 : f32 to vector<16x1xf32>
      %16 = arith.divf %14, %15 : vector<16x1xf32>
      %17 = vector.broadcast %16 : vector<16x1xf32> to vector<16x128xf32>
      %18 = arith.subf %12, %17 : vector<16x128xf32>
      %19 = arith.mulf %18, %18 : vector<16x128xf32>
      %cst_12 = arith.constant dense<0.000000e+00> : vector<16xf32>
      %20 = vector.multi_reduction <add>, %19, %cst_12 [1] : vector<16x128xf32> to vector<16xf32>
      %21 = vector.shape_cast %20 : vector<16xf32> to vector<16x1xf32>
      %cst_13 = arith.constant 1.280000e+02 : f32
      %22 = vector.broadcast %cst_13 : f32 to vector<16x1xf32>
      %23 = arith.divf %21, %22 : vector<16x1xf32>
      %cst_14 = arith.constant 9.99999974E-6 : f32
      %24 = vector.broadcast %cst_14 : f32 to vector<16x1xf32>
      %25 = arith.addf %23, %24 : vector<16x1xf32>
      %26 = math.rsqrt %25 : vector<16x1xf32>
      %27 = vector.broadcast %26 : vector<16x1xf32> to vector<16x128xf32>
      %28 = arith.mulf %18, %27 : vector<16x128xf32>
      %c0_15 = arith.constant 0 : index
      %c0_16 = arith.constant 0 : index
      %29 = vector.load %arg3[%c0_15, %c0_16] : memref<1x128xf32, #tpu.memory_space<vmem>>, vector<1x128xf32>
      %30 = vector.broadcast %29 : vector<1x128xf32> to vector<16x128xf32>
      %31 = arith.mulf %28, %30 : vector<16x128xf32>
      %c0_17 = arith.constant 0 : index
      %c0_18 = arith.constant 0 : index
      %32 = vector.load %arg4[%c0_17, %c0_18] : memref<1x128xf32, #tpu.memory_space<vmem>>, vector<1x128xf32>
      %33 = vector.broadcast %32 : vector<1x128xf32> to vector<16x128xf32>
      %34 = arith.addf %31, %33 : vector<16x128xf32>
      %35 = arith.truncf %34 : vector<16x128xf32> to vector<16x128xbf16>
      %c0_19 = arith.constant 0 : index
      %c0_20 = arith.constant 0 : index
      %36 = vector.load %arg8[%c0_19, %c0_20] : memref<16x128xbf16, #tpu.memory_space<vmem>>, vector<16x128xbf16>
      tpu.vector_store %arg8[%c0_19, %c0_20], %35 {strides = array<i32>} : memref<16x128xbf16, #tpu.memory_space<vmem>>, vector<16x128xbf16>,
    } else {
    }
    %c0 = arith.constant 0 : index
    %c0_1 = arith.constant 0 : index
    %3 = vector.load %arg8[%c0, %c0_1] : memref<16x128xbf16, #tpu.memory_space<vmem>>, vector<16x128xbf16>
    %c0_2 = arith.constant 0 : index
    %c0_3 = arith.constant 0 : index
    %4 = vector.load %arg5[%c0_2, %c0_3] : memref<128x384xbf16, #tpu.memory_space<vmem>>, vector<128x384xbf16>
    %cst = arith.constant dense<0.000000e+00> : vector<16x384xf32>
    %5 = tpu.matmul %3, %4, %cst {dimension_numbers = #tpu.dot_dimension_numbers<[1], [0], [0], [1], [0, 0, 1, 1], [], []>} : vector<16x128xbf16>, vector<128x384xbf16>, vector<16x384xf32> -> vector<16x384xf32>
    %c0_4 = arith.constant 0 : index
    %c0_5 = arith.constant 0 : index
    %6 = vector.load %arg6[%c0_4, %c0_5] : memref<1x384xf32, #tpu.memory_space<vmem>>, vector<1x384xf32>
    %7 = vector.broadcast %6 : vector<1x384xf32> to vector<16x384xf32>
    %8 = arith.addf %5, %7 : vector<16x384xf32>
    %9 = arith.truncf %8 : vector<16x384xf32> to vector<16x384xbf16>
    %c0_6 = arith.constant 0 : index
    %c0_7 = arith.constant 0 : index
    %10 = vector.load %arg7[%c0_6, %c0_7] : memref<16x384xbf16, #tpu.memory_space<vmem>>, vector<16x384xbf16>
    tpu.vector_store %arg7[%c0_6, %c0_7], %9 {strides = array<i32>} : memref<16x384xbf16, #tpu.memory_space<vmem>>, vector<16x384xbf16>,
    return
  }
  func.func @transform_0(%arg0: i32, %arg1: i32) -> (i32, i32) {
    %c0_i32 = arith.constant 0 : i32
    %c0_i32_0 = arith.constant 0 : i32
    return %arg0, %c0_i32 : i32, i32
  }
  func.func @transform_1(%arg0: i32, %arg1: i32) -> (i32, i32) {
    %c0_i32 = arith.constant 0 : i32
    %c0_i32_0 = arith.constant 0 : i32
    %c0_i32_1 = arith.constant 0 : i32
    return %c0_i32, %c0_i32_0 : i32, i32
  }
  func.func @transform_2(%arg0: i32, %arg1: i32) -> (i32, i32) {
    %c0_i32 = arith.constant 0 : i32
    %c0_i32_0 = arith.constant 0 : i32
    %c0_i32_1 = arith.constant 0 : i32
    return %c0_i32, %c0_i32_0 : i32, i32
  }
  func.func @transform_3(%arg0: i32, %arg1: i32) -> (i32, i32) {
    %c0_i32 = arith.constant 0 : i32
    %c0_i32_0 = arith.constant 0 : i32
    return %c0_i32, %arg1 : i32, i32
  }
  func.func @transform_4(%arg0: i32, %arg1: i32) -> (i32, i32) {
    %c0_i32 = arith.constant 0 : i32
    %c0_i32_0 = arith.constant 0 : i32
    return %c0_i32, %arg1 : i32, i32
  }
  func.func @transform_5(%arg0: i32, %arg1: i32) -> (i32, i32) {
    %c0_i32 = arith.constant 0 : i32
    return %arg0, %arg1 : i32, i32
  }
}

module attributes {stable_mosaic.version = 11 : i64} {
  func.func @_attn_kernel(%arg0: i32, %arg1: i32, %arg2: memref<1x5x128xbf16, #tpu.memory_space<vmem>>, %arg3: memref<1x5x128xbf16, #tpu.memory_space<vmem>>, %arg4: memref<1x5x128xbf16, #tpu.memory_space<vmem>>, %arg5: memref<1x5x128xbf16, #tpu.memory_space<vmem>>) attributes {dimension_semantics = [#tpu.dimension_semantics<parallel>, #tpu.dimension_semantics<parallel>], iteration_bounds = array<i64: 2, 1>, scalar_prefetch = 0 : i64, scratch_operands = 0 : i64, tpu.core_type = #tpu.core_type<tc>, window_params = [{transform_indices = @transform_0, window_bounds = array<i64: 1, 5, 128>}, {transform_indices = @transform_1, window_bounds = array<i64: 1, 5, 128>}, {transform_indices = @transform_2, window_bounds = array<i64: 1, 5, 128>}, {transform_indices = @transform_3, window_bounds = array<i64: 1, 5, 128>}]} {
    %c0 = arith.constant 0 : index
    %c0_0 = arith.constant 0 : index
    %c0_1 = arith.constant 0 : index
    %0 = vector.load %arg2[%c0, %c0_0, %c0_1] : memref<1x5x128xbf16, #tpu.memory_space<vmem>>, vector<1x5x128xbf16>
    %1 = vector.shape_cast %0 : vector<1x5x128xbf16> to vector<5x128xbf16>
    %c0_2 = arith.constant 0 : index
    %c0_3 = arith.constant 0 : index
    %c0_4 = arith.constant 0 : index
    %2 = vector.load %arg3[%c0_2, %c0_3, %c0_4] : memref<1x5x128xbf16, #tpu.memory_space<vmem>>, vector<1x5x128xbf16>
    %3 = vector.shape_cast %2 : vector<1x5x128xbf16> to vector<5x128xbf16>
    %c0_5 = arith.constant 0 : index
    %c0_6 = arith.constant 0 : index
    %c0_7 = arith.constant 0 : index
    %4 = vector.load %arg4[%c0_5, %c0_6, %c0_7] : memref<1x5x128xbf16, #tpu.memory_space<vmem>>, vector<1x5x128xbf16>
    %5 = vector.shape_cast %4 : vector<1x5x128xbf16> to vector<5x128xbf16>
    %6 = vector.extract_strided_slice %1 {offsets = [0, 0], sizes = [5, 64], strides = [1, 1]} : vector<5x128xbf16> to vector<5x64xbf16>
    %7 = arith.extf %6 : vector<5x64xbf16> to vector<5x64xf32>
    %cst = arith.constant 1.250000e-01 : f32
    %8 = vector.broadcast %cst : f32 to vector<5x64xf32>
    %9 = arith.mulf %7, %8 : vector<5x64xf32>
    %10 = arith.truncf %9 : vector<5x64xf32> to vector<5x64xbf16>
    %11 = vector.extract_strided_slice %3 {offsets = [0, 0], sizes = [5, 64], strides = [1, 1]} : vector<5x128xbf16> to vector<5x64xbf16>
    %12 = vector.extract_strided_slice %5 {offsets = [0, 0], sizes = [5, 64], strides = [1, 1]} : vector<5x128xbf16> to vector<5x64xbf16>
    %cst_8 = arith.constant dense<0.000000e+00> : vector<5x5xf32>
    %13 = tpu.matmul %10, %11, %cst_8 {dimension_numbers = #tpu.dot_dimension_numbers<[1], [1], [0], [0], [0, 0, 1, 0], [], []>} : vector<5x64xbf16>, vector<5x64xbf16>, vector<5x5xf32> -> vector<5x5xf32>
    %cst_9 = arith.constant dense<0xFF800000> : vector<5xf32>
    %14 = vector.multi_reduction <maximumf>, %13, %cst_9 [1] : vector<5x5xf32> to vector<5xf32>
    %15 = vector.shape_cast %14 : vector<5xf32> to vector<5x1xf32>
    %16 = vector.broadcast %15 : vector<5x1xf32> to vector<5x5xf32>
    %17 = arith.subf %13, %16 : vector<5x5xf32>
    %18 = math.exp %17 : vector<5x5xf32>
    %cst_10 = arith.constant dense<0.000000e+00> : vector<5xf32>
    %19 = vector.multi_reduction <add>, %18, %cst_10 [1] : vector<5x5xf32> to vector<5xf32>
    %20 = vector.shape_cast %19 : vector<5xf32> to vector<5x1xf32>
    %21 = tpu.reciprocal %20 {approx = true} : vector<5x1xf32> -> vector<5x1xf32>
    %22 = vector.broadcast %21 : vector<5x1xf32> to vector<5x5xf32>
    %23 = arith.mulf %18, %22 : vector<5x5xf32>
    %24 = arith.truncf %23 : vector<5x5xf32> to vector<5x5xbf16>
    %cst_11 = arith.constant dense<0.000000e+00> : vector<5x64xf32>
    %25 = tpu.matmul %24, %12, %cst_11 {dimension_numbers = #tpu.dot_dimension_numbers<[1], [0], [0], [1], [0, 0, 1, 1], [], []>} : vector<5x5xbf16>, vector<5x64xbf16>, vector<5x64xf32> -> vector<5x64xf32>
    %26 = vector.extract_strided_slice %1 {offsets = [0, 64], sizes = [5, 64], strides = [1, 1]} : vector<5x128xbf16> to vector<5x64xbf16>
    %27 = arith.extf %26 : vector<5x64xbf16> to vector<5x64xf32>
    %cst_12 = arith.constant 1.250000e-01 : f32
    %28 = vector.broadcast %cst_12 : f32 to vector<5x64xf32>
    %29 = arith.mulf %27, %28 : vector<5x64xf32>
    %30 = arith.truncf %29 : vector<5x64xf32> to vector<5x64xbf16>
    %31 = vector.extract_strided_slice %3 {offsets = [0, 64], sizes = [5, 64], strides = [1, 1]} : vector<5x128xbf16> to vector<5x64xbf16>
    %32 = vector.extract_strided_slice %5 {offsets = [0, 64], sizes = [5, 64], strides = [1, 1]} : vector<5x128xbf16> to vector<5x64xbf16>
    %cst_13 = arith.constant dense<0.000000e+00> : vector<5x5xf32>
    %33 = tpu.matmul %30, %31, %cst_13 {dimension_numbers = #tpu.dot_dimension_numbers<[1], [1], [0], [0], [0, 0, 1, 0], [], []>} : vector<5x64xbf16>, vector<5x64xbf16>, vector<5x5xf32> -> vector<5x5xf32>
    %cst_14 = arith.constant dense<0xFF800000> : vector<5xf32>
    %34 = vector.multi_reduction <maximumf>, %33, %cst_14 [1] : vector<5x5xf32> to vector<5xf32>
    %35 = vector.shape_cast %34 : vector<5xf32> to vector<5x1xf32>
    %36 = vector.broadcast %35 : vector<5x1xf32> to vector<5x5xf32>
    %37 = arith.subf %33, %36 : vector<5x5xf32>
    %38 = math.exp %37 : vector<5x5xf32>
    %cst_15 = arith.constant dense<0.000000e+00> : vector<5xf32>
    %39 = vector.multi_reduction <add>, %38, %cst_15 [1] : vector<5x5xf32> to vector<5xf32>
    %40 = vector.shape_cast %39 : vector<5xf32> to vector<5x1xf32>
    %41 = tpu.reciprocal %40 {approx = true} : vector<5x1xf32> -> vector<5x1xf32>
    %42 = vector.broadcast %41 : vector<5x1xf32> to vector<5x5xf32>
    %43 = arith.mulf %38, %42 : vector<5x5xf32>
    %44 = arith.truncf %43 : vector<5x5xf32> to vector<5x5xbf16>
    %cst_16 = arith.constant dense<0.000000e+00> : vector<5x64xf32>
    %45 = tpu.matmul %44, %32, %cst_16 {dimension_numbers = #tpu.dot_dimension_numbers<[1], [0], [0], [1], [0, 0, 1, 1], [], []>} : vector<5x5xbf16>, vector<5x64xbf16>, vector<5x64xf32> -> vector<5x64xf32>
    %46 = tpu.concatenate %25, %45 in 1 : vector<5x64xf32>, vector<5x64xf32> -> vector<5x128xf32>
    %47 = arith.truncf %46 : vector<5x128xf32> to vector<5x128xbf16>
    %c0_17 = arith.constant 0 : index
    %c0_18 = arith.constant 0 : index
    %c0_19 = arith.constant 0 : index
    %48 = vector.load %arg5[%c0_17, %c0_18, %c0_19] : memref<1x5x128xbf16, #tpu.memory_space<vmem>>, vector<1x5x128xbf16>
    %49 = vector.shape_cast %48 : vector<1x5x128xbf16> to vector<5x128xbf16>
    %50 = vector.shape_cast %47 : vector<5x128xbf16> to vector<1x5x128xbf16>
    tpu.vector_store %arg5[%c0_17, %c0_18, %c0_19], %50 {strides = array<i32>} : memref<1x5x128xbf16, #tpu.memory_space<vmem>>, vector<1x5x128xbf16>,
    return
  }
  func.func @transform_0(%arg0: i32, %arg1: i32) -> (i32, i32, i32) {
    %c0_i32 = arith.constant 0 : i32
    %c0_i32_0 = arith.constant 0 : i32
    return %arg0, %c0_i32, %arg1 : i32, i32, i32
  }
  func.func @transform_1(%arg0: i32, %arg1: i32) -> (i32, i32, i32) {
    %c1_i32 = arith.constant 1 : i32
    %0 = arith.addi %arg1, %c1_i32 : i32
    %c0_i32 = arith.constant 0 : i32
    %c0_i32_0 = arith.constant 0 : i32
    return %arg0, %c0_i32, %0 : i32, i32, i32
  }
  func.func @transform_2(%arg0: i32, %arg1: i32) -> (i32, i32, i32) {
    %c2_i32 = arith.constant 2 : i32
    %0 = arith.addi %arg1, %c2_i32 : i32
    %c0_i32 = arith.constant 0 : i32
    %c0_i32_0 = arith.constant 0 : i32
    return %arg0, %c0_i32, %0 : i32, i32, i32
  }
  func.func @transform_3(%arg0: i32, %arg1: i32) -> (i32, i32, i32) {
    %c0_i32 = arith.constant 0 : i32
    %c0_i32_0 = arith.constant 0 : i32
    return %arg0, %c0_i32, %arg1 : i32, i32, i32
  }
}

module attributes {stable_mosaic.version = 11 : i64} {
  func.func @_linear_kernel(%arg0: i32, %arg1: i32, %arg2: i32, %arg3: memref<16x128xbf16, #tpu.memory_space<vmem>>, %arg4: memref<128x128xbf16, #tpu.memory_space<vmem>>, %arg5: memref<1x128xf32, #tpu.memory_space<vmem>>, %arg6: memref<16x128xbf16, #tpu.memory_space<vmem>>, %arg7: memref<16x128xbf16, #tpu.memory_space<vmem>>) attributes {dimension_semantics = [#tpu.dimension_semantics<parallel>, #tpu.dimension_semantics<parallel>, #tpu.dimension_semantics<arbitrary>], iteration_bounds = array<i64: 1, 1, 1>, scalar_prefetch = 0 : i64, scratch_operands = 0 : i64, tpu.core_type = #tpu.core_type<tc>, window_params = [{transform_indices = @transform_0, window_bounds = array<i64: 16, 128>}, {transform_indices = @transform_1, window_bounds = array<i64: 128, 128>}, {transform_indices = @transform_2, window_bounds = array<i64: 1, 128>}, {transform_indices = @transform_3, window_bounds = array<i64: 16, 128>}, {transform_indices = @transform_4, window_bounds = array<i64: 16, 128>}]} {
    %c0 = arith.constant 0 : index
    %c0_0 = arith.constant 0 : index
    %0 = vector.load %arg3[%c0, %c0_0] : memref<16x128xbf16, #tpu.memory_space<vmem>>, vector<16x128xbf16>
    %c0_1 = arith.constant 0 : index
    %c0_2 = arith.constant 0 : index
    %1 = vector.load %arg4[%c0_1, %c0_2] : memref<128x128xbf16, #tpu.memory_space<vmem>>, vector<128x128xbf16>
    %cst = arith.constant dense<0.000000e+00> : vector<16x128xf32>
    %2 = tpu.matmul %0, %1, %cst {dimension_numbers = #tpu.dot_dimension_numbers<[1], [0], [0], [1], [0, 0, 1, 1], [], []>} : vector<16x128xbf16>, vector<128x128xbf16>, vector<16x128xf32> -> vector<16x128xf32>
    %c0_3 = arith.constant 0 : index
    %c0_4 = arith.constant 0 : index
    %3 = vector.load %arg5[%c0_3, %c0_4] : memref<1x128xf32, #tpu.memory_space<vmem>>, vector<1x128xf32>
    %4 = vector.broadcast %3 : vector<1x128xf32> to vector<16x128xf32>
    %5 = arith.addf %2, %4 : vector<16x128xf32>
    %c0_5 = arith.constant 0 : index
    %c0_6 = arith.constant 0 : index
    %6 = vector.load %arg6[%c0_5, %c0_6] : memref<16x128xbf16, #tpu.memory_space<vmem>>, vector<16x128xbf16>
    %7 = arith.extf %6 : vector<16x128xbf16> to vector<16x128xf32>
    %8 = arith.addf %5, %7 : vector<16x128xf32>
    %9 = arith.truncf %8 : vector<16x128xf32> to vector<16x128xbf16>
    %c0_7 = arith.constant 0 : index
    %c0_8 = arith.constant 0 : index
    %10 = vector.load %arg7[%c0_7, %c0_8] : memref<16x128xbf16, #tpu.memory_space<vmem>>, vector<16x128xbf16>
    tpu.vector_store %arg7[%c0_7, %c0_8], %9 {strides = array<i32>} : memref<16x128xbf16, #tpu.memory_space<vmem>>, vector<16x128xbf16>,
    return
  }
  func.func @transform_0(%arg0: i32, %arg1: i32, %arg2: i32) -> (i32, i32) {
    %c0_i32 = arith.constant 0 : i32
    return %arg0, %arg2 : i32, i32
  }
  func.func @transform_1(%arg0: i32, %arg1: i32, %arg2: i32) -> (i32, i32) {
    %c0_i32 = arith.constant 0 : i32
    return %arg2, %arg1 : i32, i32
  }
  func.func @transform_2(%arg0: i32, %arg1: i32, %arg2: i32) -> (i32, i32) {
    %c0_i32 = arith.constant 0 : i32
    %c0_i32_0 = arith.constant 0 : i32
    return %c0_i32, %arg1 : i32, i32
  }
  func.func @transform_3(%arg0: i32, %arg1: i32, %arg2: i32) -> (i32, i32) {
    %c0_i32 = arith.constant 0 : i32
    return %arg0, %arg1 : i32, i32
  }
  func.func @transform_4(%arg0: i32, %arg1: i32, %arg2: i32) -> (i32, i32) {
    %c0_i32 = arith.constant 0 : i32
    return %arg0, %arg1 : i32, i32
  }
}

module attributes {stable_mosaic.version = 11 : i64} {
  func.func @_ln_linear_kernel(%arg0: i32, %arg1: i32, %arg2: memref<16x128xbf16, #tpu.memory_space<vmem>>, %arg3: memref<1x128xf32, #tpu.memory_space<vmem>>, %arg4: memref<1x128xf32, #tpu.memory_space<vmem>>, %arg5: memref<128x512xbf16, #tpu.memory_space<vmem>>, %arg6: memref<1x512xf32, #tpu.memory_space<vmem>>, %arg7: memref<16x512xbf16, #tpu.memory_space<vmem>>, %arg8: memref<16x128xbf16, #tpu.memory_space<vmem>>) attributes {dimension_semantics = [#tpu.dimension_semantics<parallel>, #tpu.dimension_semantics<arbitrary>], iteration_bounds = array<i64: 1, 1>, scalar_prefetch = 0 : i64, scratch_operands = 1 : i64, tpu.core_type = #tpu.core_type<tc>, window_params = [{transform_indices = @transform_0, window_bounds = array<i64: 16, 128>}, {pipeline_mode = #tpu.pipeline_mode<synchronous>, transform_indices = @transform_1, window_bounds = array<i64: 1, 128>}, {pipeline_mode = #tpu.pipeline_mode<synchronous>, transform_indices = @transform_2, window_bounds = array<i64: 1, 128>}, {transform_indices = @transform_3, window_bounds = array<i64: 128, 512>}, {transform_indices = @transform_4, window_bounds = array<i64: 1, 512>}, {transform_indices = @transform_5, window_bounds = array<i64: 16, 512>}]} {
    %c0_i32 = arith.constant 0 : i32
    %0 = arith.cmpi eq, %arg1, %c0_i32 : i32
    %1 = arith.extui %0 : i1 to i32
    %c0_i32_0 = arith.constant 0 : i32
    %2 = arith.cmpi ne, %1, %c0_i32_0 : i32
    scf.if %2 {
      %c0_10 = arith.constant 0 : index
      %c0_11 = arith.constant 0 : index
      %19 = vector.load %arg2[%c0_10, %c0_11] : memref<16x128xbf16, #tpu.memory_space<vmem>>, vector<16x128xbf16>
      %20 = arith.extf %19 : vector<16x128xbf16> to vector<16x128xf32>
      %cst_12 = arith.constant dense<0.000000e+00> : vector<16xf32>
      %21 = vector.multi_reduction <add>, %20, %cst_12 [1] : vector<16x128xf32> to vector<16xf32>
      %22 = vector.shape_cast %21 : vector<16xf32> to vector<16x1xf32>
      %cst_13 = arith.constant 1.280000e+02 : f32
      %23 = vector.broadcast %cst_13 : f32 to vector<16x1xf32>
      %24 = arith.divf %22, %23 : vector<16x1xf32>
      %25 = vector.broadcast %24 : vector<16x1xf32> to vector<16x128xf32>
      %26 = arith.subf %20, %25 : vector<16x128xf32>
      %27 = arith.mulf %26, %26 : vector<16x128xf32>
      %cst_14 = arith.constant dense<0.000000e+00> : vector<16xf32>
      %28 = vector.multi_reduction <add>, %27, %cst_14 [1] : vector<16x128xf32> to vector<16xf32>
      %29 = vector.shape_cast %28 : vector<16xf32> to vector<16x1xf32>
      %cst_15 = arith.constant 1.280000e+02 : f32
      %30 = vector.broadcast %cst_15 : f32 to vector<16x1xf32>
      %31 = arith.divf %29, %30 : vector<16x1xf32>
      %cst_16 = arith.constant 9.99999974E-6 : f32
      %32 = vector.broadcast %cst_16 : f32 to vector<16x1xf32>
      %33 = arith.addf %31, %32 : vector<16x1xf32>
      %34 = math.rsqrt %33 : vector<16x1xf32>
      %35 = vector.broadcast %34 : vector<16x1xf32> to vector<16x128xf32>
      %36 = arith.mulf %26, %35 : vector<16x128xf32>
      %c0_17 = arith.constant 0 : index
      %c0_18 = arith.constant 0 : index
      %37 = vector.load %arg3[%c0_17, %c0_18] : memref<1x128xf32, #tpu.memory_space<vmem>>, vector<1x128xf32>
      %38 = vector.broadcast %37 : vector<1x128xf32> to vector<16x128xf32>
      %39 = arith.mulf %36, %38 : vector<16x128xf32>
      %c0_19 = arith.constant 0 : index
      %c0_20 = arith.constant 0 : index
      %40 = vector.load %arg4[%c0_19, %c0_20] : memref<1x128xf32, #tpu.memory_space<vmem>>, vector<1x128xf32>
      %41 = vector.broadcast %40 : vector<1x128xf32> to vector<16x128xf32>
      %42 = arith.addf %39, %41 : vector<16x128xf32>
      %43 = arith.truncf %42 : vector<16x128xf32> to vector<16x128xbf16>
      %c0_21 = arith.constant 0 : index
      %c0_22 = arith.constant 0 : index
      %44 = vector.load %arg8[%c0_21, %c0_22] : memref<16x128xbf16, #tpu.memory_space<vmem>>, vector<16x128xbf16>
      tpu.vector_store %arg8[%c0_21, %c0_22], %43 {strides = array<i32>} : memref<16x128xbf16, #tpu.memory_space<vmem>>, vector<16x128xbf16>,
    } else {
    }
    %c0 = arith.constant 0 : index
    %c0_1 = arith.constant 0 : index
    %3 = vector.load %arg8[%c0, %c0_1] : memref<16x128xbf16, #tpu.memory_space<vmem>>, vector<16x128xbf16>
    %c0_2 = arith.constant 0 : index
    %c0_3 = arith.constant 0 : index
    %4 = vector.load %arg5[%c0_2, %c0_3] : memref<128x512xbf16, #tpu.memory_space<vmem>>, vector<128x512xbf16>
    %cst = arith.constant dense<0.000000e+00> : vector<16x512xf32>
    %5 = tpu.matmul %3, %4, %cst {dimension_numbers = #tpu.dot_dimension_numbers<[1], [0], [0], [1], [0, 0, 1, 1], [], []>} : vector<16x128xbf16>, vector<128x512xbf16>, vector<16x512xf32> -> vector<16x512xf32>
    %c0_4 = arith.constant 0 : index
    %c0_5 = arith.constant 0 : index
    %6 = vector.load %arg6[%c0_4, %c0_5] : memref<1x512xf32, #tpu.memory_space<vmem>>, vector<1x512xf32>
    %7 = vector.broadcast %6 : vector<1x512xf32> to vector<16x512xf32>
    %8 = arith.addf %5, %7 : vector<16x512xf32>
    %cst_6 = arith.constant 1.702000e+00 : f32
    %9 = vector.broadcast %cst_6 : f32 to vector<16x512xf32>
    %10 = arith.mulf %9, %8 : vector<16x512xf32>
    %11 = arith.negf %10 : vector<16x512xf32>
    %12 = math.exp %11 : vector<16x512xf32>
    %cst_7 = arith.constant 1.000000e+00 : f32
    %13 = vector.broadcast %cst_7 : f32 to vector<16x512xf32>
    %14 = arith.addf %13, %12 : vector<16x512xf32>
    %15 = arith.divf %13, %14 : vector<16x512xf32>
    %16 = arith.mulf %8, %15 : vector<16x512xf32>
    %17 = arith.truncf %16 : vector<16x512xf32> to vector<16x512xbf16>
    %c0_8 = arith.constant 0 : index
    %c0_9 = arith.constant 0 : index
    %18 = vector.load %arg7[%c0_8, %c0_9] : memref<16x512xbf16, #tpu.memory_space<vmem>>, vector<16x512xbf16>
    tpu.vector_store %arg7[%c0_8, %c0_9], %17 {strides = array<i32>} : memref<16x512xbf16, #tpu.memory_space<vmem>>, vector<16x512xbf16>,
    return
  }
  func.func @transform_0(%arg0: i32, %arg1: i32) -> (i32, i32) {
    %c0_i32 = arith.constant 0 : i32
    %c0_i32_0 = arith.constant 0 : i32
    return %arg0, %c0_i32 : i32, i32
  }
  func.func @transform_1(%arg0: i32, %arg1: i32) -> (i32, i32) {
    %c0_i32 = arith.constant 0 : i32
    %c0_i32_0 = arith.constant 0 : i32
    %c0_i32_1 = arith.constant 0 : i32
    return %c0_i32, %c0_i32_0 : i32, i32
  }
  func.func @transform_2(%arg0: i32, %arg1: i32) -> (i32, i32) {
    %c0_i32 = arith.constant 0 : i32
    %c0_i32_0 = arith.constant 0 : i32
    %c0_i32_1 = arith.constant 0 : i32
    return %c0_i32, %c0_i32_0 : i32, i32
  }
  func.func @transform_3(%arg0: i32, %arg1: i32) -> (i32, i32) {
    %c0_i32 = arith.constant 0 : i32
    %c0_i32_0 = arith.constant 0 : i32
    return %c0_i32, %arg1 : i32, i32
  }
  func.func @transform_4(%arg0: i32, %arg1: i32) -> (i32, i32) {
    %c0_i32 = arith.constant 0 : i32
    %c0_i32_0 = arith.constant 0 : i32
    return %c0_i32, %arg1 : i32, i32
  }
  func.func @transform_5(%arg0: i32, %arg1: i32) -> (i32, i32) {
    %c0_i32 = arith.constant 0 : i32
    return %arg0, %arg1 : i32, i32
  }
}

module attributes {stable_mosaic.version = 11 : i64} {
  func.func @_linear_kernel(%arg0: i32, %arg1: i32, %arg2: i32, %arg3: memref<16x512xbf16, #tpu.memory_space<vmem>>, %arg4: memref<512x128xbf16, #tpu.memory_space<vmem>>, %arg5: memref<1x128xf32, #tpu.memory_space<vmem>>, %arg6: memref<16x128xbf16, #tpu.memory_space<vmem>>, %arg7: memref<16x128xbf16, #tpu.memory_space<vmem>>) attributes {dimension_semantics = [#tpu.dimension_semantics<parallel>, #tpu.dimension_semantics<parallel>, #tpu.dimension_semantics<arbitrary>], iteration_bounds = array<i64: 1, 1, 1>, scalar_prefetch = 0 : i64, scratch_operands = 0 : i64, tpu.core_type = #tpu.core_type<tc>, window_params = [{transform_indices = @transform_0, window_bounds = array<i64: 16, 512>}, {transform_indices = @transform_1, window_bounds = array<i64: 512, 128>}, {transform_indices = @transform_2, window_bounds = array<i64: 1, 128>}, {transform_indices = @transform_3, window_bounds = array<i64: 16, 128>}, {transform_indices = @transform_4, window_bounds = array<i64: 16, 128>}]} {
    %c0 = arith.constant 0 : index
    %c0_0 = arith.constant 0 : index
    %0 = vector.load %arg3[%c0, %c0_0] : memref<16x512xbf16, #tpu.memory_space<vmem>>, vector<16x512xbf16>
    %c0_1 = arith.constant 0 : index
    %c0_2 = arith.constant 0 : index
    %1 = vector.load %arg4[%c0_1, %c0_2] : memref<512x128xbf16, #tpu.memory_space<vmem>>, vector<512x128xbf16>
    %cst = arith.constant dense<0.000000e+00> : vector<16x128xf32>
    %2 = tpu.matmul %0, %1, %cst {dimension_numbers = #tpu.dot_dimension_numbers<[1], [0], [0], [1], [0, 0, 1, 1], [], []>} : vector<16x512xbf16>, vector<512x128xbf16>, vector<16x128xf32> -> vector<16x128xf32>
    %c0_3 = arith.constant 0 : index
    %c0_4 = arith.constant 0 : index
    %3 = vector.load %arg5[%c0_3, %c0_4] : memref<1x128xf32, #tpu.memory_space<vmem>>, vector<1x128xf32>
    %4 = vector.broadcast %3 : vector<1x128xf32> to vector<16x128xf32>
    %5 = arith.addf %2, %4 : vector<16x128xf32>
    %c0_5 = arith.constant 0 : index
    %c0_6 = arith.constant 0 : index
    %6 = vector.load %arg6[%c0_5, %c0_6] : memref<16x128xbf16, #tpu.memory_space<vmem>>, vector<16x128xbf16>
    %7 = arith.extf %6 : vector<16x128xbf16> to vector<16x128xf32>
    %8 = arith.addf %5, %7 : vector<16x128xf32>
    %9 = arith.truncf %8 : vector<16x128xf32> to vector<16x128xbf16>
    %c0_7 = arith.constant 0 : index
    %c0_8 = arith.constant 0 : index
    %10 = vector.load %arg7[%c0_7, %c0_8] : memref<16x128xbf16, #tpu.memory_space<vmem>>, vector<16x128xbf16>
    tpu.vector_store %arg7[%c0_7, %c0_8], %9 {strides = array<i32>} : memref<16x128xbf16, #tpu.memory_space<vmem>>, vector<16x128xbf16>,
    return
  }
  func.func @transform_0(%arg0: i32, %arg1: i32, %arg2: i32) -> (i32, i32) {
    %c0_i32 = arith.constant 0 : i32
    return %arg0, %arg2 : i32, i32
  }
  func.func @transform_1(%arg0: i32, %arg1: i32, %arg2: i32) -> (i32, i32) {
    %c0_i32 = arith.constant 0 : i32
    return %arg2, %arg1 : i32, i32
  }
  func.func @transform_2(%arg0: i32, %arg1: i32, %arg2: i32) -> (i32, i32) {
    %c0_i32 = arith.constant 0 : i32
    %c0_i32_0 = arith.constant 0 : i32
    return %c0_i32, %arg1 : i32, i32
  }
  func.func @transform_3(%arg0: i32, %arg1: i32, %arg2: i32) -> (i32, i32) {
    %c0_i32 = arith.constant 0 : i32
    return %arg0, %arg1 : i32, i32
  }
  func.func @transform_4(%arg0: i32, %arg1: i32, %arg2: i32) -> (i32, i32) {
    %c0_i32 = arith.constant 0 : i32
    return %arg0, %arg1 : i32, i32
  }
}

module attributes {stable_mosaic.version = 11 : i64} {
  func.func @_clip_logits_kernel(%arg0: memref<2x128xbf16, #tpu.memory_space<vmem>>, %arg1: memref<8x128xbf16, #tpu.memory_space<vmem>>, %arg2: memref<1x1xf32, #tpu.memory_space<smem>>, %arg3: memref<2x8xf32, #tpu.memory_space<vmem>>) attributes {dimension_semantics = [], scalar_prefetch = 0 : i64, scratch_operands = 0 : i64, tpu.core_type = #tpu.core_type<tc>} {
    %c0 = arith.constant 0 : index
    %c0_0 = arith.constant 0 : index
    %0 = vector.load %arg0[%c0, %c0_0] : memref<2x128xbf16, #tpu.memory_space<vmem>>, vector<2x128xbf16>
    %1 = arith.extf %0 : vector<2x128xbf16> to vector<2x128xf32>
    %c0_1 = arith.constant 0 : index
    %c0_2 = arith.constant 0 : index
    %2 = vector.load %arg1[%c0_1, %c0_2] : memref<8x128xbf16, #tpu.memory_space<vmem>>, vector<8x128xbf16>
    %3 = arith.extf %2 : vector<8x128xbf16> to vector<8x128xf32>
    %4 = arith.mulf %1, %1 : vector<2x128xf32>
    %cst = arith.constant dense<0.000000e+00> : vector<2xf32>
    %5 = vector.multi_reduction <add>, %4, %cst [1] : vector<2x128xf32> to vector<2xf32>
    %6 = vector.shape_cast %5 : vector<2xf32> to vector<2x1xf32>
    %7 = math.rsqrt %6 : vector<2x1xf32>
    %8 = vector.broadcast %7 : vector<2x1xf32> to vector<2x128xf32>
    %9 = arith.mulf %1, %8 : vector<2x128xf32>
    %10 = arith.mulf %3, %3 : vector<8x128xf32>
    %cst_3 = arith.constant dense<0.000000e+00> : vector<8xf32>
    %11 = vector.multi_reduction <add>, %10, %cst_3 [1] : vector<8x128xf32> to vector<8xf32>
    %12 = vector.shape_cast %11 : vector<8xf32> to vector<8x1xf32>
    %13 = math.rsqrt %12 : vector<8x1xf32>
    %14 = vector.broadcast %13 : vector<8x1xf32> to vector<8x128xf32>
    %15 = arith.mulf %3, %14 : vector<8x128xf32>
    %cst_4 = arith.constant dense<0.000000e+00> : vector<2x8xf32>
    %16 = tpu.matmul %9, %15, %cst_4 {dimension_numbers = #tpu.dot_dimension_numbers<[1], [1], [0], [0], [0, 0, 1, 0], [], []>} : vector<2x128xf32>, vector<8x128xf32>, vector<2x8xf32> -> vector<2x8xf32>
    %c0_5 = arith.constant 0 : index
    %c0_6 = arith.constant 0 : index
    %17 = memref.load %arg2[%c0_5, %c0_6] : memref<1x1xf32, #tpu.memory_space<smem>>
    %18 = vector.broadcast %17 : f32 to vector<1x1xf32>
    %19 = math.exp %18 : vector<1x1xf32>
    %20 = vector.broadcast %19 : vector<1x1xf32> to vector<2x8xf32>
    %21 = arith.mulf %16, %20 : vector<2x8xf32>
    %c0_7 = arith.constant 0 : index
    %c0_8 = arith.constant 0 : index
    %22 = vector.load %arg3[%c0_7, %c0_8] : memref<2x8xf32, #tpu.memory_space<vmem>>, vector<2x8xf32>
    tpu.vector_store %arg3[%c0_7, %c0_8], %21 {strides = array<i32>} : memref<2x8xf32, #tpu.memory_space<vmem>>, vector<2x8xf32>,
    return
  }
}

</mosaic_0001>

<llo_original>
// kernel: coop_forward.40
$region0: #{coop_forward.40}
  #allocation0 [shape = 'u32[]', space=smem, size = 0x4, offset = 0x4, fixed_abs, tag = 'smem constant byte address 0x4 - core index']
  #allocation1 [shape = 'u32[144,128]{1,0:T(1,128)}', space=vmem, size = 0x12000, scoped, tag = 'internal scratch']
  %s0 = inlined_call_operand.vmem [shape: bf16[128,128], index: 0, kind: input, shape index: {}]
  %s1 = inlined_call_operand.vmem [shape: bf16[128,128], index: 1, kind: input, shape index: {}]
  %s2 = inlined_call_operand.vmem [shape: f32[1,128], index: 2, kind: input, shape index: {}]
  %s3 = inlined_call_operand.vmem [shape: bf16[128,128], index: 3, kind: input, shape index: {}]
  %s4 = inlined_call_operand.vmem [shape: bf16[128,128], index: 4, kind: output, shape index: {}]
  %s5 = sld [smem:[#allocation0]]
  $region26: #{coop_forward.40} parent=0
    _
  %s7 = ssub.s32 1, %s5
  %s8 = scalar_select 0, %s7, %s5
  // Predicated region
  $region2: #{coop_forward.40} parent=0 // pred_check
    _
  $region3: #{coop_forward.40} parent=0 // pred_check_branch
    %10 = sbr.rel (0) target = $region5
  $region4: #{coop_forward.40} parent=0 // pred_region
    _
  $region5: #{coop_forward.40} parent=0 // pred_fallthru
    _
  // Predicated region
  $region6: #{coop_forward.40} parent=0 // pred_check
    _
  $region7: #{coop_forward.40} parent=0 // pred_check_branch
    %12 = sbr.rel (0) target = $region9
  $region8: #{coop_forward.40} parent=0 // pred_region
    _
  $region9: #{coop_forward.40} parent=0 // pred_fallthru
    _
  // Predicated region
  $region10: #{coop_forward.40} parent=0 // pred_check
    _
  $region11: #{coop_forward.40} parent=0 // pred_check_branch
    %14 = sbr.rel (0) target = $region13
  $region12: #{coop_forward.40} parent=0 // pred_region
    _
  $region13: #{coop_forward.40} parent=0 // pred_fallthru
    _
  // Predicated region
  $region14: #{coop_forward.40} parent=0 // pred_check
    _
  $region15: #{coop_forward.40} parent=0 // pred_check_branch
    %16 = sbr.rel (0) target = $region17
  $region16: #{coop_forward.40} parent=0 // pred_region
    _
  $region17: #{coop_forward.40} parent=0 // pred_fallthru
    _
  %v18 = vld [vmem:[%s0] sm:$0xf]
  %v19 = vld [vmem:[%s0 + $0x4] sm:$0xf]
  %v20 = vld [vmem:[%s0 + $0x8] sm:$0xf]
  %v21 = vld [vmem:[%s0 + $0xc] sm:$0xf]
  %v22 = vld [vmem:[%s0 + $0x10] sm:$0xf]
  %v23 = vld [vmem:[%s0 + $0x14] sm:$0xf]
  %v24 = vld [vmem:[%s0 + $0x18] sm:$0xf]
  %v25 = vld [vmem:[%s0 + $0x1c] sm:$0xf]
  %v26 = vld [vmem:[%s0 + $0x20] sm:$0xf]
  %v27 = vld [vmem:[%s0 + $0x24] sm:$0xf]
  %v28 = vld [vmem:[%s0 + $0x28] sm:$0xf]
  %v29 = vld [vmem:[%s0 + $0x2c] sm:$0xf]
  %v30 = vld [vmem:[%s0 + $0x30] sm:$0xf]
  %v31 = vld [vmem:[%s0 + $0x34] sm:$0xf]
  %v32 = vld [vmem:[%s0 + $0x38] sm:$0xf]
  %v33 = vld [vmem:[%s0 + $0x3c] sm:$0xf]
  %v34 = vld [vmem:[%s1] sm:$0xf]
  %v35 = vld [vmem:[%s1 + $0x4] sm:$0xf]
  %v36 = vld [vmem:[%s1 + $0x8] sm:$0xf]
  %v37 = vld [vmem:[%s1 + $0xc] sm:$0xf]
  %v38 = vld [vmem:[%s1 + $0x10] sm:$0xf]
  %v39 = vld [vmem:[%s1 + $0x14] sm:$0xf]
  %v40 = vld [vmem:[%s1 + $0x18] sm:$0xf]
  %v41 = vld [vmem:[%s1 + $0x1c] sm:$0xf]
  %v42 = vld [vmem:[%s1 + $0x20] sm:$0xf]
  %v43 = vld [vmem:[%s1 + $0x24] sm:$0xf]
  %v44 = vld [vmem:[%s1 + $0x28] sm:$0xf]
  %v45 = vld [vmem:[%s1 + $0x2c] sm:$0xf]
  %v46 = vld [vmem:[%s1 + $0x30] sm:$0xf]
  %v47 = vld [vmem:[%s1 + $0x34] sm:$0xf]
  %v48 = vld [vmem:[%s1 + $0x38] sm:$0xf]
  %v49 = vld [vmem:[%s1 + $0x3c] sm:$0xf]
  %v50 = vld [vmem:[%s2] sm:$0x1]
  %v52 = vlaneseq
  %v53 = vshrl.u32 %v52, 7
  %v54 = vsub.s32 0, %v53
  %v55 = vrot.slane %v50, %v54
  %v73 = vunpack.c.l.b16 %v18
  %v74 = vunpack.c.l.b16 %v19
  %v75 = vunpack.c.l.b16 %v20
  %v76 = vunpack.c.l.b16 %v21
  %v77 = vunpack.c.l.b16 %v22
  %v78 = vunpack.c.l.b16 %v23
  %v79 = vunpack.c.l.b16 %v24
  %v80 = vunpack.c.l.b16 %v25
  %v81 = vunpack.c.l.b16 %v26
  %v82 = vunpack.c.l.b16 %v27
  %v83 = vunpack.c.l.b16 %v28
  %v84 = vunpack.c.l.b16 %v29
  %v85 = vunpack.c.l.b16 %v30
  %v86 = vunpack.c.l.b16 %v31
  %v87 = vunpack.c.l.b16 %v32
  %v88 = vunpack.c.l.b16 %v33
  %v89 = vpack.c.b16 %v74, %v73
  %v90 = vpack.c.b16 %v76, %v75
  %v91 = vpack.c.b16 %v78, %v77
  %v92 = vpack.c.b16 %v80, %v79
  %v93 = vpack.c.b16 %v82, %v81
  %v94 = vpack.c.b16 %v84, %v83
  %v95 = vpack.c.b16 %v86, %v85
  %v96 = vpack.c.b16 %v88, %v87
  %v121 = vunpack.c.l.b16 %v34
  %v122 = vunpack.c.l.b16 %v35
  %v123 = vunpack.c.l.b16 %v36
  %v124 = vunpack.c.l.b16 %v37
  %v125 = vunpack.c.l.b16 %v38
  %v126 = vunpack.c.l.b16 %v39
  %v127 = vunpack.c.l.b16 %v40
  %v128 = vunpack.c.l.b16 %v41
  %v129 = vunpack.c.l.b16 %v42
  %v130 = vunpack.c.l.b16 %v43
  %v131 = vunpack.c.l.b16 %v44
  %v132 = vunpack.c.l.b16 %v45
  %v133 = vunpack.c.l.b16 %v46
  %v134 = vunpack.c.l.b16 %v47
  %v135 = vunpack.c.l.b16 %v48
  %v136 = vunpack.c.l.b16 %v49
  %v137 = vpack.c.b16 %v122, %v121
  %v138 = vpack.c.b16 %v124, %v123
  %v139 = vpack.c.b16 %v126, %v125
  %v140 = vpack.c.b16 %v128, %v127
  %v141 = vpack.c.b16 %v130, %v129
  %v142 = vpack.c.b16 %v132, %v131
  %v143 = vpack.c.b16 %v134, %v133
  %v144 = vpack.c.b16 %v136, %v135
  %153 = vmatprep.subr.bf16.mxu0 0
  %154 = vmatpush1.bf16.msra.mxu0 %v137
  %155 = vmatprep.subr.bf16.mxu0 0
  %156 = vmatpush1.bf16.msra.mxu0 %v138
  %157 = vmatprep.subr.bf16.mxu0 0
  %158 = vmatpush1.bf16.msra.mxu0 %v139
  %159 = vmatprep.subr.bf16.mxu0 0
  %160 = vmatpush1.bf16.msra.mxu0 %v140
  %161 = vmatprep.subr.bf16.mxu0 0
  %162 = vmatpush1.bf16.msra.mxu0 %v141
  %163 = vmatprep.subr.bf16.mxu0 0
  %164 = vmatpush1.bf16.msra.mxu0 %v142
  %165 = vmatprep.subr.bf16.mxu0 0
  %166 = vmatpush1.bf16.msra.mxu0 %v143
  %167 = vmatprep.subr.bf16.mxu0 0
  %168 = vmatpush1.bf16.msra.mxu0 %v144
  %169 = vmatprep.subr.bf16.mxu0 0
  %170 = vmatpush1.bf16.msra.mxu0 0
  %171 = vmatprep.subr.bf16.mxu0 0
  %172 = vmatpush1.bf16.msra.mxu0 0
  %173 = vmatprep.subr.bf16.mxu0 0
  %174 = vmatpush1.bf16.msra.mxu0 0
  %175 = vmatprep.subr.bf16.mxu0 0
  %176 = vmatpush1.bf16.msra.mxu0 0
  %177 = vmatprep.subr.bf16.mxu0 0
  %178 = vmatpush1.bf16.msra.mxu0 0
  %179 = vmatprep.subr.bf16.mxu0 0
  %180 = vmatpush1.bf16.msra.mxu0 0
  %181 = vmatprep.subr.bf16.mxu0 0
  %182 = vmatpush1.bf16.msra.mxu0 0
  %183 = vmatprep.subr.bf16.mxu0 0
  %184 = vmatpush1.bf16.msra.mxu0 0
  %185 = vmatprep.mubr.bf16.mxu0 0
  %186 = vmatmul.mubr.bf16.gmra.mrb[0].mxu0 %v89
  %v187 = vpop.f32.mrb[0].mxu0
  %v188 = vadd.f32 %v55, %v187
  %v189 = vpop.f32.mrb[0].mxu0
  %v190 = vpop.f32.mrb[0].mxu0
  %v191 = vadd.f32 %v55, %v190
  %v192 = vpop.f32.mrb[0].mxu0
  %193 = vmatprep.mubr.bf16.mxu0 0
  %194 = vmatmul.mubr.bf16.gmra.mrb[0].mxu0 %v90
  %v195 = vpop.f32.mrb[0].mxu0
  %v196 = vadd.f32 %v55, %v195
  %v197 = vpop.f32.mrb[0].mxu0
  %v198 = vpop.f32.mrb[0].mxu0
  %v199 = vadd.f32 %v55, %v198
  %v200 = vpop.f32.mrb[0].mxu0
  %201 = vmatprep.mubr.bf16.mxu0 0
  %202 = vmatmul.mubr.bf16.gmra.mrb[0].mxu0 %v91
  %v203 = vpop.f32.mrb[0].mxu0
  %v204 = vadd.f32 %v55, %v203
  %v205 = vpop.f32.mrb[0].mxu0
  %v206 = vpop.f32.mrb[0].mxu0
  %v207 = vadd.f32 %v55, %v206
  %v208 = vpop.f32.mrb[0].mxu0
  %209 = vmatprep.mubr.bf16.mxu0 0
  %210 = vmatmul.mubr.bf16.gmra.mrb[0].mxu0 %v92
  %v211 = vpop.f32.mrb[0].mxu0
  %v212 = vadd.f32 %v55, %v211
  %v213 = vpop.f32.mrb[0].mxu0
  %v214 = vpop.f32.mrb[0].mxu0
  %v215 = vadd.f32 %v55, %v214
  %v216 = vpop.f32.mrb[0].mxu0
  %217 = vmatprep.mubr.bf16.mxu0 0
  %218 = vmatmul.mubr.bf16.gmra.mrb[0].mxu0 %v93
  %v219 = vpop.f32.mrb[0].mxu0
  %v220 = vadd.f32 %v55, %v219
  %v221 = vpop.f32.mrb[0].mxu0
  %v222 = vpop.f32.mrb[0].mxu0
  %v223 = vadd.f32 %v55, %v222
  %v224 = vpop.f32.mrb[0].mxu0
  %225 = vmatprep.mubr.bf16.mxu0 0
  %226 = vmatmul.mubr.bf16.gmra.mrb[0].mxu0 %v94
  %v227 = vpop.f32.mrb[0].mxu0
  %v228 = vadd.f32 %v55, %v227
  %v229 = vpop.f32.mrb[0].mxu0
  %v230 = vpop.f32.mrb[0].mxu0
  %v231 = vadd.f32 %v55, %v230
  %v232 = vpop.f32.mrb[0].mxu0
  %233 = vmatprep.mubr.bf16.mxu0 0
  %234 = vmatmul.mubr.bf16.gmra.mrb[0].mxu0 %v95
  %v235 = vpop.f32.mrb[0].mxu0
  %v236 = vadd.f32 %v55, %v235
  %v237 = vpop.f32.mrb[0].mxu0
  %v238 = vpop.f32.mrb[0].mxu0
  %v239 = vadd.f32 %v55, %v238
  %v240 = vpop.f32.mrb[0].mxu0
  %241 = vmatprep.mubr.bf16.mxu0 0
  %242 = vmatmul.mubr.bf16.gmra.mrb[0].mxu0 %v96
  %v243 = vpop.f32.mrb[0].mxu0
  %v244 = vadd.f32 %v55, %v243
  %v245 = vpop.f32.mrb[0].mxu0
  %v246 = vpop.f32.mrb[0].mxu0
  %v247 = vadd.f32 %v55, %v246
  %v248 = vpop.f32.mrb[0].mxu0
  %249 = vdwg.mxu0
  %v250 = vld [vmem:[%s3] sm:$0xf]
  %v251 = vld [vmem:[%s3 + $0x4] sm:$0xf]
  %v252 = vld [vmem:[%s3 + $0x8] sm:$0xf]
  %v253 = vld [vmem:[%s3 + $0xc] sm:$0xf]
  %v254 = vld [vmem:[%s3 + $0x10] sm:$0xf]
  %v255 = vld [vmem:[%s3 + $0x14] sm:$0xf]
  %v256 = vld [vmem:[%s3 + $0x18] sm:$0xf]
  %v257 = vld [vmem:[%s3 + $0x1c] sm:$0xf]
  %v258 = vld [vmem:[%s3 + $0x20] sm:$0xf]
  %v259 = vld [vmem:[%s3 + $0x24] sm:$0xf]
  %v260 = vld [vmem:[%s3 + $0x28] sm:$0xf]
  %v261 = vld [vmem:[%s3 + $0x2c] sm:$0xf]
  %v262 = vld [vmem:[%s3 + $0x30] sm:$0xf]
  %v263 = vld [vmem:[%s3 + $0x34] sm:$0xf]
  %v264 = vld [vmem:[%s3 + $0x38] sm:$0xf]
  %v265 = vld [vmem:[%s3 + $0x3c] sm:$0xf]
  %v266 = vunpack.c.l.bf16 %v250
  %v267 = vunpack.c.l.bf16 %v251
  %v268 = vunpack.c.l.bf16 %v252
  %v269 = vunpack.c.l.bf16 %v253
  %v270 = vunpack.c.l.bf16 %v254
  %v271 = vunpack.c.l.bf16 %v255
  %v272 = vunpack.c.l.bf16 %v256
  %v273 = vunpack.c.l.bf16 %v257
  %v274 = vunpack.c.l.bf16 %v258
  %v275 = vunpack.c.l.bf16 %v259
  %v276 = vunpack.c.l.bf16 %v260
  %v277 = vunpack.c.l.bf16 %v261
  %v278 = vunpack.c.l.bf16 %v262
  %v279 = vunpack.c.l.bf16 %v263
  %v280 = vunpack.c.l.bf16 %v264
  %v281 = vunpack.c.l.bf16 %v265
  %v282 = vadd.f32 %v188, %v266
  %v283 = vadd.f32 %v191, %v267
  %v284 = vadd.f32 %v196, %v268
  %v285 = vadd.f32 %v199, %v269
  %v286 = vadd.f32 %v204, %v270
  %v287 = vadd.f32 %v207, %v271
  %v288 = vadd.f32 %v212, %v272
  %v289 = vadd.f32 %v215, %v273
  %v290 = vadd.f32 %v220, %v274
  %v291 = vadd.f32 %v223, %v275
  %v292 = vadd.f32 %v228, %v276
  %v293 = vadd.f32 %v231, %v277
  %v294 = vadd.f32 %v236, %v278
  %v295 = vadd.f32 %v239, %v279
  %v296 = vadd.f32 %v244, %v280
  %v297 = vadd.f32 %v247, %v281
  %v298 = vpack.c.bf16 %v283, %v282
  %v299 = vpack.c.bf16 %v285, %v284
  %v300 = vpack.c.bf16 %v287, %v286
  %v301 = vpack.c.bf16 %v289, %v288
  %v302 = vpack.c.bf16 %v291, %v290
  %v303 = vpack.c.bf16 %v293, %v292
  %v304 = vpack.c.bf16 %v295, %v294
  %v305 = vpack.c.bf16 %v297, %v296
  %v314 = vunpack.c.l.b16 %v298
  %v315 = vunpack.c.h.b16 %v298
  %v316 = vunpack.c.l.b16 %v299
  %v317 = vunpack.c.h.b16 %v299
  %v318 = vunpack.c.l.b16 %v300
  %v319 = vunpack.c.h.b16 %v300
  %v320 = vunpack.c.l.b16 %v301
  %v321 = vunpack.c.h.b16 %v301
  %v322 = vunpack.c.l.b16 %v302
  %v323 = vunpack.c.h.b16 %v302
  %v324 = vunpack.c.l.b16 %v303
  %v325 = vunpack.c.h.b16 %v303
  %v326 = vunpack.c.l.b16 %v304
  %v327 = vunpack.c.h.b16 %v304
  %v328 = vunpack.c.l.b16 %v305
  %v329 = vunpack.c.h.b16 %v305
  %v330 = vpack.c.b16 %v314, %v314
  %v331 = vpack.c.b16 %v315, %v315
  %v332 = vpack.c.b16 %v316, %v316
  %v333 = vpack.c.b16 %v317, %v317
  %v334 = vpack.c.b16 %v318, %v318
  %v335 = vpack.c.b16 %v319, %v319
  %v336 = vpack.c.b16 %v320, %v320
  %v337 = vpack.c.b16 %v321, %v321
  %v338 = vpack.c.b16 %v322, %v322
  %v339 = vpack.c.b16 %v323, %v323
  %v340 = vpack.c.b16 %v324, %v324
  %v341 = vpack.c.b16 %v325, %v325
  %v342 = vpack.c.b16 %v326, %v326
  %v343 = vpack.c.b16 %v327, %v327
  %v344 = vpack.c.b16 %v328, %v328
  %v345 = vpack.c.b16 %v329, %v329
  %362 = vst [vmem:[%s4] sm:$0xf] %v330
  %363 = vst [vmem:[%s4 + $0x4] sm:$0xf] %v331
  %364 = vst [vmem:[%s4 + $0x8] sm:$0xf] %v332
  %365 = vst [vmem:[%s4 + $0xc] sm:$0xf] %v333
  %366 = vst [vmem:[%s4 + $0x10] sm:$0xf] %v334
  %367 = vst [vmem:[%s4 + $0x14] sm:$0xf] %v335
  %368 = vst [vmem:[%s4 + $0x18] sm:$0xf] %v336
  %369 = vst [vmem:[%s4 + $0x1c] sm:$0xf] %v337
  %370 = vst [vmem:[%s4 + $0x20] sm:$0xf] %v338
  %371 = vst [vmem:[%s4 + $0x24] sm:$0xf] %v339
  %372 = vst [vmem:[%s4 + $0x28] sm:$0xf] %v340
  %373 = vst [vmem:[%s4 + $0x2c] sm:$0xf] %v341
  %374 = vst [vmem:[%s4 + $0x30] sm:$0xf] %v342
  %375 = vst [vmem:[%s4 + $0x34] sm:$0xf] %v343
  %376 = vst [vmem:[%s4 + $0x38] sm:$0xf] %v344
  %377 = vst [vmem:[%s4 + $0x3c] sm:$0xf] %v345
  // Predicated region
  $region18: #{coop_forward.40} parent=0 // pred_check
    _
  $region19: #{coop_forward.40} parent=0 // pred_check_branch
    %379 = sbr.rel (0) target = $region21
  $region20: #{coop_forward.40} parent=0 // pred_region
    _
  $region21: #{coop_forward.40} parent=0 // pred_fallthru
    _
  // Predicated region
  $region22: #{coop_forward.40} parent=0 // pred_check
    _
  $region23: #{coop_forward.40} parent=0 // pred_check_branch
    %381 = sbr.rel (0) target = $region25
  $region24: #{coop_forward.40} parent=0 // pred_region
    _
  $region25: #{coop_forward.40} parent=0 // pred_fallthru
    _

// kernel: coop_forward.39
$region0: #{coop_forward.39}
  #allocation0 [shape = 'u32[]', space=smem, size = 0x4, offset = 0x4, fixed_abs, tag = 'smem constant byte address 0x4 - core index']
  #allocation1 [shape = 'u32[144,128]{1,0:T(1,128)}', space=vmem, size = 0x12000, scoped, tag = 'internal scratch']
  %s0 = inlined_call_operand.vmem [shape: bf16[8,16,384], index: 0, kind: input, shape index: {}, may-alias: {0,1,2}]
  %s1 = inlined_call_operand.vmem [shape: bf16[8,16,384], index: 1, kind: input, shape index: {}, may-alias: {0,1,2}]
  %s2 = inlined_call_operand.vmem [shape: bf16[8,16,384], index: 2, kind: input, shape index: {}, may-alias: {0,1,2}]
  %s3 = inlined_call_operand.vmem [shape: bf16[8,16,128], index: 3, kind: output, shape index: {}]
  %s4 = sld [smem:[#allocation0]]
  $region168: #{coop_forward.39} parent=0
    _
  %s6 = ssub.s32 1, %s4
  %s7 = scalar_select 0, %s6, %s4
  $region1: #{coop_forward.39} parent=0
    #allocation2 [shape = 'u8[8192]{0}', space=vmem, size = 0x2000, scoped, tag = 'input window, operand 0']
    #allocation3 [shape = 'u8[8192]{0}', space=vmem, size = 0x2000, scoped, tag = 'input window, operand 1']
    #allocation4 [shape = 'u8[8192]{0}', space=vmem, size = 0x2000, scoped, tag = 'input window, operand 2']
    loop: start=0, step=1, limit=10
    $region2: #{coop_forward.39} parent=1 // loop_pre_header
      _
    $region3: #{coop_forward.39} parent=1 // loop_header
      %s9 = sphi 0, %s13
      %p10 = scmp.ge.s32.totalorder %s9, 10
      %s16 = sphi 0, %s28
      %s17 = sphi 0, %s24
      %s18 = sphi 0, %s16
      %s19 = sphi 0, %s17
      %s20 = sphi 0, %s18
      %s21 = sphi 0, %s19
      %s33 = sphi 0, %s35
      %s36 = sphi 0, %s33
      %s37 = sphi 0, %s36
      %s53 = sphi 0, %s37
      %s63 = sphi 0, %s65
      %s66 = sphi 0, %s63
      %s67 = sphi 0, %s66
      %s83 = sphi 0, %s67
      %s93 = sphi 0, %s95
      %s96 = sphi 0, %s93
      %s97 = sphi 0, %s96
      %s113 = sphi 0, %s97
      %s121 = sphi 0, %s123
      %s124 = sphi 0, %s121
      %s125 = sphi 0, %s124
      %s141 = sphi 0, %s125
    $region4: #{coop_forward.39} parent=1 // loop_header_branch
      %12 = sbr.rel (%p10) target = $region8
    $region5: #{coop_forward.39} parent=1 // loop_body
      %s14 = ssub.s32 %s9, 1
      %s15 = ssub.s32 %s9, 2
      %s22 = sadd.s32 1, %s17
      %p23 = scmp.ge.s32.totalorder %s22, 1
      %s24 = scalar_select %p23, 0, %s22
      %s25 = sadd.s32 1, %s16
      %s26 = scalar_select %p23, %s25, %s16
      %p27 = scmp.ge.s32.totalorder %s26, 8
      %s28 = scalar_select %p27, 0, %s26
      %s29 = ssub.s32 %s16, %s28
      %s30 = ssub.s32 %s17, %s24
      %s31 = sor.u32 %s29, %s30
      %p32 = scmp.eq.s32.totalorder %s31, 0
      %s34 = sadd.s32 %s33, 1
      %s35 = scalar_select %p32, %s33, %s34
      %p38 = pneg %p32
      %p39 = scmp.eq.s32.totalorder %s9, 7
      %p40 = por %p38, %p39
      %p41 = scmp.ne.s32.totalorder %s33, %s36
      %p42 = scmp.eq.s32.totalorder %s9, 0
      %p43 = por %p41, %p42
      %p44 = scmp.ne.s32.totalorder %s33, %s36
      %p45 = scmp.eq.s32.totalorder %s14, 7
      %p46 = por %p44, %p45
      %p47 = scmp.ne.s32.totalorder %s36, %s37
      %p48 = scmp.eq.s32.totalorder %s14, 0
      %p49 = por %p47, %p48
      %p50 = scmp.ne.s32.totalorder %s36, %s37
      %p51 = scmp.eq.s32.totalorder %s15, 7
      %p52 = por %p50, %p51
      %p54 = scmp.ne.s32.totalorder %s37, %s53
      %p55 = scmp.eq.s32.totalorder %s15, 0
      %p56 = por %p54, %p55
      %s57 = sadd.s32 %s17, 1
      %s58 = sadd.s32 %s24, 1
      %s59 = ssub.s32 %s16, %s28
      %s60 = ssub.s32 %s57, %s58
      %s61 = sor.u32 %s59, %s60
      %p62 = scmp.eq.s32.totalorder %s61, 0
      %s64 = sadd.s32 %s63, 1
      %s65 = scalar_select %p62, %s63, %s64
      %p68 = pneg %p62
      %p69 = scmp.eq.s32.totalorder %s9, 7
      %p70 = por %p68, %p69
      %p71 = scmp.ne.s32.totalorder %s63, %s66
      %p72 = scmp.eq.s32.totalorder %s9, 0
      %p73 = por %p71, %p72
      %p74 = scmp.ne.s32.totalorder %s63, %s66
      %p75 = scmp.eq.s32.totalorder %s14, 7
      %p76 = por %p74, %p75
      %p77 = scmp.ne.s32.totalorder %s66, %s67
      %p78 = scmp.eq.s32.totalorder %s14, 0
      %p79 = por %p77, %p78
      %p80 = scmp.ne.s32.totalorder %s66, %s67
      %p81 = scmp.eq.s32.totalorder %s15, 7
      %p82 = por %p80, %p81
      %p84 = scmp.ne.s32.totalorder %s67, %s83
      %p85 = scmp.eq.s32.totalorder %s15, 0
      %p86 = por %p84, %p85
      %s87 = sadd.s32 %s17, 2
      %s88 = sadd.s32 %s24, 2
      %s89 = ssub.s32 %s16, %s28
      %s90 = ssub.s32 %s87, %s88
      %s91 = sor.u32 %s89, %s90
      %p92 = scmp.eq.s32.totalorder %s91, 0
      %s94 = sadd.s32 %s93, 1
      %s95 = scalar_select %p92, %s93, %s94
      %p98 = pneg %p92
      %p99 = scmp.eq.s32.totalorder %s9, 7
      %p100 = por %p98, %p99
      %p101 = scmp.ne.s32.totalorder %s93, %s96
      %p102 = scmp.eq.s32.totalorder %s9, 0
      %p103 = por %p101, %p102
      %p104 = scmp.ne.s32.totalorder %s93, %s96
      %p105 = scmp.eq.s32.totalorder %s14, 7
      %p106 = por %p104, %p105
      %p107 = scmp.ne.s32.totalorder %s96, %s97
      %p108 = scmp.eq.s32.totalorder %s14, 0
      %p109 = por %p107, %p108
      %p110 = scmp.ne.s32.totalorder %s96, %s97
      %p111 = scmp.eq.s32.totalorder %s15, 7
      %p112 = por %p110, %p111
      %p114 = scmp.ne.s32.totalorder %s97, %s113
      %p115 = scmp.eq.s32.totalorder %s15, 0
      %p116 = por %p114, %p115
      %s117 = ssub.s32 %s16, %s28
      %s118 = ssub.s32 %s17, %s24
      %s119 = sor.u32 %s117, %s118
      %p120 = scmp.eq.s32.totalorder %s119, 0
      %s122 = sadd.s32 %s121, 1
      %s123 = scalar_select %p120, %s121, %s122
      %p126 = pneg %p120
      %p127 = scmp.eq.s32.totalorder %s9, 7
      %p128 = por %p126, %p127
      %p129 = scmp.ne.s32.totalorder %s121, %s124
      %p130 = scmp.eq.s32.totalorder %s9, 0
      %p131 = por %p129, %p130
      %p132 = scmp.ne.s32.totalorder %s121, %s124
      %p133 = scmp.eq.s32.totalorder %s14, 7
      %p134 = por %p132, %p133
      %p135 = scmp.ne.s32.totalorder %s124, %s125
      %p136 = scmp.eq.s32.totalorder %s14, 0
      %p137 = por %p135, %p136
      %p138 = scmp.ne.s32.totalorder %s124, %s125
      %p139 = scmp.eq.s32.totalorder %s15, 7
      %p140 = por %p138, %p139
      %p142 = scmp.ne.s32.totalorder %s125, %s141
      %p143 = scmp.eq.s32.totalorder %s15, 0
      %p144 = por %p142, %p143
      %p145 = scmp.le.s32.totalorder 1, %s9
      %p146 = scmp.lt.s32.totalorder %s9, 9
      %p147 = pnand %p145, %p146
      %p148 = pneg %p147
      // Predicated region
      $region9: #{coop_forward.39} parent=5 // pred_check
        _
      $region10: #{coop_forward.39} parent=5 // pred_check_branch
        %150 = sbr.rel (%p147) target = $region12
      $region11: #{coop_forward.39} parent=5 // pred_region
        %s151 = ssub.s32 %s9, 1
      $region12: #{coop_forward.39} parent=5 // pred_fallthru
        _
      %p152 = scmp.lt.s32.totalorder %s9, 8
      // Predicated region
      $region13: #{coop_forward.39} parent=5 // pred_check
        %p153 = pneg %p152
      $region14: #{coop_forward.39} parent=5 // pred_check_branch
        %155 = sbr.rel (%p153) target = $region16
      $region15: #{coop_forward.39} parent=5 // pred_region
        // Predicated region
        $region17: #{coop_forward.39} parent=15 // pred_check
          %p156 = pneg %p43
        $region18: #{coop_forward.39} parent=15 // pred_check_branch
          %158 = sbr.rel (%p156) target = $region20
        $region19: #{coop_forward.39} parent=15 // pred_region
          %s159 = sand.u32 %s33, 1
          %s160 = sand.u32 %s33, 1
          %s161 = smul.addr %s160, 8
          %s162 = scalar_lea.vmem [#allocation2], %s161
          %s163 = smul.addr %s16, 6
          %s164 = sadd.s32 %s17, %s163
          %s165 = smul.addr %s164, 4
          %s166 = scalar_lea.vmem %s0, %s165
          // Predicated region
          $region21: #{coop_forward.39} parent=19 // pred_check
            _
          $region22: #{coop_forward.39} parent=19 // pred_check_branch
            %168 = sbr.rel (0) target = $region24
          $region23: #{coop_forward.39} parent=19 // pred_region
            // Predicated region
            $region25: #{coop_forward.39} parent=23 // pred_check
              _
            $region26: #{coop_forward.39} parent=23 // pred_check_branch
              %170 = sbr.rel target = $region28
            $region27: #{coop_forward.39} parent=23 // pred_region
              // Predicated region
              $region40: #{coop_forward.39} parent=27 // pred_check
                _
              $region41: #{coop_forward.39} parent=27 // pred_check_branch
                %187 = sbr.rel (0) target = $region43
              $region42: #{coop_forward.39} parent=27 // pred_region
                loop: start=0, step=1, limit=1
                $region44: #{coop_forward.39} parent=42 // loop_pre_header
                  _
                $region45: #{coop_forward.39} parent=42 // loop_header
                  %s189 = sphi 0, %s193
                  %p190 = scmp.ge.s32.totalorder %s189, 1
                  %s194 = sphi %s166, %s166
                  %s195 = sphi %s162, %s162
                $region46: #{coop_forward.39} parent=42 // loop_header_branch
                  %192 = sbr.rel (%p190) target = $region50
                $region47: #{coop_forward.39} parent=42 // loop_body
                  _
                $region48: #{coop_forward.39} parent=42 // loop_footer
                  %s193 = sadd.s32 1, %s189
                $region49: #{coop_forward.39} parent=42 // loop_footer_branch
                  %188 = sbr.rel target = $region45
                $region50: #{coop_forward.39} parent=42 // loop_exit
                  _
                loop: start=0, step=1, limit=1
                $region51: #{coop_forward.39} parent=42 // loop_pre_header
                  _
                $region52: #{coop_forward.39} parent=42 // loop_header
                  %s198 = sphi 0, %s202
                  %p199 = scmp.ge.s32.totalorder %s198, 1
                  %s203 = sphi %s166, %s166
                  %s204 = sphi %s162, %s162
                $region53: #{coop_forward.39} parent=42 // loop_header_branch
                  %201 = sbr.rel (%p199) target = $region57
                $region54: #{coop_forward.39} parent=42 // loop_body
                  %v205 = vld [vmem:[%s203] sm:$0xf]
                  %206 = vst [vmem:[%s204] sm:$0xf] %v205
                  %v207 = vld [vmem:[%s203 + $0xc] sm:$0xf]
                  %208 = vst [vmem:[%s204 + $0x4] sm:$0xf] %v207
                $region55: #{coop_forward.39} parent=42 // loop_footer
                  %s202 = sadd.s32 1, %s198
                $region56: #{coop_forward.39} parent=42 // loop_footer_branch
                  %197 = sbr.rel target = $region52
                $region57: #{coop_forward.39} parent=42 // loop_exit
                  _
              $region43: #{coop_forward.39} parent=27 // pred_fallthru
                _
            $region28: #{coop_forward.39} parent=23 // pred_fallthru
              _
            // Predicated region
            $region29: #{coop_forward.39} parent=23 // pred_check
              _
            $region30: #{coop_forward.39} parent=23 // pred_check_branch
              %172 = sbr.rel (0) target = $region32
            $region31: #{coop_forward.39} parent=23 // pred_region
              loop: start=0, step=1, limit=1
              $region33: #{coop_forward.39} parent=31 // loop_pre_header
                _
              $region34: #{coop_forward.39} parent=31 // loop_header
                %s175 = sphi 0, %s179
                %p176 = scmp.ge.s32.totalorder %s175, 1
                %s180 = sphi %s166, %s166
                %s181 = sphi %s162, %s162
              $region35: #{coop_forward.39} parent=31 // loop_header_branch
                %178 = sbr.rel (%p176) target = $region39
              $region36: #{coop_forward.39} parent=31 // loop_body
                %v182 = vld [vmem:[%s180] sm:$0xf]
                %183 = vst [vmem:[%s181] sm:$0xf] %v182
                %v184 = vld [vmem:[%s180 + $0xc] sm:$0xf]
                %185 = vst [vmem:[%s181 + $0x4] sm:$0xf] %v184
              $region37: #{coop_forward.39} parent=31 // loop_footer
                %s179 = sadd.s32 1, %s175
              $region38: #{coop_forward.39} parent=31 // loop_footer_branch
                %174 = sbr.rel target = $region34
              $region39: #{coop_forward.39} parent=31 // loop_exit
                _
            $region32: #{coop_forward.39} parent=23 // pred_fallthru
              _
          $region24: #{coop_forward.39} parent=19 // pred_fallthru
            _
          %209 = vnop
        $region20: #{coop_forward.39} parent=15 // pred_fallthru
          _
        // Predicated region
        $region58: #{coop_forward.39} parent=15 // pred_check
          %p210 = pneg %p73
        $region59: #{coop_forward.39} parent=15 // pred_check_branch
          %212 = sbr.rel (%p210) target = $region61
        $region60: #{coop_forward.39} parent=15 // pred_region
          %s213 = sand.u32 %s63, 1
          %s214 = sand.u32 %s63, 1
          %s215 = smul.addr %s214, 8
          %s216 = scalar_lea.vmem [#allocation3], %s215
          %s217 = sadd.s32 %s17, 1
          %s218 = smul.addr %s16, 6
          %s219 = sadd.s32 %s217, %s218
          %s220 = smul.addr %s219, 4
          %s221 = scalar_lea.vmem %s1, %s220
          // Predicated region
          $region62: #{coop_forward.39} parent=60 // pred_check
            _
          $region63: #{coop_forward.39} parent=60 // pred_check_branch
            %223 = sbr.rel (0) target = $region65
          $region64: #{coop_forward.39} parent=60 // pred_region
            // Predicated region
            $region66: #{coop_forward.39} parent=64 // pred_check
              _
            $region67: #{coop_forward.39} parent=64 // pred_check_branch
              %225 = sbr.rel target = $region69
            $region68: #{coop_forward.39} parent=64 // pred_region
              // Predicated region
              $region81: #{coop_forward.39} parent=68 // pred_check
                _
              $region82: #{coop_forward.39} parent=68 // pred_check_branch
                %242 = sbr.rel (0) target = $region84
              $region83: #{coop_forward.39} parent=68 // pred_region
                loop: start=0, step=1, limit=1
                $region85: #{coop_forward.39} parent=83 // loop_pre_header
                  _
                $region86: #{coop_forward.39} parent=83 // loop_header
                  %s244 = sphi 0, %s248
                  %p245 = scmp.ge.s32.totalorder %s244, 1
                  %s249 = sphi %s221, %s221
                  %s250 = sphi %s216, %s216
                $region87: #{coop_forward.39} parent=83 // loop_header_branch
                  %247 = sbr.rel (%p245) target = $region91
                $region88: #{coop_forward.39} parent=83 // loop_body
                  _
                $region89: #{coop_forward.39} parent=83 // loop_footer
                  %s248 = sadd.s32 1, %s244
                $region90: #{coop_forward.39} parent=83 // loop_footer_branch
                  %243 = sbr.rel target = $region86
                $region91: #{coop_forward.39} parent=83 // loop_exit
                  _
                loop: start=0, step=1, limit=1
                $region92: #{coop_forward.39} parent=83 // loop_pre_header
                  _
                $region93: #{coop_forward.39} parent=83 // loop_header
                  %s253 = sphi 0, %s257
                  %p254 = scmp.ge.s32.totalorder %s253, 1
                  %s258 = sphi %s221, %s221
                  %s259 = sphi %s216, %s216
                $region94: #{coop_forward.39} parent=83 // loop_header_branch
                  %256 = sbr.rel (%p254) target = $region98
                $region95: #{coop_forward.39} parent=83 // loop_body
                  %v260 = vld [vmem:[%s258] sm:$0xf]
                  %261 = vst [vmem:[%s259] sm:$0xf] %v260
                  %v262 = vld [vmem:[%s258 + $0xc] sm:$0xf]
                  %263 = vst [vmem:[%s259 + $0x4] sm:$0xf] %v262
                $region96: #{coop_forward.39} parent=83 // loop_footer
                  %s257 = sadd.s32 1, %s253
                $region97: #{coop_forward.39} parent=83 // loop_footer_branch
                  %252 = sbr.rel target = $region93
                $region98: #{coop_forward.39} parent=83 // loop_exit
                  _
              $region84: #{coop_forward.39} parent=68 // pred_fallthru
                _
            $region69: #{coop_forward.39} parent=64 // pred_fallthru
              _
            // Predicated region
            $region70: #{coop_forward.39} parent=64 // pred_check
              _
            $region71: #{coop_forward.39} parent=64 // pred_check_branch
              %227 = sbr.rel (0) target = $region73
            $region72: #{coop_forward.39} parent=64 // pred_region
              loop: start=0, step=1, limit=1
              $region74: #{coop_forward.39} parent=72 // loop_pre_header
                _
              $region75: #{coop_forward.39} parent=72 // loop_header
                %s230 = sphi 0, %s234
                %p231 = scmp.ge.s32.totalorder %s230, 1
                %s235 = sphi %s221, %s221
                %s236 = sphi %s216, %s216
              $region76: #{coop_forward.39} parent=72 // loop_header_branch
                %233 = sbr.rel (%p231) target = $region80
              $region77: #{coop_forward.39} parent=72 // loop_body
                %v237 = vld [vmem:[%s235] sm:$0xf]
                %238 = vst [vmem:[%s236] sm:$0xf] %v237
                %v239 = vld [vmem:[%s235 + $0xc] sm:$0xf]
                %240 = vst [vmem:[%s236 + $0x4] sm:$0xf] %v239
              $region78: #{coop_forward.39} parent=72 // loop_footer
                %s234 = sadd.s32 1, %s230
              $region79: #{coop_forward.39} parent=72 // loop_footer_branch
                %229 = sbr.rel target = $region75
              $region80: #{coop_forward.39} parent=72 // loop_exit
                _
            $region73: #{coop_forward.39} parent=64 // pred_fallthru
              _
          $region65: #{coop_forward.39} parent=60 // pred_fallthru
            _
          %264 = vnop
        $region61: #{coop_forward.39} parent=15 // pred_fallthru
          _
        // Predicated region
        $region99: #{coop_forward.39} parent=15 // pred_check
          %p265 = pneg %p103
        $region100: #{coop_forward.39} parent=15 // pred_check_branch
          %267 = sbr.rel (%p265) target = $region102
        $region101: #{coop_forward.39} parent=15 // pred_region
          %s268 = sand.u32 %s93, 1
          %s269 = sand.u32 %s93, 1
          %s270 = smul.addr %s269, 8
          %s271 = scalar_lea.vmem [#allocation4], %s270
          %s272 = sadd.s32 %s17, 2
          %s273 = smul.addr %s16, 6
          %s274 = sadd.s32 %s272, %s273
          %s275 = smul.addr %s274, 4
          %s276 = scalar_lea.vmem %s2, %s275
          // Predicated region
          $region103: #{coop_forward.39} parent=101 // pred_check
            _
          $region104: #{coop_forward.39} parent=101 // pred_check_branch
            %278 = sbr.rel (0) target = $region106
          $region105: #{coop_forward.39} parent=101 // pred_region
            // Predicated region
            $region107: #{coop_forward.39} parent=105 // pred_check
              _
            $region108: #{coop_forward.39} parent=105 // pred_check_branch
              %280 = sbr.rel target = $region110
            $region109: #{coop_forward.39} parent=105 // pred_region
              // Predicated region
              $region122: #{coop_forward.39} parent=109 // pred_check
                _
              $region123: #{coop_forward.39} parent=109 // pred_check_branch
                %297 = sbr.rel (0) target = $region125
              $region124: #{coop_forward.39} parent=109 // pred_region
                loop: start=0, step=1, limit=1
                $region126: #{coop_forward.39} parent=124 // loop_pre_header
                  _
                $region127: #{coop_forward.39} parent=124 // loop_header
                  %s299 = sphi 0, %s303
                  %p300 = scmp.ge.s32.totalorder %s299, 1
                  %s304 = sphi %s276, %s276
                  %s305 = sphi %s271, %s271
                $region128: #{coop_forward.39} parent=124 // loop_header_branch
                  %302 = sbr.rel (%p300) target = $region132
                $region129: #{coop_forward.39} parent=124 // loop_body
                  _
                $region130: #{coop_forward.39} parent=124 // loop_footer
                  %s303 = sadd.s32 1, %s299
                $region131: #{coop_forward.39} parent=124 // loop_footer_branch
                  %298 = sbr.rel target = $region127
                $region132: #{coop_forward.39} parent=124 // loop_exit
                  _
                loop: start=0, step=1, limit=1
                $region133: #{coop_forward.39} parent=124 // loop_pre_header
                  _
                $region134: #{coop_forward.39} parent=124 // loop_header
                  %s308 = sphi 0, %s312
                  %p309 = scmp.ge.s32.totalorder %s308, 1
                  %s313 = sphi %s276, %s276
                  %s314 = sphi %s271, %s271
                $region135: #{coop_forward.39} parent=124 // loop_header_branch
                  %311 = sbr.rel (%p309) target = $region139
                $region136: #{coop_forward.39} parent=124 // loop_body
                  %v315 = vld [vmem:[%s313] sm:$0xf]
                  %316 = vst [vmem:[%s314] sm:$0xf] %v315
                  %v317 = vld [vmem:[%s313 + $0xc] sm:$0xf]
                  %318 = vst [vmem:[%s314 + $0x4] sm:$0xf] %v317
                $region137: #{coop_forward.39} parent=124 // loop_footer
                  %s312 = sadd.s32 1, %s308
                $region138: #{coop_forward.39} parent=124 // loop_footer_branch
                  %307 = sbr.rel target = $region134
                $region139: #{coop_forward.39} parent=124 // loop_exit
                  _
              $region125: #{coop_forward.39} parent=109 // pred_fallthru
                _
            $region110: #{coop_forward.39} parent=105 // pred_fallthru
              _
            // Predicated region
            $region111: #{coop_forward.39} parent=105 // pred_check
              _
            $region112: #{coop_forward.39} parent=105 // pred_check_branch
              %282 = sbr.rel (0) target = $region114
            $region113: #{coop_forward.39} parent=105 // pred_region
              loop: start=0, step=1, limit=1
              $region115: #{coop_forward.39} parent=113 // loop_pre_header
                _
              $region116: #{coop_forward.39} parent=113 // loop_header
                %s285 = sphi 0, %s289
                %p286 = scmp.ge.s32.totalorder %s285, 1
                %s290 = sphi %s276, %s276
                %s291 = sphi %s271, %s271
              $region117: #{coop_forward.39} parent=113 // loop_header_branch
                %288 = sbr.rel (%p286) target = $region121
              $region118: #{coop_forward.39} parent=113 // loop_body
                %v292 = vld [vmem:[%s290] sm:$0xf]
                %293 = vst [vmem:[%s291] sm:$0xf] %v292
                %v294 = vld [vmem:[%s290 + $0xc] sm:$0xf]
                %295 = vst [vmem:[%s291 + $0x4] sm:$0xf] %v294
              $region119: #{coop_forward.39} parent=113 // loop_footer
                %s289 = sadd.s32 1, %s285
              $region120: #{coop_forward.39} parent=113 // loop_footer_branch
                %284 = sbr.rel target = $region116
              $region121: #{coop_forward.39} parent=113 // loop_exit
                _
            $region114: #{coop_forward.39} parent=105 // pred_fallthru
              _
          $region106: #{coop_forward.39} parent=101 // pred_fallthru
            _
          %319 = vnop
        $region102: #{coop_forward.39} parent=15 // pred_fallthru
          _
      $region16: #{coop_forward.39} parent=5 // pred_fallthru
        _
      %p320 = scmp.le.s32.totalorder 1, %s9
      %p321 = scmp.lt.s32.totalorder %s9, 9
      %p322 = pnand %p320, %p321
      %p323 = pneg %p322
      // Predicated region
      $region140: #{coop_forward.39} parent=5 // pred_check
        _
      $region141: #{coop_forward.39} parent=5 // pred_check_branch
        %325 = sbr.rel (%p322) target = $region143
      $region142: #{coop_forward.39} parent=5 // pred_region
        %s326 = ssub.s32 %s9, 1
        %s327 = sand.u32 %s36, 1
        %s328 = sand.u32 %s36, 1
        %s329 = smul.addr %s328, 8
        %s330 = scalar_lea.vmem [#allocation2], %s329
        // Predicated region
        $region144: #{coop_forward.39} parent=142 // pred_check
          %p331 = pneg %p49
        $region145: #{coop_forward.39} parent=142 // pred_check_branch
          %333 = sbr.rel (%p331) target = $region147
        $region146: #{coop_forward.39} parent=142 // pred_region
          _
        $region147: #{coop_forward.39} parent=142 // pred_fallthru
          _
        %s334 = sand.u32 %s66, 1
        %s335 = sand.u32 %s66, 1
        %s336 = smul.addr %s335, 8
        %s337 = scalar_lea.vmem [#allocation3], %s336
        // Predicated region
        $region148: #{coop_forward.39} parent=142 // pred_check
          %p338 = pneg %p79
        $region149: #{coop_forward.39} parent=142 // pred_check_branch
          %340 = sbr.rel (%p338) target = $region151
        $region150: #{coop_forward.39} parent=142 // pred_region
          _
        $region151: #{coop_forward.39} parent=142 // pred_fallthru
          _
        %s341 = sand.u32 %s96, 1
        %s342 = sand.u32 %s96, 1
        %s343 = smul.addr %s342, 8
        %s344 = scalar_lea.vmem [#allocation4], %s343
        // Predicated region
        $region152: #{coop_forward.39} parent=142 // pred_check
          %p345 = pneg %p109
        $region153: #{coop_forward.39} parent=142 // pred_check_branch
          %347 = sbr.rel (%p345) target = $region155
        $region154: #{coop_forward.39} parent=142 // pred_region
          _
        $region155: #{coop_forward.39} parent=142 // pred_fallthru
          _
        %s348 = sand.u32 %s36, 1
        %s349 = sand.u32 %s36, 1
        %s350 = smul.addr %s349, 8
        %s351 = scalar_lea.vmem [#allocation2], %s350
        %p352 = pneg %p49
        %p353 = pneg %p46
        %s354 = sand.u32 %s66, 1
        %s355 = sand.u32 %s66, 1
        %s356 = smul.addr %s355, 8
        %s357 = scalar_lea.vmem [#allocation3], %s356
        %p358 = pneg %p79
        %p359 = pneg %p76
        %s360 = sand.u32 %s96, 1
        %s361 = sand.u32 %s96, 1
        %s362 = smul.addr %s361, 8
        %s363 = scalar_lea.vmem [#allocation4], %s362
        %p364 = pneg %p109
        %p365 = pneg %p106
        %p366 = pneg %p137
        %p367 = pneg %p134
        %p368 = scmp.lt.s32.totalorder %s18, 7
        %s369 = scalar_select %p368, %s18, 7
        %p370 = scmp.lt.s32.totalorder %s19, 0
        %s371 = scalar_select %p370, %s19, 0
        %s372 = smul.addr %s369, 2
        %s373 = sadd.s32 %s371, %s372
        %s374 = smul.addr %s373, 4
        %s375 = scalar_lea.vmem %s3, %s374
        %s376 = sadd.s32 %s19, 1
        %s377 = sadd.s32 %s19, 2
        %p378 = scmp.lt.s32.totalorder %s18, 7
        %s379 = scalar_select %p378, %s18, 7
        %p380 = scmp.lt.s32.totalorder %s19, 0
        %s381 = scalar_select %p380, %s19, 0
        %s382 = smul.addr %s379, 2
        %s383 = sadd.s32 %s381, %s382
        %s384 = smul.addr %s383, 4
        %s385 = scalar_lea.vmem %s3, %s384
        %v387 = vld [vmem:[%s330] sm:$0xf]
        %v388 = vld [vmem:[%s330 + $0x4] sm:$0xf]
        %v389 = vld [vmem:[%s337] sm:$0xf]
        %v390 = vld [vmem:[%s337 + $0x4] sm:$0xf]
        %v391 = vld [vmem:[%s344] sm:$0xf]
        %v392 = vld [vmem:[%s344 + $0x4] sm:$0xf]
        %v393 = vlaneseq
        %v394 = vshrl.u32 %v393, 7
        %v395 = vadd.s32 %v394, 8
        %v396 = vlaneseq
        %v397 = vand.u32 %v396, 127
        %vm398 = vcmp.le.s32.totalorder %v397, %v394
        %vm399 = vcmp.le.s32.totalorder %v397, %v395
        %v400 = vsel %vm398, 0.0, -1e+30
        %v401 = vsel %vm399, 0.0, -1e+30
        %v402 = vunpack.c.l.bf16 %v387
        %v403 = vunpack.c.l.bf16 %v388
        %v404 = vmul.f32 %v402, 0.125
        %v405 = vmul.f32 %v403, 0.125
        %v406 = vpack.c.bf16 %v405, %v404
        %v409 = vunpack.c.l.b16 %v389
        %v410 = vunpack.c.l.b16 %v390
        %v411 = vpack.c.b16 %v410, %v409
        %vm412 = vcmask 523264
        %v414 = vsel %vm412, %v406, 0
        %v417 = vsel %vm412, %v411, 0
        %419 = vmatprep.subr.bf16.mxu0 0
        %420 = vmatpush1.bf16.xpose.msra.mxu0 %v417
        %421 = vmatprep.subr.bf16.mxu0 0
        %422 = vmatpush1.bf16.xpose.msra.mxu0 0
        %423 = vmatprep.subr.bf16.mxu0 0
        %424 = vmatpush1.bf16.xpose.msra.mxu0 0
        %425 = vmatprep.subr.bf16.mxu0 0
        %426 = vmatpush1.bf16.xpose.msra.mxu0 0
        %427 = vmatprep.subr.bf16.mxu0 0
        %428 = vmatpush1.bf16.xpose.msra.mxu0 0
        %429 = vmatprep.subr.bf16.mxu0 0
        %430 = vmatpush1.bf16.xpose.msra.mxu0 0
        %431 = vmatprep.subr.bf16.mxu0 0
        %432 = vmatpush1.bf16.xpose.msra.mxu0 0
        %433 = vmatprep.subr.bf16.mxu0 0
        %434 = vmatpush1.bf16.xpose.msra.mxu0 0
        %435 = vmatprep.subr.bf16.mxu0 0
        %436 = vmatpush1.bf16.xpose.msra.mxu0 0
        %437 = vmatprep.subr.bf16.mxu0 0
        %438 = vmatpush1.bf16.xpose.msra.mxu0 0
        %439 = vmatprep.subr.bf16.mxu0 0
        %440 = vmatpush1.bf16.xpose.msra.mxu0 0
        %441 = vmatprep.subr.bf16.mxu0 0
        %442 = vmatpush1.bf16.xpose.msra.mxu0 0
        %443 = vmatprep.subr.bf16.mxu0 0
        %444 = vmatpush1.bf16.xpose.msra.mxu0 0
        %445 = vmatprep.subr.bf16.mxu0 0
        %446 = vmatpush1.bf16.xpose.msra.mxu0 0
        %447 = vmatprep.subr.bf16.mxu0 0
        %448 = vmatpush1.bf16.xpose.msra.mxu0 0
        %449 = vmatprep.subr.bf16.mxu0 0
        %450 = vmatpush1.bf16.xpose.msra.mxu0 0
        %451 = vmatprep.mubr.bf16.mxu0 0
        %452 = vmatmul.mubr.bf16.gmra.mrb[0].mxu0 %v414
        %v453 = vpop.f32.mrb[0].mxu0
        %v454 = vadd.f32 %v400, %v453
        %v455 = vpop.f32.mrb[0].mxu0
        %v456 = vpop.f32.mrb[0].mxu0
        %v457 = vadd.f32 %v401, %v456
        %v458 = vpop.f32.mrb[0].mxu0
        %459 = vdwg.mxu0
        %vm460 = vcmask 130048
        %v461 = vsel %vm460, %v454, -inf
        %462 = vmax.xlane.f32.xlu0 %v461
        %v463 = vpop.xlane.xlu0 %462
        %v464 = vsel %vm460, %v457, -inf
        %465 = vmax.xlane.f32.xlu0 %v464
        %v466 = vpop.xlane.xlu0 %465
        %v467 = vsub.f32 %v454, %v463
        %v468 = vsub.f32 %v457, %v466
        %v469 = vmul.f32 %v467, 1.442695
        %v470 = vpow.pop %v469
        %v471 = vmul.f32 %v468, 1.442695
        %v472 = vpow.pop %v471
        %v473 = vsel %vm460, %v470, 0.0
        %474 = vadd.xlane.f32.xlu0 %v473
        %v475 = vpop.xlane.xlu0 %474
        %v476 = vsel %vm460, %v472, 0.0
        %477 = vadd.xlane.f32.xlu0 %v476
        %v478 = vpop.xlane.xlu0 %477
        %v479 = vrcp.pop %v475
        %v480 = vrcp.pop %v478
        %v481 = vmul.f32 %v470, %v479
        %v482 = vmul.f32 %v472, %v480
        %v483 = vpack.c.bf16 %v482, %v481
        %v486 = vunpack.c.l.b16 %v391
        %v487 = vunpack.c.l.b16 %v392
        %v488 = vpack.c.b16 %v487, %v486
        %v491 = vsel %vm460, %v483, 0
        %493 = vmatprep.subr.bf16.mxu0 0
        %494 = vmatpush1.bf16.msra.mxu0 %v488
        %495 = vmatprep.subr.bf16.mxu0 0
        %496 = vmatpush1.bf16.msra.mxu0 0
        %497 = vmatprep.subr.bf16.mxu0 0
        %498 = vmatpush1.bf16.msra.mxu0 0
        %499 = vmatprep.subr.bf16.mxu0 0
        %500 = vmatpush1.bf16.msra.mxu0 0
        %501 = vmatprep.subr.bf16.mxu0 0
        %502 = vmatpush1.bf16.msra.mxu0 0
        %503 = vmatprep.subr.bf16.mxu0 0
        %504 = vmatpush1.bf16.msra.mxu0 0
        %505 = vmatprep.subr.bf16.mxu0 0
        %506 = vmatpush1.bf16.msra.mxu0 0
        %507 = vmatprep.subr.bf16.mxu0 0
        %508 = vmatpush1.bf16.msra.mxu0 0
        %509 = vmatprep.subr.bf16.mxu0 0
        %510 = vmatpush1.bf16.msra.mxu0 0
        %511 = vmatprep.subr.bf16.mxu0 0
        %512 = vmatpush1.bf16.msra.mxu0 0
        %513 = vmatprep.subr.bf16.mxu0 0
        %514 = vmatpush1.bf16.msra.mxu0 0
        %515 = vmatprep.subr.bf16.mxu0 0
        %516 = vmatpush1.bf16.msra.mxu0 0
        %517 = vmatprep.subr.bf16.mxu0 0
        %518 = vmatpush1.bf16.msra.mxu0 0
        %519 = vmatprep.subr.bf16.mxu0 0
        %520 = vmatpush1.bf16.msra.mxu0 0
        %521 = vmatprep.subr.bf16.mxu0 0
        %522 = vmatpush1.bf16.msra.mxu0 0
        %523 = vmatprep.subr.bf16.mxu0 0
        %524 = vmatpush1.bf16.msra.mxu0 0
        %525 = vmatprep.mubr.bf16.mxu0 0
        %526 = vmatmul.mubr.bf16.gmra.mrb[0].mxu0 %v491
        %v527 = vpop.f32.mrb[0].mxu0
        %v528 = vadd.f32 0.0, %v527
        %v529 = vpop.f32.mrb[0].mxu0
        %v530 = vpop.f32.mrb[0].mxu0
        %v531 = vadd.f32 0.0, %v530
        %v532 = vpop.f32.mrb[0].mxu0
        %533 = vdwg.mxu0
        %535 = vrot.lane.b32.xlu0 %v406, 64
        %v536 = vpop.permute.xlu0 %535
        %537 = vrot.lane.b32.xlu0 %v411, 64
        %v538 = vpop.permute.xlu0 %537
        %v540 = vsel %vm412, %v536, 0
        %v543 = vsel %vm412, %v538, 0
        %545 = vmatprep.subr.bf16.mxu0 0
        %546 = vmatpush1.bf16.xpose.msra.mxu0 %v543
        %547 = vmatprep.subr.bf16.mxu0 0
        %548 = vmatpush1.bf16.xpose.msra.mxu0 0
        %549 = vmatprep.subr.bf16.mxu0 0
        %550 = vmatpush1.bf16.xpose.msra.mxu0 0
        %551 = vmatprep.subr.bf16.mxu0 0
        %552 = vmatpush1.bf16.xpose.msra.mxu0 0
        %553 = vmatprep.subr.bf16.mxu0 0
        %554 = vmatpush1.bf16.xpose.msra.mxu0 0
        %555 = vmatprep.subr.bf16.mxu0 0
        %556 = vmatpush1.bf16.xpose.msra.mxu0 0
        %557 = vmatprep.subr.bf16.mxu0 0
        %558 = vmatpush1.bf16.xpose.msra.mxu0 0
        %559 = vmatprep.subr.bf16.mxu0 0
        %560 = vmatpush1.bf16.xpose.msra.mxu0 0
        %561 = vmatprep.subr.bf16.mxu0 0
        %562 = vmatpush1.bf16.xpose.msra.mxu0 0
        %563 = vmatprep.subr.bf16.mxu0 0
        %564 = vmatpush1.bf16.xpose.msra.mxu0 0
        %565 = vmatprep.subr.bf16.mxu0 0
        %566 = vmatpush1.bf16.xpose.msra.mxu0 0
        %567 = vmatprep.subr.bf16.mxu0 0
        %568 = vmatpush1.bf16.xpose.msra.mxu0 0
        %569 = vmatprep.subr.bf16.mxu0 0
        %570 = vmatpush1.bf16.xpose.msra.mxu0 0
        %571 = vmatprep.subr.bf16.mxu0 0
        %572 = vmatpush1.bf16.xpose.msra.mxu0 0
        %573 = vmatprep.subr.bf16.mxu0 0
        %574 = vmatpush1.bf16.xpose.msra.mxu0 0
        %575 = vmatprep.subr.bf16.mxu0 0
        %576 = vmatpush1.bf16.xpose.msra.mxu0 0
        %577 = vmatprep.mubr.bf16.mxu0 0
        %578 = vmatmul.mubr.bf16.gmra.mrb[0].mxu0 %v540
        %v579 = vpop.f32.mrb[0].mxu0
        %v580 = vadd.f32 %v400, %v579
        %v581 = vpop.f32.mrb[0].mxu0
        %v582 = vpop.f32.mrb[0].mxu0
        %v583 = vadd.f32 %v401, %v582
        %v584 = vpop.f32.mrb[0].mxu0
        %585 = vdwg.mxu0
        %v586 = vsel %vm460, %v580, -inf
        %587 = vmax.xlane.f32.xlu0 %v586
        %v588 = vpop.xlane.xlu0 %587
        %v589 = vsel %vm460, %v583, -inf
        %590 = vmax.xlane.f32.xlu0 %v589
        %v591 = vpop.xlane.xlu0 %590
        %v592 = vsub.f32 %v580, %v588
        %v593 = vsub.f32 %v583, %v591
        %v594 = vmul.f32 %v592, 1.442695
        %v595 = vpow.pop %v594
        %v596 = vmul.f32 %v593, 1.442695
        %v597 = vpow.pop %v596
        %v598 = vsel %vm460, %v595, 0.0
        %599 = vadd.xlane.f32.xlu0 %v598
        %v600 = vpop.xlane.xlu0 %599
        %v601 = vsel %vm460, %v597, 0.0
        %602 = vadd.xlane.f32.xlu0 %v601
        %v603 = vpop.xlane.xlu0 %602
        %v604 = vrcp.pop %v600
        %v605 = vrcp.pop %v603
        %v606 = vmul.f32 %v595, %v604
        %v607 = vmul.f32 %v597, %v605
        %v608 = vpack.c.bf16 %v607, %v606
        %609 = vrot.lane.b32.xlu0 %v488, 64
        %v610 = vpop.permute.xlu0 %609
        %v613 = vsel %vm460, %v608, 0
        %615 = vmatprep.subr.bf16.mxu0 0
        %616 = vmatpush1.bf16.msra.mxu0 %v610
        %617 = vmatprep.subr.bf16.mxu0 0
        %618 = vmatpush1.bf16.msra.mxu0 0
        %619 = vmatprep.subr.bf16.mxu0 0
        %620 = vmatpush1.bf16.msra.mxu0 0
        %621 = vmatprep.subr.bf16.mxu0 0
        %622 = vmatpush1.bf16.msra.mxu0 0
        %623 = vmatprep.subr.bf16.mxu0 0
        %624 = vmatpush1.bf16.msra.mxu0 0
        %625 = vmatprep.subr.bf16.mxu0 0
        %626 = vmatpush1.bf16.msra.mxu0 0
        %627 = vmatprep.subr.bf16.mxu0 0
        %628 = vmatpush1.bf16.msra.mxu0 0
        %629 = vmatprep.subr.bf16.mxu0 0
        %630 = vmatpush1.bf16.msra.mxu0 0
        %631 = vmatprep.subr.bf16.mxu0 0
        %632 = vmatpush1.bf16.msra.mxu0 0
        %633 = vmatprep.subr.bf16.mxu0 0
        %634 = vmatpush1.bf16.msra.mxu0 0
        %635 = vmatprep.subr.bf16.mxu0 0
        %636 = vmatpush1.bf16.msra.mxu0 0
        %637 = vmatprep.subr.bf16.mxu0 0
        %638 = vmatpush1.bf16.msra.mxu0 0
        %639 = vmatprep.subr.bf16.mxu0 0
        %640 = vmatpush1.bf16.msra.mxu0 0
        %641 = vmatprep.subr.bf16.mxu0 0
        %642 = vmatpush1.bf16.msra.mxu0 0
        %643 = vmatprep.subr.bf16.mxu0 0
        %644 = vmatpush1.bf16.msra.mxu0 0
        %645 = vmatprep.subr.bf16.mxu0 0
        %646 = vmatpush1.bf16.msra.mxu0 0
        %647 = vmatprep.mubr.bf16.mxu0 0
        %648 = vmatmul.mubr.bf16.gmra.mrb[0].mxu0 %v613
        %v649 = vpop.f32.mrb[0].mxu0
        %v650 = vadd.f32 0.0, %v649
        %v651 = vpop.f32.mrb[0].mxu0
        %v652 = vpop.f32.mrb[0].mxu0
        %v653 = vadd.f32 0.0, %v652
        %v654 = vpop.f32.mrb[0].mxu0
        %655 = vdwg.mxu0
        %658 = vrot.lane.b32.xlu0 %v650, 64
        %v659 = vpop.permute.xlu0 %658
        %660 = vrot.lane.b32.xlu0 %v653, 64
        %v661 = vpop.permute.xlu0 %660
        %v664 = vsel %vm412, %v528, %v659
        %v665 = vsel %vm412, %v531, %v661
        %v666 = vpack.c.bf16 %v665, %v664
        %v668 = vunpack.c.l.b16 %v666
        %v669 = vunpack.c.h.b16 %v666
        %v670 = vpack.c.b16 %v668, %v668
        %v671 = vpack.c.b16 %v669, %v669
        %674 = vst [vmem:[%s385] sm:$0xf] %v670
        %675 = vst [vmem:[%s385 + $0x4] sm:$0xf] %v671
        %p676 = scmp.lt.s32.totalorder %s18, 7
        %s677 = scalar_select %p676, %s18, 7
        %p678 = scmp.lt.s32.totalorder %s19, 0
        %s679 = scalar_select %p678, %s19, 0
        %s680 = smul.addr %s677, 2
        %s681 = sadd.s32 %s679, %s680
        %s682 = smul.addr %s681, 4
        %s683 = scalar_lea.vmem %s3, %s682
        // Predicated region
        $region156: #{coop_forward.39} parent=142 // pred_check
          %p684 = pneg %p134
        $region157: #{coop_forward.39} parent=142 // pred_check_branch
          %686 = sbr.rel (%p684) target = $region159
        $region158: #{coop_forward.39} parent=142 // pred_region
          _
        $region159: #{coop_forward.39} parent=142 // pred_fallthru
          _
      $region143: #{coop_forward.39} parent=5 // pred_fallthru
        _
      %p687 = scmp.le.s32.totalorder 2, %s9
      // Predicated region
      $region160: #{coop_forward.39} parent=5 // pred_check
        %p688 = pneg %p687
      $region161: #{coop_forward.39} parent=5 // pred_check_branch
        %690 = sbr.rel (%p688) target = $region163
      $region162: #{coop_forward.39} parent=5 // pred_region
        %s691 = ssub.s32 %s9, 2
        // Predicated region
        $region164: #{coop_forward.39} parent=162 // pred_check
          %p692 = pneg %p140
        $region165: #{coop_forward.39} parent=162 // pred_check_branch
          %694 = sbr.rel (%p692) target = $region167
        $region166: #{coop_forward.39} parent=162 // pred_region
          %p695 = scmp.lt.s32.totalorder %s20, 7
          %s696 = scalar_select %p695, %s20, 7
          %p697 = scmp.lt.s32.totalorder %s21, 0
          %s698 = scalar_select %p697, %s21, 0
          %s699 = smul.addr %s696, 2
          %s700 = sadd.s32 %s698, %s699
          %s701 = smul.addr %s700, 4
          %s702 = scalar_lea.vmem %s3, %s701
        $region167: #{coop_forward.39} parent=162 // pred_fallthru
          _
      $region163: #{coop_forward.39} parent=5 // pred_fallthru
        _
    $region6: #{coop_forward.39} parent=1 // loop_footer
      %s13 = sadd.s32 1, %s9
    $region7: #{coop_forward.39} parent=1 // loop_footer_branch
      %8 = sbr.rel target = $region3
    $region8: #{coop_forward.39} parent=1 // loop_exit
      _

// kernel: coop_forward.38
$region0: #{coop_forward.38}
  #allocation0 [shape = 'u32[]', space=smem, size = 0x4, offset = 0x4, fixed_abs, tag = 'smem constant byte address 0x4 - core index']
  #allocation1 [shape = 'u32[144,128]{1,0:T(1,128)}', space=vmem, size = 0x12000, scoped, tag = 'internal scratch']
  #allocation2 [shape = 'bf16[128,128]{1,0:T(16,128)(2,1)}', space=vmem, size = 0x8000, scoped, tag = 'scratch operand']
  %s0 = inlined_call_operand.vmem [shape: bf16[128,128], index: 0, kind: input, shape index: {}]
  %s1 = inlined_call_operand.vmem [shape: f32[1,128], index: 1, kind: input, shape index: {}]
  %s2 = inlined_call_operand.vmem [shape: f32[1,128], index: 2, kind: input, shape index: {}]
  %s3 = inlined_call_operand.vmem [shape: bf16[128,384], index: 3, kind: input, shape index: {}]
  %s4 = inlined_call_operand.vmem [shape: f32[1,384], index: 4, kind: input, shape index: {}]
  %s5 = inlined_call_operand.vmem [shape: bf16[128,384], index: 5, kind: output, shape index: {}]
  %s6 = sld [smem:[#allocation0]]
  $region34: #{coop_forward.38} parent=0
    _
  %s8 = ssub.s32 1, %s6
  %s9 = scalar_select 0, %s8, %s6
  // Predicated region
  $region2: #{coop_forward.38} parent=0 // pred_check
    _
  $region3: #{coop_forward.38} parent=0 // pred_check_branch
    %11 = sbr.rel (0) target = $region5
  $region4: #{coop_forward.38} parent=0 // pred_region
    _
  $region5: #{coop_forward.38} parent=0 // pred_fallthru
    _
  // Predicated region
  $region6: #{coop_forward.38} parent=0 // pred_check
    _
  $region7: #{coop_forward.38} parent=0 // pred_check_branch
    %13 = sbr.rel (0) target = $region9
  $region8: #{coop_forward.38} parent=0 // pred_region
    _
  $region9: #{coop_forward.38} parent=0 // pred_fallthru
    _
  // Predicated region
  $region10: #{coop_forward.38} parent=0 // pred_check
    _
  $region11: #{coop_forward.38} parent=0 // pred_check_branch
    %15 = sbr.rel (0) target = $region13
  $region12: #{coop_forward.38} parent=0 // pred_region
    _
  $region13: #{coop_forward.38} parent=0 // pred_fallthru
    _
  // Predicated region
  $region14: #{coop_forward.38} parent=0 // pred_check
    _
  $region15: #{coop_forward.38} parent=0 // pred_check_branch
    %17 = sbr.rel (0) target = $region17
  $region16: #{coop_forward.38} parent=0 // pred_region
    _
  $region17: #{coop_forward.38} parent=0 // pred_fallthru
    _
  // Predicated region
  $region18: #{coop_forward.38} parent=0 // pred_check
    _
  $region19: #{coop_forward.38} parent=0 // pred_check_branch
    %19 = sbr.rel (0) target = $region21
  $region20: #{coop_forward.38} parent=0 // pred_region
    _
  $region21: #{coop_forward.38} parent=0 // pred_fallthru
    _
  %p21 = scmp.eq.s32.totalorder 0, 0
  // Predicated region
  $region22: #{coop_forward.38} parent=0 // pred_check
    %p22 = pneg %p21
  $region23: #{coop_forward.38} parent=0 // pred_check_branch
    %24 = sbr.rel (%p22) target = $region25
  $region24: #{coop_forward.38} parent=0 // pred_region
    %v25 = vld [vmem:[%s0] sm:$0xf]
    %v26 = vld [vmem:[%s0 + $0x4] sm:$0xf]
    %v27 = vld [vmem:[%s0 + $0x8] sm:$0xf]
    %v28 = vld [vmem:[%s0 + $0xc] sm:$0xf]
    %v29 = vld [vmem:[%s0 + $0x10] sm:$0xf]
    %v30 = vld [vmem:[%s0 + $0x14] sm:$0xf]
    %v31 = vld [vmem:[%s0 + $0x18] sm:$0xf]
    %v32 = vld [vmem:[%s0 + $0x1c] sm:$0xf]
    %v33 = vld [vmem:[%s0 + $0x20] sm:$0xf]
    %v34 = vld [vmem:[%s0 + $0x24] sm:$0xf]
    %v35 = vld [vmem:[%s0 + $0x28] sm:$0xf]
    %v36 = vld [vmem:[%s0 + $0x2c] sm:$0xf]
    %v37 = vld [vmem:[%s0 + $0x30] sm:$0xf]
    %v38 = vld [vmem:[%s0 + $0x34] sm:$0xf]
    %v39 = vld [vmem:[%s0 + $0x38] sm:$0xf]
    %v40 = vld [vmem:[%s0 + $0x3c] sm:$0xf]
    %v41 = vunpack.c.l.bf16 %v25
    %v42 = vunpack.c.l.bf16 %v26
    %v43 = vunpack.c.l.bf16 %v27
    %v44 = vunpack.c.l.bf16 %v28
    %v45 = vunpack.c.l.bf16 %v29
    %v46 = vunpack.c.l.bf16 %v30
    %v47 = vunpack.c.l.bf16 %v31
    %v48 = vunpack.c.l.bf16 %v32
    %v49 = vunpack.c.l.bf16 %v33
    %v50 = vunpack.c.l.bf16 %v34
    %v51 = vunpack.c.l.bf16 %v35
    %v52 = vunpack.c.l.bf16 %v36
    %v53 = vunpack.c.l.bf16 %v37
    %v54 = vunpack.c.l.bf16 %v38
    %v55 = vunpack.c.l.bf16 %v39
    %v56 = vunpack.c.l.bf16 %v40
    %57 = vadd.xlane.f32.xlu0 %v41
    %v58 = vpop.xlane.xlu0 %57
    %59 = vadd.xlane.f32.xlu0 %v42
    %v60 = vpop.xlane.xlu0 %59
    %61 = vadd.xlane.f32.xlu0 %v43
    %v62 = vpop.xlane.xlu0 %61
    %63 = vadd.xlane.f32.xlu0 %v44
    %v64 = vpop.xlane.xlu0 %63
    %65 = vadd.xlane.f32.xlu0 %v45
    %v66 = vpop.xlane.xlu0 %65
    %67 = vadd.xlane.f32.xlu0 %v46
    %v68 = vpop.xlane.xlu0 %67
    %69 = vadd.xlane.f32.xlu0 %v47
    %v70 = vpop.xlane.xlu0 %69
    %71 = vadd.xlane.f32.xlu0 %v48
    %v72 = vpop.xlane.xlu0 %71
    %73 = vadd.xlane.f32.xlu0 %v49
    %v74 = vpop.xlane.xlu0 %73
    %75 = vadd.xlane.f32.xlu0 %v50
    %v76 = vpop.xlane.xlu0 %75
    %77 = vadd.xlane.f32.xlu0 %v51
    %v78 = vpop.xlane.xlu0 %77
    %79 = vadd.xlane.f32.xlu0 %v52
    %v80 = vpop.xlane.xlu0 %79
    %81 = vadd.xlane.f32.xlu0 %v53
    %v82 = vpop.xlane.xlu0 %81
    %83 = vadd.xlane.f32.xlu0 %v54
    %v84 = vpop.xlane.xlu0 %83
    %85 = vadd.xlane.f32.xlu0 %v55
    %v86 = vpop.xlane.xlu0 %85
    %87 = vadd.xlane.f32.xlu0 %v56
    %v88 = vpop.xlane.xlu0 %87
    %v89 = vrcp.pop 128.0
    %v90 = vmul.f32 %v58, %v89
    %v91 = vmul.f32 %v60, %v89
    %v92 = vmul.f32 %v62, %v89
    %v93 = vmul.f32 %v64, %v89
    %v94 = vmul.f32 %v66, %v89
    %v95 = vmul.f32 %v68, %v89
    %v96 = vmul.f32 %v70, %v89
    %v97 = vmul.f32 %v72, %v89
    %v98 = vmul.f32 %v74, %v89
    %v99 = vmul.f32 %v76, %v89
    %v100 = vmul.f32 %v78, %v89
    %v101 = vmul.f32 %v80, %v89
    %v102 = vmul.f32 %v82, %v89
    %v103 = vmul.f32 %v84, %v89
    %v104 = vmul.f32 %v86, %v89
    %v105 = vmul.f32 %v88, %v89
    %v106 = vsub.f32 %v41, %v90
    %v107 = vsub.f32 %v42, %v91
    %v108 = vsub.f32 %v43, %v92
    %v109 = vsub.f32 %v44, %v93
    %v110 = vsub.f32 %v45, %v94
    %v111 = vsub.f32 %v46, %v95
    %v112 = vsub.f32 %v47, %v96
    %v113 = vsub.f32 %v48, %v97
    %v114 = vsub.f32 %v49, %v98
    %v115 = vsub.f32 %v50, %v99
    %v116 = vsub.f32 %v51, %v100
    %v117 = vsub.f32 %v52, %v101
    %v118 = vsub.f32 %v53, %v102
    %v119 = vsub.f32 %v54, %v103
    %v120 = vsub.f32 %v55, %v104
    %v121 = vsub.f32 %v56, %v105
    %v122 = vmul.f32 %v106, %v106
    %v123 = vmul.f32 %v107, %v107
    %v124 = vmul.f32 %v108, %v108
    %v125 = vmul.f32 %v109, %v109
    %v126 = vmul.f32 %v110, %v110
    %v127 = vmul.f32 %v111, %v111
    %v128 = vmul.f32 %v112, %v112
    %v129 = vmul.f32 %v113, %v113
    %v130 = vmul.f32 %v114, %v114
    %v131 = vmul.f32 %v115, %v115
    %v132 = vmul.f32 %v116, %v116
    %v133 = vmul.f32 %v117, %v117
    %v134 = vmul.f32 %v118, %v118
    %v135 = vmul.f32 %v119, %v119
    %v136 = vmul.f32 %v120, %v120
    %v137 = vmul.f32 %v121, %v121
    %138 = vadd.xlane.f32.xlu0 %v122
    %v139 = vpop.xlane.xlu0 %138
    %140 = vadd.xlane.f32.xlu0 %v123
    %v141 = vpop.xlane.xlu0 %140
    %142 = vadd.xlane.f32.xlu0 %v124
    %v143 = vpop.xlane.xlu0 %142
    %144 = vadd.xlane.f32.xlu0 %v125
    %v145 = vpop.xlane.xlu0 %144
    %146 = vadd.xlane.f32.xlu0 %v126
    %v147 = vpop.xlane.xlu0 %146
    %148 = vadd.xlane.f32.xlu0 %v127
    %v149 = vpop.xlane.xlu0 %148
    %150 = vadd.xlane.f32.xlu0 %v128
    %v151 = vpop.xlane.xlu0 %150
    %152 = vadd.xlane.f32.xlu0 %v129
    %v153 = vpop.xlane.xlu0 %152
    %154 = vadd.xlane.f32.xlu0 %v130
    %v155 = vpop.xlane.xlu0 %154
    %156 = vadd.xlane.f32.xlu0 %v131
    %v157 = vpop.xlane.xlu0 %156
    %158 = vadd.xlane.f32.xlu0 %v132
    %v159 = vpop.xlane.xlu0 %158
    %160 = vadd.xlane.f32.xlu0 %v133
    %v161 = vpop.xlane.xlu0 %160
    %162 = vadd.xlane.f32.xlu0 %v134
    %v163 = vpop.xlane.xlu0 %162
    %164 = vadd.xlane.f32.xlu0 %v135
    %v165 = vpop.xlane.xlu0 %164
    %166 = vadd.xlane.f32.xlu0 %v136
    %v167 = vpop.xlane.xlu0 %166
    %168 = vadd.xlane.f32.xlu0 %v137
    %v169 = vpop.xlane.xlu0 %168
    %v170 = vmul.f32 %v139, %v89
    %v171 = vmul.f32 %v141, %v89
    %v172 = vmul.f32 %v143, %v89
    %v173 = vmul.f32 %v145, %v89
    %v174 = vmul.f32 %v147, %v89
    %v175 = vmul.f32 %v149, %v89
    %v176 = vmul.f32 %v151, %v89
    %v177 = vmul.f32 %v153, %v89
    %v178 = vmul.f32 %v155, %v89
    %v179 = vmul.f32 %v157, %v89
    %v180 = vmul.f32 %v159, %v89
    %v181 = vmul.f32 %v161, %v89
    %v182 = vmul.f32 %v163, %v89
    %v183 = vmul.f32 %v165, %v89
    %v184 = vmul.f32 %v167, %v89
    %v185 = vmul.f32 %v169, %v89
    %v186 = vadd.f32 %v170, 1e-05
    %v187 = vadd.f32 %v171, 1e-05
    %v188 = vadd.f32 %v172, 1e-05
    %v189 = vadd.f32 %v173, 1e-05
    %v190 = vadd.f32 %v174, 1e-05
    %v191 = vadd.f32 %v175, 1e-05
    %v192 = vadd.f32 %v176, 1e-05
    %v193 = vadd.f32 %v177, 1e-05
    %v194 = vadd.f32 %v178, 1e-05
    %v195 = vadd.f32 %v179, 1e-05
    %v196 = vadd.f32 %v180, 1e-05
    %v197 = vadd.f32 %v181, 1e-05
    %v198 = vadd.f32 %v182, 1e-05
    %v199 = vadd.f32 %v183, 1e-05
    %v200 = vadd.f32 %v184, 1e-05
    %v201 = vadd.f32 %v185, 1e-05
    %v202 = vrsqrt.pop %v186
    %v203 = vrsqrt.pop %v187
    %v204 = vrsqrt.pop %v188
    %v205 = vrsqrt.pop %v189
    %v206 = vrsqrt.pop %v190
    %v207 = vrsqrt.pop %v191
    %v208 = vrsqrt.pop %v192
    %v209 = vrsqrt.pop %v193
    %v210 = vrsqrt.pop %v194
    %v211 = vrsqrt.pop %v195
    %v212 = vrsqrt.pop %v196
    %v213 = vrsqrt.pop %v197
    %v214 = vrsqrt.pop %v198
    %v215 = vrsqrt.pop %v199
    %v216 = vrsqrt.pop %v200
    %v217 = vrsqrt.pop %v201
    %v218 = vmul.f32 %v106, %v202
    %v219 = vmul.f32 %v107, %v203
    %v220 = vmul.f32 %v108, %v204
    %v221 = vmul.f32 %v109, %v205
    %v222 = vmul.f32 %v110, %v206
    %v223 = vmul.f32 %v111, %v207
    %v224 = vmul.f32 %v112, %v208
    %v225 = vmul.f32 %v113, %v209
    %v226 = vmul.f32 %v114, %v210
    %v227 = vmul.f32 %v115, %v211
    %v228 = vmul.f32 %v116, %v212
    %v229 = vmul.f32 %v117, %v213
    %v230 = vmul.f32 %v118, %v214
    %v231 = vmul.f32 %v119, %v215
    %v232 = vmul.f32 %v120, %v216
    %v233 = vmul.f32 %v121, %v217
    %v234 = vld [vmem:[%s1] sm:$0x1]
    %v236 = vlaneseq
    %v237 = vshrl.u32 %v236, 7
    %v238 = vsub.s32 0, %v237
    %v239 = vrot.slane %v234, %v238
    %v241 = vmul.f32 %v218, %v239
    %v242 = vmul.f32 %v219, %v239
    %v243 = vmul.f32 %v220, %v239
    %v244 = vmul.f32 %v221, %v239
    %v245 = vmul.f32 %v222, %v239
    %v246 = vmul.f32 %v223, %v239
    %v247 = vmul.f32 %v224, %v239
    %v248 = vmul.f32 %v225, %v239
    %v249 = vmul.f32 %v226, %v239
    %v250 = vmul.f32 %v227, %v239
    %v251 = vmul.f32 %v228, %v239
    %v252 = vmul.f32 %v229, %v239
    %v253 = vmul.f32 %v230, %v239
    %v254 = vmul.f32 %v231, %v239
    %v255 = vmul.f32 %v232, %v239
    %v256 = vmul.f32 %v233, %v239
    %v257 = vld [vmem:[%s2] sm:$0x1]
    %v259 = vlaneseq
    %v260 = vshrl.u32 %v259, 7
    %v261 = vsub.s32 0, %v260
    %v262 = vrot.slane %v257, %v261
    %v264 = vadd.f32 %v241, %v262
    %v265 = vadd.f32 %v242, %v262
    %v266 = vadd.f32 %v243, %v262
    %v267 = vadd.f32 %v244, %v262
    %v268 = vadd.f32 %v245, %v262
    %v269 = vadd.f32 %v246, %v262
    %v270 = vadd.f32 %v247, %v262
    %v271 = vadd.f32 %v248, %v262
    %v272 = vadd.f32 %v249, %v262
    %v273 = vadd.f32 %v250, %v262
    %v274 = vadd.f32 %v251, %v262
    %v275 = vadd.f32 %v252, %v262
    %v276 = vadd.f32 %v253, %v262
    %v277 = vadd.f32 %v254, %v262
    %v278 = vadd.f32 %v255, %v262
    %v279 = vadd.f32 %v256, %v262
    %v280 = vpack.c.bf16 %v265, %v264
    %v281 = vpack.c.bf16 %v267, %v266
    %v282 = vpack.c.bf16 %v269, %v268
    %v283 = vpack.c.bf16 %v271, %v270
    %v284 = vpack.c.bf16 %v273, %v272
    %v285 = vpack.c.bf16 %v275, %v274
    %v286 = vpack.c.bf16 %v277, %v276
    %v287 = vpack.c.bf16 %v279, %v278
    %288 = vst [vmem:[#allocation2] sm:$0xff] %v280
    %289 = vst [vmem:[#allocation2 + $0x8] sm:$0xff] %v281
    %290 = vst [vmem:[#allocation2 + $0x10] sm:$0xff] %v282
    %291 = vst [vmem:[#allocation2 + $0x18] sm:$0xff] %v283
    %292 = vst [vmem:[#allocation2 + $0x20] sm:$0xff] %v284
    %293 = vst [vmem:[#allocation2 + $0x28] sm:$0xff] %v285
    %294 = vst [vmem:[#allocation2 + $0x30] sm:$0xff] %v286
    %295 = vst [vmem:[#allocation2 + $0x38] sm:$0xff] %v287
  $region25: #{coop_forward.38} parent=0 // pred_fallthru
    _
  %v296 = vld [vmem:[#allocation2] sm:$0xff]
  %v297 = vld [vmem:[#allocation2 + $0x8] sm:$0xff]
  %v298 = vld [vmem:[#allocation2 + $0x10] sm:$0xff]
  %v299 = vld [vmem:[#allocation2 + $0x18] sm:$0xff]
  %v300 = vld [vmem:[#allocation2 + $0x20] sm:$0xff]
  %v301 = vld [vmem:[#allocation2 + $0x28] sm:$0xff]
  %v302 = vld [vmem:[#allocation2 + $0x30] sm:$0xff]
  %v303 = vld [vmem:[#allocation2 + $0x38] sm:$0xff]
  %v304 = vld [vmem:[%s3] sm:$0xff]
  %v305 = vld [vmem:[%s3 + $0x8] sm:$0xf]
  %v306 = vld [vmem:[%s3 + $0xc] sm:$0xff]
  %v307 = vld [vmem:[%s3 + $0x14] sm:$0xf]
  %v308 = vld [vmem:[%s3 + $0x18] sm:$0xff]
  %v309 = vld [vmem:[%s3 + $0x20] sm:$0xf]
  %v310 = vld [vmem:[%s3 + $0x24] sm:$0xff]
  %v311 = vld [vmem:[%s3 + $0x2c] sm:$0xf]
  %v312 = vld [vmem:[%s3 + $0x30] sm:$0xff]
  %v313 = vld [vmem:[%s3 + $0x38] sm:$0xf]
  %v314 = vld [vmem:[%s3 + $0x3c] sm:$0xff]
  %v315 = vld [vmem:[%s3 + $0x44] sm:$0xf]
  %v316 = vld [vmem:[%s3 + $0x48] sm:$0xff]
  %v317 = vld [vmem:[%s3 + $0x50] sm:$0xf]
  %v318 = vld [vmem:[%s3 + $0x54] sm:$0xff]
  %v319 = vld [vmem:[%s3 + $0x5c] sm:$0xf]
  %v320 = vld [vmem:[%s3 + $0x60] sm:$0xff]
  %v321 = vld [vmem:[%s3 + $0x68] sm:$0xf]
  %v322 = vld [vmem:[%s3 + $0x6c] sm:$0xff]
  %v323 = vld [vmem:[%s3 + $0x74] sm:$0xf]
  %v324 = vld [vmem:[%s3 + $0x78] sm:$0xff]
  %v325 = vld [vmem:[%s3 + $0x80] sm:$0xf]
  %v326 = vld [vmem:[%s3 + $0x84] sm:$0xff]
  %v327 = vld [vmem:[%s3 + $0x8c] sm:$0xf]
  %v328 = vld [vmem:[%s3 + $0x90] sm:$0xff]
  %v329 = vld [vmem:[%s3 + $0x98] sm:$0xf]
  %v330 = vld [vmem:[%s3 + $0x9c] sm:$0xff]
  %v331 = vld [vmem:[%s3 + $0xa4] sm:$0xf]
  %v332 = vld [vmem:[%s3 + $0xa8] sm:$0xff]
  %v333 = vld [vmem:[%s3 + $0xb0] sm:$0xf]
  %v334 = vld [vmem:[%s3 + $0xb4] sm:$0xff]
  %v335 = vld [vmem:[%s3 + $0xbc] sm:$0xf]
  %v336 = vld [vmem:[%s4] sm:$0x7]
  %v338 = vlaneseq
  %v339 = vshrl.u32 %v338, 7
  %v340 = vsub.s32 0, %v339
  %v341 = vrot.slane %v336, %v340
  %v342 = vlaneseq
  %v343 = vshrl.u32 %v342, 7
  %v344 = vsub.s32 1, %v343
  %v345 = vrot.slane %v336, %v344
  %v346 = vlaneseq
  %v347 = vshrl.u32 %v346, 7
  %v348 = vsub.s32 2, %v347
  %v349 = vrot.slane %v336, %v348
  %v385 = vunpack.c.l.b16 %v304
  %v386 = vunpack.c.h.b16 %v304
  %v387 = vunpack.c.l.b16 %v305
  %v388 = vunpack.c.l.b16 %v306
  %v389 = vunpack.c.h.b16 %v306
  %v390 = vunpack.c.l.b16 %v307
  %v391 = vunpack.c.l.b16 %v308
  %v392 = vunpack.c.h.b16 %v308
  %v393 = vunpack.c.l.b16 %v309
  %v394 = vunpack.c.l.b16 %v310
  %v395 = vunpack.c.h.b16 %v310
  %v396 = vunpack.c.l.b16 %v311
  %v397 = vunpack.c.l.b16 %v312
  %v398 = vunpack.c.h.b16 %v312
  %v399 = vunpack.c.l.b16 %v313
  %v400 = vunpack.c.l.b16 %v314
  %v401 = vunpack.c.h.b16 %v314
  %v402 = vunpack.c.l.b16 %v315
  %v403 = vunpack.c.l.b16 %v316
  %v404 = vunpack.c.h.b16 %v316
  %v405 = vunpack.c.l.b16 %v317
  %v406 = vunpack.c.l.b16 %v318
  %v407 = vunpack.c.h.b16 %v318
  %v408 = vunpack.c.l.b16 %v319
  %v409 = vunpack.c.l.b16 %v320
  %v410 = vunpack.c.h.b16 %v320
  %v411 = vunpack.c.l.b16 %v321
  %v412 = vunpack.c.l.b16 %v322
  %v413 = vunpack.c.h.b16 %v322
  %v414 = vunpack.c.l.b16 %v323
  %v415 = vunpack.c.l.b16 %v324
  %v416 = vunpack.c.h.b16 %v324
  %v417 = vunpack.c.l.b16 %v325
  %v418 = vunpack.c.l.b16 %v326
  %v419 = vunpack.c.h.b16 %v326
  %v420 = vunpack.c.l.b16 %v327
  %v421 = vunpack.c.l.b16 %v328
  %v422 = vunpack.c.h.b16 %v328
  %v423 = vunpack.c.l.b16 %v329
  %v424 = vunpack.c.l.b16 %v330
  %v425 = vunpack.c.h.b16 %v330
  %v426 = vunpack.c.l.b16 %v331
  %v427 = vunpack.c.l.b16 %v332
  %v428 = vunpack.c.h.b16 %v332
  %v429 = vunpack.c.l.b16 %v333
  %v430 = vunpack.c.l.b16 %v334
  %v431 = vunpack.c.h.b16 %v334
  %v432 = vunpack.c.l.b16 %v335
  %v433 = vpack.c.b16 %v388, %v385
  %v434 = vpack.c.b16 %v389, %v386
  %v435 = vpack.c.b16 %v390, %v387
  %v436 = vpack.c.b16 %v394, %v391
  %v437 = vpack.c.b16 %v395, %v392
  %v438 = vpack.c.b16 %v396, %v393
  %v439 = vpack.c.b16 %v400, %v397
  %v440 = vpack.c.b16 %v401, %v398
  %v441 = vpack.c.b16 %v402, %v399
  %v442 = vpack.c.b16 %v406, %v403
  %v443 = vpack.c.b16 %v407, %v404
  %v444 = vpack.c.b16 %v408, %v405
  %v445 = vpack.c.b16 %v412, %v409
  %v446 = vpack.c.b16 %v413, %v410
  %v447 = vpack.c.b16 %v414, %v411
  %v448 = vpack.c.b16 %v418, %v415
  %v449 = vpack.c.b16 %v419, %v416
  %v450 = vpack.c.b16 %v420, %v417
  %v451 = vpack.c.b16 %v424, %v421
  %v452 = vpack.c.b16 %v425, %v422
  %v453 = vpack.c.b16 %v426, %v423
  %v454 = vpack.c.b16 %v430, %v427
  %v455 = vpack.c.b16 %v431, %v428
  %v456 = vpack.c.b16 %v432, %v429
  %481 = vmatprep.subr.bf16.mxu0 %v434
  %482 = vmatpush1.bf16.msra.mxu0 %v433
  %483 = vmatprep.subr.bf16.mxu0 %v437
  %484 = vmatpush1.bf16.msra.mxu0 %v436
  %485 = vmatprep.subr.bf16.mxu0 %v440
  %486 = vmatpush1.bf16.msra.mxu0 %v439
  %487 = vmatprep.subr.bf16.mxu0 %v443
  %488 = vmatpush1.bf16.msra.mxu0 %v442
  %489 = vmatprep.subr.bf16.mxu0 %v446
  %490 = vmatpush1.bf16.msra.mxu0 %v445
  %491 = vmatprep.subr.bf16.mxu0 %v449
  %492 = vmatpush1.bf16.msra.mxu0 %v448
  %493 = vmatprep.subr.bf16.mxu0 %v452
  %494 = vmatpush1.bf16.msra.mxu0 %v451
  %495 = vmatprep.subr.bf16.mxu0 %v455
  %496 = vmatpush1.bf16.msra.mxu0 %v454
  %497 = vmatprep.subr.bf16.mxu0 0
  %498 = vmatpush1.bf16.msra.mxu0 0
  %499 = vmatprep.subr.bf16.mxu0 0
  %500 = vmatpush1.bf16.msra.mxu0 0
  %501 = vmatprep.subr.bf16.mxu0 0
  %502 = vmatpush1.bf16.msra.mxu0 0
  %503 = vmatprep.subr.bf16.mxu0 0
  %504 = vmatpush1.bf16.msra.mxu0 0
  %505 = vmatprep.subr.bf16.mxu0 0
  %506 = vmatpush1.bf16.msra.mxu0 0
  %507 = vmatprep.subr.bf16.mxu0 0
  %508 = vmatpush1.bf16.msra.mxu0 0
  %509 = vmatprep.subr.bf16.mxu0 0
  %510 = vmatpush1.bf16.msra.mxu0 0
  %511 = vmatprep.subr.bf16.mxu0 0
  %512 = vmatpush1.bf16.msra.mxu0 0
  %513 = vmatprep.mubr.bf16.mxu0 0
  %514 = vmatmul.mubr.bf16.gmra.mrb[0].mxu0 %v296
  %v515 = vpop.f32.mrb[0].mxu0
  %v516 = vadd.f32 %v341, %v515
  %v517 = vpop.f32.mrb[0].mxu0
  %v518 = vadd.f32 %v345, %v517
  %v519 = vpop.f32.mrb[0].mxu0
  %v520 = vadd.f32 %v341, %v519
  %v521 = vpop.f32.mrb[0].mxu0
  %v522 = vadd.f32 %v345, %v521
  %523 = vmatprep.mubr.bf16.mxu0 0
  %524 = vmatmul.mubr.bf16.gmra.mrb[0].mxu0 %v297
  %v525 = vpop.f32.mrb[0].mxu0
  %v526 = vadd.f32 %v341, %v525
  %v527 = vpop.f32.mrb[0].mxu0
  %v528 = vadd.f32 %v345, %v527
  %v529 = vpop.f32.mrb[0].mxu0
  %v530 = vadd.f32 %v341, %v529
  %v531 = vpop.f32.mrb[0].mxu0
  %v532 = vadd.f32 %v345, %v531
  %533 = vmatprep.mubr.bf16.mxu0 0
  %534 = vmatmul.mubr.bf16.gmra.mrb[0].mxu0 %v298
  %v535 = vpop.f32.mrb[0].mxu0
  %v536 = vadd.f32 %v341, %v535
  %v537 = vpop.f32.mrb[0].mxu0
  %v538 = vadd.f32 %v345, %v537
  %v539 = vpop.f32.mrb[0].mxu0
  %v540 = vadd.f32 %v341, %v539
  %v541 = vpop.f32.mrb[0].mxu0
  %v542 = vadd.f32 %v345, %v541
  %543 = vmatprep.mubr.bf16.mxu0 0
  %544 = vmatmul.mubr.bf16.gmra.mrb[0].mxu0 %v299
  %v545 = vpop.f32.mrb[0].mxu0
  %v546 = vadd.f32 %v341, %v545
  %v547 = vpop.f32.mrb[0].mxu0
  %v548 = vadd.f32 %v345, %v547
  %v549 = vpop.f32.mrb[0].mxu0
  %v550 = vadd.f32 %v341, %v549
  %v551 = vpop.f32.mrb[0].mxu0
  %v552 = vadd.f32 %v345, %v551
  %553 = vmatprep.mubr.bf16.mxu0 0
  %554 = vmatmul.mubr.bf16.gmra.mrb[0].mxu0 %v300
  %v555 = vpop.f32.mrb[0].mxu0
  %v556 = vadd.f32 %v341, %v555
  %v557 = vpop.f32.mrb[0].mxu0
  %v558 = vadd.f32 %v345, %v557
  %v559 = vpop.f32.mrb[0].mxu0
  %v560 = vadd.f32 %v341, %v559
  %v561 = vpop.f32.mrb[0].mxu0
  %v562 = vadd.f32 %v345, %v561
  %563 = vmatprep.mubr.bf16.mxu0 0
  %564 = vmatmul.mubr.bf16.gmra.mrb[0].mxu0 %v301
  %v565 = vpop.f32.mrb[0].mxu0
  %v566 = vadd.f32 %v341, %v565
  %v567 = vpop.f32.mrb[0].mxu0
  %v568 = vadd.f32 %v345, %v567
  %v569 = vpop.f32.mrb[0].mxu0
  %v570 = vadd.f32 %v341, %v569
  %v571 = vpop.f32.mrb[0].mxu0
  %v572 = vadd.f32 %v345, %v571
  %573 = vmatprep.mubr.bf16.mxu0 0
  %574 = vmatmul.mubr.bf16.gmra.mrb[0].mxu0 %v302
  %v575 = vpop.f32.mrb[0].mxu0
  %v576 = vadd.f32 %v341, %v575
  %v577 = vpop.f32.mrb[0].mxu0
  %v578 = vadd.f32 %v345, %v577
  %v579 = vpop.f32.mrb[0].mxu0
  %v580 = vadd.f32 %v341, %v579
  %v581 = vpop.f32.mrb[0].mxu0
  %v582 = vadd.f32 %v345, %v581
  %583 = vmatprep.mubr.bf16.mxu0 0
  %584 = vmatmul.mubr.bf16.gmra.mrb[0].mxu0 %v303
  %v585 = vpop.f32.mrb[0].mxu0
  %v586 = vadd.f32 %v341, %v585
  %v587 = vpop.f32.mrb[0].mxu0
  %v588 = vadd.f32 %v345, %v587
  %v589 = vpop.f32.mrb[0].mxu0
  %v590 = vadd.f32 %v341, %v589
  %v591 = vpop.f32.mrb[0].mxu0
  %v592 = vadd.f32 %v345, %v591
  %593 = vdwg.mxu0
  %594 = vmatprep.subr.bf16.mxu0 0
  %595 = vmatpush1.bf16.msra.mxu0 %v435
  %596 = vmatprep.subr.bf16.mxu0 0
  %597 = vmatpush1.bf16.msra.mxu0 %v438
  %598 = vmatprep.subr.bf16.mxu0 0
  %599 = vmatpush1.bf16.msra.mxu0 %v441
  %600 = vmatprep.subr.bf16.mxu0 0
  %601 = vmatpush1.bf16.msra.mxu0 %v444
  %602 = vmatprep.subr.bf16.mxu0 0
  %603 = vmatpush1.bf16.msra.mxu0 %v447
  %604 = vmatprep.subr.bf16.mxu0 0
  %605 = vmatpush1.bf16.msra.mxu0 %v450
  %606 = vmatprep.subr.bf16.mxu0 0
  %607 = vmatpush1.bf16.msra.mxu0 %v453
  %608 = vmatprep.subr.bf16.mxu0 0
  %609 = vmatpush1.bf16.msra.mxu0 %v456
  %610 = vmatprep.subr.bf16.mxu0 0
  %611 = vmatpush1.bf16.msra.mxu0 0
  %612 = vmatprep.subr.bf16.mxu0 0
  %613 = vmatpush1.bf16.msra.mxu0 0
  %614 = vmatprep.subr.bf16.mxu0 0
  %615 = vmatpush1.bf16.msra.mxu0 0
  %616 = vmatprep.subr.bf16.mxu0 0
  %617 = vmatpush1.bf16.msra.mxu0 0
  %618 = vmatprep.subr.bf16.mxu0 0
  %619 = vmatpush1.bf16.msra.mxu0 0
  %620 = vmatprep.subr.bf16.mxu0 0
  %621 = vmatpush1.bf16.msra.mxu0 0
  %622 = vmatprep.subr.bf16.mxu0 0
  %623 = vmatpush1.bf16.msra.mxu0 0
  %624 = vmatprep.subr.bf16.mxu0 0
  %625 = vmatpush1.bf16.msra.mxu0 0
  %626 = vmatprep.mubr.bf16.mxu0 0
  %627 = vmatmul.mubr.bf16.gmra.mrb[0].mxu0 %v296
  %v628 = vpop.f32.mrb[0].mxu0
  %v629 = vadd.f32 %v349, %v628
  %v630 = vpop.f32.mrb[0].mxu0
  %v631 = vpop.f32.mrb[0].mxu0
  %v632 = vadd.f32 %v349, %v631
  %v633 = vpop.f32.mrb[0].mxu0
  %634 = vmatprep.mubr.bf16.mxu0 0
  %635 = vmatmul.mubr.bf16.gmra.mrb[0].mxu0 %v297
  %v636 = vpop.f32.mrb[0].mxu0
  %v637 = vadd.f32 %v349, %v636
  %v638 = vpop.f32.mrb[0].mxu0
  %v639 = vpop.f32.mrb[0].mxu0
  %v640 = vadd.f32 %v349, %v639
  %v641 = vpop.f32.mrb[0].mxu0
  %642 = vmatprep.mubr.bf16.mxu0 0
  %643 = vmatmul.mubr.bf16.gmra.mrb[0].mxu0 %v298
  %v644 = vpop.f32.mrb[0].mxu0
  %v645 = vadd.f32 %v349, %v644
  %v646 = vpop.f32.mrb[0].mxu0
  %v647 = vpop.f32.mrb[0].mxu0
  %v648 = vadd.f32 %v349, %v647
  %v649 = vpop.f32.mrb[0].mxu0
  %650 = vmatprep.mubr.bf16.mxu0 0
  %651 = vmatmul.mubr.bf16.gmra.mrb[0].mxu0 %v299
  %v652 = vpop.f32.mrb[0].mxu0
  %v653 = vadd.f32 %v349, %v652
  %v654 = vpop.f32.mrb[0].mxu0
  %v655 = vpop.f32.mrb[0].mxu0
  %v656 = vadd.f32 %v349, %v655
  %v657 = vpop.f32.mrb[0].mxu0
  %658 = vmatprep.mubr.bf16.mxu0 0
  %659 = vmatmul.mubr.bf16.gmra.mrb[0].mxu0 %v300
  %v660 = vpop.f32.mrb[0].mxu0
  %v661 = vadd.f32 %v349, %v660
  %v662 = vpop.f32.mrb[0].mxu0
  %v663 = vpop.f32.mrb[0].mxu0
  %v664 = vadd.f32 %v349, %v663
  %v665 = vpop.f32.mrb[0].mxu0
  %666 = vmatprep.mubr.bf16.mxu0 0
  %667 = vmatmul.mubr.bf16.gmra.mrb[0].mxu0 %v301
  %v668 = vpop.f32.mrb[0].mxu0
  %v669 = vadd.f32 %v349, %v668
  %v670 = vpop.f32.mrb[0].mxu0
  %v671 = vpop.f32.mrb[0].mxu0
  %v672 = vadd.f32 %v349, %v671
  %v673 = vpop.f32.mrb[0].mxu0
  %674 = vmatprep.mubr.bf16.mxu0 0
  %675 = vmatmul.mubr.bf16.gmra.mrb[0].mxu0 %v302
  %v676 = vpop.f32.mrb[0].mxu0
  %v677 = vadd.f32 %v349, %v676
  %v678 = vpop.f32.mrb[0].mxu0
  %v679 = vpop.f32.mrb[0].mxu0
  %v680 = vadd.f32 %v349, %v679
  %v681 = vpop.f32.mrb[0].mxu0
  %682 = vmatprep.mubr.bf16.mxu0 0
  %683 = vmatmul.mubr.bf16.gmra.mrb[0].mxu0 %v303
  %v684 = vpop.f32.mrb[0].mxu0
  %v685 = vadd.f32 %v349, %v684
  %v686 = vpop.f32.mrb[0].mxu0
  %v687 = vpop.f32.mrb[0].mxu0
  %v688 = vadd.f32 %v349, %v687
  %v689 = vpop.f32.mrb[0].mxu0
  %690 = vdwg.mxu0
  %v691 = vpack.c.bf16 %v520, %v516
  %v692 = vpack.c.bf16 %v522, %v518
  %v693 = vpack.c.bf16 %v632, %v629
  %v694 = vpack.c.bf16 %v530, %v526
  %v695 = vpack.c.bf16 %v532, %v528
  %v696 = vpack.c.bf16 %v640, %v637
  %v697 = vpack.c.bf16 %v540, %v536
  %v698 = vpack.c.bf16 %v542, %v538
  %v699 = vpack.c.bf16 %v648, %v645
  %v700 = vpack.c.bf16 %v550, %v546
  %v701 = vpack.c.bf16 %v552, %v548
  %v702 = vpack.c.bf16 %v656, %v653
  %v703 = vpack.c.bf16 %v560, %v556
  %v704 = vpack.c.bf16 %v562, %v558
  %v705 = vpack.c.bf16 %v664, %v661
  %v706 = vpack.c.bf16 %v570, %v566
  %v707 = vpack.c.bf16 %v572, %v568
  %v708 = vpack.c.bf16 %v672, %v669
  %v709 = vpack.c.bf16 %v580, %v576
  %v710 = vpack.c.bf16 %v582, %v578
  %v711 = vpack.c.bf16 %v680, %v677
  %v712 = vpack.c.bf16 %v590, %v586
  %v713 = vpack.c.bf16 %v592, %v588
  %v714 = vpack.c.bf16 %v688, %v685
  %v739 = vunpack.c.l.b16 %v691
  %v740 = vunpack.c.l.b16 %v692
  %v741 = vunpack.c.l.b16 %v693
  %v742 = vunpack.c.h.b16 %v691
  %v743 = vunpack.c.h.b16 %v692
  %v744 = vunpack.c.h.b16 %v693
  %v745 = vunpack.c.l.b16 %v694
  %v746 = vunpack.c.l.b16 %v695
  %v747 = vunpack.c.l.b16 %v696
  %v748 = vunpack.c.h.b16 %v694
  %v749 = vunpack.c.h.b16 %v695
  %v750 = vunpack.c.h.b16 %v696
  %v751 = vunpack.c.l.b16 %v697
  %v752 = vunpack.c.l.b16 %v698
  %v753 = vunpack.c.l.b16 %v699
  %v754 = vunpack.c.h.b16 %v697
  %v755 = vunpack.c.h.b16 %v698
  %v756 = vunpack.c.h.b16 %v699
  %v757 = vunpack.c.l.b16 %v700
  %v758 = vunpack.c.l.b16 %v701
  %v759 = vunpack.c.l.b16 %v702
  %v760 = vunpack.c.h.b16 %v700
  %v761 = vunpack.c.h.b16 %v701
  %v762 = vunpack.c.h.b16 %v702
  %v763 = vunpack.c.l.b16 %v703
  %v764 = vunpack.c.l.b16 %v704
  %v765 = vunpack.c.l.b16 %v705
  %v766 = vunpack.c.h.b16 %v703
  %v767 = vunpack.c.h.b16 %v704
  %v768 = vunpack.c.h.b16 %v705
  %v769 = vunpack.c.l.b16 %v706
  %v770 = vunpack.c.l.b16 %v707
  %v771 = vunpack.c.l.b16 %v708
  %v772 = vunpack.c.h.b16 %v706
  %v773 = vunpack.c.h.b16 %v707
  %v774 = vunpack.c.h.b16 %v708
  %v775 = vunpack.c.l.b16 %v709
  %v776 = vunpack.c.l.b16 %v710
  %v777 = vunpack.c.l.b16 %v711
  %v778 = vunpack.c.h.b16 %v709
  %v779 = vunpack.c.h.b16 %v710
  %v780 = vunpack.c.h.b16 %v711
  %v781 = vunpack.c.l.b16 %v712
  %v782 = vunpack.c.l.b16 %v713
  %v783 = vunpack.c.l.b16 %v714
  %v784 = vunpack.c.h.b16 %v712
  %v785 = vunpack.c.h.b16 %v713
  %v786 = vunpack.c.h.b16 %v714
  %v787 = vpack.c.b16 %v740, %v739
  %v788 = vpack.c.b16 %v741, %v741
  %v789 = vpack.c.b16 %v743, %v742
  %v790 = vpack.c.b16 %v744, %v744
  %v791 = vpack.c.b16 %v746, %v745
  %v792 = vpack.c.b16 %v747, %v747
  %v793 = vpack.c.b16 %v749, %v748
  %v794 = vpack.c.b16 %v750, %v750
  %v795 = vpack.c.b16 %v752, %v751
  %v796 = vpack.c.b16 %v753, %v753
  %v797 = vpack.c.b16 %v755, %v754
  %v798 = vpack.c.b16 %v756, %v756
  %v799 = vpack.c.b16 %v758, %v757
  %v800 = vpack.c.b16 %v759, %v759
  %v801 = vpack.c.b16 %v761, %v760
  %v802 = vpack.c.b16 %v762, %v762
  %v803 = vpack.c.b16 %v764, %v763
  %v804 = vpack.c.b16 %v765, %v765
  %v805 = vpack.c.b16 %v767, %v766
  %v806 = vpack.c.b16 %v768, %v768
  %v807 = vpack.c.b16 %v770, %v769
  %v808 = vpack.c.b16 %v771, %v771
  %v809 = vpack.c.b16 %v773, %v772
  %v810 = vpack.c.b16 %v774, %v774
  %v811 = vpack.c.b16 %v776, %v775
  %v812 = vpack.c.b16 %v777, %v777
  %v813 = vpack.c.b16 %v779, %v778
  %v814 = vpack.c.b16 %v780, %v780
  %v815 = vpack.c.b16 %v782, %v781
  %v816 = vpack.c.b16 %v783, %v783
  %v817 = vpack.c.b16 %v785, %v784
  %v818 = vpack.c.b16 %v786, %v786
  %851 = vst [vmem:[%s5] sm:$0xff] %v787
  %852 = vst [vmem:[%s5 + $0x8] sm:$0xf] %v788
  %853 = vst [vmem:[%s5 + $0xc] sm:$0xff] %v789
  %854 = vst [vmem:[%s5 + $0x14] sm:$0xf] %v790
  %855 = vst [vmem:[%s5 + $0x18] sm:$0xff] %v791
  %856 = vst [vmem:[%s5 + $0x20] sm:$0xf] %v792
  %857 = vst [vmem:[%s5 + $0x24] sm:$0xff] %v793
  %858 = vst [vmem:[%s5 + $0x2c] sm:$0xf] %v794
  %859 = vst [vmem:[%s5 + $0x30] sm:$0xff] %v795
  %860 = vst [vmem:[%s5 + $0x38] sm:$0xf] %v796
  %861 = vst [vmem:[%s5 + $0x3c] sm:$0xff] %v797
  %862 = vst [vmem:[%s5 + $0x44] sm:$0xf] %v798
  %863 = vst [vmem:[%s5 + $0x48] sm:$0xff] %v799
  %864 = vst [vmem:[%s5 + $0x50] sm:$0xf] %v800
  %865 = vst [vmem:[%s5 + $0x54] sm:$0xff] %v801
  %866 = vst [vmem:[%s5 + $0x5c] sm:$0xf] %v802
  %867 = vst [vmem:[%s5 + $0x60] sm:$0xff] %v803
  %868 = vst [vmem:[%s5 + $0x68] sm:$0xf] %v804
  %869 = vst [vmem:[%s5 + $0x6c] sm:$0xff] %v805
  %870 = vst [vmem:[%s5 + $0x74] sm:$0xf] %v806
  %871 = vst [vmem:[%s5 + $0x78] sm:$0xff] %v807
  %872 = vst [vmem:[%s5 + $0x80] sm:$0xf] %v808
  %873 = vst [vmem:[%s5 + $0x84] sm:$0xff] %v809
  %874 = vst [vmem:[%s5 + $0x8c] sm:$0xf] %v810
  %875 = vst [vmem:[%s5 + $0x90] sm:$0xff] %v811
  %876 = vst [vmem:[%s5 + $0x98] sm:$0xf] %v812
  %877 = vst [vmem:[%s5 + $0x9c] sm:$0xff] %v813
  %878 = vst [vmem:[%s5 + $0xa4] sm:$0xf] %v814
  %879 = vst [vmem:[%s5 + $0xa8] sm:$0xff] %v815
  %880 = vst [vmem:[%s5 + $0xb0] sm:$0xf] %v816
  %881 = vst [vmem:[%s5 + $0xb4] sm:$0xff] %v817
  %882 = vst [vmem:[%s5 + $0xbc] sm:$0xf] %v818
  // Predicated region
  $region26: #{coop_forward.38} parent=0 // pred_check
    _
  $region27: #{coop_forward.38} parent=0 // pred_check_branch
    %884 = sbr.rel (0) target = $region29
  $region28: #{coop_forward.38} parent=0 // pred_region
    _
  $region29: #{coop_forward.38} parent=0 // pred_fallthru
    _
  // Predicated region
  $region30: #{coop_forward.38} parent=0 // pred_check
    _
  $region31: #{coop_forward.38} parent=0 // pred_check_branch
    %886 = sbr.rel (0) target = $region33
  $region32: #{coop_forward.38} parent=0 // pred_region
    _
  $region33: #{coop_forward.38} parent=0 // pred_fallthru
    _

// kernel: coop_forward.41
$region0: #{coop_forward.41}
  #allocation0 [shape = 'u32[]', space=smem, size = 0x4, offset = 0x4, fixed_abs, tag = 'smem constant byte address 0x4 - core index']
  #allocation1 [shape = 'u32[144,128]{1,0:T(1,128)}', space=vmem, size = 0x12000, scoped, tag = 'internal scratch']
  #allocation2 [shape = 'bf16[128,128]{1,0:T(16,128)(2,1)}', space=vmem, size = 0x8000, scoped, tag = 'scratch operand']
  %s0 = inlined_call_operand.vmem [shape: bf16[128,128], index: 0, kind: input, shape index: {}]
  %s1 = inlined_call_operand.vmem [shape: f32[1,128], index: 1, kind: input, shape index: {}]
  %s2 = inlined_call_operand.vmem [shape: f32[1,128], index: 2, kind: input, shape index: {}]
  %s3 = inlined_call_operand.vmem [shape: bf16[128,512], index: 3, kind: input, shape index: {}]
  %s4 = inlined_call_operand.vmem [shape: f32[1,512], index: 4, kind: input, shape index: {}]
  %s5 = inlined_call_operand.vmem [shape: bf16[128,512], index: 5, kind: output, shape index: {}]
  %s6 = sld [smem:[#allocation0]]
  $region34: #{coop_forward.41} parent=0
    _
  %s8 = ssub.s32 1, %s6
  %s9 = scalar_select 0, %s8, %s6
  // Predicated region
  $region2: #{coop_forward.41} parent=0 // pred_check
    _
  $region3: #{coop_forward.41} parent=0 // pred_check_branch
    %11 = sbr.rel (0) target = $region5
  $region4: #{coop_forward.41} parent=0 // pred_region
    _
  $region5: #{coop_forward.41} parent=0 // pred_fallthru
    _
  // Predicated region
  $region6: #{coop_forward.41} parent=0 // pred_check
    _
  $region7: #{coop_forward.41} parent=0 // pred_check_branch
    %13 = sbr.rel (0) target = $region9
  $region8: #{coop_forward.41} parent=0 // pred_region
    _
  $region9: #{coop_forward.41} parent=0 // pred_fallthru
    _
  // Predicated region
  $region10: #{coop_forward.41} parent=0 // pred_check
    _
  $region11: #{coop_forward.41} parent=0 // pred_check_branch
    %15 = sbr.rel (0) target = $region13
  $region12: #{coop_forward.41} parent=0 // pred_region
    _
  $region13: #{coop_forward.41} parent=0 // pred_fallthru
    _
  // Predicated region
  $region14: #{coop_forward.41} parent=0 // pred_check
    _
  $region15: #{coop_forward.41} parent=0 // pred_check_branch
    %17 = sbr.rel (0) target = $region17
  $region16: #{coop_forward.41} parent=0 // pred_region
    _
  $region17: #{coop_forward.41} parent=0 // pred_fallthru
    _
  // Predicated region
  $region18: #{coop_forward.41} parent=0 // pred_check
    _
  $region19: #{coop_forward.41} parent=0 // pred_check_branch
    %19 = sbr.rel (0) target = $region21
  $region20: #{coop_forward.41} parent=0 // pred_region
    _
  $region21: #{coop_forward.41} parent=0 // pred_fallthru
    _
  %p21 = scmp.eq.s32.totalorder 0, 0
  // Predicated region
  $region22: #{coop_forward.41} parent=0 // pred_check
    %p22 = pneg %p21
  $region23: #{coop_forward.41} parent=0 // pred_check_branch
    %24 = sbr.rel (%p22) target = $region25
  $region24: #{coop_forward.41} parent=0 // pred_region
    %v25 = vld [vmem:[%s0] sm:$0xf]
    %v26 = vld [vmem:[%s0 + $0x4] sm:$0xf]
    %v27 = vld [vmem:[%s0 + $0x8] sm:$0xf]
    %v28 = vld [vmem:[%s0 + $0xc] sm:$0xf]
    %v29 = vld [vmem:[%s0 + $0x10] sm:$0xf]
    %v30 = vld [vmem:[%s0 + $0x14] sm:$0xf]
    %v31 = vld [vmem:[%s0 + $0x18] sm:$0xf]
    %v32 = vld [vmem:[%s0 + $0x1c] sm:$0xf]
    %v33 = vld [vmem:[%s0 + $0x20] sm:$0xf]
    %v34 = vld [vmem:[%s0 + $0x24] sm:$0xf]
    %v35 = vld [vmem:[%s0 + $0x28] sm:$0xf]
    %v36 = vld [vmem:[%s0 + $0x2c] sm:$0xf]
    %v37 = vld [vmem:[%s0 + $0x30] sm:$0xf]
    %v38 = vld [vmem:[%s0 + $0x34] sm:$0xf]
    %v39 = vld [vmem:[%s0 + $0x38] sm:$0xf]
    %v40 = vld [vmem:[%s0 + $0x3c] sm:$0xf]
    %v41 = vunpack.c.l.bf16 %v25
    %v42 = vunpack.c.l.bf16 %v26
    %v43 = vunpack.c.l.bf16 %v27
    %v44 = vunpack.c.l.bf16 %v28
    %v45 = vunpack.c.l.bf16 %v29
    %v46 = vunpack.c.l.bf16 %v30
    %v47 = vunpack.c.l.bf16 %v31
    %v48 = vunpack.c.l.bf16 %v32
    %v49 = vunpack.c.l.bf16 %v33
    %v50 = vunpack.c.l.bf16 %v34
    %v51 = vunpack.c.l.bf16 %v35
    %v52 = vunpack.c.l.bf16 %v36
    %v53 = vunpack.c.l.bf16 %v37
    %v54 = vunpack.c.l.bf16 %v38
    %v55 = vunpack.c.l.bf16 %v39
    %v56 = vunpack.c.l.bf16 %v40
    %57 = vadd.xlane.f32.xlu0 %v41
    %v58 = vpop.xlane.xlu0 %57
    %59 = vadd.xlane.f32.xlu0 %v42
    %v60 = vpop.xlane.xlu0 %59
    %61 = vadd.xlane.f32.xlu0 %v43
    %v62 = vpop.xlane.xlu0 %61
    %63 = vadd.xlane.f32.xlu0 %v44
    %v64 = vpop.xlane.xlu0 %63
    %65 = vadd.xlane.f32.xlu0 %v45
    %v66 = vpop.xlane.xlu0 %65
    %67 = vadd.xlane.f32.xlu0 %v46
    %v68 = vpop.xlane.xlu0 %67
    %69 = vadd.xlane.f32.xlu0 %v47
    %v70 = vpop.xlane.xlu0 %69
    %71 = vadd.xlane.f32.xlu0 %v48
    %v72 = vpop.xlane.xlu0 %71
    %73 = vadd.xlane.f32.xlu0 %v49
    %v74 = vpop.xlane.xlu0 %73
    %75 = vadd.xlane.f32.xlu0 %v50
    %v76 = vpop.xlane.xlu0 %75
    %77 = vadd.xlane.f32.xlu0 %v51
    %v78 = vpop.xlane.xlu0 %77
    %79 = vadd.xlane.f32.xlu0 %v52
    %v80 = vpop.xlane.xlu0 %79
    %81 = vadd.xlane.f32.xlu0 %v53
    %v82 = vpop.xlane.xlu0 %81
    %83 = vadd.xlane.f32.xlu0 %v54
    %v84 = vpop.xlane.xlu0 %83
    %85 = vadd.xlane.f32.xlu0 %v55
    %v86 = vpop.xlane.xlu0 %85
    %87 = vadd.xlane.f32.xlu0 %v56
    %v88 = vpop.xlane.xlu0 %87
    %v89 = vrcp.pop 128.0
    %v90 = vmul.f32 %v58, %v89
    %v91 = vmul.f32 %v60, %v89
    %v92 = vmul.f32 %v62, %v89
    %v93 = vmul.f32 %v64, %v89
    %v94 = vmul.f32 %v66, %v89
    %v95 = vmul.f32 %v68, %v89
    %v96 = vmul.f32 %v70, %v89
    %v97 = vmul.f32 %v72, %v89
    %v98 = vmul.f32 %v74, %v89
    %v99 = vmul.f32 %v76, %v89
    %v100 = vmul.f32 %v78, %v89
    %v101 = vmul.f32 %v80, %v89
    %v102 = vmul.f32 %v82, %v89
    %v103 = vmul.f32 %v84, %v89
    %v104 = vmul.f32 %v86, %v89
    %v105 = vmul.f32 %v88, %v89
    %v106 = vsub.f32 %v41, %v90
    %v107 = vsub.f32 %v42, %v91
    %v108 = vsub.f32 %v43, %v92
    %v109 = vsub.f32 %v44, %v93
    %v110 = vsub.f32 %v45, %v94
    %v111 = vsub.f32 %v46, %v95
    %v112 = vsub.f32 %v47, %v96
    %v113 = vsub.f32 %v48, %v97
    %v114 = vsub.f32 %v49, %v98
    %v115 = vsub.f32 %v50, %v99
    %v116 = vsub.f32 %v51, %v100
    %v117 = vsub.f32 %v52, %v101
    %v118 = vsub.f32 %v53, %v102
    %v119 = vsub.f32 %v54, %v103
    %v120 = vsub.f32 %v55, %v104
    %v121 = vsub.f32 %v56, %v105
    %v122 = vmul.f32 %v106, %v106
    %v123 = vmul.f32 %v107, %v107
    %v124 = vmul.f32 %v108, %v108
    %v125 = vmul.f32 %v109, %v109
    %v126 = vmul.f32 %v110, %v110
    %v127 = vmul.f32 %v111, %v111
    %v128 = vmul.f32 %v112, %v112
    %v129 = vmul.f32 %v113, %v113
    %v130 = vmul.f32 %v114, %v114
    %v131 = vmul.f32 %v115, %v115
    %v132 = vmul.f32 %v116, %v116
    %v133 = vmul.f32 %v117, %v117
    %v134 = vmul.f32 %v118, %v118
    %v135 = vmul.f32 %v119, %v119
    %v136 = vmul.f32 %v120, %v120
    %v137 = vmul.f32 %v121, %v121
    %138 = vadd.xlane.f32.xlu0 %v122
    %v139 = vpop.xlane.xlu0 %138
    %140 = vadd.xlane.f32.xlu0 %v123
    %v141 = vpop.xlane.xlu0 %140
    %142 = vadd.xlane.f32.xlu0 %v124
    %v143 = vpop.xlane.xlu0 %142
    %144 = vadd.xlane.f32.xlu0 %v125
    %v145 = vpop.xlane.xlu0 %144
    %146 = vadd.xlane.f32.xlu0 %v126
    %v147 = vpop.xlane.xlu0 %146
    %148 = vadd.xlane.f32.xlu0 %v127
    %v149 = vpop.xlane.xlu0 %148
    %150 = vadd.xlane.f32.xlu0 %v128
    %v151 = vpop.xlane.xlu0 %150
    %152 = vadd.xlane.f32.xlu0 %v129
    %v153 = vpop.xlane.xlu0 %152
    %154 = vadd.xlane.f32.xlu0 %v130
    %v155 = vpop.xlane.xlu0 %154
    %156 = vadd.xlane.f32.xlu0 %v131
    %v157 = vpop.xlane.xlu0 %156
    %158 = vadd.xlane.f32.xlu0 %v132
    %v159 = vpop.xlane.xlu0 %158
    %160 = vadd.xlane.f32.xlu0 %v133
    %v161 = vpop.xlane.xlu0 %160
    %162 = vadd.xlane.f32.xlu0 %v134
    %v163 = vpop.xlane.xlu0 %162
    %164 = vadd.xlane.f32.xlu0 %v135
    %v165 = vpop.xlane.xlu0 %164
    %166 = vadd.xlane.f32.xlu0 %v136
    %v167 = vpop.xlane.xlu0 %166
    %168 = vadd.xlane.f32.xlu0 %v137
    %v169 = vpop.xlane.xlu0 %168
    %v170 = vmul.f32 %v139, %v89
    %v171 = vmul.f32 %v141, %v89
    %v172 = vmul.f32 %v143, %v89
    %v173 = vmul.f32 %v145, %v89
    %v174 = vmul.f32 %v147, %v89
    %v175 = vmul.f32 %v149, %v89
    %v176 = vmul.f32 %v151, %v89
    %v177 = vmul.f32 %v153, %v89
    %v178 = vmul.f32 %v155, %v89
    %v179 = vmul.f32 %v157, %v89
    %v180 = vmul.f32 %v159, %v89
    %v181 = vmul.f32 %v161, %v89
    %v182 = vmul.f32 %v163, %v89
    %v183 = vmul.f32 %v165, %v89
    %v184 = vmul.f32 %v167, %v89
    %v185 = vmul.f32 %v169, %v89
    %v186 = vadd.f32 %v170, 1e-05
    %v187 = vadd.f32 %v171, 1e-05
    %v188 = vadd.f32 %v172, 1e-05
    %v189 = vadd.f32 %v173, 1e-05
    %v190 = vadd.f32 %v174, 1e-05
    %v191 = vadd.f32 %v175, 1e-05
    %v192 = vadd.f32 %v176, 1e-05
    %v193 = vadd.f32 %v177, 1e-05
    %v194 = vadd.f32 %v178, 1e-05
    %v195 = vadd.f32 %v179, 1e-05
    %v196 = vadd.f32 %v180, 1e-05
    %v197 = vadd.f32 %v181, 1e-05
    %v198 = vadd.f32 %v182, 1e-05
    %v199 = vadd.f32 %v183, 1e-05
    %v200 = vadd.f32 %v184, 1e-05
    %v201 = vadd.f32 %v185, 1e-05
    %v202 = vrsqrt.pop %v186
    %v203 = vrsqrt.pop %v187
    %v204 = vrsqrt.pop %v188
    %v205 = vrsqrt.pop %v189
    %v206 = vrsqrt.pop %v190
    %v207 = vrsqrt.pop %v191
    %v208 = vrsqrt.pop %v192
    %v209 = vrsqrt.pop %v193
    %v210 = vrsqrt.pop %v194
    %v211 = vrsqrt.pop %v195
    %v212 = vrsqrt.pop %v196
    %v213 = vrsqrt.pop %v197
    %v214 = vrsqrt.pop %v198
    %v215 = vrsqrt.pop %v199
    %v216 = vrsqrt.pop %v200
    %v217 = vrsqrt.pop %v201
    %v218 = vmul.f32 %v106, %v202
    %v219 = vmul.f32 %v107, %v203
    %v220 = vmul.f32 %v108, %v204
    %v221 = vmul.f32 %v109, %v205
    %v222 = vmul.f32 %v110, %v206
    %v223 = vmul.f32 %v111, %v207
    %v224 = vmul.f32 %v112, %v208
    %v225 = vmul.f32 %v113, %v209
    %v226 = vmul.f32 %v114, %v210
    %v227 = vmul.f32 %v115, %v211
    %v228 = vmul.f32 %v116, %v212
    %v229 = vmul.f32 %v117, %v213
    %v230 = vmul.f32 %v118, %v214
    %v231 = vmul.f32 %v119, %v215
    %v232 = vmul.f32 %v120, %v216
    %v233 = vmul.f32 %v121, %v217
    %v234 = vld [vmem:[%s1] sm:$0x1]
    %v236 = vlaneseq
    %v237 = vshrl.u32 %v236, 7
    %v238 = vsub.s32 0, %v237
    %v239 = vrot.slane %v234, %v238
    %v241 = vmul.f32 %v218, %v239
    %v242 = vmul.f32 %v219, %v239
    %v243 = vmul.f32 %v220, %v239
    %v244 = vmul.f32 %v221, %v239
    %v245 = vmul.f32 %v222, %v239
    %v246 = vmul.f32 %v223, %v239
    %v247 = vmul.f32 %v224, %v239
    %v248 = vmul.f32 %v225, %v239
    %v249 = vmul.f32 %v226, %v239
    %v250 = vmul.f32 %v227, %v239
    %v251 = vmul.f32 %v228, %v239
    %v252 = vmul.f32 %v229, %v239
    %v253 = vmul.f32 %v230, %v239
    %v254 = vmul.f32 %v231, %v239
    %v255 = vmul.f32 %v232, %v239
    %v256 = vmul.f32 %v233, %v239
    %v257 = vld [vmem:[%s2] sm:$0x1]
    %v259 = vlaneseq
    %v260 = vshrl.u32 %v259, 7
    %v261 = vsub.s32 0, %v260
    %v262 = vrot.slane %v257, %v261
    %v264 = vadd.f32 %v241, %v262
    %v265 = vadd.f32 %v242, %v262
    %v266 = vadd.f32 %v243, %v262
    %v267 = vadd.f32 %v244, %v262
    %v268 = vadd.f32 %v245, %v262
    %v269 = vadd.f32 %v246, %v262
    %v270 = vadd.f32 %v247, %v262
    %v271 = vadd.f32 %v248, %v262
    %v272 = vadd.f32 %v249, %v262
    %v273 = vadd.f32 %v250, %v262
    %v274 = vadd.f32 %v251, %v262
    %v275 = vadd.f32 %v252, %v262
    %v276 = vadd.f32 %v253, %v262
    %v277 = vadd.f32 %v254, %v262
    %v278 = vadd.f32 %v255, %v262
    %v279 = vadd.f32 %v256, %v262
    %v280 = vpack.c.bf16 %v265, %v264
    %v281 = vpack.c.bf16 %v267, %v266
    %v282 = vpack.c.bf16 %v269, %v268
    %v283 = vpack.c.bf16 %v271, %v270
    %v284 = vpack.c.bf16 %v273, %v272
    %v285 = vpack.c.bf16 %v275, %v274
    %v286 = vpack.c.bf16 %v277, %v276
    %v287 = vpack.c.bf16 %v279, %v278
    %288 = vst [vmem:[#allocation2] sm:$0xff] %v280
    %289 = vst [vmem:[#allocation2 + $0x8] sm:$0xff] %v281
    %290 = vst [vmem:[#allocation2 + $0x10] sm:$0xff] %v282
    %291 = vst [vmem:[#allocation2 + $0x18] sm:$0xff] %v283
    %292 = vst [vmem:[#allocation2 + $0x20] sm:$0xff] %v284
    %293 = vst [vmem:[#allocation2 + $0x28] sm:$0xff] %v285
    %294 = vst [vmem:[#allocation2 + $0x30] sm:$0xff] %v286
    %295 = vst [vmem:[#allocation2 + $0x38] sm:$0xff] %v287
  $region25: #{coop_forward.41} parent=0 // pred_fallthru
    _
  %v296 = vld [vmem:[#allocation2] sm:$0xff]
  %v297 = vld [vmem:[#allocation2 + $0x8] sm:$0xff]
  %v298 = vld [vmem:[#allocation2 + $0x10] sm:$0xff]
  %v299 = vld [vmem:[#allocation2 + $0x18] sm:$0xff]
  %v300 = vld [vmem:[#allocation2 + $0x20] sm:$0xff]
  %v301 = vld [vmem:[#allocation2 + $0x28] sm:$0xff]
  %v302 = vld [vmem:[#allocation2 + $0x30] sm:$0xff]
  %v303 = vld [vmem:[#allocation2 + $0x38] sm:$0xff]
  %v304 = vld [vmem:[%s3] sm:$0xff]
  %v305 = vld [vmem:[%s3 + $0x8] sm:$0xff]
  %v306 = vld [vmem:[%s3 + $0x10] sm:$0xff]
  %v307 = vld [vmem:[%s3 + $0x18] sm:$0xff]
  %v308 = vld [vmem:[%s3 + $0x20] sm:$0xff]
  %v309 = vld [vmem:[%s3 + $0x28] sm:$0xff]
  %v310 = vld [vmem:[%s3 + $0x30] sm:$0xff]
  %v311 = vld [vmem:[%s3 + $0x38] sm:$0xff]
  %v312 = vld [vmem:[%s3 + $0x40] sm:$0xff]
  %v313 = vld [vmem:[%s3 + $0x48] sm:$0xff]
  %v314 = vld [vmem:[%s3 + $0x50] sm:$0xff]
  %v315 = vld [vmem:[%s3 + $0x58] sm:$0xff]
  %v316 = vld [vmem:[%s3 + $0x60] sm:$0xff]
  %v317 = vld [vmem:[%s3 + $0x68] sm:$0xff]
  %v318 = vld [vmem:[%s3 + $0x70] sm:$0xff]
  %v319 = vld [vmem:[%s3 + $0x78] sm:$0xff]
  %v320 = vld [vmem:[%s3 + $0x80] sm:$0xff]
  %v321 = vld [vmem:[%s3 + $0x88] sm:$0xff]
  %v322 = vld [vmem:[%s3 + $0x90] sm:$0xff]
  %v323 = vld [vmem:[%s3 + $0x98] sm:$0xff]
  %v324 = vld [vmem:[%s3 + $0xa0] sm:$0xff]
  %v325 = vld [vmem:[%s3 + $0xa8] sm:$0xff]
  %v326 = vld [vmem:[%s3 + $0xb0] sm:$0xff]
  %v327 = vld [vmem:[%s3 + $0xb8] sm:$0xff]
  %v328 = vld [vmem:[%s3 + $0xc0] sm:$0xff]
  %v329 = vld [vmem:[%s3 + $0xc8] sm:$0xff]
  %v330 = vld [vmem:[%s3 + $0xd0] sm:$0xff]
  %v331 = vld [vmem:[%s3 + $0xd8] sm:$0xff]
  %v332 = vld [vmem:[%s3 + $0xe0] sm:$0xff]
  %v333 = vld [vmem:[%s3 + $0xe8] sm:$0xff]
  %v334 = vld [vmem:[%s3 + $0xf0] sm:$0xff]
  %v335 = vld [vmem:[%s3 + $0xf8] sm:$0xff]
  %v336 = vld [vmem:[%s4] sm:$0xf]
  %v338 = vlaneseq
  %v339 = vshrl.u32 %v338, 7
  %v340 = vsub.s32 0, %v339
  %v341 = vrot.slane %v336, %v340
  %v342 = vlaneseq
  %v343 = vshrl.u32 %v342, 7
  %v344 = vsub.s32 1, %v343
  %v345 = vrot.slane %v336, %v344
  %v346 = vlaneseq
  %v347 = vshrl.u32 %v346, 7
  %v348 = vsub.s32 2, %v347
  %v349 = vrot.slane %v336, %v348
  %v350 = vlaneseq
  %v351 = vshrl.u32 %v350, 7
  %v352 = vsub.s32 3, %v351
  %v353 = vrot.slane %v336, %v352
  %v390 = vunpack.c.l.b16 %v304
  %v391 = vunpack.c.h.b16 %v304
  %v392 = vunpack.c.l.b16 %v305
  %v393 = vunpack.c.h.b16 %v305
  %v394 = vunpack.c.l.b16 %v306
  %v395 = vunpack.c.h.b16 %v306
  %v396 = vunpack.c.l.b16 %v307
  %v397 = vunpack.c.h.b16 %v307
  %v398 = vunpack.c.l.b16 %v308
  %v399 = vunpack.c.h.b16 %v308
  %v400 = vunpack.c.l.b16 %v309
  %v401 = vunpack.c.h.b16 %v309
  %v402 = vunpack.c.l.b16 %v310
  %v403 = vunpack.c.h.b16 %v310
  %v404 = vunpack.c.l.b16 %v311
  %v405 = vunpack.c.h.b16 %v311
  %v406 = vunpack.c.l.b16 %v312
  %v407 = vunpack.c.h.b16 %v312
  %v408 = vunpack.c.l.b16 %v313
  %v409 = vunpack.c.h.b16 %v313
  %v410 = vunpack.c.l.b16 %v314
  %v411 = vunpack.c.h.b16 %v314
  %v412 = vunpack.c.l.b16 %v315
  %v413 = vunpack.c.h.b16 %v315
  %v414 = vunpack.c.l.b16 %v316
  %v415 = vunpack.c.h.b16 %v316
  %v416 = vunpack.c.l.b16 %v317
  %v417 = vunpack.c.h.b16 %v317
  %v418 = vunpack.c.l.b16 %v318
  %v419 = vunpack.c.h.b16 %v318
  %v420 = vunpack.c.l.b16 %v319
  %v421 = vunpack.c.h.b16 %v319
  %v422 = vunpack.c.l.b16 %v320
  %v423 = vunpack.c.h.b16 %v320
  %v424 = vunpack.c.l.b16 %v321
  %v425 = vunpack.c.h.b16 %v321
  %v426 = vunpack.c.l.b16 %v322
  %v427 = vunpack.c.h.b16 %v322
  %v428 = vunpack.c.l.b16 %v323
  %v429 = vunpack.c.h.b16 %v323
  %v430 = vunpack.c.l.b16 %v324
  %v431 = vunpack.c.h.b16 %v324
  %v432 = vunpack.c.l.b16 %v325
  %v433 = vunpack.c.h.b16 %v325
  %v434 = vunpack.c.l.b16 %v326
  %v435 = vunpack.c.h.b16 %v326
  %v436 = vunpack.c.l.b16 %v327
  %v437 = vunpack.c.h.b16 %v327
  %v438 = vunpack.c.l.b16 %v328
  %v439 = vunpack.c.h.b16 %v328
  %v440 = vunpack.c.l.b16 %v329
  %v441 = vunpack.c.h.b16 %v329
  %v442 = vunpack.c.l.b16 %v330
  %v443 = vunpack.c.h.b16 %v330
  %v444 = vunpack.c.l.b16 %v331
  %v445 = vunpack.c.h.b16 %v331
  %v446 = vunpack.c.l.b16 %v332
  %v447 = vunpack.c.h.b16 %v332
  %v448 = vunpack.c.l.b16 %v333
  %v449 = vunpack.c.h.b16 %v333
  %v450 = vunpack.c.l.b16 %v334
  %v451 = vunpack.c.h.b16 %v334
  %v452 = vunpack.c.l.b16 %v335
  %v453 = vunpack.c.h.b16 %v335
  %v454 = vpack.c.b16 %v394, %v390
  %v455 = vpack.c.b16 %v395, %v391
  %v456 = vpack.c.b16 %v396, %v392
  %v457 = vpack.c.b16 %v397, %v393
  %v458 = vpack.c.b16 %v402, %v398
  %v459 = vpack.c.b16 %v403, %v399
  %v460 = vpack.c.b16 %v404, %v400
  %v461 = vpack.c.b16 %v405, %v401
  %v462 = vpack.c.b16 %v410, %v406
  %v463 = vpack.c.b16 %v411, %v407
  %v464 = vpack.c.b16 %v412, %v408
  %v465 = vpack.c.b16 %v413, %v409
  %v466 = vpack.c.b16 %v418, %v414
  %v467 = vpack.c.b16 %v419, %v415
  %v468 = vpack.c.b16 %v420, %v416
  %v469 = vpack.c.b16 %v421, %v417
  %v470 = vpack.c.b16 %v426, %v422
  %v471 = vpack.c.b16 %v427, %v423
  %v472 = vpack.c.b16 %v428, %v424
  %v473 = vpack.c.b16 %v429, %v425
  %v474 = vpack.c.b16 %v434, %v430
  %v475 = vpack.c.b16 %v435, %v431
  %v476 = vpack.c.b16 %v436, %v432
  %v477 = vpack.c.b16 %v437, %v433
  %v478 = vpack.c.b16 %v442, %v438
  %v479 = vpack.c.b16 %v443, %v439
  %v480 = vpack.c.b16 %v444, %v440
  %v481 = vpack.c.b16 %v445, %v441
  %v482 = vpack.c.b16 %v450, %v446
  %v483 = vpack.c.b16 %v451, %v447
  %v484 = vpack.c.b16 %v452, %v448
  %v485 = vpack.c.b16 %v453, %v449
  %518 = vmatprep.subr.bf16.mxu0 %v455
  %519 = vmatpush1.bf16.msra.mxu0 %v454
  %520 = vmatprep.subr.bf16.mxu0 %v459
  %521 = vmatpush1.bf16.msra.mxu0 %v458
  %522 = vmatprep.subr.bf16.mxu0 %v463
  %523 = vmatpush1.bf16.msra.mxu0 %v462
  %524 = vmatprep.subr.bf16.mxu0 %v467
  %525 = vmatpush1.bf16.msra.mxu0 %v466
  %526 = vmatprep.subr.bf16.mxu0 %v471
  %527 = vmatpush1.bf16.msra.mxu0 %v470
  %528 = vmatprep.subr.bf16.mxu0 %v475
  %529 = vmatpush1.bf16.msra.mxu0 %v474
  %530 = vmatprep.subr.bf16.mxu0 %v479
  %531 = vmatpush1.bf16.msra.mxu0 %v478
  %532 = vmatprep.subr.bf16.mxu0 %v483
  %533 = vmatpush1.bf16.msra.mxu0 %v482
  %534 = vmatprep.subr.bf16.mxu0 0
  %535 = vmatpush1.bf16.msra.mxu0 0
  %536 = vmatprep.subr.bf16.mxu0 0
  %537 = vmatpush1.bf16.msra.mxu0 0
  %538 = vmatprep.subr.bf16.mxu0 0
  %539 = vmatpush1.bf16.msra.mxu0 0
  %540 = vmatprep.subr.bf16.mxu0 0
  %541 = vmatpush1.bf16.msra.mxu0 0
  %542 = vmatprep.subr.bf16.mxu0 0
  %543 = vmatpush1.bf16.msra.mxu0 0
  %544 = vmatprep.subr.bf16.mxu0 0
  %545 = vmatpush1.bf16.msra.mxu0 0
  %546 = vmatprep.subr.bf16.mxu0 0
  %547 = vmatpush1.bf16.msra.mxu0 0
  %548 = vmatprep.subr.bf16.mxu0 0
  %549 = vmatpush1.bf16.msra.mxu0 0
  %550 = vmatprep.mubr.bf16.mxu0 0
  %551 = vmatmul.mubr.bf16.gmra.mrb[0].mxu0 %v296
  %v552 = vpop.f32.mrb[0].mxu0
  %v553 = vadd.f32 %v341, %v552
  %v554 = vpop.f32.mrb[0].mxu0
  %v555 = vadd.f32 %v345, %v554
  %v556 = vpop.f32.mrb[0].mxu0
  %v557 = vadd.f32 %v341, %v556
  %v558 = vpop.f32.mrb[0].mxu0
  %v559 = vadd.f32 %v345, %v558
  %560 = vmatprep.mubr.bf16.mxu0 0
  %561 = vmatmul.mubr.bf16.gmra.mrb[0].mxu0 %v297
  %v562 = vpop.f32.mrb[0].mxu0
  %v563 = vadd.f32 %v341, %v562
  %v564 = vpop.f32.mrb[0].mxu0
  %v565 = vadd.f32 %v345, %v564
  %v566 = vpop.f32.mrb[0].mxu0
  %v567 = vadd.f32 %v341, %v566
  %v568 = vpop.f32.mrb[0].mxu0
  %v569 = vadd.f32 %v345, %v568
  %570 = vmatprep.mubr.bf16.mxu0 0
  %571 = vmatmul.mubr.bf16.gmra.mrb[0].mxu0 %v298
  %v572 = vpop.f32.mrb[0].mxu0
  %v573 = vadd.f32 %v341, %v572
  %v574 = vpop.f32.mrb[0].mxu0
  %v575 = vadd.f32 %v345, %v574
  %v576 = vpop.f32.mrb[0].mxu0
  %v577 = vadd.f32 %v341, %v576
  %v578 = vpop.f32.mrb[0].mxu0
  %v579 = vadd.f32 %v345, %v578
  %580 = vmatprep.mubr.bf16.mxu0 0
  %581 = vmatmul.mubr.bf16.gmra.mrb[0].mxu0 %v299
  %v582 = vpop.f32.mrb[0].mxu0
  %v583 = vadd.f32 %v341, %v582
  %v584 = vpop.f32.mrb[0].mxu0
  %v585 = vadd.f32 %v345, %v584
  %v586 = vpop.f32.mrb[0].mxu0
  %v587 = vadd.f32 %v341, %v586
  %v588 = vpop.f32.mrb[0].mxu0
  %v589 = vadd.f32 %v345, %v588
  %590 = vmatprep.mubr.bf16.mxu0 0
  %591 = vmatmul.mubr.bf16.gmra.mrb[0].mxu0 %v300
  %v592 = vpop.f32.mrb[0].mxu0
  %v593 = vadd.f32 %v341, %v592
  %v594 = vpop.f32.mrb[0].mxu0
  %v595 = vadd.f32 %v345, %v594
  %v596 = vpop.f32.mrb[0].mxu0
  %v597 = vadd.f32 %v341, %v596
  %v598 = vpop.f32.mrb[0].mxu0
  %v599 = vadd.f32 %v345, %v598
  %600 = vmatprep.mubr.bf16.mxu0 0
  %601 = vmatmul.mubr.bf16.gmra.mrb[0].mxu0 %v301
  %v602 = vpop.f32.mrb[0].mxu0
  %v603 = vadd.f32 %v341, %v602
  %v604 = vpop.f32.mrb[0].mxu0
  %v605 = vadd.f32 %v345, %v604
  %v606 = vpop.f32.mrb[0].mxu0
  %v607 = vadd.f32 %v341, %v606
  %v608 = vpop.f32.mrb[0].mxu0
  %v609 = vadd.f32 %v345, %v608
  %610 = vmatprep.mubr.bf16.mxu0 0
  %611 = vmatmul.mubr.bf16.gmra.mrb[0].mxu0 %v302
  %v612 = vpop.f32.mrb[0].mxu0
  %v613 = vadd.f32 %v341, %v612
  %v614 = vpop.f32.mrb[0].mxu0
  %v615 = vadd.f32 %v345, %v614
  %v616 = vpop.f32.mrb[0].mxu0
  %v617 = vadd.f32 %v341, %v616
  %v618 = vpop.f32.mrb[0].mxu0
  %v619 = vadd.f32 %v345, %v618
  %620 = vmatprep.mubr.bf16.mxu0 0
  %621 = vmatmul.mubr.bf16.gmra.mrb[0].mxu0 %v303
  %v622 = vpop.f32.mrb[0].mxu0
  %v623 = vadd.f32 %v341, %v622
  %v624 = vpop.f32.mrb[0].mxu0
  %v625 = vadd.f32 %v345, %v624
  %v626 = vpop.f32.mrb[0].mxu0
  %v627 = vadd.f32 %v341, %v626
  %v628 = vpop.f32.mrb[0].mxu0
  %v629 = vadd.f32 %v345, %v628
  %630 = vdwg.mxu0
  %631 = vmatprep.subr.bf16.mxu0 %v457
  %632 = vmatpush1.bf16.msra.mxu0 %v456
  %633 = vmatprep.subr.bf16.mxu0 %v461
  %634 = vmatpush1.bf16.msra.mxu0 %v460
  %635 = vmatprep.subr.bf16.mxu0 %v465
  %636 = vmatpush1.bf16.msra.mxu0 %v464
  %637 = vmatprep.subr.bf16.mxu0 %v469
  %638 = vmatpush1.bf16.msra.mxu0 %v468
  %639 = vmatprep.subr.bf16.mxu0 %v473
  %640 = vmatpush1.bf16.msra.mxu0 %v472
  %641 = vmatprep.subr.bf16.mxu0 %v477
  %642 = vmatpush1.bf16.msra.mxu0 %v476
  %643 = vmatprep.subr.bf16.mxu0 %v481
  %644 = vmatpush1.bf16.msra.mxu0 %v480
  %645 = vmatprep.subr.bf16.mxu0 %v485
  %646 = vmatpush1.bf16.msra.mxu0 %v484
  %647 = vmatprep.subr.bf16.mxu0 0
  %648 = vmatpush1.bf16.msra.mxu0 0
  %649 = vmatprep.subr.bf16.mxu0 0
  %650 = vmatpush1.bf16.msra.mxu0 0
  %651 = vmatprep.subr.bf16.mxu0 0
  %652 = vmatpush1.bf16.msra.mxu0 0
  %653 = vmatprep.subr.bf16.mxu0 0
  %654 = vmatpush1.bf16.msra.mxu0 0
  %655 = vmatprep.subr.bf16.mxu0 0
  %656 = vmatpush1.bf16.msra.mxu0 0
  %657 = vmatprep.subr.bf16.mxu0 0
  %658 = vmatpush1.bf16.msra.mxu0 0
  %659 = vmatprep.subr.bf16.mxu0 0
  %660 = vmatpush1.bf16.msra.mxu0 0
  %661 = vmatprep.subr.bf16.mxu0 0
  %662 = vmatpush1.bf16.msra.mxu0 0
  %663 = vmatprep.mubr.bf16.mxu0 0
  %664 = vmatmul.mubr.bf16.gmra.mrb[0].mxu0 %v296
  %v665 = vpop.f32.mrb[0].mxu0
  %v666 = vadd.f32 %v349, %v665
  %v667 = vpop.f32.mrb[0].mxu0
  %v668 = vadd.f32 %v353, %v667
  %v669 = vpop.f32.mrb[0].mxu0
  %v670 = vadd.f32 %v349, %v669
  %v671 = vpop.f32.mrb[0].mxu0
  %v672 = vadd.f32 %v353, %v671
  %673 = vmatprep.mubr.bf16.mxu0 0
  %674 = vmatmul.mubr.bf16.gmra.mrb[0].mxu0 %v297
  %v675 = vpop.f32.mrb[0].mxu0
  %v676 = vadd.f32 %v349, %v675
  %v677 = vpop.f32.mrb[0].mxu0
  %v678 = vadd.f32 %v353, %v677
  %v679 = vpop.f32.mrb[0].mxu0
  %v680 = vadd.f32 %v349, %v679
  %v681 = vpop.f32.mrb[0].mxu0
  %v682 = vadd.f32 %v353, %v681
  %683 = vmatprep.mubr.bf16.mxu0 0
  %684 = vmatmul.mubr.bf16.gmra.mrb[0].mxu0 %v298
  %v685 = vpop.f32.mrb[0].mxu0
  %v686 = vadd.f32 %v349, %v685
  %v687 = vpop.f32.mrb[0].mxu0
  %v688 = vadd.f32 %v353, %v687
  %v689 = vpop.f32.mrb[0].mxu0
  %v690 = vadd.f32 %v349, %v689
  %v691 = vpop.f32.mrb[0].mxu0
  %v692 = vadd.f32 %v353, %v691
  %693 = vmatprep.mubr.bf16.mxu0 0
  %694 = vmatmul.mubr.bf16.gmra.mrb[0].mxu0 %v299
  %v695 = vpop.f32.mrb[0].mxu0
  %v696 = vadd.f32 %v349, %v695
  %v697 = vpop.f32.mrb[0].mxu0
  %v698 = vadd.f32 %v353, %v697
  %v699 = vpop.f32.mrb[0].mxu0
  %v700 = vadd.f32 %v349, %v699
  %v701 = vpop.f32.mrb[0].mxu0
  %v702 = vadd.f32 %v353, %v701
  %703 = vmatprep.mubr.bf16.mxu0 0
  %704 = vmatmul.mubr.bf16.gmra.mrb[0].mxu0 %v300
  %v705 = vpop.f32.mrb[0].mxu0
  %v706 = vadd.f32 %v349, %v705
  %v707 = vpop.f32.mrb[0].mxu0
  %v708 = vadd.f32 %v353, %v707
  %v709 = vpop.f32.mrb[0].mxu0
  %v710 = vadd.f32 %v349, %v709
  %v711 = vpop.f32.mrb[0].mxu0
  %v712 = vadd.f32 %v353, %v711
  %713 = vmatprep.mubr.bf16.mxu0 0
  %714 = vmatmul.mubr.bf16.gmra.mrb[0].mxu0 %v301
  %v715 = vpop.f32.mrb[0].mxu0
  %v716 = vadd.f32 %v349, %v715
  %v717 = vpop.f32.mrb[0].mxu0
  %v718 = vadd.f32 %v353, %v717
  %v719 = vpop.f32.mrb[0].mxu0
  %v720 = vadd.f32 %v349, %v719
  %v721 = vpop.f32.mrb[0].mxu0
  %v722 = vadd.f32 %v353, %v721
  %723 = vmatprep.mubr.bf16.mxu0 0
  %724 = vmatmul.mubr.bf16.gmra.mrb[0].mxu0 %v302
  %v725 = vpop.f32.mrb[0].mxu0
  %v726 = vadd.f32 %v349, %v725
  %v727 = vpop.f32.mrb[0].mxu0
  %v728 = vadd.f32 %v353, %v727
  %v729 = vpop.f32.mrb[0].mxu0
  %v730 = vadd.f32 %v349, %v729
  %v731 = vpop.f32.mrb[0].mxu0
  %v732 = vadd.f32 %v353, %v731
  %733 = vmatprep.mubr.bf16.mxu0 0
  %734 = vmatmul.mubr.bf16.gmra.mrb[0].mxu0 %v303
  %v735 = vpop.f32.mrb[0].mxu0
  %v736 = vadd.f32 %v349, %v735
  %v737 = vpop.f32.mrb[0].mxu0
  %v738 = vadd.f32 %v353, %v737
  %v739 = vpop.f32.mrb[0].mxu0
  %v740 = vadd.f32 %v349, %v739
  %v741 = vpop.f32.mrb[0].mxu0
  %v742 = vadd.f32 %v353, %v741
  %743 = vdwg.mxu0
  %v744 = vmul.f32 %v553, 1.702
  %v745 = vmul.f32 %v555, 1.702
  %v746 = vmul.f32 %v666, 1.702
  %v747 = vmul.f32 %v668, 1.702
  %v748 = vmul.f32 %v557, 1.702
  %v749 = vmul.f32 %v559, 1.702
  %v750 = vmul.f32 %v670, 1.702
  %v751 = vmul.f32 %v672, 1.702
  %v752 = vmul.f32 %v563, 1.702
  %v753 = vmul.f32 %v565, 1.702
  %v754 = vmul.f32 %v676, 1.702
  %v755 = vmul.f32 %v678, 1.702
  %v756 = vmul.f32 %v567, 1.702
  %v757 = vmul.f32 %v569, 1.702
  %v758 = vmul.f32 %v680, 1.702
  %v759 = vmul.f32 %v682, 1.702
  %v760 = vmul.f32 %v573, 1.702
  %v761 = vmul.f32 %v575, 1.702
  %v762 = vmul.f32 %v686, 1.702
  %v763 = vmul.f32 %v688, 1.702
  %v764 = vmul.f32 %v577, 1.702
  %v765 = vmul.f32 %v579, 1.702
  %v766 = vmul.f32 %v690, 1.702
  %v767 = vmul.f32 %v692, 1.702
  %v768 = vmul.f32 %v583, 1.702
  %v769 = vmul.f32 %v585, 1.702
  %v770 = vmul.f32 %v696, 1.702
  %v771 = vmul.f32 %v698, 1.702
  %v772 = vmul.f32 %v587, 1.702
  %v773 = vmul.f32 %v589, 1.702
  %v774 = vmul.f32 %v700, 1.702
  %v775 = vmul.f32 %v702, 1.702
  %v776 = vmul.f32 %v593, 1.702
  %v777 = vmul.f32 %v595, 1.702
  %v778 = vmul.f32 %v706, 1.702
  %v779 = vmul.f32 %v708, 1.702
  %v780 = vmul.f32 %v597, 1.702
  %v781 = vmul.f32 %v599, 1.702
  %v782 = vmul.f32 %v710, 1.702
  %v783 = vmul.f32 %v712, 1.702
  %v784 = vmul.f32 %v603, 1.702
  %v785 = vmul.f32 %v605, 1.702
  %v786 = vmul.f32 %v716, 1.702
  %v787 = vmul.f32 %v718, 1.702
  %v788 = vmul.f32 %v607, 1.702
  %v789 = vmul.f32 %v609, 1.702
  %v790 = vmul.f32 %v720, 1.702
  %v791 = vmul.f32 %v722, 1.702
  %v792 = vmul.f32 %v613, 1.702
  %v793 = vmul.f32 %v615, 1.702
  %v794 = vmul.f32 %v726, 1.702
  %v795 = vmul.f32 %v728, 1.702
  %v796 = vmul.f32 %v617, 1.702
  %v797 = vmul.f32 %v619, 1.702
  %v798 = vmul.f32 %v730, 1.702
  %v799 = vmul.f32 %v732, 1.702
  %v800 = vmul.f32 %v623, 1.702
  %v801 = vmul.f32 %v625, 1.702
  %v802 = vmul.f32 %v736, 1.702
  %v803 = vmul.f32 %v738, 1.702
  %v804 = vmul.f32 %v627, 1.702
  %v805 = vmul.f32 %v629, 1.702
  %v806 = vmul.f32 %v740, 1.702
  %v807 = vmul.f32 %v742, 1.702
  %v808 = vxor.u32 %v744, 2147483648
  %v809 = vxor.u32 %v745, 2147483648
  %v810 = vxor.u32 %v746, 2147483648
  %v811 = vxor.u32 %v747, 2147483648
  %v812 = vxor.u32 %v748, 2147483648
  %v813 = vxor.u32 %v749, 2147483648
  %v814 = vxor.u32 %v750, 2147483648
  %v815 = vxor.u32 %v751, 2147483648
  %v816 = vxor.u32 %v752, 2147483648
  %v817 = vxor.u32 %v753, 2147483648
  %v818 = vxor.u32 %v754, 2147483648
  %v819 = vxor.u32 %v755, 2147483648
  %v820 = vxor.u32 %v756, 2147483648
  %v821 = vxor.u32 %v757, 2147483648
  %v822 = vxor.u32 %v758, 2147483648
  %v823 = vxor.u32 %v759, 2147483648
  %v824 = vxor.u32 %v760, 2147483648
  %v825 = vxor.u32 %v761, 2147483648
  %v826 = vxor.u32 %v762, 2147483648
  %v827 = vxor.u32 %v763, 2147483648
  %v828 = vxor.u32 %v764, 2147483648
  %v829 = vxor.u32 %v765, 2147483648
  %v830 = vxor.u32 %v766, 2147483648
  %v831 = vxor.u32 %v767, 2147483648
  %v832 = vxor.u32 %v768, 2147483648
  %v833 = vxor.u32 %v769, 2147483648
  %v834 = vxor.u32 %v770, 2147483648
  %v835 = vxor.u32 %v771, 2147483648
  %v836 = vxor.u32 %v772, 2147483648
  %v837 = vxor.u32 %v773, 2147483648
  %v838 = vxor.u32 %v774, 2147483648
  %v839 = vxor.u32 %v775, 2147483648
  %v840 = vxor.u32 %v776, 2147483648
  %v841 = vxor.u32 %v777, 2147483648
  %v842 = vxor.u32 %v778, 2147483648
  %v843 = vxor.u32 %v779, 2147483648
  %v844 = vxor.u32 %v780, 2147483648
  %v845 = vxor.u32 %v781, 2147483648
  %v846 = vxor.u32 %v782, 2147483648
  %v847 = vxor.u32 %v783, 2147483648
  %v848 = vxor.u32 %v784, 2147483648
  %v849 = vxor.u32 %v785, 2147483648
  %v850 = vxor.u32 %v786, 2147483648
  %v851 = vxor.u32 %v787, 2147483648
  %v852 = vxor.u32 %v788, 2147483648
  %v853 = vxor.u32 %v789, 2147483648
  %v854 = vxor.u32 %v790, 2147483648
  %v855 = vxor.u32 %v791, 2147483648
  %v856 = vxor.u32 %v792, 2147483648
  %v857 = vxor.u32 %v793, 2147483648
  %v858 = vxor.u32 %v794, 2147483648
  %v859 = vxor.u32 %v795, 2147483648
  %v860 = vxor.u32 %v796, 2147483648
  %v861 = vxor.u32 %v797, 2147483648
  %v862 = vxor.u32 %v798, 2147483648
  %v863 = vxor.u32 %v799, 2147483648
  %v864 = vxor.u32 %v800, 2147483648
  %v865 = vxor.u32 %v801, 2147483648
  %v866 = vxor.u32 %v802, 2147483648
  %v867 = vxor.u32 %v803, 2147483648
  %v868 = vxor.u32 %v804, 2147483648
  %v869 = vxor.u32 %v805, 2147483648
  %v870 = vxor.u32 %v806, 2147483648
  %v871 = vxor.u32 %v807, 2147483648
  %v872 = vmul.f32 %v808, 1.442695
  %v873 = vpow.pop %v872
  %v874 = vmul.f32 %v809, 1.442695
  %v875 = vpow.pop %v874
  %v876 = vmul.f32 %v810, 1.442695
  %v877 = vpow.pop %v876
  %v878 = vmul.f32 %v811, 1.442695
  %v879 = vpow.pop %v878
  %v880 = vmul.f32 %v812, 1.442695
  %v881 = vpow.pop %v880
  %v882 = vmul.f32 %v813, 1.442695
  %v883 = vpow.pop %v882
  %v884 = vmul.f32 %v814, 1.442695
  %v885 = vpow.pop %v884
  %v886 = vmul.f32 %v815, 1.442695
  %v887 = vpow.pop %v886
  %v888 = vmul.f32 %v816, 1.442695
  %v889 = vpow.pop %v888
  %v890 = vmul.f32 %v817, 1.442695
  %v891 = vpow.pop %v890
  %v892 = vmul.f32 %v818, 1.442695
  %v893 = vpow.pop %v892
  %v894 = vmul.f32 %v819, 1.442695
  %v895 = vpow.pop %v894
  %v896 = vmul.f32 %v820, 1.442695
  %v897 = vpow.pop %v896
  %v898 = vmul.f32 %v821, 1.442695
  %v899 = vpow.pop %v898
  %v900 = vmul.f32 %v822, 1.442695
  %v901 = vpow.pop %v900
  %v902 = vmul.f32 %v823, 1.442695
  %v903 = vpow.pop %v902
  %v904 = vmul.f32 %v824, 1.442695
  %v905 = vpow.pop %v904
  %v906 = vmul.f32 %v825, 1.442695
  %v907 = vpow.pop %v906
  %v908 = vmul.f32 %v826, 1.442695
  %v909 = vpow.pop %v908
  %v910 = vmul.f32 %v827, 1.442695
  %v911 = vpow.pop %v910
  %v912 = vmul.f32 %v828, 1.442695
  %v913 = vpow.pop %v912
  %v914 = vmul.f32 %v829, 1.442695
  %v915 = vpow.pop %v914
  %v916 = vmul.f32 %v830, 1.442695
  %v917 = vpow.pop %v916
  %v918 = vmul.f32 %v831, 1.442695
  %v919 = vpow.pop %v918
  %v920 = vmul.f32 %v832, 1.442695
  %v921 = vpow.pop %v920
  %v922 = vmul.f32 %v833, 1.442695
  %v923 = vpow.pop %v922
  %v924 = vmul.f32 %v834, 1.442695
  %v925 = vpow.pop %v924
  %v926 = vmul.f32 %v835, 1.442695
  %v927 = vpow.pop %v926
  %v928 = vmul.f32 %v836, 1.442695
  %v929 = vpow.pop %v928
  %v930 = vmul.f32 %v837, 1.442695
  %v931 = vpow.pop %v930
  %v932 = vmul.f32 %v838, 1.442695
  %v933 = vpow.pop %v932
  %v934 = vmul.f32 %v839, 1.442695
  %v935 = vpow.pop %v934
  %v936 = vmul.f32 %v840, 1.442695
  %v937 = vpow.pop %v936
  %v938 = vmul.f32 %v841, 1.442695
  %v939 = vpow.pop %v938
  %v940 = vmul.f32 %v842, 1.442695
  %v941 = vpow.pop %v940
  %v942 = vmul.f32 %v843, 1.442695
  %v943 = vpow.pop %v942
  %v944 = vmul.f32 %v844, 1.442695
  %v945 = vpow.pop %v944
  %v946 = vmul.f32 %v845, 1.442695
  %v947 = vpow.pop %v946
  %v948 = vmul.f32 %v846, 1.442695
  %v949 = vpow.pop %v948
  %v950 = vmul.f32 %v847, 1.442695
  %v951 = vpow.pop %v950
  %v952 = vmul.f32 %v848, 1.442695
  %v953 = vpow.pop %v952
  %v954 = vmul.f32 %v849, 1.442695
  %v955 = vpow.pop %v954
  %v956 = vmul.f32 %v850, 1.442695
  %v957 = vpow.pop %v956
  %v958 = vmul.f32 %v851, 1.442695
  %v959 = vpow.pop %v958
  %v960 = vmul.f32 %v852, 1.442695
  %v961 = vpow.pop %v960
  %v962 = vmul.f32 %v853, 1.442695
  %v963 = vpow.pop %v962
  %v964 = vmul.f32 %v854, 1.442695
  %v965 = vpow.pop %v964
  %v966 = vmul.f32 %v855, 1.442695
  %v967 = vpow.pop %v966
  %v968 = vmul.f32 %v856, 1.442695
  %v969 = vpow.pop %v968
  %v970 = vmul.f32 %v857, 1.442695
  %v971 = vpow.pop %v970
  %v972 = vmul.f32 %v858, 1.442695
  %v973 = vpow.pop %v972
  %v974 = vmul.f32 %v859, 1.442695
  %v975 = vpow.pop %v974
  %v976 = vmul.f32 %v860, 1.442695
  %v977 = vpow.pop %v976
  %v978 = vmul.f32 %v861, 1.442695
  %v979 = vpow.pop %v978
  %v980 = vmul.f32 %v862, 1.442695
  %v981 = vpow.pop %v980
  %v982 = vmul.f32 %v863, 1.442695
  %v983 = vpow.pop %v982
  %v984 = vmul.f32 %v864, 1.442695
  %v985 = vpow.pop %v984
  %v986 = vmul.f32 %v865, 1.442695
  %v987 = vpow.pop %v986
  %v988 = vmul.f32 %v866, 1.442695
  %v989 = vpow.pop %v988
  %v990 = vmul.f32 %v867, 1.442695
  %v991 = vpow.pop %v990
  %v992 = vmul.f32 %v868, 1.442695
  %v993 = vpow.pop %v992
  %v994 = vmul.f32 %v869, 1.442695
  %v995 = vpow.pop %v994
  %v996 = vmul.f32 %v870, 1.442695
  %v997 = vpow.pop %v996
  %v998 = vmul.f32 %v871, 1.442695
  %v999 = vpow.pop %v998
  %v1000 = vadd.f32 %v873, 1.0
  %v1001 = vadd.f32 %v875, 1.0
  %v1002 = vadd.f32 %v877, 1.0
  %v1003 = vadd.f32 %v879, 1.0
  %v1004 = vadd.f32 %v881, 1.0
  %v1005 = vadd.f32 %v883, 1.0
  %v1006 = vadd.f32 %v885, 1.0
  %v1007 = vadd.f32 %v887, 1.0
  %v1008 = vadd.f32 %v889, 1.0
  %v1009 = vadd.f32 %v891, 1.0
  %v1010 = vadd.f32 %v893, 1.0
  %v1011 = vadd.f32 %v895, 1.0
  %v1012 = vadd.f32 %v897, 1.0
  %v1013 = vadd.f32 %v899, 1.0
  %v1014 = vadd.f32 %v901, 1.0
  %v1015 = vadd.f32 %v903, 1.0
  %v1016 = vadd.f32 %v905, 1.0
  %v1017 = vadd.f32 %v907, 1.0
  %v1018 = vadd.f32 %v909, 1.0
  %v1019 = vadd.f32 %v911, 1.0
  %v1020 = vadd.f32 %v913, 1.0
  %v1021 = vadd.f32 %v915, 1.0
  %v1022 = vadd.f32 %v917, 1.0
  %v1023 = vadd.f32 %v919, 1.0
  %v1024 = vadd.f32 %v921, 1.0
  %v1025 = vadd.f32 %v923, 1.0
  %v1026 = vadd.f32 %v925, 1.0
  %v1027 = vadd.f32 %v927, 1.0
  %v1028 = vadd.f32 %v929, 1.0
  %v1029 = vadd.f32 %v931, 1.0
  %v1030 = vadd.f32 %v933, 1.0
  %v1031 = vadd.f32 %v935, 1.0
  %v1032 = vadd.f32 %v937, 1.0
  %v1033 = vadd.f32 %v939, 1.0
  %v1034 = vadd.f32 %v941, 1.0
  %v1035 = vadd.f32 %v943, 1.0
  %v1036 = vadd.f32 %v945, 1.0
  %v1037 = vadd.f32 %v947, 1.0
  %v1038 = vadd.f32 %v949, 1.0
  %v1039 = vadd.f32 %v951, 1.0
  %v1040 = vadd.f32 %v953, 1.0
  %v1041 = vadd.f32 %v955, 1.0
  %v1042 = vadd.f32 %v957, 1.0
  %v1043 = vadd.f32 %v959, 1.0
  %v1044 = vadd.f32 %v961, 1.0
  %v1045 = vadd.f32 %v963, 1.0
  %v1046 = vadd.f32 %v965, 1.0
  %v1047 = vadd.f32 %v967, 1.0
  %v1048 = vadd.f32 %v969, 1.0
  %v1049 = vadd.f32 %v971, 1.0
  %v1050 = vadd.f32 %v973, 1.0
  %v1051 = vadd.f32 %v975, 1.0
  %v1052 = vadd.f32 %v977, 1.0
  %v1053 = vadd.f32 %v979, 1.0
  %v1054 = vadd.f32 %v981, 1.0
  %v1055 = vadd.f32 %v983, 1.0
  %v1056 = vadd.f32 %v985, 1.0
  %v1057 = vadd.f32 %v987, 1.0
  %v1058 = vadd.f32 %v989, 1.0
  %v1059 = vadd.f32 %v991, 1.0
  %v1060 = vadd.f32 %v993, 1.0
  %v1061 = vadd.f32 %v995, 1.0
  %v1062 = vadd.f32 %v997, 1.0
  %v1063 = vadd.f32 %v999, 1.0
  %v1064 = vrcp.pop %v1000
  %v1065 = vmul.f32 1.0, %v1064
  %v1066 = vrcp.pop %v1001
  %v1067 = vmul.f32 1.0, %v1066
  %v1068 = vrcp.pop %v1002
  %v1069 = vmul.f32 1.0, %v1068
  %v1070 = vrcp.pop %v1003
  %v1071 = vmul.f32 1.0, %v1070
  %v1072 = vrcp.pop %v1004
  %v1073 = vmul.f32 1.0, %v1072
  %v1074 = vrcp.pop %v1005
  %v1075 = vmul.f32 1.0, %v1074
  %v1076 = vrcp.pop %v1006
  %v1077 = vmul.f32 1.0, %v1076
  %v1078 = vrcp.pop %v1007
  %v1079 = vmul.f32 1.0, %v1078
  %v1080 = vrcp.pop %v1008
  %v1081 = vmul.f32 1.0, %v1080
  %v1082 = vrcp.pop %v1009
  %v1083 = vmul.f32 1.0, %v1082
  %v1084 = vrcp.pop %v1010
  %v1085 = vmul.f32 1.0, %v1084
  %v1086 = vrcp.pop %v1011
  %v1087 = vmul.f32 1.0, %v1086
  %v1088 = vrcp.pop %v1012
  %v1089 = vmul.f32 1.0, %v1088
  %v1090 = vrcp.pop %v1013
  %v1091 = vmul.f32 1.0, %v1090
  %v1092 = vrcp.pop %v1014
  %v1093 = vmul.f32 1.0, %v1092
  %v1094 = vrcp.pop %v1015
  %v1095 = vmul.f32 1.0, %v1094
  %v1096 = vrcp.pop %v1016
  %v1097 = vmul.f32 1.0, %v1096
  %v1098 = vrcp.pop %v1017
  %v1099 = vmul.f32 1.0, %v1098
  %v1100 = vrcp.pop %v1018
  %v1101 = vmul.f32 1.0, %v1100
  %v1102 = vrcp.pop %v1019
  %v1103 = vmul.f32 1.0, %v1102
  %v1104 = vrcp.pop %v1020
  %v1105 = vmul.f32 1.0, %v1104
  %v1106 = vrcp.pop %v1021
  %v1107 = vmul.f32 1.0, %v1106
  %v1108 = vrcp.pop %v1022
  %v1109 = vmul.f32 1.0, %v1108
  %v1110 = vrcp.pop %v1023
  %v1111 = vmul.f32 1.0, %v1110
  %v1112 = vrcp.pop %v1024
  %v1113 = vmul.f32 1.0, %v1112
  %v1114 = vrcp.pop %v1025
  %v1115 = vmul.f32 1.0, %v1114
  %v1116 = vrcp.pop %v1026
  %v1117 = vmul.f32 1.0, %v1116
  %v1118 = vrcp.pop %v1027
  %v1119 = vmul.f32 1.0, %v1118
  %v1120 = vrcp.pop %v1028
  %v1121 = vmul.f32 1.0, %v1120
  %v1122 = vrcp.pop %v1029
  %v1123 = vmul.f32 1.0, %v1122
  %v1124 = vrcp.pop %v1030
  %v1125 = vmul.f32 1.0, %v1124
  %v1126 = vrcp.pop %v1031
  %v1127 = vmul.f32 1.0, %v1126
  %v1128 = vrcp.pop %v1032
  %v1129 = vmul.f32 1.0, %v1128
  %v1130 = vrcp.pop %v1033
  %v1131 = vmul.f32 1.0, %v1130
  %v1132 = vrcp.pop %v1034
  %v1133 = vmul.f32 1.0, %v1132
  %v1134 = vrcp.pop %v1035
  %v1135 = vmul.f32 1.0, %v1134
  %v1136 = vrcp.pop %v1036
  %v1137 = vmul.f32 1.0, %v1136
  %v1138 = vrcp.pop %v1037
  %v1139 = vmul.f32 1.0, %v1138
  %v1140 = vrcp.pop %v1038
  %v1141 = vmul.f32 1.0, %v1140
  %v1142 = vrcp.pop %v1039
  %v1143 = vmul.f32 1.0, %v1142
  %v1144 = vrcp.pop %v1040
  %v1145 = vmul.f32 1.0, %v1144
  %v1146 = vrcp.pop %v1041
  %v1147 = vmul.f32 1.0, %v1146
  %v1148 = vrcp.pop %v1042
  %v1149 = vmul.f32 1.0, %v1148
  %v1150 = vrcp.pop %v1043
  %v1151 = vmul.f32 1.0, %v1150
  %v1152 = vrcp.pop %v1044
  %v1153 = vmul.f32 1.0, %v1152
  %v1154 = vrcp.pop %v1045
  %v1155 = vmul.f32 1.0, %v1154
  %v1156 = vrcp.pop %v1046
  %v1157 = vmul.f32 1.0, %v1156
  %v1158 = vrcp.pop %v1047
  %v1159 = vmul.f32 1.0, %v1158
  %v1160 = vrcp.pop %v1048
  %v1161 = vmul.f32 1.0, %v1160
  %v1162 = vrcp.pop %v1049
  %v1163 = vmul.f32 1.0, %v1162
  %v1164 = vrcp.pop %v1050
  %v1165 = vmul.f32 1.0, %v1164
  %v1166 = vrcp.pop %v1051
  %v1167 = vmul.f32 1.0, %v1166
  %v1168 = vrcp.pop %v1052
  %v1169 = vmul.f32 1.0, %v1168
  %v1170 = vrcp.pop %v1053
  %v1171 = vmul.f32 1.0, %v1170
  %v1172 = vrcp.pop %v1054
  %v1173 = vmul.f32 1.0, %v1172
  %v1174 = vrcp.pop %v1055
  %v1175 = vmul.f32 1.0, %v1174
  %v1176 = vrcp.pop %v1056
  %v1177 = vmul.f32 1.0, %v1176
  %v1178 = vrcp.pop %v1057
  %v1179 = vmul.f32 1.0, %v1178
  %v1180 = vrcp.pop %v1058
  %v1181 = vmul.f32 1.0, %v1180
  %v1182 = vrcp.pop %v1059
  %v1183 = vmul.f32 1.0, %v1182
  %v1184 = vrcp.pop %v1060
  %v1185 = vmul.f32 1.0, %v1184
  %v1186 = vrcp.pop %v1061
  %v1187 = vmul.f32 1.0, %v1186
  %v1188 = vrcp.pop %v1062
  %v1189 = vmul.f32 1.0, %v1188
  %v1190 = vrcp.pop %v1063
  %v1191 = vmul.f32 1.0, %v1190
  %v1192 = vmul.f32 %v553, %v1065
  %v1193 = vmul.f32 %v555, %v1067
  %v1194 = vmul.f32 %v666, %v1069
  %v1195 = vmul.f32 %v668, %v1071
  %v1196 = vmul.f32 %v557, %v1073
  %v1197 = vmul.f32 %v559, %v1075
  %v1198 = vmul.f32 %v670, %v1077
  %v1199 = vmul.f32 %v672, %v1079
  %v1200 = vmul.f32 %v563, %v1081
  %v1201 = vmul.f32 %v565, %v1083
  %v1202 = vmul.f32 %v676, %v1085
  %v1203 = vmul.f32 %v678, %v1087
  %v1204 = vmul.f32 %v567, %v1089
  %v1205 = vmul.f32 %v569, %v1091
  %v1206 = vmul.f32 %v680, %v1093
  %v1207 = vmul.f32 %v682, %v1095
  %v1208 = vmul.f32 %v573, %v1097
  %v1209 = vmul.f32 %v575, %v1099
  %v1210 = vmul.f32 %v686, %v1101
  %v1211 = vmul.f32 %v688, %v1103
  %v1212 = vmul.f32 %v577, %v1105
  %v1213 = vmul.f32 %v579, %v1107
  %v1214 = vmul.f32 %v690, %v1109
  %v1215 = vmul.f32 %v692, %v1111
  %v1216 = vmul.f32 %v583, %v1113
  %v1217 = vmul.f32 %v585, %v1115
  %v1218 = vmul.f32 %v696, %v1117
  %v1219 = vmul.f32 %v698, %v1119
  %v1220 = vmul.f32 %v587, %v1121
  %v1221 = vmul.f32 %v589, %v1123
  %v1222 = vmul.f32 %v700, %v1125
  %v1223 = vmul.f32 %v702, %v1127
  %v1224 = vmul.f32 %v593, %v1129
  %v1225 = vmul.f32 %v595, %v1131
  %v1226 = vmul.f32 %v706, %v1133
  %v1227 = vmul.f32 %v708, %v1135
  %v1228 = vmul.f32 %v597, %v1137
  %v1229 = vmul.f32 %v599, %v1139
  %v1230 = vmul.f32 %v710, %v1141
  %v1231 = vmul.f32 %v712, %v1143
  %v1232 = vmul.f32 %v603, %v1145
  %v1233 = vmul.f32 %v605, %v1147
  %v1234 = vmul.f32 %v716, %v1149
  %v1235 = vmul.f32 %v718, %v1151
  %v1236 = vmul.f32 %v607, %v1153
  %v1237 = vmul.f32 %v609, %v1155
  %v1238 = vmul.f32 %v720, %v1157
  %v1239 = vmul.f32 %v722, %v1159
  %v1240 = vmul.f32 %v613, %v1161
  %v1241 = vmul.f32 %v615, %v1163
  %v1242 = vmul.f32 %v726, %v1165
  %v1243 = vmul.f32 %v728, %v1167
  %v1244 = vmul.f32 %v617, %v1169
  %v1245 = vmul.f32 %v619, %v1171
  %v1246 = vmul.f32 %v730, %v1173
  %v1247 = vmul.f32 %v732, %v1175
  %v1248 = vmul.f32 %v623, %v1177
  %v1249 = vmul.f32 %v625, %v1179
  %v1250 = vmul.f32 %v736, %v1181
  %v1251 = vmul.f32 %v738, %v1183
  %v1252 = vmul.f32 %v627, %v1185
  %v1253 = vmul.f32 %v629, %v1187
  %v1254 = vmul.f32 %v740, %v1189
  %v1255 = vmul.f32 %v742, %v1191
  %v1256 = vpack.c.bf16 %v1196, %v1192
  %v1257 = vpack.c.bf16 %v1197, %v1193
  %v1258 = vpack.c.bf16 %v1198, %v1194
  %v1259 = vpack.c.bf16 %v1199, %v1195
  %v1260 = vpack.c.bf16 %v1204, %v1200
  %v1261 = vpack.c.bf16 %v1205, %v1201
  %v1262 = vpack.c.bf16 %v1206, %v1202
  %v1263 = vpack.c.bf16 %v1207, %v1203
  %v1264 = vpack.c.bf16 %v1212, %v1208
  %v1265 = vpack.c.bf16 %v1213, %v1209
  %v1266 = vpack.c.bf16 %v1214, %v1210
  %v1267 = vpack.c.bf16 %v1215, %v1211
  %v1268 = vpack.c.bf16 %v1220, %v1216
  %v1269 = vpack.c.bf16 %v1221, %v1217
  %v1270 = vpack.c.bf16 %v1222, %v1218
  %v1271 = vpack.c.bf16 %v1223, %v1219
  %v1272 = vpack.c.bf16 %v1228, %v1224
  %v1273 = vpack.c.bf16 %v1229, %v1225
  %v1274 = vpack.c.bf16 %v1230, %v1226
  %v1275 = vpack.c.bf16 %v1231, %v1227
  %v1276 = vpack.c.bf16 %v1236, %v1232
  %v1277 = vpack.c.bf16 %v1237, %v1233
  %v1278 = vpack.c.bf16 %v1238, %v1234
  %v1279 = vpack.c.bf16 %v1239, %v1235
  %v1280 = vpack.c.bf16 %v1244, %v1240
  %v1281 = vpack.c.bf16 %v1245, %v1241
  %v1282 = vpack.c.bf16 %v1246, %v1242
  %v1283 = vpack.c.bf16 %v1247, %v1243
  %v1284 = vpack.c.bf16 %v1252, %v1248
  %v1285 = vpack.c.bf16 %v1253, %v1249
  %v1286 = vpack.c.bf16 %v1254, %v1250
  %v1287 = vpack.c.bf16 %v1255, %v1251
  %v1320 = vunpack.c.l.b16 %v1256
  %v1321 = vunpack.c.l.b16 %v1257
  %v1322 = vunpack.c.l.b16 %v1258
  %v1323 = vunpack.c.l.b16 %v1259
  %v1324 = vunpack.c.h.b16 %v1256
  %v1325 = vunpack.c.h.b16 %v1257
  %v1326 = vunpack.c.h.b16 %v1258
  %v1327 = vunpack.c.h.b16 %v1259
  %v1328 = vunpack.c.l.b16 %v1260
  %v1329 = vunpack.c.l.b16 %v1261
  %v1330 = vunpack.c.l.b16 %v1262
  %v1331 = vunpack.c.l.b16 %v1263
  %v1332 = vunpack.c.h.b16 %v1260
  %v1333 = vunpack.c.h.b16 %v1261
  %v1334 = vunpack.c.h.b16 %v1262
  %v1335 = vunpack.c.h.b16 %v1263
  %v1336 = vunpack.c.l.b16 %v1264
  %v1337 = vunpack.c.l.b16 %v1265
  %v1338 = vunpack.c.l.b16 %v1266
  %v1339 = vunpack.c.l.b16 %v1267
  %v1340 = vunpack.c.h.b16 %v1264
  %v1341 = vunpack.c.h.b16 %v1265
  %v1342 = vunpack.c.h.b16 %v1266
  %v1343 = vunpack.c.h.b16 %v1267
  %v1344 = vunpack.c.l.b16 %v1268
  %v1345 = vunpack.c.l.b16 %v1269
  %v1346 = vunpack.c.l.b16 %v1270
  %v1347 = vunpack.c.l.b16 %v1271
  %v1348 = vunpack.c.h.b16 %v1268
  %v1349 = vunpack.c.h.b16 %v1269
  %v1350 = vunpack.c.h.b16 %v1270
  %v1351 = vunpack.c.h.b16 %v1271
  %v1352 = vunpack.c.l.b16 %v1272
  %v1353 = vunpack.c.l.b16 %v1273
  %v1354 = vunpack.c.l.b16 %v1274
  %v1355 = vunpack.c.l.b16 %v1275
  %v1356 = vunpack.c.h.b16 %v1272
  %v1357 = vunpack.c.h.b16 %v1273
  %v1358 = vunpack.c.h.b16 %v1274
  %v1359 = vunpack.c.h.b16 %v1275
  %v1360 = vunpack.c.l.b16 %v1276
  %v1361 = vunpack.c.l.b16 %v1277
  %v1362 = vunpack.c.l.b16 %v1278
  %v1363 = vunpack.c.l.b16 %v1279
  %v1364 = vunpack.c.h.b16 %v1276
  %v1365 = vunpack.c.h.b16 %v1277
  %v1366 = vunpack.c.h.b16 %v1278
  %v1367 = vunpack.c.h.b16 %v1279
  %v1368 = vunpack.c.l.b16 %v1280
  %v1369 = vunpack.c.l.b16 %v1281
  %v1370 = vunpack.c.l.b16 %v1282
  %v1371 = vunpack.c.l.b16 %v1283
  %v1372 = vunpack.c.h.b16 %v1280
  %v1373 = vunpack.c.h.b16 %v1281
  %v1374 = vunpack.c.h.b16 %v1282
  %v1375 = vunpack.c.h.b16 %v1283
  %v1376 = vunpack.c.l.b16 %v1284
  %v1377 = vunpack.c.l.b16 %v1285
  %v1378 = vunpack.c.l.b16 %v1286
  %v1379 = vunpack.c.l.b16 %v1287
  %v1380 = vunpack.c.h.b16 %v1284
  %v1381 = vunpack.c.h.b16 %v1285
  %v1382 = vunpack.c.h.b16 %v1286
  %v1383 = vunpack.c.h.b16 %v1287
  %v1384 = vpack.c.b16 %v1321, %v1320
  %v1385 = vpack.c.b16 %v1323, %v1322
  %v1386 = vpack.c.b16 %v1325, %v1324
  %v1387 = vpack.c.b16 %v1327, %v1326
  %v1388 = vpack.c.b16 %v1329, %v1328
  %v1389 = vpack.c.b16 %v1331, %v1330
  %v1390 = vpack.c.b16 %v1333, %v1332
  %v1391 = vpack.c.b16 %v1335, %v1334
  %v1392 = vpack.c.b16 %v1337, %v1336
  %v1393 = vpack.c.b16 %v1339, %v1338
  %v1394 = vpack.c.b16 %v1341, %v1340
  %v1395 = vpack.c.b16 %v1343, %v1342
  %v1396 = vpack.c.b16 %v1345, %v1344
  %v1397 = vpack.c.b16 %v1347, %v1346
  %v1398 = vpack.c.b16 %v1349, %v1348
  %v1399 = vpack.c.b16 %v1351, %v1350
  %v1400 = vpack.c.b16 %v1353, %v1352
  %v1401 = vpack.c.b16 %v1355, %v1354
  %v1402 = vpack.c.b16 %v1357, %v1356
  %v1403 = vpack.c.b16 %v1359, %v1358
  %v1404 = vpack.c.b16 %v1361, %v1360
  %v1405 = vpack.c.b16 %v1363, %v1362
  %v1406 = vpack.c.b16 %v1365, %v1364
  %v1407 = vpack.c.b16 %v1367, %v1366
  %v1408 = vpack.c.b16 %v1369, %v1368
  %v1409 = vpack.c.b16 %v1371, %v1370
  %v1410 = vpack.c.b16 %v1373, %v1372
  %v1411 = vpack.c.b16 %v1375, %v1374
  %v1412 = vpack.c.b16 %v1377, %v1376
  %v1413 = vpack.c.b16 %v1379, %v1378
  %v1414 = vpack.c.b16 %v1381, %v1380
  %v1415 = vpack.c.b16 %v1383, %v1382
  %1448 = vst [vmem:[%s5] sm:$0xff] %v1384
  %1449 = vst [vmem:[%s5 + $0x8] sm:$0xff] %v1385
  %1450 = vst [vmem:[%s5 + $0x10] sm:$0xff] %v1386
  %1451 = vst [vmem:[%s5 + $0x18] sm:$0xff] %v1387
  %1452 = vst [vmem:[%s5 + $0x20] sm:$0xff] %v1388
  %1453 = vst [vmem:[%s5 + $0x28] sm:$0xff] %v1389
  %1454 = vst [vmem:[%s5 + $0x30] sm:$0xff] %v1390
  %1455 = vst [vmem:[%s5 + $0x38] sm:$0xff] %v1391
  %1456 = vst [vmem:[%s5 + $0x40] sm:$0xff] %v1392
  %1457 = vst [vmem:[%s5 + $0x48] sm:$0xff] %v1393
  %1458 = vst [vmem:[%s5 + $0x50] sm:$0xff] %v1394
  %1459 = vst [vmem:[%s5 + $0x58] sm:$0xff] %v1395
  %1460 = vst [vmem:[%s5 + $0x60] sm:$0xff] %v1396
  %1461 = vst [vmem:[%s5 + $0x68] sm:$0xff] %v1397
  %1462 = vst [vmem:[%s5 + $0x70] sm:$0xff] %v1398
  %1463 = vst [vmem:[%s5 + $0x78] sm:$0xff] %v1399
  %1464 = vst [vmem:[%s5 + $0x80] sm:$0xff] %v1400
  %1465 = vst [vmem:[%s5 + $0x88] sm:$0xff] %v1401
  %1466 = vst [vmem:[%s5 + $0x90] sm:$0xff] %v1402
  %1467 = vst [vmem:[%s5 + $0x98] sm:$0xff] %v1403
  %1468 = vst [vmem:[%s5 + $0xa0] sm:$0xff] %v1404
  %1469 = vst [vmem:[%s5 + $0xa8] sm:$0xff] %v1405
  %1470 = vst [vmem:[%s5 + $0xb0] sm:$0xff] %v1406
  %1471 = vst [vmem:[%s5 + $0xb8] sm:$0xff] %v1407
  %1472 = vst [vmem:[%s5 + $0xc0] sm:$0xff] %v1408
  %1473 = vst [vmem:[%s5 + $0xc8] sm:$0xff] %v1409
  %1474 = vst [vmem:[%s5 + $0xd0] sm:$0xff] %v1410
  %1475 = vst [vmem:[%s5 + $0xd8] sm:$0xff] %v1411
  %1476 = vst [vmem:[%s5 + $0xe0] sm:$0xff] %v1412
  %1477 = vst [vmem:[%s5 + $0xe8] sm:$0xff] %v1413
  %1478 = vst [vmem:[%s5 + $0xf0] sm:$0xff] %v1414
  %1479 = vst [vmem:[%s5 + $0xf8] sm:$0xff] %v1415
  // Predicated region
  $region26: #{coop_forward.41} parent=0 // pred_check
    _
  $region27: #{coop_forward.41} parent=0 // pred_check_branch
    %1481 = sbr.rel (0) target = $region29
  $region28: #{coop_forward.41} parent=0 // pred_region
    _
  $region29: #{coop_forward.41} parent=0 // pred_fallthru
    _
  // Predicated region
  $region30: #{coop_forward.41} parent=0 // pred_check
    _
  $region31: #{coop_forward.41} parent=0 // pred_check_branch
    %1483 = sbr.rel (0) target = $region33
  $region32: #{coop_forward.41} parent=0 // pred_region
    _
  $region33: #{coop_forward.41} parent=0 // pred_fallthru
    _

// kernel: coop_forward.48
$region0: #{coop_forward.48}
  #allocation0 [shape = 'u32[]', space=smem, size = 0x4, offset = 0x4, fixed_abs, tag = 'smem constant byte address 0x4 - core index']
  #allocation1 [shape = 'u32[144,128]{1,0:T(1,128)}', space=vmem, size = 0x12000, scoped, tag = 'internal scratch']
  #allocation2 [shape = 'bf16[8,128]{1,0:T(8,128)(2,1)}', space=vmem, size = 0x800, scoped, tag = 'scratch operand']
  %s0 = inlined_call_operand.vmem [shape: bf16[8,128], index: 0, kind: input, shape index: {}]
  %s1 = inlined_call_operand.vmem [shape: f32[1,128], index: 1, kind: input, shape index: {}]
  %s2 = inlined_call_operand.vmem [shape: f32[1,128], index: 2, kind: input, shape index: {}]
  %s3 = inlined_call_operand.vmem [shape: bf16[128,128], index: 3, kind: input, shape index: {}]
  %s4 = inlined_call_operand.vmem [shape: bf16[8,128], index: 4, kind: output, shape index: {}]
  %s5 = sld [smem:[#allocation0]]
  $region30: #{coop_forward.48} parent=0
    _
  %s7 = ssub.s32 1, %s5
  %s8 = scalar_select 0, %s7, %s5
  // Predicated region
  $region2: #{coop_forward.48} parent=0 // pred_check
    _
  $region3: #{coop_forward.48} parent=0 // pred_check_branch
    %10 = sbr.rel (0) target = $region5
  $region4: #{coop_forward.48} parent=0 // pred_region
    _
  $region5: #{coop_forward.48} parent=0 // pred_fallthru
    _
  // Predicated region
  $region6: #{coop_forward.48} parent=0 // pred_check
    _
  $region7: #{coop_forward.48} parent=0 // pred_check_branch
    %12 = sbr.rel (0) target = $region9
  $region8: #{coop_forward.48} parent=0 // pred_region
    _
  $region9: #{coop_forward.48} parent=0 // pred_fallthru
    _
  // Predicated region
  $region10: #{coop_forward.48} parent=0 // pred_check
    _
  $region11: #{coop_forward.48} parent=0 // pred_check_branch
    %14 = sbr.rel (0) target = $region13
  $region12: #{coop_forward.48} parent=0 // pred_region
    _
  $region13: #{coop_forward.48} parent=0 // pred_fallthru
    _
  // Predicated region
  $region14: #{coop_forward.48} parent=0 // pred_check
    _
  $region15: #{coop_forward.48} parent=0 // pred_check_branch
    %16 = sbr.rel (0) target = $region17
  $region16: #{coop_forward.48} parent=0 // pred_region
    _
  $region17: #{coop_forward.48} parent=0 // pred_fallthru
    _
  %p18 = scmp.eq.s32.totalorder 0, 0
  // Predicated region
  $region18: #{coop_forward.48} parent=0 // pred_check
    %p19 = pneg %p18
  $region19: #{coop_forward.48} parent=0 // pred_check_branch
    %21 = sbr.rel (%p19) target = $region21
  $region20: #{coop_forward.48} parent=0 // pred_region
    %v22 = vld [vmem:[%s0] sm:$0xf]
    %v23 = vunpack.c.l.bf16 %v22
    %24 = vadd.xlane.f32.xlu0 %v23
    %v25 = vpop.xlane.xlu0 %24
    %v26 = vrcp.pop 128.0
    %v27 = vmul.f32 %v25, %v26
    %v28 = vsub.f32 %v23, %v27
    %v29 = vmul.f32 %v28, %v28
    %30 = vadd.xlane.f32.xlu0 %v29
    %v31 = vpop.xlane.xlu0 %30
    %v32 = vmul.f32 %v31, %v26
    %v33 = vadd.f32 %v32, 1e-05
    %v34 = vrsqrt.pop %v33
    %v35 = vmul.f32 %v28, %v34
    %v36 = vld [vmem:[%s1] sm:$0x1]
    %v38 = vlaneseq
    %v39 = vshrl.u32 %v38, 7
    %v40 = vsub.s32 0, %v39
    %v41 = vrot.slane %v36, %v40
    %v43 = vmul.f32 %v35, %v41
    %v44 = vld [vmem:[%s2] sm:$0x1]
    %v46 = vlaneseq
    %v47 = vshrl.u32 %v46, 7
    %v48 = vsub.s32 0, %v47
    %v49 = vrot.slane %v44, %v48
    %v51 = vadd.f32 %v43, %v49
    %v52 = vpack.c.bf16 %v51, %v51
    %53 = vst [vmem:[#allocation2] sm:$0xf] %v52
  $region21: #{coop_forward.48} parent=0 // pred_fallthru
    _
  %v54 = vld [vmem:[#allocation2] sm:$0xf]
  %v55 = vld [vmem:[%s3] sm:$0xf]
  %v56 = vld [vmem:[%s3 + $0x4] sm:$0xf]
  %v57 = vld [vmem:[%s3 + $0x8] sm:$0xf]
  %v58 = vld [vmem:[%s3 + $0xc] sm:$0xf]
  %v59 = vld [vmem:[%s3 + $0x10] sm:$0xf]
  %v60 = vld [vmem:[%s3 + $0x14] sm:$0xf]
  %v61 = vld [vmem:[%s3 + $0x18] sm:$0xf]
  %v62 = vld [vmem:[%s3 + $0x1c] sm:$0xf]
  %v63 = vld [vmem:[%s3 + $0x20] sm:$0xf]
  %v64 = vld [vmem:[%s3 + $0x24] sm:$0xf]
  %v65 = vld [vmem:[%s3 + $0x28] sm:$0xf]
  %v66 = vld [vmem:[%s3 + $0x2c] sm:$0xf]
  %v67 = vld [vmem:[%s3 + $0x30] sm:$0xf]
  %v68 = vld [vmem:[%s3 + $0x34] sm:$0xf]
  %v69 = vld [vmem:[%s3 + $0x38] sm:$0xf]
  %v70 = vld [vmem:[%s3 + $0x3c] sm:$0xf]
  %v87 = vunpack.c.l.b16 %v55
  %v88 = vunpack.c.l.b16 %v56
  %v89 = vunpack.c.l.b16 %v57
  %v90 = vunpack.c.l.b16 %v58
  %v91 = vunpack.c.l.b16 %v59
  %v92 = vunpack.c.l.b16 %v60
  %v93 = vunpack.c.l.b16 %v61
  %v94 = vunpack.c.l.b16 %v62
  %v95 = vunpack.c.l.b16 %v63
  %v96 = vunpack.c.l.b16 %v64
  %v97 = vunpack.c.l.b16 %v65
  %v98 = vunpack.c.l.b16 %v66
  %v99 = vunpack.c.l.b16 %v67
  %v100 = vunpack.c.l.b16 %v68
  %v101 = vunpack.c.l.b16 %v69
  %v102 = vunpack.c.l.b16 %v70
  %v103 = vpack.c.b16 %v88, %v87
  %v104 = vpack.c.b16 %v90, %v89
  %v105 = vpack.c.b16 %v92, %v91
  %v106 = vpack.c.b16 %v94, %v93
  %v107 = vpack.c.b16 %v96, %v95
  %v108 = vpack.c.b16 %v98, %v97
  %v109 = vpack.c.b16 %v100, %v99
  %v110 = vpack.c.b16 %v102, %v101
  %119 = vmatprep.subr.bf16.mxu0 0
  %120 = vmatpush1.bf16.msra.mxu0 %v103
  %121 = vmatprep.subr.bf16.mxu0 0
  %122 = vmatpush1.bf16.msra.mxu0 %v104
  %123 = vmatprep.subr.bf16.mxu0 0
  %124 = vmatpush1.bf16.msra.mxu0 %v105
  %125 = vmatprep.subr.bf16.mxu0 0
  %126 = vmatpush1.bf16.msra.mxu0 %v106
  %127 = vmatprep.subr.bf16.mxu0 0
  %128 = vmatpush1.bf16.msra.mxu0 %v107
  %129 = vmatprep.subr.bf16.mxu0 0
  %130 = vmatpush1.bf16.msra.mxu0 %v108
  %131 = vmatprep.subr.bf16.mxu0 0
  %132 = vmatpush1.bf16.msra.mxu0 %v109
  %133 = vmatprep.subr.bf16.mxu0 0
  %134 = vmatpush1.bf16.msra.mxu0 %v110
  %135 = vmatprep.subr.bf16.mxu0 0
  %136 = vmatpush1.bf16.msra.mxu0 0
  %137 = vmatprep.subr.bf16.mxu0 0
  %138 = vmatpush1.bf16.msra.mxu0 0
  %139 = vmatprep.subr.bf16.mxu0 0
  %140 = vmatpush1.bf16.msra.mxu0 0
  %141 = vmatprep.subr.bf16.mxu0 0
  %142 = vmatpush1.bf16.msra.mxu0 0
  %143 = vmatprep.subr.bf16.mxu0 0
  %144 = vmatpush1.bf16.msra.mxu0 0
  %145 = vmatprep.subr.bf16.mxu0 0
  %146 = vmatpush1.bf16.msra.mxu0 0
  %147 = vmatprep.subr.bf16.mxu0 0
  %148 = vmatpush1.bf16.msra.mxu0 0
  %149 = vmatprep.subr.bf16.mxu0 0
  %150 = vmatpush1.bf16.msra.mxu0 0
  %151 = vmatprep.mubr.bf16.mxu0 0
  %152 = vmatmul.mubr.bf16.gmra.mrb[0].mxu0 %v54
  %v153 = vpop.f32.mrb[0].mxu0
  %v154 = vadd.f32 0.0, %v153
  %v155 = vpop.f32.mrb[0].mxu0
  %v156 = vpop.f32.mrb[0].mxu0
  %v157 = vpop.f32.mrb[0].mxu0
  %158 = vdwg.mxu0
  %v159 = vpack.c.bf16 %v154, %v154
  %160 = vst [vmem:[%s4] sm:$0xf] %v159
  // Predicated region
  $region22: #{coop_forward.48} parent=0 // pred_check
    _
  $region23: #{coop_forward.48} parent=0 // pred_check_branch
    %162 = sbr.rel (0) target = $region25
  $region24: #{coop_forward.48} parent=0 // pred_region
    _
  $region25: #{coop_forward.48} parent=0 // pred_fallthru
    _
  // Predicated region
  $region26: #{coop_forward.48} parent=0 // pred_check
    _
  $region27: #{coop_forward.48} parent=0 // pred_check_branch
    %164 = sbr.rel (0) target = $region29
  $region28: #{coop_forward.48} parent=0 // pred_region
    _
  $region29: #{coop_forward.48} parent=0 // pred_fallthru
    _

// kernel: coop_forward.42
$region0: #{coop_forward.42}
  #allocation0 [shape = 'u32[]', space=smem, size = 0x4, offset = 0x4, fixed_abs, tag = 'smem constant byte address 0x4 - core index']
  #allocation1 [shape = 'u32[144,128]{1,0:T(1,128)}', space=vmem, size = 0x12000, scoped, tag = 'internal scratch']
  %s0 = inlined_call_operand.vmem [shape: bf16[128,512], index: 0, kind: input, shape index: {}]
  %s1 = inlined_call_operand.vmem [shape: bf16[512,128], index: 1, kind: input, shape index: {}]
  %s2 = inlined_call_operand.vmem [shape: f32[1,128], index: 2, kind: input, shape index: {}]
  %s3 = inlined_call_operand.vmem [shape: bf16[128,128], index: 3, kind: input, shape index: {}]
  %s4 = inlined_call_operand.vmem [shape: bf16[128,128], index: 4, kind: output, shape index: {}]
  %s5 = sld [smem:[#allocation0]]
  $region26: #{coop_forward.42} parent=0
    _
  %s7 = ssub.s32 1, %s5
  %s8 = scalar_select 0, %s7, %s5
  // Predicated region
  $region2: #{coop_forward.42} parent=0 // pred_check
    _
  $region3: #{coop_forward.42} parent=0 // pred_check_branch
    %10 = sbr.rel (0) target = $region5
  $region4: #{coop_forward.42} parent=0 // pred_region
    _
  $region5: #{coop_forward.42} parent=0 // pred_fallthru
    _
  // Predicated region
  $region6: #{coop_forward.42} parent=0 // pred_check
    _
  $region7: #{coop_forward.42} parent=0 // pred_check_branch
    %12 = sbr.rel (0) target = $region9
  $region8: #{coop_forward.42} parent=0 // pred_region
    _
  $region9: #{coop_forward.42} parent=0 // pred_fallthru
    _
  // Predicated region
  $region10: #{coop_forward.42} parent=0 // pred_check
    _
  $region11: #{coop_forward.42} parent=0 // pred_check_branch
    %14 = sbr.rel (0) target = $region13
  $region12: #{coop_forward.42} parent=0 // pred_region
    _
  $region13: #{coop_forward.42} parent=0 // pred_fallthru
    _
  // Predicated region
  $region14: #{coop_forward.42} parent=0 // pred_check
    _
  $region15: #{coop_forward.42} parent=0 // pred_check_branch
    %16 = sbr.rel (0) target = $region17
  $region16: #{coop_forward.42} parent=0 // pred_region
    _
  $region17: #{coop_forward.42} parent=0 // pred_fallthru
    _
  %v18 = vld [vmem:[%s0] sm:$0xff]
  %v19 = vld [vmem:[%s0 + $0x8] sm:$0xff]
  %v20 = vld [vmem:[%s0 + $0x10] sm:$0xff]
  %v21 = vld [vmem:[%s0 + $0x18] sm:$0xff]
  %v22 = vld [vmem:[%s0 + $0x20] sm:$0xff]
  %v23 = vld [vmem:[%s0 + $0x28] sm:$0xff]
  %v24 = vld [vmem:[%s0 + $0x30] sm:$0xff]
  %v25 = vld [vmem:[%s0 + $0x38] sm:$0xff]
  %v26 = vld [vmem:[%s0 + $0x40] sm:$0xff]
  %v27 = vld [vmem:[%s0 + $0x48] sm:$0xff]
  %v28 = vld [vmem:[%s0 + $0x50] sm:$0xff]
  %v29 = vld [vmem:[%s0 + $0x58] sm:$0xff]
  %v30 = vld [vmem:[%s0 + $0x60] sm:$0xff]
  %v31 = vld [vmem:[%s0 + $0x68] sm:$0xff]
  %v32 = vld [vmem:[%s0 + $0x70] sm:$0xff]
  %v33 = vld [vmem:[%s0 + $0x78] sm:$0xff]
  %v34 = vld [vmem:[%s0 + $0x80] sm:$0xff]
  %v35 = vld [vmem:[%s0 + $0x88] sm:$0xff]
  %v36 = vld [vmem:[%s0 + $0x90] sm:$0xff]
  %v37 = vld [vmem:[%s0 + $0x98] sm:$0xff]
  %v38 = vld [vmem:[%s0 + $0xa0] sm:$0xff]
  %v39 = vld [vmem:[%s0 + $0xa8] sm:$0xff]
  %v40 = vld [vmem:[%s0 + $0xb0] sm:$0xff]
  %v41 = vld [vmem:[%s0 + $0xb8] sm:$0xff]
  %v42 = vld [vmem:[%s0 + $0xc0] sm:$0xff]
  %v43 = vld [vmem:[%s0 + $0xc8] sm:$0xff]
  %v44 = vld [vmem:[%s0 + $0xd0] sm:$0xff]
  %v45 = vld [vmem:[%s0 + $0xd8] sm:$0xff]
  %v46 = vld [vmem:[%s0 + $0xe0] sm:$0xff]
  %v47 = vld [vmem:[%s0 + $0xe8] sm:$0xff]
  %v48 = vld [vmem:[%s0 + $0xf0] sm:$0xff]
  %v49 = vld [vmem:[%s0 + $0xf8] sm:$0xff]
  %v50 = vld [vmem:[%s1] sm:$0xf]
  %v51 = vld [vmem:[%s1 + $0x4] sm:$0xf]
  %v52 = vld [vmem:[%s1 + $0x8] sm:$0xf]
  %v53 = vld [vmem:[%s1 + $0xc] sm:$0xf]
  %v54 = vld [vmem:[%s1 + $0x10] sm:$0xf]
  %v55 = vld [vmem:[%s1 + $0x14] sm:$0xf]
  %v56 = vld [vmem:[%s1 + $0x18] sm:$0xf]
  %v57 = vld [vmem:[%s1 + $0x1c] sm:$0xf]
  %v58 = vld [vmem:[%s1 + $0x20] sm:$0xf]
  %v59 = vld [vmem:[%s1 + $0x24] sm:$0xf]
  %v60 = vld [vmem:[%s1 + $0x28] sm:$0xf]
  %v61 = vld [vmem:[%s1 + $0x2c] sm:$0xf]
  %v62 = vld [vmem:[%s1 + $0x30] sm:$0xf]
  %v63 = vld [vmem:[%s1 + $0x34] sm:$0xf]
  %v64 = vld [vmem:[%s1 + $0x38] sm:$0xf]
  %v65 = vld [vmem:[%s1 + $0x3c] sm:$0xf]
  %v66 = vld [vmem:[%s1 + $0x40] sm:$0xf]
  %v67 = vld [vmem:[%s1 + $0x44] sm:$0xf]
  %v68 = vld [vmem:[%s1 + $0x48] sm:$0xf]
  %v69 = vld [vmem:[%s1 + $0x4c] sm:$0xf]
  %v70 = vld [vmem:[%s1 + $0x50] sm:$0xf]
  %v71 = vld [vmem:[%s1 + $0x54] sm:$0xf]
  %v72 = vld [vmem:[%s1 + $0x58] sm:$0xf]
  %v73 = vld [vmem:[%s1 + $0x5c] sm:$0xf]
  %v74 = vld [vmem:[%s1 + $0x60] sm:$0xf]
  %v75 = vld [vmem:[%s1 + $0x64] sm:$0xf]
  %v76 = vld [vmem:[%s1 + $0x68] sm:$0xf]
  %v77 = vld [vmem:[%s1 + $0x6c] sm:$0xf]
  %v78 = vld [vmem:[%s1 + $0x70] sm:$0xf]
  %v79 = vld [vmem:[%s1 + $0x74] sm:$0xf]
  %v80 = vld [vmem:[%s1 + $0x78] sm:$0xf]
  %v81 = vld [vmem:[%s1 + $0x7c] sm:$0xf]
  %v82 = vld [vmem:[%s1 + $0x80] sm:$0xf]
  %v83 = vld [vmem:[%s1 + $0x84] sm:$0xf]
  %v84 = vld [vmem:[%s1 + $0x88] sm:$0xf]
  %v85 = vld [vmem:[%s1 + $0x8c] sm:$0xf]
  %v86 = vld [vmem:[%s1 + $0x90] sm:$0xf]
  %v87 = vld [vmem:[%s1 + $0x94] sm:$0xf]
  %v88 = vld [vmem:[%s1 + $0x98] sm:$0xf]
  %v89 = vld [vmem:[%s1 + $0x9c] sm:$0xf]
  %v90 = vld [vmem:[%s1 + $0xa0] sm:$0xf]
  %v91 = vld [vmem:[%s1 + $0xa4] sm:$0xf]
  %v92 = vld [vmem:[%s1 + $0xa8] sm:$0xf]
  %v93 = vld [vmem:[%s1 + $0xac] sm:$0xf]
  %v94 = vld [vmem:[%s1 + $0xb0] sm:$0xf]
  %v95 = vld [vmem:[%s1 + $0xb4] sm:$0xf]
  %v96 = vld [vmem:[%s1 + $0xb8] sm:$0xf]
  %v97 = vld [vmem:[%s1 + $0xbc] sm:$0xf]
  %v98 = vld [vmem:[%s1 + $0xc0] sm:$0xf]
  %v99 = vld [vmem:[%s1 + $0xc4] sm:$0xf]
  %v100 = vld [vmem:[%s1 + $0xc8] sm:$0xf]
  %v101 = vld [vmem:[%s1 + $0xcc] sm:$0xf]
  %v102 = vld [vmem:[%s1 + $0xd0] sm:$0xf]
  %v103 = vld [vmem:[%s1 + $0xd4] sm:$0xf]
  %v104 = vld [vmem:[%s1 + $0xd8] sm:$0xf]
  %v105 = vld [vmem:[%s1 + $0xdc] sm:$0xf]
  %v106 = vld [vmem:[%s1 + $0xe0] sm:$0xf]
  %v107 = vld [vmem:[%s1 + $0xe4] sm:$0xf]
  %v108 = vld [vmem:[%s1 + $0xe8] sm:$0xf]
  %v109 = vld [vmem:[%s1 + $0xec] sm:$0xf]
  %v110 = vld [vmem:[%s1 + $0xf0] sm:$0xf]
  %v111 = vld [vmem:[%s1 + $0xf4] sm:$0xf]
  %v112 = vld [vmem:[%s1 + $0xf8] sm:$0xf]
  %v113 = vld [vmem:[%s1 + $0xfc] sm:$0xf]
  %v114 = vld [vmem:[%s2] sm:$0x1]
  %v116 = vlaneseq
  %v117 = vshrl.u32 %v116, 7
  %v118 = vsub.s32 0, %v117
  %v119 = vrot.slane %v114, %v118
  %v153 = vunpack.c.l.b16 %v18
  %v154 = vunpack.c.h.b16 %v18
  %v155 = vunpack.c.l.b16 %v19
  %v156 = vunpack.c.h.b16 %v19
  %v157 = vunpack.c.l.b16 %v20
  %v158 = vunpack.c.h.b16 %v20
  %v159 = vunpack.c.l.b16 %v21
  %v160 = vunpack.c.h.b16 %v21
  %v161 = vunpack.c.l.b16 %v22
  %v162 = vunpack.c.h.b16 %v22
  %v163 = vunpack.c.l.b16 %v23
  %v164 = vunpack.c.h.b16 %v23
  %v165 = vunpack.c.l.b16 %v24
  %v166 = vunpack.c.h.b16 %v24
  %v167 = vunpack.c.l.b16 %v25
  %v168 = vunpack.c.h.b16 %v25
  %v169 = vunpack.c.l.b16 %v26
  %v170 = vunpack.c.h.b16 %v26
  %v171 = vunpack.c.l.b16 %v27
  %v172 = vunpack.c.h.b16 %v27
  %v173 = vunpack.c.l.b16 %v28
  %v174 = vunpack.c.h.b16 %v28
  %v175 = vunpack.c.l.b16 %v29
  %v176 = vunpack.c.h.b16 %v29
  %v177 = vunpack.c.l.b16 %v30
  %v178 = vunpack.c.h.b16 %v30
  %v179 = vunpack.c.l.b16 %v31
  %v180 = vunpack.c.h.b16 %v31
  %v181 = vunpack.c.l.b16 %v32
  %v182 = vunpack.c.h.b16 %v32
  %v183 = vunpack.c.l.b16 %v33
  %v184 = vunpack.c.h.b16 %v33
  %v185 = vunpack.c.l.b16 %v34
  %v186 = vunpack.c.h.b16 %v34
  %v187 = vunpack.c.l.b16 %v35
  %v188 = vunpack.c.h.b16 %v35
  %v189 = vunpack.c.l.b16 %v36
  %v190 = vunpack.c.h.b16 %v36
  %v191 = vunpack.c.l.b16 %v37
  %v192 = vunpack.c.h.b16 %v37
  %v193 = vunpack.c.l.b16 %v38
  %v194 = vunpack.c.h.b16 %v38
  %v195 = vunpack.c.l.b16 %v39
  %v196 = vunpack.c.h.b16 %v39
  %v197 = vunpack.c.l.b16 %v40
  %v198 = vunpack.c.h.b16 %v40
  %v199 = vunpack.c.l.b16 %v41
  %v200 = vunpack.c.h.b16 %v41
  %v201 = vunpack.c.l.b16 %v42
  %v202 = vunpack.c.h.b16 %v42
  %v203 = vunpack.c.l.b16 %v43
  %v204 = vunpack.c.h.b16 %v43
  %v205 = vunpack.c.l.b16 %v44
  %v206 = vunpack.c.h.b16 %v44
  %v207 = vunpack.c.l.b16 %v45
  %v208 = vunpack.c.h.b16 %v45
  %v209 = vunpack.c.l.b16 %v46
  %v210 = vunpack.c.h.b16 %v46
  %v211 = vunpack.c.l.b16 %v47
  %v212 = vunpack.c.h.b16 %v47
  %v213 = vunpack.c.l.b16 %v48
  %v214 = vunpack.c.h.b16 %v48
  %v215 = vunpack.c.l.b16 %v49
  %v216 = vunpack.c.h.b16 %v49
  %v217 = vpack.c.b16 %v157, %v153
  %v218 = vpack.c.b16 %v158, %v154
  %v219 = vpack.c.b16 %v159, %v155
  %v220 = vpack.c.b16 %v160, %v156
  %v221 = vpack.c.b16 %v165, %v161
  %v222 = vpack.c.b16 %v166, %v162
  %v223 = vpack.c.b16 %v167, %v163
  %v224 = vpack.c.b16 %v168, %v164
  %v225 = vpack.c.b16 %v173, %v169
  %v226 = vpack.c.b16 %v174, %v170
  %v227 = vpack.c.b16 %v175, %v171
  %v228 = vpack.c.b16 %v176, %v172
  %v229 = vpack.c.b16 %v181, %v177
  %v230 = vpack.c.b16 %v182, %v178
  %v231 = vpack.c.b16 %v183, %v179
  %v232 = vpack.c.b16 %v184, %v180
  %v233 = vpack.c.b16 %v189, %v185
  %v234 = vpack.c.b16 %v190, %v186
  %v235 = vpack.c.b16 %v191, %v187
  %v236 = vpack.c.b16 %v192, %v188
  %v237 = vpack.c.b16 %v197, %v193
  %v238 = vpack.c.b16 %v198, %v194
  %v239 = vpack.c.b16 %v199, %v195
  %v240 = vpack.c.b16 %v200, %v196
  %v241 = vpack.c.b16 %v205, %v201
  %v242 = vpack.c.b16 %v206, %v202
  %v243 = vpack.c.b16 %v207, %v203
  %v244 = vpack.c.b16 %v208, %v204
  %v245 = vpack.c.b16 %v213, %v209
  %v246 = vpack.c.b16 %v214, %v210
  %v247 = vpack.c.b16 %v215, %v211
  %v248 = vpack.c.b16 %v216, %v212
  %v345 = vunpack.c.l.b16 %v50
  %v346 = vunpack.c.l.b16 %v51
  %v347 = vunpack.c.l.b16 %v52
  %v348 = vunpack.c.l.b16 %v53
  %v349 = vunpack.c.l.b16 %v54
  %v350 = vunpack.c.l.b16 %v55
  %v351 = vunpack.c.l.b16 %v56
  %v352 = vunpack.c.l.b16 %v57
  %v353 = vunpack.c.l.b16 %v58
  %v354 = vunpack.c.l.b16 %v59
  %v355 = vunpack.c.l.b16 %v60
  %v356 = vunpack.c.l.b16 %v61
  %v357 = vunpack.c.l.b16 %v62
  %v358 = vunpack.c.l.b16 %v63
  %v359 = vunpack.c.l.b16 %v64
  %v360 = vunpack.c.l.b16 %v65
  %v361 = vunpack.c.l.b16 %v66
  %v362 = vunpack.c.l.b16 %v67
  %v363 = vunpack.c.l.b16 %v68
  %v364 = vunpack.c.l.b16 %v69
  %v365 = vunpack.c.l.b16 %v70
  %v366 = vunpack.c.l.b16 %v71
  %v367 = vunpack.c.l.b16 %v72
  %v368 = vunpack.c.l.b16 %v73
  %v369 = vunpack.c.l.b16 %v74
  %v370 = vunpack.c.l.b16 %v75
  %v371 = vunpack.c.l.b16 %v76
  %v372 = vunpack.c.l.b16 %v77
  %v373 = vunpack.c.l.b16 %v78
  %v374 = vunpack.c.l.b16 %v79
  %v375 = vunpack.c.l.b16 %v80
  %v376 = vunpack.c.l.b16 %v81
  %v377 = vunpack.c.l.b16 %v82
  %v378 = vunpack.c.l.b16 %v83
  %v379 = vunpack.c.l.b16 %v84
  %v380 = vunpack.c.l.b16 %v85
  %v381 = vunpack.c.l.b16 %v86
  %v382 = vunpack.c.l.b16 %v87
  %v383 = vunpack.c.l.b16 %v88
  %v384 = vunpack.c.l.b16 %v89
  %v385 = vunpack.c.l.b16 %v90
  %v386 = vunpack.c.l.b16 %v91
  %v387 = vunpack.c.l.b16 %v92
  %v388 = vunpack.c.l.b16 %v93
  %v389 = vunpack.c.l.b16 %v94
  %v390 = vunpack.c.l.b16 %v95
  %v391 = vunpack.c.l.b16 %v96
  %v392 = vunpack.c.l.b16 %v97
  %v393 = vunpack.c.l.b16 %v98
  %v394 = vunpack.c.l.b16 %v99
  %v395 = vunpack.c.l.b16 %v100
  %v396 = vunpack.c.l.b16 %v101
  %v397 = vunpack.c.l.b16 %v102
  %v398 = vunpack.c.l.b16 %v103
  %v399 = vunpack.c.l.b16 %v104
  %v400 = vunpack.c.l.b16 %v105
  %v401 = vunpack.c.l.b16 %v106
  %v402 = vunpack.c.l.b16 %v107
  %v403 = vunpack.c.l.b16 %v108
  %v404 = vunpack.c.l.b16 %v109
  %v405 = vunpack.c.l.b16 %v110
  %v406 = vunpack.c.l.b16 %v111
  %v407 = vunpack.c.l.b16 %v112
  %v408 = vunpack.c.l.b16 %v113
  %v409 = vpack.c.b16 %v346, %v345
  %v410 = vpack.c.b16 %v348, %v347
  %v411 = vpack.c.b16 %v350, %v349
  %v412 = vpack.c.b16 %v352, %v351
  %v413 = vpack.c.b16 %v354, %v353
  %v414 = vpack.c.b16 %v356, %v355
  %v415 = vpack.c.b16 %v358, %v357
  %v416 = vpack.c.b16 %v360, %v359
  %v417 = vpack.c.b16 %v362, %v361
  %v418 = vpack.c.b16 %v364, %v363
  %v419 = vpack.c.b16 %v366, %v365
  %v420 = vpack.c.b16 %v368, %v367
  %v421 = vpack.c.b16 %v370, %v369
  %v422 = vpack.c.b16 %v372, %v371
  %v423 = vpack.c.b16 %v374, %v373
  %v424 = vpack.c.b16 %v376, %v375
  %v425 = vpack.c.b16 %v378, %v377
  %v426 = vpack.c.b16 %v380, %v379
  %v427 = vpack.c.b16 %v382, %v381
  %v428 = vpack.c.b16 %v384, %v383
  %v429 = vpack.c.b16 %v386, %v385
  %v430 = vpack.c.b16 %v388, %v387
  %v431 = vpack.c.b16 %v390, %v389
  %v432 = vpack.c.b16 %v392, %v391
  %v433 = vpack.c.b16 %v394, %v393
  %v434 = vpack.c.b16 %v396, %v395
  %v435 = vpack.c.b16 %v398, %v397
  %v436 = vpack.c.b16 %v400, %v399
  %v437 = vpack.c.b16 %v402, %v401
  %v438 = vpack.c.b16 %v404, %v403
  %v439 = vpack.c.b16 %v406, %v405
  %v440 = vpack.c.b16 %v408, %v407
  %473 = vmatprep.subr.bf16.mxu0 0
  %474 = vmatpush1.bf16.msra.mxu0 %v409
  %475 = vmatprep.subr.bf16.mxu0 0
  %476 = vmatpush1.bf16.msra.mxu0 %v410
  %477 = vmatprep.subr.bf16.mxu0 0
  %478 = vmatpush1.bf16.msra.mxu0 %v411
  %479 = vmatprep.subr.bf16.mxu0 0
  %480 = vmatpush1.bf16.msra.mxu0 %v412
  %481 = vmatprep.subr.bf16.mxu0 0
  %482 = vmatpush1.bf16.msra.mxu0 %v413
  %483 = vmatprep.subr.bf16.mxu0 0
  %484 = vmatpush1.bf16.msra.mxu0 %v414
  %485 = vmatprep.subr.bf16.mxu0 0
  %486 = vmatpush1.bf16.msra.mxu0 %v415
  %487 = vmatprep.subr.bf16.mxu0 0
  %488 = vmatpush1.bf16.msra.mxu0 %v416
  %489 = vmatprep.subr.bf16.mxu0 0
  %490 = vmatpush1.bf16.msra.mxu0 %v417
  %491 = vmatprep.subr.bf16.mxu0 0
  %492 = vmatpush1.bf16.msra.mxu0 %v418
  %493 = vmatprep.subr.bf16.mxu0 0
  %494 = vmatpush1.bf16.msra.mxu0 %v419
  %495 = vmatprep.subr.bf16.mxu0 0
  %496 = vmatpush1.bf16.msra.mxu0 %v420
  %497 = vmatprep.subr.bf16.mxu0 0
  %498 = vmatpush1.bf16.msra.mxu0 %v421
  %499 = vmatprep.subr.bf16.mxu0 0
  %500 = vmatpush1.bf16.msra.mxu0 %v422
  %501 = vmatprep.subr.bf16.mxu0 0
  %502 = vmatpush1.bf16.msra.mxu0 %v423
  %503 = vmatprep.subr.bf16.mxu0 0
  %504 = vmatpush1.bf16.msra.mxu0 %v424
  %505 = vmatprep.mubr.bf16.mxu0 %v218
  %506 = vmatmul.mubr.bf16.gmra.mrb[0].mxu0 %v217
  %v507 = vpop.f32.mrb[0].mxu0
  %v508 = vadd.f32 %v119, %v507
  %v509 = vpop.f32.mrb[0].mxu0
  %v510 = vpop.f32.mrb[0].mxu0
  %v511 = vadd.f32 %v119, %v510
  %v512 = vpop.f32.mrb[0].mxu0
  %513 = vmatprep.mubr.bf16.mxu0 %v222
  %514 = vmatmul.mubr.bf16.gmra.mrb[0].mxu0 %v221
  %v515 = vpop.f32.mrb[0].mxu0
  %v516 = vadd.f32 %v119, %v515
  %v517 = vpop.f32.mrb[0].mxu0
  %v518 = vpop.f32.mrb[0].mxu0
  %v519 = vadd.f32 %v119, %v518
  %v520 = vpop.f32.mrb[0].mxu0
  %521 = vmatprep.mubr.bf16.mxu0 %v226
  %522 = vmatmul.mubr.bf16.gmra.mrb[0].mxu0 %v225
  %v523 = vpop.f32.mrb[0].mxu0
  %v524 = vadd.f32 %v119, %v523
  %v525 = vpop.f32.mrb[0].mxu0
  %v526 = vpop.f32.mrb[0].mxu0
  %v527 = vadd.f32 %v119, %v526
  %v528 = vpop.f32.mrb[0].mxu0
  %529 = vmatprep.mubr.bf16.mxu0 %v230
  %530 = vmatmul.mubr.bf16.gmra.mrb[0].mxu0 %v229
  %v531 = vpop.f32.mrb[0].mxu0
  %v532 = vadd.f32 %v119, %v531
  %v533 = vpop.f32.mrb[0].mxu0
  %v534 = vpop.f32.mrb[0].mxu0
  %v535 = vadd.f32 %v119, %v534
  %v536 = vpop.f32.mrb[0].mxu0
  %537 = vmatprep.mubr.bf16.mxu0 %v234
  %538 = vmatmul.mubr.bf16.gmra.mrb[0].mxu0 %v233
  %v539 = vpop.f32.mrb[0].mxu0
  %v540 = vadd.f32 %v119, %v539
  %v541 = vpop.f32.mrb[0].mxu0
  %v542 = vpop.f32.mrb[0].mxu0
  %v543 = vadd.f32 %v119, %v542
  %v544 = vpop.f32.mrb[0].mxu0
  %545 = vmatprep.mubr.bf16.mxu0 %v238
  %546 = vmatmul.mubr.bf16.gmra.mrb[0].mxu0 %v237
  %v547 = vpop.f32.mrb[0].mxu0
  %v548 = vadd.f32 %v119, %v547
  %v549 = vpop.f32.mrb[0].mxu0
  %v550 = vpop.f32.mrb[0].mxu0
  %v551 = vadd.f32 %v119, %v550
  %v552 = vpop.f32.mrb[0].mxu0
  %553 = vmatprep.mubr.bf16.mxu0 %v242
  %554 = vmatmul.mubr.bf16.gmra.mrb[0].mxu0 %v241
  %v555 = vpop.f32.mrb[0].mxu0
  %v556 = vadd.f32 %v119, %v555
  %v557 = vpop.f32.mrb[0].mxu0
  %v558 = vpop.f32.mrb[0].mxu0
  %v559 = vadd.f32 %v119, %v558
  %v560 = vpop.f32.mrb[0].mxu0
  %561 = vmatprep.mubr.bf16.mxu0 %v246
  %562 = vmatmul.mubr.bf16.gmra.mrb[0].mxu0 %v245
  %v563 = vpop.f32.mrb[0].mxu0
  %v564 = vadd.f32 %v119, %v563
  %v565 = vpop.f32.mrb[0].mxu0
  %v566 = vpop.f32.mrb[0].mxu0
  %v567 = vadd.f32 %v119, %v566
  %v568 = vpop.f32.mrb[0].mxu0
  %569 = vdwg.mxu0
  %570 = vmatprep.subr.bf16.mxu0 0
  %571 = vmatpush1.bf16.msra.mxu0 %v425
  %572 = vmatprep.subr.bf16.mxu0 0
  %573 = vmatpush1.bf16.msra.mxu0 %v426
  %574 = vmatprep.subr.bf16.mxu0 0
  %575 = vmatpush1.bf16.msra.mxu0 %v427
  %576 = vmatprep.subr.bf16.mxu0 0
  %577 = vmatpush1.bf16.msra.mxu0 %v428
  %578 = vmatprep.subr.bf16.mxu0 0
  %579 = vmatpush1.bf16.msra.mxu0 %v429
  %580 = vmatprep.subr.bf16.mxu0 0
  %581 = vmatpush1.bf16.msra.mxu0 %v430
  %582 = vmatprep.subr.bf16.mxu0 0
  %583 = vmatpush1.bf16.msra.mxu0 %v431
  %584 = vmatprep.subr.bf16.mxu0 0
  %585 = vmatpush1.bf16.msra.mxu0 %v432
  %586 = vmatprep.subr.bf16.mxu0 0
  %587 = vmatpush1.bf16.msra.mxu0 %v433
  %588 = vmatprep.subr.bf16.mxu0 0
  %589 = vmatpush1.bf16.msra.mxu0 %v434
  %590 = vmatprep.subr.bf16.mxu0 0
  %591 = vmatpush1.bf16.msra.mxu0 %v435
  %592 = vmatprep.subr.bf16.mxu0 0
  %593 = vmatpush1.bf16.msra.mxu0 %v436
  %594 = vmatprep.subr.bf16.mxu0 0
  %595 = vmatpush1.bf16.msra.mxu0 %v437
  %596 = vmatprep.subr.bf16.mxu0 0
  %597 = vmatpush1.bf16.msra.mxu0 %v438
  %598 = vmatprep.subr.bf16.mxu0 0
  %599 = vmatpush1.bf16.msra.mxu0 %v439
  %600 = vmatprep.subr.bf16.mxu0 0
  %601 = vmatpush1.bf16.msra.mxu0 %v440
  %602 = vmatprep.mubr.bf16.mxu0 %v220
  %603 = vmatmul.mubr.bf16.gmra.mrb[0].mxu0 %v219
  %v604 = vpop.f32.mrb[0].mxu0
  %v605 = vadd.f32 %v508, %v604
  %v606 = vpop.f32.mrb[0].mxu0
  %v607 = vpop.f32.mrb[0].mxu0
  %v608 = vadd.f32 %v511, %v607
  %v609 = vpop.f32.mrb[0].mxu0
  %610 = vmatprep.mubr.bf16.mxu0 %v224
  %611 = vmatmul.mubr.bf16.gmra.mrb[0].mxu0 %v223
  %v612 = vpop.f32.mrb[0].mxu0
  %v613 = vadd.f32 %v516, %v612
  %v614 = vpop.f32.mrb[0].mxu0
  %v615 = vpop.f32.mrb[0].mxu0
  %v616 = vadd.f32 %v519, %v615
  %v617 = vpop.f32.mrb[0].mxu0
  %618 = vmatprep.mubr.bf16.mxu0 %v228
  %619 = vmatmul.mubr.bf16.gmra.mrb[0].mxu0 %v227
  %v620 = vpop.f32.mrb[0].mxu0
  %v621 = vadd.f32 %v524, %v620
  %v622 = vpop.f32.mrb[0].mxu0
  %v623 = vpop.f32.mrb[0].mxu0
  %v624 = vadd.f32 %v527, %v623
  %v625 = vpop.f32.mrb[0].mxu0
  %626 = vmatprep.mubr.bf16.mxu0 %v232
  %627 = vmatmul.mubr.bf16.gmra.mrb[0].mxu0 %v231
  %v628 = vpop.f32.mrb[0].mxu0
  %v629 = vadd.f32 %v532, %v628
  %v630 = vpop.f32.mrb[0].mxu0
  %v631 = vpop.f32.mrb[0].mxu0
  %v632 = vadd.f32 %v535, %v631
  %v633 = vpop.f32.mrb[0].mxu0
  %634 = vmatprep.mubr.bf16.mxu0 %v236
  %635 = vmatmul.mubr.bf16.gmra.mrb[0].mxu0 %v235
  %v636 = vpop.f32.mrb[0].mxu0
  %v637 = vadd.f32 %v540, %v636
  %v638 = vpop.f32.mrb[0].mxu0
  %v639 = vpop.f32.mrb[0].mxu0
  %v640 = vadd.f32 %v543, %v639
  %v641 = vpop.f32.mrb[0].mxu0
  %642 = vmatprep.mubr.bf16.mxu0 %v240
  %643 = vmatmul.mubr.bf16.gmra.mrb[0].mxu0 %v239
  %v644 = vpop.f32.mrb[0].mxu0
  %v645 = vadd.f32 %v548, %v644
  %v646 = vpop.f32.mrb[0].mxu0
  %v647 = vpop.f32.mrb[0].mxu0
  %v648 = vadd.f32 %v551, %v647
  %v649 = vpop.f32.mrb[0].mxu0
  %650 = vmatprep.mubr.bf16.mxu0 %v244
  %651 = vmatmul.mubr.bf16.gmra.mrb[0].mxu0 %v243
  %v652 = vpop.f32.mrb[0].mxu0
  %v653 = vadd.f32 %v556, %v652
  %v654 = vpop.f32.mrb[0].mxu0
  %v655 = vpop.f32.mrb[0].mxu0
  %v656 = vadd.f32 %v559, %v655
  %v657 = vpop.f32.mrb[0].mxu0
  %658 = vmatprep.mubr.bf16.mxu0 %v248
  %659 = vmatmul.mubr.bf16.gmra.mrb[0].mxu0 %v247
  %v660 = vpop.f32.mrb[0].mxu0
  %v661 = vadd.f32 %v564, %v660
  %v662 = vpop.f32.mrb[0].mxu0
  %v663 = vpop.f32.mrb[0].mxu0
  %v664 = vadd.f32 %v567, %v663
  %v665 = vpop.f32.mrb[0].mxu0
  %666 = vdwg.mxu0
  %v667 = vld [vmem:[%s3] sm:$0xf]
  %v668 = vld [vmem:[%s3 + $0x4] sm:$0xf]
  %v669 = vld [vmem:[%s3 + $0x8] sm:$0xf]
  %v670 = vld [vmem:[%s3 + $0xc] sm:$0xf]
  %v671 = vld [vmem:[%s3 + $0x10] sm:$0xf]
  %v672 = vld [vmem:[%s3 + $0x14] sm:$0xf]
  %v673 = vld [vmem:[%s3 + $0x18] sm:$0xf]
  %v674 = vld [vmem:[%s3 + $0x1c] sm:$0xf]
  %v675 = vld [vmem:[%s3 + $0x20] sm:$0xf]
  %v676 = vld [vmem:[%s3 + $0x24] sm:$0xf]
  %v677 = vld [vmem:[%s3 + $0x28] sm:$0xf]
  %v678 = vld [vmem:[%s3 + $0x2c] sm:$0xf]
  %v679 = vld [vmem:[%s3 + $0x30] sm:$0xf]
  %v680 = vld [vmem:[%s3 + $0x34] sm:$0xf]
  %v681 = vld [vmem:[%s3 + $0x38] sm:$0xf]
  %v682 = vld [vmem:[%s3 + $0x3c] sm:$0xf]
  %v683 = vunpack.c.l.bf16 %v667
  %v684 = vunpack.c.l.bf16 %v668
  %v685 = vunpack.c.l.bf16 %v669
  %v686 = vunpack.c.l.bf16 %v670
  %v687 = vunpack.c.l.bf16 %v671
  %v688 = vunpack.c.l.bf16 %v672
  %v689 = vunpack.c.l.bf16 %v673
  %v690 = vunpack.c.l.bf16 %v674
  %v691 = vunpack.c.l.bf16 %v675
  %v692 = vunpack.c.l.bf16 %v676
  %v693 = vunpack.c.l.bf16 %v677
  %v694 = vunpack.c.l.bf16 %v678
  %v695 = vunpack.c.l.bf16 %v679
  %v696 = vunpack.c.l.bf16 %v680
  %v697 = vunpack.c.l.bf16 %v681
  %v698 = vunpack.c.l.bf16 %v682
  %v699 = vadd.f32 %v605, %v683
  %v700 = vadd.f32 %v608, %v684
  %v701 = vadd.f32 %v613, %v685
  %v702 = vadd.f32 %v616, %v686
  %v703 = vadd.f32 %v621, %v687
  %v704 = vadd.f32 %v624, %v688
  %v705 = vadd.f32 %v629, %v689
  %v706 = vadd.f32 %v632, %v690
  %v707 = vadd.f32 %v637, %v691
  %v708 = vadd.f32 %v640, %v692
  %v709 = vadd.f32 %v645, %v693
  %v710 = vadd.f32 %v648, %v694
  %v711 = vadd.f32 %v653, %v695
  %v712 = vadd.f32 %v656, %v696
  %v713 = vadd.f32 %v661, %v697
  %v714 = vadd.f32 %v664, %v698
  %v715 = vpack.c.bf16 %v700, %v699
  %v716 = vpack.c.bf16 %v702, %v701
  %v717 = vpack.c.bf16 %v704, %v703
  %v718 = vpack.c.bf16 %v706, %v705
  %v719 = vpack.c.bf16 %v708, %v707
  %v720 = vpack.c.bf16 %v710, %v709
  %v721 = vpack.c.bf16 %v712, %v711
  %v722 = vpack.c.bf16 %v714, %v713
  %v731 = vunpack.c.l.b16 %v715
  %v732 = vunpack.c.h.b16 %v715
  %v733 = vunpack.c.l.b16 %v716
  %v734 = vunpack.c.h.b16 %v716
  %v735 = vunpack.c.l.b16 %v717
  %v736 = vunpack.c.h.b16 %v717
  %v737 = vunpack.c.l.b16 %v718
  %v738 = vunpack.c.h.b16 %v718
  %v739 = vunpack.c.l.b16 %v719
  %v740 = vunpack.c.h.b16 %v719
  %v741 = vunpack.c.l.b16 %v720
  %v742 = vunpack.c.h.b16 %v720
  %v743 = vunpack.c.l.b16 %v721
  %v744 = vunpack.c.h.b16 %v721
  %v745 = vunpack.c.l.b16 %v722
  %v746 = vunpack.c.h.b16 %v722
  %v747 = vpack.c.b16 %v731, %v731
  %v748 = vpack.c.b16 %v732, %v732
  %v749 = vpack.c.b16 %v733, %v733
  %v750 = vpack.c.b16 %v734, %v734
  %v751 = vpack.c.b16 %v735, %v735
  %v752 = vpack.c.b16 %v736, %v736
  %v753 = vpack.c.b16 %v737, %v737
  %v754 = vpack.c.b16 %v738, %v738
  %v755 = vpack.c.b16 %v739, %v739
  %v756 = vpack.c.b16 %v740, %v740
  %v757 = vpack.c.b16 %v741, %v741
  %v758 = vpack.c.b16 %v742, %v742
  %v759 = vpack.c.b16 %v743, %v743
  %v760 = vpack.c.b16 %v744, %v744
  %v761 = vpack.c.b16 %v745, %v745
  %v762 = vpack.c.b16 %v746, %v746
  %779 = vst [vmem:[%s4] sm:$0xf] %v747
  %780 = vst [vmem:[%s4 + $0x4] sm:$0xf] %v748
  %781 = vst [vmem:[%s4 + $0x8] sm:$0xf] %v749
  %782 = vst [vmem:[%s4 + $0xc] sm:$0xf] %v750
  %783 = vst [vmem:[%s4 + $0x10] sm:$0xf] %v751
  %784 = vst [vmem:[%s4 + $0x14] sm:$0xf] %v752
  %785 = vst [vmem:[%s4 + $0x18] sm:$0xf] %v753
  %786 = vst [vmem:[%s4 + $0x1c] sm:$0xf] %v754
  %787 = vst [vmem:[%s4 + $0x20] sm:$0xf] %v755
  %788 = vst [vmem:[%s4 + $0x24] sm:$0xf] %v756
  %789 = vst [vmem:[%s4 + $0x28] sm:$0xf] %v757
  %790 = vst [vmem:[%s4 + $0x2c] sm:$0xf] %v758
  %791 = vst [vmem:[%s4 + $0x30] sm:$0xf] %v759
  %792 = vst [vmem:[%s4 + $0x34] sm:$0xf] %v760
  %793 = vst [vmem:[%s4 + $0x38] sm:$0xf] %v761
  %794 = vst [vmem:[%s4 + $0x3c] sm:$0xf] %v762
  // Predicated region
  $region18: #{coop_forward.42} parent=0 // pred_check
    _
  $region19: #{coop_forward.42} parent=0 // pred_check_branch
    %796 = sbr.rel (0) target = $region21
  $region20: #{coop_forward.42} parent=0 // pred_region
    _
  $region21: #{coop_forward.42} parent=0 // pred_fallthru
    _
  // Predicated region
  $region22: #{coop_forward.42} parent=0 // pred_check
    _
  $region23: #{coop_forward.42} parent=0 // pred_check_branch
    %798 = sbr.rel (0) target = $region25
  $region24: #{coop_forward.42} parent=0 // pred_region
    _
  $region25: #{coop_forward.42} parent=0 // pred_fallthru
    _

// kernel: coop_forward.26
$region0: #{coop_forward.26}
  #allocation0 [shape = 'u32[]', space=smem, size = 0x4, offset = 0x4, fixed_abs, tag = 'smem constant byte address 0x4 - core index']
  #allocation1 [shape = 'u32[144,128]{1,0:T(1,128)}', space=vmem, size = 0x12000, scoped, tag = 'internal scratch']
  %s0 = inlined_call_operand.vmem [shape: bf16[2,5,128], index: 0, kind: input, shape index: {}]
  %s1 = inlined_call_operand.vmem [shape: f32[5,128], index: 1, kind: input, shape index: {}]
  %s2 = inlined_call_operand.vmem [shape: f32[1,128], index: 2, kind: input, shape index: {}]
  %s3 = inlined_call_operand.vmem [shape: f32[1,128], index: 3, kind: input, shape index: {}]
  %s4 = inlined_call_operand.vmem [shape: bf16[2,5,128], index: 4, kind: output, shape index: {}]
  %s5 = sld [smem:[#allocation0]]
  $region49: #{coop_forward.26} parent=0
    _
  %s7 = ssub.s32 1, %s5
  %s8 = scalar_select 0, %s7, %s5
  loop: start=0, step=1, limit=4
  $region2: #{coop_forward.26} parent=0 // loop_pre_header
    _
  $region3: #{coop_forward.26} parent=0 // loop_header
    %s10 = sphi 0, %s14
    %p11 = scmp.ge.s32.totalorder %s10, 4
    %s20 = sphi 0, %s22
    %s23 = sphi 0, %s20
    %s24 = sphi 0, %s23
    %s40 = sphi 0, %s24
    %s44 = sphi 0, %s44
    %s46 = sphi 0, %s44
    %s47 = sphi 0, %s46
    %s61 = sphi 0, %s47
    %s65 = sphi 0, %s65
    %s67 = sphi 0, %s65
    %s68 = sphi 0, %s67
    %s82 = sphi 0, %s68
    %s86 = sphi 0, %s86
    %s88 = sphi 0, %s86
    %s89 = sphi 0, %s88
    %s103 = sphi 0, %s89
    %s109 = sphi 0, %s111
    %s112 = sphi 0, %s109
    %s113 = sphi 0, %s112
    %s129 = sphi 0, %s113
  $region4: #{coop_forward.26} parent=0 // loop_header_branch
    %13 = sbr.rel (%p11) target = $region8
  $region5: #{coop_forward.26} parent=0 // loop_body
    %s15 = ssub.s32 %s10, 1
    %s16 = ssub.s32 %s10, 2
    %s17 = sadd.s32 %s10, 1
    %s18 = ssub.s32 %s10, %s17
    %p19 = scmp.eq.s32.totalorder %s18, 0
    %s21 = sadd.s32 %s20, 1
    %s22 = scalar_select %p19, %s20, %s21
    %p25 = pneg %p19
    %p26 = scmp.eq.s32.totalorder %s10, 1
    %p27 = por %p25, %p26
    %p28 = scmp.ne.s32.totalorder %s20, %s23
    %p29 = scmp.eq.s32.totalorder %s10, 0
    %p30 = por %p28, %p29
    %p31 = scmp.ne.s32.totalorder %s20, %s23
    %p32 = scmp.eq.s32.totalorder %s15, 1
    %p33 = por %p31, %p32
    %p34 = scmp.ne.s32.totalorder %s23, %s24
    %p35 = scmp.eq.s32.totalorder %s15, 0
    %p36 = por %p34, %p35
    %p37 = scmp.ne.s32.totalorder %s23, %s24
    %p38 = scmp.eq.s32.totalorder %s16, 1
    %p39 = por %p37, %p38
    %p41 = scmp.ne.s32.totalorder %s24, %s40
    %p42 = scmp.eq.s32.totalorder %s16, 0
    %p43 = por %p41, %p42
    %s45 = sadd.s32 %s44, 1
    %p48 = scmp.eq.s32.totalorder %s10, 1
    %p49 = scmp.ne.s32.totalorder %s44, %s46
    %p50 = scmp.eq.s32.totalorder %s10, 0
    %p51 = por %p49, %p50
    %p52 = scmp.ne.s32.totalorder %s44, %s46
    %p53 = scmp.eq.s32.totalorder %s15, 1
    %p54 = por %p52, %p53
    %p55 = scmp.ne.s32.totalorder %s46, %s47
    %p56 = scmp.eq.s32.totalorder %s15, 0
    %p57 = por %p55, %p56
    %p58 = scmp.ne.s32.totalorder %s46, %s47
    %p59 = scmp.eq.s32.totalorder %s16, 1
    %p60 = por %p58, %p59
    %p62 = scmp.ne.s32.totalorder %s47, %s61
    %p63 = scmp.eq.s32.totalorder %s16, 0
    %p64 = por %p62, %p63
    %s66 = sadd.s32 %s65, 1
    %p69 = scmp.eq.s32.totalorder %s10, 1
    %p70 = scmp.ne.s32.totalorder %s65, %s67
    %p71 = scmp.eq.s32.totalorder %s10, 0
    %p72 = por %p70, %p71
    %p73 = scmp.ne.s32.totalorder %s65, %s67
    %p74 = scmp.eq.s32.totalorder %s15, 1
    %p75 = por %p73, %p74
    %p76 = scmp.ne.s32.totalorder %s67, %s68
    %p77 = scmp.eq.s32.totalorder %s15, 0
    %p78 = por %p76, %p77
    %p79 = scmp.ne.s32.totalorder %s67, %s68
    %p80 = scmp.eq.s32.totalorder %s16, 1
    %p81 = por %p79, %p80
    %p83 = scmp.ne.s32.totalorder %s68, %s82
    %p84 = scmp.eq.s32.totalorder %s16, 0
    %p85 = por %p83, %p84
    %s87 = sadd.s32 %s86, 1
    %p90 = scmp.eq.s32.totalorder %s10, 1
    %p91 = scmp.ne.s32.totalorder %s86, %s88
    %p92 = scmp.eq.s32.totalorder %s10, 0
    %p93 = por %p91, %p92
    %p94 = scmp.ne.s32.totalorder %s86, %s88
    %p95 = scmp.eq.s32.totalorder %s15, 1
    %p96 = por %p94, %p95
    %p97 = scmp.ne.s32.totalorder %s88, %s89
    %p98 = scmp.eq.s32.totalorder %s15, 0
    %p99 = por %p97, %p98
    %p100 = scmp.ne.s32.totalorder %s88, %s89
    %p101 = scmp.eq.s32.totalorder %s16, 1
    %p102 = por %p100, %p101
    %p104 = scmp.ne.s32.totalorder %s89, %s103
    %p105 = scmp.eq.s32.totalorder %s16, 0
    %p106 = por %p104, %p105
    %s107 = ssub.s32 %s10, %s17
    %p108 = scmp.eq.s32.totalorder %s107, 0
    %s110 = sadd.s32 %s109, 1
    %s111 = scalar_select %p108, %s109, %s110
    %p114 = pneg %p108
    %p115 = scmp.eq.s32.totalorder %s10, 1
    %p116 = por %p114, %p115
    %p117 = scmp.ne.s32.totalorder %s109, %s112
    %p118 = scmp.eq.s32.totalorder %s10, 0
    %p119 = por %p117, %p118
    %p120 = scmp.ne.s32.totalorder %s109, %s112
    %p121 = scmp.eq.s32.totalorder %s15, 1
    %p122 = por %p120, %p121
    %p123 = scmp.ne.s32.totalorder %s112, %s113
    %p124 = scmp.eq.s32.totalorder %s15, 0
    %p125 = por %p123, %p124
    %p126 = scmp.ne.s32.totalorder %s112, %s113
    %p127 = scmp.eq.s32.totalorder %s16, 1
    %p128 = por %p126, %p127
    %p130 = scmp.ne.s32.totalorder %s113, %s129
    %p131 = scmp.eq.s32.totalorder %s16, 0
    %p132 = por %p130, %p131
    %p133 = scmp.le.s32.totalorder 1, %s10
    %p134 = scmp.lt.s32.totalorder %s10, 3
    %p135 = pnand %p133, %p134
    %p136 = pneg %p135
    // Predicated region
    $region9: #{coop_forward.26} parent=5 // pred_check
      _
    $region10: #{coop_forward.26} parent=5 // pred_check_branch
      %138 = sbr.rel (%p135) target = $region12
    $region11: #{coop_forward.26} parent=5 // pred_region
      %s139 = ssub.s32 %s10, 1
      // Predicated region
      $region13: #{coop_forward.26} parent=11 // pred_check
        %p140 = pneg %p57
      $region14: #{coop_forward.26} parent=11 // pred_check_branch
        %142 = sbr.rel (%p140) target = $region16
      $region15: #{coop_forward.26} parent=11 // pred_region
        _
      $region16: #{coop_forward.26} parent=11 // pred_fallthru
        _
      // Predicated region
      $region17: #{coop_forward.26} parent=11 // pred_check
        %p143 = pneg %p78
      $region18: #{coop_forward.26} parent=11 // pred_check_branch
        %145 = sbr.rel (%p143) target = $region20
      $region19: #{coop_forward.26} parent=11 // pred_region
        _
      $region20: #{coop_forward.26} parent=11 // pred_fallthru
        _
      // Predicated region
      $region21: #{coop_forward.26} parent=11 // pred_check
        %p146 = pneg %p99
      $region22: #{coop_forward.26} parent=11 // pred_check_branch
        %148 = sbr.rel (%p146) target = $region24
      $region23: #{coop_forward.26} parent=11 // pred_region
        _
      $region24: #{coop_forward.26} parent=11 // pred_fallthru
        _
    $region12: #{coop_forward.26} parent=5 // pred_fallthru
      _
    %p149 = scmp.lt.s32.totalorder %s10, 2
    // Predicated region
    $region25: #{coop_forward.26} parent=5 // pred_check
      %p150 = pneg %p149
    $region26: #{coop_forward.26} parent=5 // pred_check_branch
      %152 = sbr.rel (%p150) target = $region28
    $region27: #{coop_forward.26} parent=5 // pred_region
      // Predicated region
      $region29: #{coop_forward.26} parent=27 // pred_check
        %p153 = pneg %p30
      $region30: #{coop_forward.26} parent=27 // pred_check_branch
        %155 = sbr.rel (%p153) target = $region32
      $region31: #{coop_forward.26} parent=27 // pred_region
        %p156 = scmp.lt.s32.totalorder %s10, 1
        %s157 = scalar_select %p156, %s10, 1
        %s158 = smul.addr %s157, 4
        %s159 = scalar_lea.vmem %s0, %s158
      $region32: #{coop_forward.26} parent=27 // pred_fallthru
        _
    $region28: #{coop_forward.26} parent=5 // pred_fallthru
      _
    %p160 = scmp.le.s32.totalorder 1, %s10
    %p161 = scmp.lt.s32.totalorder %s10, 3
    %p162 = pnand %p160, %p161
    %p163 = pneg %p162
    // Predicated region
    $region33: #{coop_forward.26} parent=5 // pred_check
      _
    $region34: #{coop_forward.26} parent=5 // pred_check_branch
      %165 = sbr.rel (%p162) target = $region36
    $region35: #{coop_forward.26} parent=5 // pred_region
      %s166 = ssub.s32 %s10, 1
      %p167 = scmp.lt.s32.totalorder %s15, 1
      %s168 = scalar_select %p167, %s15, 1
      %s169 = smul.addr %s168, 4
      %s170 = scalar_lea.vmem %s0, %s169
      %p171 = pneg %p36
      %p172 = pneg %p33
      %p173 = pneg %p57
      %p174 = pneg %p54
      %p175 = pneg %p78
      %p176 = pneg %p75
      %p177 = pneg %p99
      %p178 = pneg %p96
      %p179 = pneg %p125
      %p180 = pneg %p122
      %p181 = scmp.lt.s32.totalorder %s15, 1
      %s182 = scalar_select %p181, %s15, 1
      %s183 = smul.addr %s182, 4
      %s184 = scalar_lea.vmem %s4, %s183
      %p185 = scmp.lt.s32.totalorder %s15, 1
      %s186 = scalar_select %p185, %s15, 1
      %s187 = smul.addr %s186, 4
      %s188 = scalar_lea.vmem %s0, %s187
      %p189 = scmp.lt.s32.totalorder %s15, 1
      %s190 = scalar_select %p189, %s15, 1
      %s191 = smul.addr %s190, 4
      %s192 = scalar_lea.vmem %s4, %s191
      %v193 = vld [vmem:[%s188] sm:$0x7]
      %v194 = vunpack.c.l.bf16 %v193
      %v195 = vld [vmem:[%s1] sm:$0x1f]
      %v196 = vadd.f32 %v194, %v195
      %vm197 = vcmask 1044480
      %v198 = vsel %vm197, %v196, 0.0
      %199 = vadd.xlane.f32.xlu0 %v198
      %v200 = vpop.xlane.xlu0 %199
      %v201 = vrcp.pop 128.0
      %v202 = vmul.f32 %v200, %v201
      %v203 = vsub.f32 %v196, %v202
      %v204 = vmul.f32 %v203, %v203
      %v205 = vsel %vm197, %v204, 0.0
      %206 = vadd.xlane.f32.xlu0 %v205
      %v207 = vpop.xlane.xlu0 %206
      %v208 = vmul.f32 %v207, %v201
      %v209 = vadd.f32 %v208, 1e-05
      %v210 = vrsqrt.pop %v209
      %v211 = vmul.f32 %v203, %v210
      %v212 = vld [vmem:[%s2] sm:$0x1]
      %v214 = vlaneseq
      %v215 = vshrl.u32 %v214, 7
      %v216 = vsub.s32 0, %v215
      %v217 = vrot.slane %v212, %v216
      %v219 = vmul.f32 %v211, %v217
      %v220 = vld [vmem:[%s3] sm:$0x1]
      %v222 = vlaneseq
      %v223 = vshrl.u32 %v222, 7
      %v224 = vsub.s32 0, %v223
      %v225 = vrot.slane %v220, %v224
      %v227 = vadd.f32 %v219, %v225
      %v228 = vpack.c.bf16 %v227, %v227
      %vm229 = vcmask 1042432
      %vm230 = vsmask.f32 2304
      %vm231 = vmand %vm229, %vm230
      %v232 = vld [vmem:[%s192] sm:$0x7]
      %v233 = vsel %vm231, %v228, %v232
      %234 = vst [vmem:[%s192] sm:$0x7] %v233
      %p235 = scmp.lt.s32.totalorder %s15, 1
      %s236 = scalar_select %p235, %s15, 1
      %s237 = smul.addr %s236, 4
      %s238 = scalar_lea.vmem %s4, %s237
      // Predicated region
      $region37: #{coop_forward.26} parent=35 // pred_check
        %p239 = pneg %p122
      $region38: #{coop_forward.26} parent=35 // pred_check_branch
        %241 = sbr.rel (%p239) target = $region40
      $region39: #{coop_forward.26} parent=35 // pred_region
        _
      $region40: #{coop_forward.26} parent=35 // pred_fallthru
        _
    $region36: #{coop_forward.26} parent=5 // pred_fallthru
      _
    %p242 = scmp.le.s32.totalorder 2, %s10
    // Predicated region
    $region41: #{coop_forward.26} parent=5 // pred_check
      %p243 = pneg %p242
    $region42: #{coop_forward.26} parent=5 // pred_check_branch
      %245 = sbr.rel (%p243) target = $region44
    $region43: #{coop_forward.26} parent=5 // pred_region
      %s246 = ssub.s32 %s10, 2
      // Predicated region
      $region45: #{coop_forward.26} parent=43 // pred_check
        %p247 = pneg %p128
      $region46: #{coop_forward.26} parent=43 // pred_check_branch
        %249 = sbr.rel (%p247) target = $region48
      $region47: #{coop_forward.26} parent=43 // pred_region
        %p250 = scmp.lt.s32.totalorder %s16, 1
        %s251 = scalar_select %p250, %s16, 1
        %s252 = smul.addr %s251, 4
        %s253 = scalar_lea.vmem %s4, %s252
      $region48: #{coop_forward.26} parent=43 // pred_fallthru
        _
    $region44: #{coop_forward.26} parent=5 // pred_fallthru
      _
  $region6: #{coop_forward.26} parent=0 // loop_footer
    %s14 = sadd.s32 1, %s10
  $region7: #{coop_forward.26} parent=0 // loop_footer_branch
    %9 = sbr.rel target = $region3
  $region8: #{coop_forward.26} parent=0 // loop_exit
    _

// kernel: coop_forward.25
$region0: #{coop_forward.25}
  #allocation0 [shape = 'u32[]', space=smem, size = 0x4, offset = 0x4, fixed_abs, tag = 'smem constant byte address 0x4 - core index']
  #allocation1 [shape = 'u32[144,128]{1,0:T(1,128)}', space=vmem, size = 0x12000, scoped, tag = 'internal scratch']
  %s0 = inlined_call_operand.vmem [shape: bf16[8,192], index: 0, kind: input, shape index: {}]
  %s1 = inlined_call_operand.vmem [shape: bf16[192,128], index: 1, kind: input, shape index: {}]
  %s2 = inlined_call_operand.vmem [shape: bf16[8,128], index: 2, kind: output, shape index: {}]
  %s3 = sld [smem:[#allocation0]]
  $region18: #{coop_forward.25} parent=0
    _
  %s5 = ssub.s32 1, %s3
  %s6 = scalar_select 0, %s5, %s3
  // Predicated region
  $region2: #{coop_forward.25} parent=0 // pred_check
    _
  $region3: #{coop_forward.25} parent=0 // pred_check_branch
    %8 = sbr.rel (0) target = $region5
  $region4: #{coop_forward.25} parent=0 // pred_region
    _
  $region5: #{coop_forward.25} parent=0 // pred_fallthru
    _
  // Predicated region
  $region6: #{coop_forward.25} parent=0 // pred_check
    _
  $region7: #{coop_forward.25} parent=0 // pred_check_branch
    %10 = sbr.rel (0) target = $region9
  $region8: #{coop_forward.25} parent=0 // pred_region
    _
  $region9: #{coop_forward.25} parent=0 // pred_fallthru
    _
  %v12 = vld [vmem:[%s0] sm:$0xff]
  %v13 = vld [vmem:[%s1] sm:$0xf]
  %v14 = vld [vmem:[%s1 + $0x4] sm:$0xf]
  %v15 = vld [vmem:[%s1 + $0x8] sm:$0xf]
  %v16 = vld [vmem:[%s1 + $0xc] sm:$0xf]
  %v17 = vld [vmem:[%s1 + $0x10] sm:$0xf]
  %v18 = vld [vmem:[%s1 + $0x14] sm:$0xf]
  %v19 = vld [vmem:[%s1 + $0x18] sm:$0xf]
  %v20 = vld [vmem:[%s1 + $0x1c] sm:$0xf]
  %v21 = vld [vmem:[%s1 + $0x20] sm:$0xf]
  %v22 = vld [vmem:[%s1 + $0x24] sm:$0xf]
  %v23 = vld [vmem:[%s1 + $0x28] sm:$0xf]
  %v24 = vld [vmem:[%s1 + $0x2c] sm:$0xf]
  %v25 = vld [vmem:[%s1 + $0x30] sm:$0xf]
  %v26 = vld [vmem:[%s1 + $0x34] sm:$0xf]
  %v27 = vld [vmem:[%s1 + $0x38] sm:$0xf]
  %v28 = vld [vmem:[%s1 + $0x3c] sm:$0xf]
  %v29 = vld [vmem:[%s1 + $0x40] sm:$0xf]
  %v30 = vld [vmem:[%s1 + $0x44] sm:$0xf]
  %v31 = vld [vmem:[%s1 + $0x48] sm:$0xf]
  %v32 = vld [vmem:[%s1 + $0x4c] sm:$0xf]
  %v33 = vld [vmem:[%s1 + $0x50] sm:$0xf]
  %v34 = vld [vmem:[%s1 + $0x54] sm:$0xf]
  %v35 = vld [vmem:[%s1 + $0x58] sm:$0xf]
  %v36 = vld [vmem:[%s1 + $0x5c] sm:$0xf]
  %v38 = vunpack.c.l.b16 %v12
  %v39 = vunpack.c.h.b16 %v12
  %v40 = vpack.c.b16 %v38, %v38
  %v41 = vpack.c.b16 %v39, %v39
  %v67 = vunpack.c.l.b16 %v13
  %v68 = vunpack.c.l.b16 %v14
  %v69 = vunpack.c.l.b16 %v15
  %v70 = vunpack.c.l.b16 %v16
  %v71 = vunpack.c.l.b16 %v17
  %v72 = vunpack.c.l.b16 %v18
  %v73 = vunpack.c.l.b16 %v19
  %v74 = vunpack.c.l.b16 %v20
  %v75 = vunpack.c.l.b16 %v21
  %v76 = vunpack.c.l.b16 %v22
  %v77 = vunpack.c.l.b16 %v23
  %v78 = vunpack.c.l.b16 %v24
  %v79 = vunpack.c.l.b16 %v25
  %v80 = vunpack.c.l.b16 %v26
  %v81 = vunpack.c.l.b16 %v27
  %v82 = vunpack.c.l.b16 %v28
  %v83 = vunpack.c.l.b16 %v29
  %v84 = vunpack.c.l.b16 %v30
  %v85 = vunpack.c.l.b16 %v31
  %v86 = vunpack.c.l.b16 %v32
  %v87 = vunpack.c.l.b16 %v33
  %v88 = vunpack.c.l.b16 %v34
  %v89 = vunpack.c.l.b16 %v35
  %v90 = vunpack.c.l.b16 %v36
  %v91 = vpack.c.b16 %v68, %v67
  %v92 = vpack.c.b16 %v70, %v69
  %v93 = vpack.c.b16 %v72, %v71
  %v94 = vpack.c.b16 %v74, %v73
  %v95 = vpack.c.b16 %v76, %v75
  %v96 = vpack.c.b16 %v78, %v77
  %v97 = vpack.c.b16 %v80, %v79
  %v98 = vpack.c.b16 %v82, %v81
  %v99 = vpack.c.b16 %v84, %v83
  %v100 = vpack.c.b16 %v86, %v85
  %v101 = vpack.c.b16 %v88, %v87
  %v102 = vpack.c.b16 %v90, %v89
  %vm115 = vcmask 523264
  %v117 = vsel %vm115, %v41, 0
  %119 = vmatprep.subr.bf16.mxu0 0
  %120 = vmatpush1.bf16.msra.mxu0 %v91
  %121 = vmatprep.subr.bf16.mxu0 0
  %122 = vmatpush1.bf16.msra.mxu0 %v92
  %123 = vmatprep.subr.bf16.mxu0 0
  %124 = vmatpush1.bf16.msra.mxu0 %v93
  %125 = vmatprep.subr.bf16.mxu0 0
  %126 = vmatpush1.bf16.msra.mxu0 %v94
  %127 = vmatprep.subr.bf16.mxu0 0
  %128 = vmatpush1.bf16.msra.mxu0 %v95
  %129 = vmatprep.subr.bf16.mxu0 0
  %130 = vmatpush1.bf16.msra.mxu0 %v96
  %131 = vmatprep.subr.bf16.mxu0 0
  %132 = vmatpush1.bf16.msra.mxu0 %v97
  %133 = vmatprep.subr.bf16.mxu0 0
  %134 = vmatpush1.bf16.msra.mxu0 %v98
  %135 = vmatprep.subr.bf16.mxu0 0
  %136 = vmatpush1.bf16.msra.mxu0 %v99
  %137 = vmatprep.subr.bf16.mxu0 0
  %138 = vmatpush1.bf16.msra.mxu0 %v100
  %139 = vmatprep.subr.bf16.mxu0 0
  %140 = vmatpush1.bf16.msra.mxu0 %v101
  %141 = vmatprep.subr.bf16.mxu0 0
  %142 = vmatpush1.bf16.msra.mxu0 %v102
  %143 = vmatprep.subr.bf16.mxu0 0
  %144 = vmatpush1.bf16.msra.mxu0 0
  %145 = vmatprep.subr.bf16.mxu0 0
  %146 = vmatpush1.bf16.msra.mxu0 0
  %147 = vmatprep.subr.bf16.mxu0 0
  %148 = vmatpush1.bf16.msra.mxu0 0
  %149 = vmatprep.subr.bf16.mxu0 0
  %150 = vmatpush1.bf16.msra.mxu0 0
  %151 = vmatprep.mubr.bf16.mxu0 %v117
  %152 = vmatmul.mubr.bf16.gmra.mrb[0].mxu0 %v40
  %v153 = vpop.f32.mrb[0].mxu0
  %v154 = vadd.f32 0.0, %v153
  %v155 = vpop.f32.mrb[0].mxu0
  %v156 = vpop.f32.mrb[0].mxu0
  %v157 = vpop.f32.mrb[0].mxu0
  %158 = vdwg.mxu0
  %v159 = vpack.c.bf16 %v154, %v154
  %160 = vst [vmem:[%s2] sm:$0xf] %v159
  // Predicated region
  $region10: #{coop_forward.25} parent=0 // pred_check
    _
  $region11: #{coop_forward.25} parent=0 // pred_check_branch
    %162 = sbr.rel (0) target = $region13
  $region12: #{coop_forward.25} parent=0 // pred_region
    _
  $region13: #{coop_forward.25} parent=0 // pred_fallthru
    _
  // Predicated region
  $region14: #{coop_forward.25} parent=0 // pred_check
    _
  $region15: #{coop_forward.25} parent=0 // pred_check_branch
    %164 = sbr.rel (0) target = $region17
  $region16: #{coop_forward.25} parent=0 // pred_region
    _
  $region17: #{coop_forward.25} parent=0 // pred_fallthru
    _

// kernel: coop_forward.28
$region0: #{coop_forward.28}
  #allocation0 [shape = 'u32[]', space=smem, size = 0x4, offset = 0x4, fixed_abs, tag = 'smem constant byte address 0x4 - core index']
  #allocation1 [shape = 'u32[144,128]{1,0:T(1,128)}', space=vmem, size = 0x12000, scoped, tag = 'internal scratch']
  %s0 = inlined_call_operand.vmem [shape: bf16[2,5,384], index: 0, kind: input, shape index: {}, may-alias: {0,1,2}]
  %s1 = inlined_call_operand.vmem [shape: bf16[2,5,384], index: 1, kind: input, shape index: {}, may-alias: {0,1,2}]
  %s2 = inlined_call_operand.vmem [shape: bf16[2,5,384], index: 2, kind: input, shape index: {}, may-alias: {0,1,2}]
  %s3 = inlined_call_operand.vmem [shape: bf16[2,5,128], index: 3, kind: output, shape index: {}]
  %s4 = sld [smem:[#allocation0]]
  $region45: #{coop_forward.28} parent=0
    _
  %s6 = ssub.s32 1, %s4
  %s7 = scalar_select 0, %s6, %s4
  loop: start=0, step=1, limit=4
  $region2: #{coop_forward.28} parent=0 // loop_pre_header
    _
  $region3: #{coop_forward.28} parent=0 // loop_header
    %s9 = sphi 0, %s13
    %p10 = scmp.ge.s32.totalorder %s9, 4
    %s16 = sphi 0, %s28
    %s17 = sphi 0, %s24
    %s18 = sphi 0, %s16
    %s19 = sphi 0, %s17
    %s20 = sphi 0, %s18
    %s21 = sphi 0, %s19
    %s33 = sphi 0, %s35
    %s36 = sphi 0, %s33
    %s37 = sphi 0, %s36
    %s53 = sphi 0, %s37
    %s63 = sphi 0, %s65
    %s66 = sphi 0, %s63
    %s67 = sphi 0, %s66
    %s83 = sphi 0, %s67
    %s93 = sphi 0, %s95
    %s96 = sphi 0, %s93
    %s97 = sphi 0, %s96
    %s113 = sphi 0, %s97
    %s121 = sphi 0, %s123
    %s124 = sphi 0, %s121
    %s125 = sphi 0, %s124
    %s141 = sphi 0, %s125
  $region4: #{coop_forward.28} parent=0 // loop_header_branch
    %12 = sbr.rel (%p10) target = $region8
  $region5: #{coop_forward.28} parent=0 // loop_body
    %s14 = ssub.s32 %s9, 1
    %s15 = ssub.s32 %s9, 2
    %s22 = sadd.s32 1, %s17
    %p23 = scmp.ge.s32.totalorder %s22, 1
    %s24 = scalar_select %p23, 0, %s22
    %s25 = sadd.s32 1, %s16
    %s26 = scalar_select %p23, %s25, %s16
    %p27 = scmp.ge.s32.totalorder %s26, 2
    %s28 = scalar_select %p27, 0, %s26
    %s29 = ssub.s32 %s16, %s28
    %s30 = ssub.s32 %s17, %s24
    %s31 = sor.u32 %s29, %s30
    %p32 = scmp.eq.s32.totalorder %s31, 0
    %s34 = sadd.s32 %s33, 1
    %s35 = scalar_select %p32, %s33, %s34
    %p38 = pneg %p32
    %p39 = scmp.eq.s32.totalorder %s9, 1
    %p40 = por %p38, %p39
    %p41 = scmp.ne.s32.totalorder %s33, %s36
    %p42 = scmp.eq.s32.totalorder %s9, 0
    %p43 = por %p41, %p42
    %p44 = scmp.ne.s32.totalorder %s33, %s36
    %p45 = scmp.eq.s32.totalorder %s14, 1
    %p46 = por %p44, %p45
    %p47 = scmp.ne.s32.totalorder %s36, %s37
    %p48 = scmp.eq.s32.totalorder %s14, 0
    %p49 = por %p47, %p48
    %p50 = scmp.ne.s32.totalorder %s36, %s37
    %p51 = scmp.eq.s32.totalorder %s15, 1
    %p52 = por %p50, %p51
    %p54 = scmp.ne.s32.totalorder %s37, %s53
    %p55 = scmp.eq.s32.totalorder %s15, 0
    %p56 = por %p54, %p55
    %s57 = sadd.s32 %s17, 1
    %s58 = sadd.s32 %s24, 1
    %s59 = ssub.s32 %s16, %s28
    %s60 = ssub.s32 %s57, %s58
    %s61 = sor.u32 %s59, %s60
    %p62 = scmp.eq.s32.totalorder %s61, 0
    %s64 = sadd.s32 %s63, 1
    %s65 = scalar_select %p62, %s63, %s64
    %p68 = pneg %p62
    %p69 = scmp.eq.s32.totalorder %s9, 1
    %p70 = por %p68, %p69
    %p71 = scmp.ne.s32.totalorder %s63, %s66
    %p72 = scmp.eq.s32.totalorder %s9, 0
    %p73 = por %p71, %p72
    %p74 = scmp.ne.s32.totalorder %s63, %s66
    %p75 = scmp.eq.s32.totalorder %s14, 1
    %p76 = por %p74, %p75
    %p77 = scmp.ne.s32.totalorder %s66, %s67
    %p78 = scmp.eq.s32.totalorder %s14, 0
    %p79 = por %p77, %p78
    %p80 = scmp.ne.s32.totalorder %s66, %s67
    %p81 = scmp.eq.s32.totalorder %s15, 1
    %p82 = por %p80, %p81
    %p84 = scmp.ne.s32.totalorder %s67, %s83
    %p85 = scmp.eq.s32.totalorder %s15, 0
    %p86 = por %p84, %p85
    %s87 = sadd.s32 %s17, 2
    %s88 = sadd.s32 %s24, 2
    %s89 = ssub.s32 %s16, %s28
    %s90 = ssub.s32 %s87, %s88
    %s91 = sor.u32 %s89, %s90
    %p92 = scmp.eq.s32.totalorder %s91, 0
    %s94 = sadd.s32 %s93, 1
    %s95 = scalar_select %p92, %s93, %s94
    %p98 = pneg %p92
    %p99 = scmp.eq.s32.totalorder %s9, 1
    %p100 = por %p98, %p99
    %p101 = scmp.ne.s32.totalorder %s93, %s96
    %p102 = scmp.eq.s32.totalorder %s9, 0
    %p103 = por %p101, %p102
    %p104 = scmp.ne.s32.totalorder %s93, %s96
    %p105 = scmp.eq.s32.totalorder %s14, 1
    %p106 = por %p104, %p105
    %p107 = scmp.ne.s32.totalorder %s96, %s97
    %p108 = scmp.eq.s32.totalorder %s14, 0
    %p109 = por %p107, %p108
    %p110 = scmp.ne.s32.totalorder %s96, %s97
    %p111 = scmp.eq.s32.totalorder %s15, 1
    %p112 = por %p110, %p111
    %p114 = scmp.ne.s32.totalorder %s97, %s113
    %p115 = scmp.eq.s32.totalorder %s15, 0
    %p116 = por %p114, %p115
    %s117 = ssub.s32 %s16, %s28
    %s118 = ssub.s32 %s17, %s24
    %s119 = sor.u32 %s117, %s118
    %p120 = scmp.eq.s32.totalorder %s119, 0
    %s122 = sadd.s32 %s121, 1
    %s123 = scalar_select %p120, %s121, %s122
    %p126 = pneg %p120
    %p127 = scmp.eq.s32.totalorder %s9, 1
    %p128 = por %p126, %p127
    %p129 = scmp.ne.s32.totalorder %s121, %s124
    %p130 = scmp.eq.s32.totalorder %s9, 0
    %p131 = por %p129, %p130
    %p132 = scmp.ne.s32.totalorder %s121, %s124
    %p133 = scmp.eq.s32.totalorder %s14, 1
    %p134 = por %p132, %p133
    %p135 = scmp.ne.s32.totalorder %s124, %s125
    %p136 = scmp.eq.s32.totalorder %s14, 0
    %p137 = por %p135, %p136
    %p138 = scmp.ne.s32.totalorder %s124, %s125
    %p139 = scmp.eq.s32.totalorder %s15, 1
    %p140 = por %p138, %p139
    %p142 = scmp.ne.s32.totalorder %s125, %s141
    %p143 = scmp.eq.s32.totalorder %s15, 0
    %p144 = por %p142, %p143
    %p145 = scmp.le.s32.totalorder 1, %s9
    %p146 = scmp.lt.s32.totalorder %s9, 3
    %p147 = pnand %p145, %p146
    %p148 = pneg %p147
    // Predicated region
    $region9: #{coop_forward.28} parent=5 // pred_check
      _
    $region10: #{coop_forward.28} parent=5 // pred_check_branch
      %150 = sbr.rel (%p147) target = $region12
    $region11: #{coop_forward.28} parent=5 // pred_region
      %s151 = ssub.s32 %s9, 1
    $region12: #{coop_forward.28} parent=5 // pred_fallthru
      _
    %p152 = scmp.lt.s32.totalorder %s9, 2
    // Predicated region
    $region13: #{coop_forward.28} parent=5 // pred_check
      %p153 = pneg %p152
    $region14: #{coop_forward.28} parent=5 // pred_check_branch
      %155 = sbr.rel (%p153) target = $region16
    $region15: #{coop_forward.28} parent=5 // pred_region
      // Predicated region
      $region17: #{coop_forward.28} parent=15 // pred_check
        %p156 = pneg %p43
      $region18: #{coop_forward.28} parent=15 // pred_check_branch
        %158 = sbr.rel (%p156) target = $region20
      $region19: #{coop_forward.28} parent=15 // pred_region
        %p159 = scmp.lt.s32.totalorder %s16, 1
        %s160 = scalar_select %p159, %s16, 1
        %p161 = scmp.lt.s32.totalorder %s17, 2
        %s162 = scalar_select %p161, %s17, 2
        %s163 = smul.addr %s160, 3
        %s164 = sadd.s32 %s162, %s163
        %s165 = smul.addr %s164, 4
        %s166 = scalar_lea.vmem %s0, %s165
      $region20: #{coop_forward.28} parent=15 // pred_fallthru
        _
      // Predicated region
      $region21: #{coop_forward.28} parent=15 // pred_check
        %p167 = pneg %p73
      $region22: #{coop_forward.28} parent=15 // pred_check_branch
        %169 = sbr.rel (%p167) target = $region24
      $region23: #{coop_forward.28} parent=15 // pred_region
        %s170 = sadd.s32 %s17, 1
        %p171 = scmp.lt.s32.totalorder %s16, 1
        %s172 = scalar_select %p171, %s16, 1
        %p173 = scmp.lt.s32.totalorder %s170, 2
        %s174 = scalar_select %p173, %s170, 2
        %s175 = smul.addr %s172, 3
        %s176 = sadd.s32 %s174, %s175
        %s177 = smul.addr %s176, 4
        %s178 = scalar_lea.vmem %s1, %s177
        %s179 = sadd.s32 %s17, 1
      $region24: #{coop_forward.28} parent=15 // pred_fallthru
        _
      // Predicated region
      $region25: #{coop_forward.28} parent=15 // pred_check
        %p180 = pneg %p103
      $region26: #{coop_forward.28} parent=15 // pred_check_branch
        %182 = sbr.rel (%p180) target = $region28
      $region27: #{coop_forward.28} parent=15 // pred_region
        %s183 = sadd.s32 %s17, 2
        %p184 = scmp.lt.s32.totalorder %s16, 1
        %s185 = scalar_select %p184, %s16, 1
        %p186 = scmp.lt.s32.totalorder %s183, 2
        %s187 = scalar_select %p186, %s183, 2
        %s188 = smul.addr %s185, 3
        %s189 = sadd.s32 %s187, %s188
        %s190 = smul.addr %s189, 4
        %s191 = scalar_lea.vmem %s2, %s190
        %s192 = sadd.s32 %s17, 2
      $region28: #{coop_forward.28} parent=15 // pred_fallthru
        _
    $region16: #{coop_forward.28} parent=5 // pred_fallthru
      _
    %p193 = scmp.le.s32.totalorder 1, %s9
    %p194 = scmp.lt.s32.totalorder %s9, 3
    %p195 = pnand %p193, %p194
    %p196 = pneg %p195
    // Predicated region
    $region29: #{coop_forward.28} parent=5 // pred_check
      _
    $region30: #{coop_forward.28} parent=5 // pred_check_branch
      %198 = sbr.rel (%p195) target = $region32
    $region31: #{coop_forward.28} parent=5 // pred_region
      %s199 = ssub.s32 %s9, 1
      %p200 = scmp.lt.s32.totalorder %s18, 1
      %s201 = scalar_select %p200, %s18, 1
      %p202 = scmp.lt.s32.totalorder %s19, 2
      %s203 = scalar_select %p202, %s19, 2
      %s204 = smul.addr %s201, 3
      %s205 = sadd.s32 %s203, %s204
      %s206 = smul.addr %s205, 4
      %s207 = scalar_lea.vmem %s0, %s206
      %p208 = pneg %p49
      %p209 = pneg %p46
      %s210 = sadd.s32 %s19, 1
      %p211 = scmp.lt.s32.totalorder %s18, 1
      %s212 = scalar_select %p211, %s18, 1
      %p213 = scmp.lt.s32.totalorder %s210, 2
      %s214 = scalar_select %p213, %s210, 2
      %s215 = smul.addr %s212, 3
      %s216 = sadd.s32 %s214, %s215
      %s217 = smul.addr %s216, 4
      %s218 = scalar_lea.vmem %s1, %s217
      %p219 = pneg %p79
      %p220 = pneg %p76
      %s221 = sadd.s32 %s19, 2
      %p222 = scmp.lt.s32.totalorder %s18, 1
      %s223 = scalar_select %p222, %s18, 1
      %p224 = scmp.lt.s32.totalorder %s221, 2
      %s225 = scalar_select %p224, %s221, 2
      %s226 = smul.addr %s223, 3
      %s227 = sadd.s32 %s225, %s226
      %s228 = smul.addr %s227, 4
      %s229 = scalar_lea.vmem %s2, %s228
      %p230 = pneg %p109
      %p231 = pneg %p106
      %p232 = pneg %p137
      %p233 = pneg %p134
      %p234 = scmp.lt.s32.totalorder %s18, 1
      %s235 = scalar_select %p234, %s18, 1
      %p236 = scmp.lt.s32.totalorder %s19, 0
      %s237 = scalar_select %p236, %s19, 0
      %s238 = sadd.s32 %s237, %s235
      %s239 = smul.addr %s238, 4
      %s240 = scalar_lea.vmem %s3, %s239
      %p241 = scmp.lt.s32.totalorder %s18, 1
      %s242 = scalar_select %p241, %s18, 1
      %p243 = scmp.lt.s32.totalorder %s19, 2
      %s244 = scalar_select %p243, %s19, 2
      %s245 = smul.addr %s242, 3
      %s246 = sadd.s32 %s244, %s245
      %s247 = smul.addr %s246, 4
      %s248 = scalar_lea.vmem %s0, %s247
      %s249 = sadd.s32 %s19, 1
      %p250 = scmp.lt.s32.totalorder %s18, 1
      %s251 = scalar_select %p250, %s18, 1
      %p252 = scmp.lt.s32.totalorder %s249, 2
      %s253 = scalar_select %p252, %s249, 2
      %s254 = smul.addr %s251, 3
      %s255 = sadd.s32 %s253, %s254
      %s256 = smul.addr %s255, 4
      %s257 = scalar_lea.vmem %s1, %s256
      %s258 = sadd.s32 %s19, 1
      %s259 = sadd.s32 %s19, 2
      %p260 = scmp.lt.s32.totalorder %s18, 1
      %s261 = scalar_select %p260, %s18, 1
      %p262 = scmp.lt.s32.totalorder %s259, 2
      %s263 = scalar_select %p262, %s259, 2
      %s264 = smul.addr %s261, 3
      %s265 = sadd.s32 %s263, %s264
      %s266 = smul.addr %s265, 4
      %s267 = scalar_lea.vmem %s2, %s266
      %s268 = sadd.s32 %s19, 2
      %p269 = scmp.lt.s32.totalorder %s18, 1
      %s270 = scalar_select %p269, %s18, 1
      %p271 = scmp.lt.s32.totalorder %s19, 0
      %s272 = scalar_select %p271, %s19, 0
      %s273 = sadd.s32 %s272, %s270
      %s274 = smul.addr %s273, 4
      %s275 = scalar_lea.vmem %s3, %s274
      %v277 = vld [vmem:[%s248] sm:$0x7]
      %v278 = vld [vmem:[%s257] sm:$0x7]
      %v279 = vld [vmem:[%s267] sm:$0x7]
      %v280 = vunpack.c.l.bf16 %v277
      %v281 = vmul.f32 %v280, 0.125
      %v282 = vpack.c.bf16 %v281, %v281
      %vm283 = vcmask 523264
      %v285 = vsel %vm283, %v282, 0
      %v288 = vsel %vm283, %v278, 0
      %290 = vmatprep.subr.bf16.mxu0 0
      %291 = vmatpush1.bf16.xpose.msra.mxu0 %v288
      %292 = vmatprep.subr.bf16.mxu0 0
      %293 = vmatpush1.bf16.xpose.msra.mxu0 0
      %294 = vmatprep.subr.bf16.mxu0 0
      %295 = vmatpush1.bf16.xpose.msra.mxu0 0
      %296 = vmatprep.subr.bf16.mxu0 0
      %297 = vmatpush1.bf16.xpose.msra.mxu0 0
      %298 = vmatprep.subr.bf16.mxu0 0
      %299 = vmatpush1.bf16.xpose.msra.mxu0 0
      %300 = vmatprep.subr.bf16.mxu0 0
      %301 = vmatpush1.bf16.xpose.msra.mxu0 0
      %302 = vmatprep.subr.bf16.mxu0 0
      %303 = vmatpush1.bf16.xpose.msra.mxu0 0
      %304 = vmatprep.subr.bf16.mxu0 0
      %305 = vmatpush1.bf16.xpose.msra.mxu0 0
      %306 = vmatprep.subr.bf16.mxu0 0
      %307 = vmatpush1.bf16.xpose.msra.mxu0 0
      %308 = vmatprep.subr.bf16.mxu0 0
      %309 = vmatpush1.bf16.xpose.msra.mxu0 0
      %310 = vmatprep.subr.bf16.mxu0 0
      %311 = vmatpush1.bf16.xpose.msra.mxu0 0
      %312 = vmatprep.subr.bf16.mxu0 0
      %313 = vmatpush1.bf16.xpose.msra.mxu0 0
      %314 = vmatprep.subr.bf16.mxu0 0
      %315 = vmatpush1.bf16.xpose.msra.mxu0 0
      %316 = vmatprep.subr.bf16.mxu0 0
      %317 = vmatpush1.bf16.xpose.msra.mxu0 0
      %318 = vmatprep.subr.bf16.mxu0 0
      %319 = vmatpush1.bf16.xpose.msra.mxu0 0
      %320 = vmatprep.subr.bf16.mxu0 0
      %321 = vmatpush1.bf16.xpose.msra.mxu0 0
      %322 = vmatprep.mubr.bf16.mxu0 0
      %323 = vmatmul.mubr.bf16.gmra.mrb[0].mxu0 %v285
      %v324 = vpop.f32.mrb[0].mxu0
      %v325 = vadd.f32 0.0, %v324
      %v326 = vpop.f32.mrb[0].mxu0
      %v327 = vpop.f32.mrb[0].mxu0
      %v328 = vpop.f32.mrb[0].mxu0
      %329 = vdwg.mxu0
      %vm330 = vcmask 36864
      %v331 = vsel %vm330, %v325, -inf
      %332 = vmax.xlane.f32.xlu0 %v331
      %v333 = vpop.xlane.xlu0 %332
      %v334 = vsub.f32 %v325, %v333
      %v335 = vmul.f32 %v334, 1.442695
      %v336 = vpow.pop %v335
      %v337 = vsel %vm330, %v336, 0.0
      %338 = vadd.xlane.f32.xlu0 %v337
      %v339 = vpop.xlane.xlu0 %338
      %v340 = vrcp.pop %v339
      %v341 = vmul.f32 %v336, %v340
      %v342 = vpack.c.bf16 %v341, %v341
      %vm343 = vcmask 39936
      %v345 = vsel %vm343, %v342, 0
      %vm347 = vcmask 1041408
      %vm348 = vcmask 1042432
      %v349 = vsel %vm347, 4294967295, 65535
      %v350 = vsel %vm348, %v349, 0
      %v352 = vand.u32 %v279, %v350
      %354 = vmatprep.subr.bf16.mxu0 0
      %355 = vmatpush1.bf16.msra.mxu0 %v352
      %356 = vmatprep.subr.bf16.mxu0 0
      %357 = vmatpush1.bf16.msra.mxu0 0
      %358 = vmatprep.subr.bf16.mxu0 0
      %359 = vmatpush1.bf16.msra.mxu0 0
      %360 = vmatprep.subr.bf16.mxu0 0
      %361 = vmatpush1.bf16.msra.mxu0 0
      %362 = vmatprep.subr.bf16.mxu0 0
      %363 = vmatpush1.bf16.msra.mxu0 0
      %364 = vmatprep.subr.bf16.mxu0 0
      %365 = vmatpush1.bf16.msra.mxu0 0
      %366 = vmatprep.subr.bf16.mxu0 0
      %367 = vmatpush1.bf16.msra.mxu0 0
      %368 = vmatprep.subr.bf16.mxu0 0
      %369 = vmatpush1.bf16.msra.mxu0 0
      %370 = vmatprep.subr.bf16.mxu0 0
      %371 = vmatpush1.bf16.msra.mxu0 0
      %372 = vmatprep.subr.bf16.mxu0 0
      %373 = vmatpush1.bf16.msra.mxu0 0
      %374 = vmatprep.subr.bf16.mxu0 0
      %375 = vmatpush1.bf16.msra.mxu0 0
      %376 = vmatprep.subr.bf16.mxu0 0
      %377 = vmatpush1.bf16.msra.mxu0 0
      %378 = vmatprep.subr.bf16.mxu0 0
      %379 = vmatpush1.bf16.msra.mxu0 0
      %380 = vmatprep.subr.bf16.mxu0 0
      %381 = vmatpush1.bf16.msra.mxu0 0
      %382 = vmatprep.subr.bf16.mxu0 0
      %383 = vmatpush1.bf16.msra.mxu0 0
      %384 = vmatprep.subr.bf16.mxu0 0
      %385 = vmatpush1.bf16.msra.mxu0 0
      %386 = vmatprep.mubr.bf16.mxu0 0
      %387 = vmatmul.mubr.bf16.gmra.mrb[0].mxu0 %v345
      %v388 = vpop.f32.mrb[0].mxu0
      %v389 = vadd.f32 0.0, %v388
      %v390 = vpop.f32.mrb[0].mxu0
      %v391 = vpop.f32.mrb[0].mxu0
      %v392 = vpop.f32.mrb[0].mxu0
      %393 = vdwg.mxu0
      %395 = vrot.lane.b32.xlu0 %v282, 64
      %v396 = vpop.permute.xlu0 %395
      %v398 = vunpack.c.l.b16 %v278
      %v399 = vpack.c.b16 %v398, %v398
      %400 = vrot.lane.b32.xlu0 %v399, 64
      %v401 = vpop.permute.xlu0 %400
      %v403 = vsel %vm283, %v396, 0
      %v406 = vsel %vm283, %v401, 0
      %408 = vmatprep.subr.bf16.mxu0 0
      %409 = vmatpush1.bf16.xpose.msra.mxu0 %v406
      %410 = vmatprep.subr.bf16.mxu0 0
      %411 = vmatpush1.bf16.xpose.msra.mxu0 0
      %412 = vmatprep.subr.bf16.mxu0 0
      %413 = vmatpush1.bf16.xpose.msra.mxu0 0
      %414 = vmatprep.subr.bf16.mxu0 0
      %415 = vmatpush1.bf16.xpose.msra.mxu0 0
      %416 = vmatprep.subr.bf16.mxu0 0
      %417 = vmatpush1.bf16.xpose.msra.mxu0 0
      %418 = vmatprep.subr.bf16.mxu0 0
      %419 = vmatpush1.bf16.xpose.msra.mxu0 0
      %420 = vmatprep.subr.bf16.mxu0 0
      %421 = vmatpush1.bf16.xpose.msra.mxu0 0
      %422 = vmatprep.subr.bf16.mxu0 0
      %423 = vmatpush1.bf16.xpose.msra.mxu0 0
      %424 = vmatprep.subr.bf16.mxu0 0
      %425 = vmatpush1.bf16.xpose.msra.mxu0 0
      %426 = vmatprep.subr.bf16.mxu0 0
      %427 = vmatpush1.bf16.xpose.msra.mxu0 0
      %428 = vmatprep.subr.bf16.mxu0 0
      %429 = vmatpush1.bf16.xpose.msra.mxu0 0
      %430 = vmatprep.subr.bf16.mxu0 0
      %431 = vmatpush1.bf16.xpose.msra.mxu0 0
      %432 = vmatprep.subr.bf16.mxu0 0
      %433 = vmatpush1.bf16.xpose.msra.mxu0 0
      %434 = vmatprep.subr.bf16.mxu0 0
      %435 = vmatpush1.bf16.xpose.msra.mxu0 0
      %436 = vmatprep.subr.bf16.mxu0 0
      %437 = vmatpush1.bf16.xpose.msra.mxu0 0
      %438 = vmatprep.subr.bf16.mxu0 0
      %439 = vmatpush1.bf16.xpose.msra.mxu0 0
      %440 = vmatprep.mubr.bf16.mxu0 0
      %441 = vmatmul.mubr.bf16.gmra.mrb[0].mxu0 %v403
      %v442 = vpop.f32.mrb[0].mxu0
      %v443 = vadd.f32 0.0, %v442
      %v444 = vpop.f32.mrb[0].mxu0
      %v445 = vpop.f32.mrb[0].mxu0
      %v446 = vpop.f32.mrb[0].mxu0
      %447 = vdwg.mxu0
      %v448 = vsel %vm330, %v443, -inf
      %449 = vmax.xlane.f32.xlu0 %v448
      %v450 = vpop.xlane.xlu0 %449
      %v451 = vsub.f32 %v443, %v450
      %v452 = vmul.f32 %v451, 1.442695
      %v453 = vpow.pop %v452
      %v454 = vsel %vm330, %v453, 0.0
      %455 = vadd.xlane.f32.xlu0 %v454
      %v456 = vpop.xlane.xlu0 %455
      %v457 = vrcp.pop %v456
      %v458 = vmul.f32 %v453, %v457
      %v459 = vpack.c.bf16 %v458, %v458
      %v461 = vunpack.c.l.b16 %v279
      %v462 = vpack.c.b16 %v461, %v461
      %463 = vrot.lane.b32.xlu0 %v462, 64
      %v464 = vpop.permute.xlu0 %463
      %v466 = vsel %vm343, %v459, 0
      %v469 = vand.u32 %v464, %v350
      %471 = vmatprep.subr.bf16.mxu0 0
      %472 = vmatpush1.bf16.msra.mxu0 %v469
      %473 = vmatprep.subr.bf16.mxu0 0
      %474 = vmatpush1.bf16.msra.mxu0 0
      %475 = vmatprep.subr.bf16.mxu0 0
      %476 = vmatpush1.bf16.msra.mxu0 0
      %477 = vmatprep.subr.bf16.mxu0 0
      %478 = vmatpush1.bf16.msra.mxu0 0
      %479 = vmatprep.subr.bf16.mxu0 0
      %480 = vmatpush1.bf16.msra.mxu0 0
      %481 = vmatprep.subr.bf16.mxu0 0
      %482 = vmatpush1.bf16.msra.mxu0 0
      %483 = vmatprep.subr.bf16.mxu0 0
      %484 = vmatpush1.bf16.msra.mxu0 0
      %485 = vmatprep.subr.bf16.mxu0 0
      %486 = vmatpush1.bf16.msra.mxu0 0
      %487 = vmatprep.subr.bf16.mxu0 0
      %488 = vmatpush1.bf16.msra.mxu0 0
      %489 = vmatprep.subr.bf16.mxu0 0
      %490 = vmatpush1.bf16.msra.mxu0 0
      %491 = vmatprep.subr.bf16.mxu0 0
      %492 = vmatpush1.bf16.msra.mxu0 0
      %493 = vmatprep.subr.bf16.mxu0 0
      %494 = vmatpush1.bf16.msra.mxu0 0
      %495 = vmatprep.subr.bf16.mxu0 0
      %496 = vmatpush1.bf16.msra.mxu0 0
      %497 = vmatprep.subr.bf16.mxu0 0
      %498 = vmatpush1.bf16.msra.mxu0 0
      %499 = vmatprep.subr.bf16.mxu0 0
      %500 = vmatpush1.bf16.msra.mxu0 0
      %501 = vmatprep.subr.bf16.mxu0 0
      %502 = vmatpush1.bf16.msra.mxu0 0
      %503 = vmatprep.mubr.bf16.mxu0 0
      %504 = vmatmul.mubr.bf16.gmra.mrb[0].mxu0 %v466
      %v505 = vpop.f32.mrb[0].mxu0
      %v506 = vadd.f32 0.0, %v505
      %v507 = vpop.f32.mrb[0].mxu0
      %v508 = vpop.f32.mrb[0].mxu0
      %v509 = vpop.f32.mrb[0].mxu0
      %510 = vdwg.mxu0
      %512 = vrot.lane.b32.xlu0 %v506, 64
      %v513 = vpop.permute.xlu0 %512
      %v515 = vsel %vm283, %v389, %v513
      %v516 = vpack.c.bf16 %v515, %v515
      %vm517 = vcmask 1042432
      %vm518 = vsmask.f32 2304
      %vm519 = vmand %vm517, %vm518
      %v520 = vld [vmem:[%s275] sm:$0x7]
      %v521 = vsel %vm519, %v516, %v520
      %522 = vst [vmem:[%s275] sm:$0x7] %v521
      %p523 = scmp.lt.s32.totalorder %s18, 1
      %s524 = scalar_select %p523, %s18, 1
      %p525 = scmp.lt.s32.totalorder %s19, 0
      %s526 = scalar_select %p525, %s19, 0
      %s527 = sadd.s32 %s526, %s524
      %s528 = smul.addr %s527, 4
      %s529 = scalar_lea.vmem %s3, %s528
      // Predicated region
      $region33: #{coop_forward.28} parent=31 // pred_check
        %p530 = pneg %p134
      $region34: #{coop_forward.28} parent=31 // pred_check_branch
        %532 = sbr.rel (%p530) target = $region36
      $region35: #{coop_forward.28} parent=31 // pred_region
        _
      $region36: #{coop_forward.28} parent=31 // pred_fallthru
        _
    $region32: #{coop_forward.28} parent=5 // pred_fallthru
      _
    %p533 = scmp.le.s32.totalorder 2, %s9
    // Predicated region
    $region37: #{coop_forward.28} parent=5 // pred_check
      %p534 = pneg %p533
    $region38: #{coop_forward.28} parent=5 // pred_check_branch
      %536 = sbr.rel (%p534) target = $region40
    $region39: #{coop_forward.28} parent=5 // pred_region
      %s537 = ssub.s32 %s9, 2
      // Predicated region
      $region41: #{coop_forward.28} parent=39 // pred_check
        %p538 = pneg %p140
      $region42: #{coop_forward.28} parent=39 // pred_check_branch
        %540 = sbr.rel (%p538) target = $region44
      $region43: #{coop_forward.28} parent=39 // pred_region
        %p541 = scmp.lt.s32.totalorder %s20, 1
        %s542 = scalar_select %p541, %s20, 1
        %p543 = scmp.lt.s32.totalorder %s21, 0
        %s544 = scalar_select %p543, %s21, 0
        %s545 = sadd.s32 %s544, %s542
        %s546 = smul.addr %s545, 4
        %s547 = scalar_lea.vmem %s3, %s546
      $region44: #{coop_forward.28} parent=39 // pred_fallthru
        _
    $region40: #{coop_forward.28} parent=5 // pred_fallthru
      _
  $region6: #{coop_forward.28} parent=0 // loop_footer
    %s13 = sadd.s32 1, %s9
  $region7: #{coop_forward.28} parent=0 // loop_footer_branch
    %8 = sbr.rel target = $region3
  $region8: #{coop_forward.28} parent=0 // loop_exit
    _

// kernel: coop_forward.27
$region0: #{coop_forward.27}
  #allocation0 [shape = 'u32[]', space=smem, size = 0x4, offset = 0x4, fixed_abs, tag = 'smem constant byte address 0x4 - core index']
  #allocation1 [shape = 'u32[144,128]{1,0:T(1,128)}', space=vmem, size = 0x12000, scoped, tag = 'internal scratch']
  #allocation2 [shape = 'bf16[16,128]{1,0:T(16,128)(2,1)}', space=vmem, size = 0x1000, scoped, tag = 'scratch operand']
  %s0 = inlined_call_operand.vmem [shape: bf16[16,128], index: 0, kind: input, shape index: {}]
  %s1 = inlined_call_operand.vmem [shape: f32[1,128], index: 1, kind: input, shape index: {}]
  %s2 = inlined_call_operand.vmem [shape: f32[1,128], index: 2, kind: input, shape index: {}]
  %s3 = inlined_call_operand.vmem [shape: bf16[128,384], index: 3, kind: input, shape index: {}]
  %s4 = inlined_call_operand.vmem [shape: f32[1,384], index: 4, kind: input, shape index: {}]
  %s5 = inlined_call_operand.vmem [shape: bf16[16,384], index: 5, kind: output, shape index: {}]
  %s6 = sld [smem:[#allocation0]]
  $region34: #{coop_forward.27} parent=0
    _
  %s8 = ssub.s32 1, %s6
  %s9 = scalar_select 0, %s8, %s6
  // Predicated region
  $region2: #{coop_forward.27} parent=0 // pred_check
    _
  $region3: #{coop_forward.27} parent=0 // pred_check_branch
    %11 = sbr.rel (0) target = $region5
  $region4: #{coop_forward.27} parent=0 // pred_region
    _
  $region5: #{coop_forward.27} parent=0 // pred_fallthru
    _
  // Predicated region
  $region6: #{coop_forward.27} parent=0 // pred_check
    _
  $region7: #{coop_forward.27} parent=0 // pred_check_branch
    %13 = sbr.rel (0) target = $region9
  $region8: #{coop_forward.27} parent=0 // pred_region
    _
  $region9: #{coop_forward.27} parent=0 // pred_fallthru
    _
  // Predicated region
  $region10: #{coop_forward.27} parent=0 // pred_check
    _
  $region11: #{coop_forward.27} parent=0 // pred_check_branch
    %15 = sbr.rel (0) target = $region13
  $region12: #{coop_forward.27} parent=0 // pred_region
    _
  $region13: #{coop_forward.27} parent=0 // pred_fallthru
    _
  // Predicated region
  $region14: #{coop_forward.27} parent=0 // pred_check
    _
  $region15: #{coop_forward.27} parent=0 // pred_check_branch
    %17 = sbr.rel (0) target = $region17
  $region16: #{coop_forward.27} parent=0 // pred_region
    _
  $region17: #{coop_forward.27} parent=0 // pred_fallthru
    _
  // Predicated region
  $region18: #{coop_forward.27} parent=0 // pred_check
    _
  $region19: #{coop_forward.27} parent=0 // pred_check_branch
    %19 = sbr.rel (0) target = $region21
  $region20: #{coop_forward.27} parent=0 // pred_region
    _
  $region21: #{coop_forward.27} parent=0 // pred_fallthru
    _
  %p21 = scmp.eq.s32.totalorder 0, 0
  // Predicated region
  $region22: #{coop_forward.27} parent=0 // pred_check
    %p22 = pneg %p21
  $region23: #{coop_forward.27} parent=0 // pred_check_branch
    %24 = sbr.rel (%p22) target = $region25
  $region24: #{coop_forward.27} parent=0 // pred_region
    %v25 = vld [vmem:[%s0] sm:$0xf]
    %v26 = vld [vmem:[%s0 + $0x4] sm:$0xf]
    %v27 = vunpack.c.l.bf16 %v25
    %v28 = vunpack.c.l.bf16 %v26
    %29 = vadd.xlane.f32.xlu0 %v27
    %v30 = vpop.xlane.xlu0 %29
    %31 = vadd.xlane.f32.xlu0 %v28
    %v32 = vpop.xlane.xlu0 %31
    %v33 = vrcp.pop 128.0
    %v34 = vmul.f32 %v30, %v33
    %v35 = vmul.f32 %v32, %v33
    %v36 = vsub.f32 %v27, %v34
    %v37 = vsub.f32 %v28, %v35
    %v38 = vmul.f32 %v36, %v36
    %v39 = vmul.f32 %v37, %v37
    %40 = vadd.xlane.f32.xlu0 %v38
    %v41 = vpop.xlane.xlu0 %40
    %42 = vadd.xlane.f32.xlu0 %v39
    %v43 = vpop.xlane.xlu0 %42
    %v44 = vmul.f32 %v41, %v33
    %v45 = vmul.f32 %v43, %v33
    %v46 = vadd.f32 %v44, 1e-05
    %v47 = vadd.f32 %v45, 1e-05
    %v48 = vrsqrt.pop %v46
    %v49 = vrsqrt.pop %v47
    %v50 = vmul.f32 %v36, %v48
    %v51 = vmul.f32 %v37, %v49
    %v52 = vld [vmem:[%s1] sm:$0x1]
    %v54 = vlaneseq
    %v55 = vshrl.u32 %v54, 7
    %v56 = vsub.s32 0, %v55
    %v57 = vrot.slane %v52, %v56
    %v59 = vmul.f32 %v50, %v57
    %v60 = vmul.f32 %v51, %v57
    %v61 = vld [vmem:[%s2] sm:$0x1]
    %v63 = vlaneseq
    %v64 = vshrl.u32 %v63, 7
    %v65 = vsub.s32 0, %v64
    %v66 = vrot.slane %v61, %v65
    %v68 = vadd.f32 %v59, %v66
    %v69 = vadd.f32 %v60, %v66
    %v70 = vpack.c.bf16 %v69, %v68
    %71 = vst [vmem:[#allocation2] sm:$0xff] %v70
  $region25: #{coop_forward.27} parent=0 // pred_fallthru
    _
  %v72 = vld [vmem:[#allocation2] sm:$0xff]
  %v73 = vld [vmem:[%s3] sm:$0xff]
  %v74 = vld [vmem:[%s3 + $0x8] sm:$0xf]
  %v75 = vld [vmem:[%s3 + $0xc] sm:$0xff]
  %v76 = vld [vmem:[%s3 + $0x14] sm:$0xf]
  %v77 = vld [vmem:[%s3 + $0x18] sm:$0xff]
  %v78 = vld [vmem:[%s3 + $0x20] sm:$0xf]
  %v79 = vld [vmem:[%s3 + $0x24] sm:$0xff]
  %v80 = vld [vmem:[%s3 + $0x2c] sm:$0xf]
  %v81 = vld [vmem:[%s3 + $0x30] sm:$0xff]
  %v82 = vld [vmem:[%s3 + $0x38] sm:$0xf]
  %v83 = vld [vmem:[%s3 + $0x3c] sm:$0xff]
  %v84 = vld [vmem:[%s3 + $0x44] sm:$0xf]
  %v85 = vld [vmem:[%s3 + $0x48] sm:$0xff]
  %v86 = vld [vmem:[%s3 + $0x50] sm:$0xf]
  %v87 = vld [vmem:[%s3 + $0x54] sm:$0xff]
  %v88 = vld [vmem:[%s3 + $0x5c] sm:$0xf]
  %v89 = vld [vmem:[%s3 + $0x60] sm:$0xff]
  %v90 = vld [vmem:[%s3 + $0x68] sm:$0xf]
  %v91 = vld [vmem:[%s3 + $0x6c] sm:$0xff]
  %v92 = vld [vmem:[%s3 + $0x74] sm:$0xf]
  %v93 = vld [vmem:[%s3 + $0x78] sm:$0xff]
  %v94 = vld [vmem:[%s3 + $0x80] sm:$0xf]
  %v95 = vld [vmem:[%s3 + $0x84] sm:$0xff]
  %v96 = vld [vmem:[%s3 + $0x8c] sm:$0xf]
  %v97 = vld [vmem:[%s3 + $0x90] sm:$0xff]
  %v98 = vld [vmem:[%s3 + $0x98] sm:$0xf]
  %v99 = vld [vmem:[%s3 + $0x9c] sm:$0xff]
  %v100 = vld [vmem:[%s3 + $0xa4] sm:$0xf]
  %v101 = vld [vmem:[%s3 + $0xa8] sm:$0xff]
  %v102 = vld [vmem:[%s3 + $0xb0] sm:$0xf]
  %v103 = vld [vmem:[%s3 + $0xb4] sm:$0xff]
  %v104 = vld [vmem:[%s3 + $0xbc] sm:$0xf]
  %v105 = vld [vmem:[%s4] sm:$0x7]
  %v107 = vlaneseq
  %v108 = vshrl.u32 %v107, 7
  %v109 = vsub.s32 0, %v108
  %v110 = vrot.slane %v105, %v109
  %v111 = vlaneseq
  %v112 = vshrl.u32 %v111, 7
  %v113 = vsub.s32 1, %v112
  %v114 = vrot.slane %v105, %v113
  %v115 = vlaneseq
  %v116 = vshrl.u32 %v115, 7
  %v117 = vsub.s32 2, %v116
  %v118 = vrot.slane %v105, %v117
  %v154 = vunpack.c.l.b16 %v73
  %v155 = vunpack.c.h.b16 %v73
  %v156 = vunpack.c.l.b16 %v74
  %v157 = vunpack.c.l.b16 %v75
  %v158 = vunpack.c.h.b16 %v75
  %v159 = vunpack.c.l.b16 %v76
  %v160 = vunpack.c.l.b16 %v77
  %v161 = vunpack.c.h.b16 %v77
  %v162 = vunpack.c.l.b16 %v78
  %v163 = vunpack.c.l.b16 %v79
  %v164 = vunpack.c.h.b16 %v79
  %v165 = vunpack.c.l.b16 %v80
  %v166 = vunpack.c.l.b16 %v81
  %v167 = vunpack.c.h.b16 %v81
  %v168 = vunpack.c.l.b16 %v82
  %v169 = vunpack.c.l.b16 %v83
  %v170 = vunpack.c.h.b16 %v83
  %v171 = vunpack.c.l.b16 %v84
  %v172 = vunpack.c.l.b16 %v85
  %v173 = vunpack.c.h.b16 %v85
  %v174 = vunpack.c.l.b16 %v86
  %v175 = vunpack.c.l.b16 %v87
  %v176 = vunpack.c.h.b16 %v87
  %v177 = vunpack.c.l.b16 %v88
  %v178 = vunpack.c.l.b16 %v89
  %v179 = vunpack.c.h.b16 %v89
  %v180 = vunpack.c.l.b16 %v90
  %v181 = vunpack.c.l.b16 %v91
  %v182 = vunpack.c.h.b16 %v91
  %v183 = vunpack.c.l.b16 %v92
  %v184 = vunpack.c.l.b16 %v93
  %v185 = vunpack.c.h.b16 %v93
  %v186 = vunpack.c.l.b16 %v94
  %v187 = vunpack.c.l.b16 %v95
  %v188 = vunpack.c.h.b16 %v95
  %v189 = vunpack.c.l.b16 %v96
  %v190 = vunpack.c.l.b16 %v97
  %v191 = vunpack.c.h.b16 %v97
  %v192 = vunpack.c.l.b16 %v98
  %v193 = vunpack.c.l.b16 %v99
  %v194 = vunpack.c.h.b16 %v99
  %v195 = vunpack.c.l.b16 %v100
  %v196 = vunpack.c.l.b16 %v101
  %v197 = vunpack.c.h.b16 %v101
  %v198 = vunpack.c.l.b16 %v102
  %v199 = vunpack.c.l.b16 %v103
  %v200 = vunpack.c.h.b16 %v103
  %v201 = vunpack.c.l.b16 %v104
  %v202 = vpack.c.b16 %v157, %v154
  %v203 = vpack.c.b16 %v158, %v155
  %v204 = vpack.c.b16 %v159, %v156
  %v205 = vpack.c.b16 %v163, %v160
  %v206 = vpack.c.b16 %v164, %v161
  %v207 = vpack.c.b16 %v165, %v162
  %v208 = vpack.c.b16 %v169, %v166
  %v209 = vpack.c.b16 %v170, %v167
  %v210 = vpack.c.b16 %v171, %v168
  %v211 = vpack.c.b16 %v175, %v172
  %v212 = vpack.c.b16 %v176, %v173
  %v213 = vpack.c.b16 %v177, %v174
  %v214 = vpack.c.b16 %v181, %v178
  %v215 = vpack.c.b16 %v182, %v179
  %v216 = vpack.c.b16 %v183, %v180
  %v217 = vpack.c.b16 %v187, %v184
  %v218 = vpack.c.b16 %v188, %v185
  %v219 = vpack.c.b16 %v189, %v186
  %v220 = vpack.c.b16 %v193, %v190
  %v221 = vpack.c.b16 %v194, %v191
  %v222 = vpack.c.b16 %v195, %v192
  %v223 = vpack.c.b16 %v199, %v196
  %v224 = vpack.c.b16 %v200, %v197
  %v225 = vpack.c.b16 %v201, %v198
  %250 = vmatprep.subr.bf16.mxu0 %v203
  %251 = vmatpush1.bf16.msra.mxu0 %v202
  %252 = vmatprep.subr.bf16.mxu0 %v206
  %253 = vmatpush1.bf16.msra.mxu0 %v205
  %254 = vmatprep.subr.bf16.mxu0 %v209
  %255 = vmatpush1.bf16.msra.mxu0 %v208
  %256 = vmatprep.subr.bf16.mxu0 %v212
  %257 = vmatpush1.bf16.msra.mxu0 %v211
  %258 = vmatprep.subr.bf16.mxu0 %v215
  %259 = vmatpush1.bf16.msra.mxu0 %v214
  %260 = vmatprep.subr.bf16.mxu0 %v218
  %261 = vmatpush1.bf16.msra.mxu0 %v217
  %262 = vmatprep.subr.bf16.mxu0 %v221
  %263 = vmatpush1.bf16.msra.mxu0 %v220
  %264 = vmatprep.subr.bf16.mxu0 %v224
  %265 = vmatpush1.bf16.msra.mxu0 %v223
  %266 = vmatprep.subr.bf16.mxu0 0
  %267 = vmatpush1.bf16.msra.mxu0 0
  %268 = vmatprep.subr.bf16.mxu0 0
  %269 = vmatpush1.bf16.msra.mxu0 0
  %270 = vmatprep.subr.bf16.mxu0 0
  %271 = vmatpush1.bf16.msra.mxu0 0
  %272 = vmatprep.subr.bf16.mxu0 0
  %273 = vmatpush1.bf16.msra.mxu0 0
  %274 = vmatprep.subr.bf16.mxu0 0
  %275 = vmatpush1.bf16.msra.mxu0 0
  %276 = vmatprep.subr.bf16.mxu0 0
  %277 = vmatpush1.bf16.msra.mxu0 0
  %278 = vmatprep.subr.bf16.mxu0 0
  %279 = vmatpush1.bf16.msra.mxu0 0
  %280 = vmatprep.subr.bf16.mxu0 0
  %281 = vmatpush1.bf16.msra.mxu0 0
  %282 = vmatprep.mubr.bf16.mxu0 0
  %283 = vmatmul.mubr.bf16.gmra.mrb[0].mxu0 %v72
  %v284 = vpop.f32.mrb[0].mxu0
  %v285 = vadd.f32 %v110, %v284
  %v286 = vpop.f32.mrb[0].mxu0
  %v287 = vadd.f32 %v114, %v286
  %v288 = vpop.f32.mrb[0].mxu0
  %v289 = vadd.f32 %v110, %v288
  %v290 = vpop.f32.mrb[0].mxu0
  %v291 = vadd.f32 %v114, %v290
  %292 = vdwg.mxu0
  %293 = vmatprep.subr.bf16.mxu0 0
  %294 = vmatpush1.bf16.msra.mxu0 %v204
  %295 = vmatprep.subr.bf16.mxu0 0
  %296 = vmatpush1.bf16.msra.mxu0 %v207
  %297 = vmatprep.subr.bf16.mxu0 0
  %298 = vmatpush1.bf16.msra.mxu0 %v210
  %299 = vmatprep.subr.bf16.mxu0 0
  %300 = vmatpush1.bf16.msra.mxu0 %v213
  %301 = vmatprep.subr.bf16.mxu0 0
  %302 = vmatpush1.bf16.msra.mxu0 %v216
  %303 = vmatprep.subr.bf16.mxu0 0
  %304 = vmatpush1.bf16.msra.mxu0 %v219
  %305 = vmatprep.subr.bf16.mxu0 0
  %306 = vmatpush1.bf16.msra.mxu0 %v222
  %307 = vmatprep.subr.bf16.mxu0 0
  %308 = vmatpush1.bf16.msra.mxu0 %v225
  %309 = vmatprep.subr.bf16.mxu0 0
  %310 = vmatpush1.bf16.msra.mxu0 0
  %311 = vmatprep.subr.bf16.mxu0 0
  %312 = vmatpush1.bf16.msra.mxu0 0
  %313 = vmatprep.subr.bf16.mxu0 0
  %314 = vmatpush1.bf16.msra.mxu0 0
  %315 = vmatprep.subr.bf16.mxu0 0
  %316 = vmatpush1.bf16.msra.mxu0 0
  %317 = vmatprep.subr.bf16.mxu0 0
  %318 = vmatpush1.bf16.msra.mxu0 0
  %319 = vmatprep.subr.bf16.mxu0 0
  %320 = vmatpush1.bf16.msra.mxu0 0
  %321 = vmatprep.subr.bf16.mxu0 0
  %322 = vmatpush1.bf16.msra.mxu0 0
  %323 = vmatprep.subr.bf16.mxu0 0
  %324 = vmatpush1.bf16.msra.mxu0 0
  %325 = vmatprep.mubr.bf16.mxu0 0
  %326 = vmatmul.mubr.bf16.gmra.mrb[0].mxu0 %v72
  %v327 = vpop.f32.mrb[0].mxu0
  %v328 = vadd.f32 %v118, %v327
  %v329 = vpop.f32.mrb[0].mxu0
  %v330 = vpop.f32.mrb[0].mxu0
  %v331 = vadd.f32 %v118, %v330
  %v332 = vpop.f32.mrb[0].mxu0
  %333 = vdwg.mxu0
  %v334 = vpack.c.bf16 %v289, %v285
  %v335 = vpack.c.bf16 %v291, %v287
  %v336 = vpack.c.bf16 %v331, %v328
  %v340 = vunpack.c.l.b16 %v334
  %v341 = vunpack.c.l.b16 %v335
  %v342 = vunpack.c.l.b16 %v336
  %v343 = vunpack.c.h.b16 %v334
  %v344 = vunpack.c.h.b16 %v335
  %v345 = vunpack.c.h.b16 %v336
  %v346 = vpack.c.b16 %v341, %v340
  %v347 = vpack.c.b16 %v342, %v342
  %v348 = vpack.c.b16 %v344, %v343
  %v349 = vpack.c.b16 %v345, %v345
  %354 = vst [vmem:[%s5] sm:$0xff] %v346
  %355 = vst [vmem:[%s5 + $0x8] sm:$0xf] %v347
  %356 = vst [vmem:[%s5 + $0xc] sm:$0xff] %v348
  %357 = vst [vmem:[%s5 + $0x14] sm:$0xf] %v349
  // Predicated region
  $region26: #{coop_forward.27} parent=0 // pred_check
    _
  $region27: #{coop_forward.27} parent=0 // pred_check_branch
    %359 = sbr.rel (0) target = $region29
  $region28: #{coop_forward.27} parent=0 // pred_region
    _
  $region29: #{coop_forward.27} parent=0 // pred_fallthru
    _
  // Predicated region
  $region30: #{coop_forward.27} parent=0 // pred_check
    _
  $region31: #{coop_forward.27} parent=0 // pred_check_branch
    %361 = sbr.rel (0) target = $region33
  $region32: #{coop_forward.27} parent=0 // pred_region
    _
  $region33: #{coop_forward.27} parent=0 // pred_fallthru
    _

// kernel: coop_forward.29
$region0: #{coop_forward.29}
  #allocation0 [shape = 'u32[]', space=smem, size = 0x4, offset = 0x4, fixed_abs, tag = 'smem constant byte address 0x4 - core index']
  #allocation1 [shape = 'u32[144,128]{1,0:T(1,128)}', space=vmem, size = 0x12000, scoped, tag = 'internal scratch']
  %s0 = inlined_call_operand.vmem [shape: bf16[16,128], index: 0, kind: input, shape index: {}]
  %s1 = inlined_call_operand.vmem [shape: bf16[128,128], index: 1, kind: input, shape index: {}]
  %s2 = inlined_call_operand.vmem [shape: f32[1,128], index: 2, kind: input, shape index: {}]
  %s3 = inlined_call_operand.vmem [shape: bf16[16,128], index: 3, kind: input, shape index: {}]
  %s4 = inlined_call_operand.vmem [shape: bf16[16,128], index: 4, kind: output, shape index: {}]
  %s5 = sld [smem:[#allocation0]]
  $region26: #{coop_forward.29} parent=0
    _
  %s7 = ssub.s32 1, %s5
  %s8 = scalar_select 0, %s7, %s5
  // Predicated region
  $region2: #{coop_forward.29} parent=0 // pred_check
    _
  $region3: #{coop_forward.29} parent=0 // pred_check_branch
    %10 = sbr.rel (0) target = $region5
  $region4: #{coop_forward.29} parent=0 // pred_region
    _
  $region5: #{coop_forward.29} parent=0 // pred_fallthru
    _
  // Predicated region
  $region6: #{coop_forward.29} parent=0 // pred_check
    _
  $region7: #{coop_forward.29} parent=0 // pred_check_branch
    %12 = sbr.rel (0) target = $region9
  $region8: #{coop_forward.29} parent=0 // pred_region
    _
  $region9: #{coop_forward.29} parent=0 // pred_fallthru
    _
  // Predicated region
  $region10: #{coop_forward.29} parent=0 // pred_check
    _
  $region11: #{coop_forward.29} parent=0 // pred_check_branch
    %14 = sbr.rel (0) target = $region13
  $region12: #{coop_forward.29} parent=0 // pred_region
    _
  $region13: #{coop_forward.29} parent=0 // pred_fallthru
    _
  // Predicated region
  $region14: #{coop_forward.29} parent=0 // pred_check
    _
  $region15: #{coop_forward.29} parent=0 // pred_check_branch
    %16 = sbr.rel (0) target = $region17
  $region16: #{coop_forward.29} parent=0 // pred_region
    _
  $region17: #{coop_forward.29} parent=0 // pred_fallthru
    _
  %v18 = vld [vmem:[%s0] sm:$0xf]
  %v19 = vld [vmem:[%s0 + $0x4] sm:$0xf]
  %v20 = vld [vmem:[%s1] sm:$0xf]
  %v21 = vld [vmem:[%s1 + $0x4] sm:$0xf]
  %v22 = vld [vmem:[%s1 + $0x8] sm:$0xf]
  %v23 = vld [vmem:[%s1 + $0xc] sm:$0xf]
  %v24 = vld [vmem:[%s1 + $0x10] sm:$0xf]
  %v25 = vld [vmem:[%s1 + $0x14] sm:$0xf]
  %v26 = vld [vmem:[%s1 + $0x18] sm:$0xf]
  %v27 = vld [vmem:[%s1 + $0x1c] sm:$0xf]
  %v28 = vld [vmem:[%s1 + $0x20] sm:$0xf]
  %v29 = vld [vmem:[%s1 + $0x24] sm:$0xf]
  %v30 = vld [vmem:[%s1 + $0x28] sm:$0xf]
  %v31 = vld [vmem:[%s1 + $0x2c] sm:$0xf]
  %v32 = vld [vmem:[%s1 + $0x30] sm:$0xf]
  %v33 = vld [vmem:[%s1 + $0x34] sm:$0xf]
  %v34 = vld [vmem:[%s1 + $0x38] sm:$0xf]
  %v35 = vld [vmem:[%s1 + $0x3c] sm:$0xf]
  %v36 = vld [vmem:[%s2] sm:$0x1]
  %v38 = vlaneseq
  %v39 = vshrl.u32 %v38, 7
  %v40 = vsub.s32 0, %v39
  %v41 = vrot.slane %v36, %v40
  %v45 = vunpack.c.l.b16 %v18
  %v46 = vunpack.c.l.b16 %v19
  %v47 = vpack.c.b16 %v46, %v45
  %v65 = vunpack.c.l.b16 %v20
  %v66 = vunpack.c.l.b16 %v21
  %v67 = vunpack.c.l.b16 %v22
  %v68 = vunpack.c.l.b16 %v23
  %v69 = vunpack.c.l.b16 %v24
  %v70 = vunpack.c.l.b16 %v25
  %v71 = vunpack.c.l.b16 %v26
  %v72 = vunpack.c.l.b16 %v27
  %v73 = vunpack.c.l.b16 %v28
  %v74 = vunpack.c.l.b16 %v29
  %v75 = vunpack.c.l.b16 %v30
  %v76 = vunpack.c.l.b16 %v31
  %v77 = vunpack.c.l.b16 %v32
  %v78 = vunpack.c.l.b16 %v33
  %v79 = vunpack.c.l.b16 %v34
  %v80 = vunpack.c.l.b16 %v35
  %v81 = vpack.c.b16 %v66, %v65
  %v82 = vpack.c.b16 %v68, %v67
  %v83 = vpack.c.b16 %v70, %v69
  %v84 = vpack.c.b16 %v72, %v71
  %v85 = vpack.c.b16 %v74, %v73
  %v86 = vpack.c.b16 %v76, %v75
  %v87 = vpack.c.b16 %v78, %v77
  %v88 = vpack.c.b16 %v80, %v79
  %97 = vmatprep.subr.bf16.mxu0 0
  %98 = vmatpush1.bf16.msra.mxu0 %v81
  %99 = vmatprep.subr.bf16.mxu0 0
  %100 = vmatpush1.bf16.msra.mxu0 %v82
  %101 = vmatprep.subr.bf16.mxu0 0
  %102 = vmatpush1.bf16.msra.mxu0 %v83
  %103 = vmatprep.subr.bf16.mxu0 0
  %104 = vmatpush1.bf16.msra.mxu0 %v84
  %105 = vmatprep.subr.bf16.mxu0 0
  %106 = vmatpush1.bf16.msra.mxu0 %v85
  %107 = vmatprep.subr.bf16.mxu0 0
  %108 = vmatpush1.bf16.msra.mxu0 %v86
  %109 = vmatprep.subr.bf16.mxu0 0
  %110 = vmatpush1.bf16.msra.mxu0 %v87
  %111 = vmatprep.subr.bf16.mxu0 0
  %112 = vmatpush1.bf16.msra.mxu0 %v88
  %113 = vmatprep.subr.bf16.mxu0 0
  %114 = vmatpush1.bf16.msra.mxu0 0
  %115 = vmatprep.subr.bf16.mxu0 0
  %116 = vmatpush1.bf16.msra.mxu0 0
  %117 = vmatprep.subr.bf16.mxu0 0
  %118 = vmatpush1.bf16.msra.mxu0 0
  %119 = vmatprep.subr.bf16.mxu0 0
  %120 = vmatpush1.bf16.msra.mxu0 0
  %121 = vmatprep.subr.bf16.mxu0 0
  %122 = vmatpush1.bf16.msra.mxu0 0
  %123 = vmatprep.subr.bf16.mxu0 0
  %124 = vmatpush1.bf16.msra.mxu0 0
  %125 = vmatprep.subr.bf16.mxu0 0
  %126 = vmatpush1.bf16.msra.mxu0 0
  %127 = vmatprep.subr.bf16.mxu0 0
  %128 = vmatpush1.bf16.msra.mxu0 0
  %129 = vmatprep.mubr.bf16.mxu0 0
  %130 = vmatmul.mubr.bf16.gmra.mrb[0].mxu0 %v47
  %v131 = vpop.f32.mrb[0].mxu0
  %v132 = vadd.f32 %v41, %v131
  %v133 = vpop.f32.mrb[0].mxu0
  %v134 = vpop.f32.mrb[0].mxu0
  %v135 = vadd.f32 %v41, %v134
  %v136 = vpop.f32.mrb[0].mxu0
  %137 = vdwg.mxu0
  %v138 = vld [vmem:[%s3] sm:$0xf]
  %v139 = vld [vmem:[%s3 + $0x4] sm:$0xf]
  %v140 = vunpack.c.l.bf16 %v138
  %v141 = vunpack.c.l.bf16 %v139
  %v142 = vadd.f32 %v132, %v140
  %v143 = vadd.f32 %v135, %v141
  %v144 = vpack.c.bf16 %v143, %v142
  %v146 = vunpack.c.l.b16 %v144
  %v147 = vunpack.c.h.b16 %v144
  %v148 = vpack.c.b16 %v146, %v146
  %v149 = vpack.c.b16 %v147, %v147
  %152 = vst [vmem:[%s4] sm:$0xf] %v148
  %153 = vst [vmem:[%s4 + $0x4] sm:$0xf] %v149
  // Predicated region
  $region18: #{coop_forward.29} parent=0 // pred_check
    _
  $region19: #{coop_forward.29} parent=0 // pred_check_branch
    %155 = sbr.rel (0) target = $region21
  $region20: #{coop_forward.29} parent=0 // pred_region
    _
  $region21: #{coop_forward.29} parent=0 // pred_fallthru
    _
  // Predicated region
  $region22: #{coop_forward.29} parent=0 // pred_check
    _
  $region23: #{coop_forward.29} parent=0 // pred_check_branch
    %157 = sbr.rel (0) target = $region25
  $region24: #{coop_forward.29} parent=0 // pred_region
    _
  $region25: #{coop_forward.29} parent=0 // pred_fallthru
    _

// kernel: coop_forward.30
$region0: #{coop_forward.30}
  #allocation0 [shape = 'u32[]', space=smem, size = 0x4, offset = 0x4, fixed_abs, tag = 'smem constant byte address 0x4 - core index']
  #allocation1 [shape = 'u32[144,128]{1,0:T(1,128)}', space=vmem, size = 0x12000, scoped, tag = 'internal scratch']
  #allocation2 [shape = 'bf16[16,128]{1,0:T(16,128)(2,1)}', space=vmem, size = 0x1000, scoped, tag = 'scratch operand']
  %s0 = inlined_call_operand.vmem [shape: bf16[16,128], index: 0, kind: input, shape index: {}]
  %s1 = inlined_call_operand.vmem [shape: f32[1,128], index: 1, kind: input, shape index: {}]
  %s2 = inlined_call_operand.vmem [shape: f32[1,128], index: 2, kind: input, shape index: {}]
  %s3 = inlined_call_operand.vmem [shape: bf16[128,512], index: 3, kind: input, shape index: {}]
  %s4 = inlined_call_operand.vmem [shape: f32[1,512], index: 4, kind: input, shape index: {}]
  %s5 = inlined_call_operand.vmem [shape: bf16[16,512], index: 5, kind: output, shape index: {}]
  %s6 = sld [smem:[#allocation0]]
  $region34: #{coop_forward.30} parent=0
    _
  %s8 = ssub.s32 1, %s6
  %s9 = scalar_select 0, %s8, %s6
  // Predicated region
  $region2: #{coop_forward.30} parent=0 // pred_check
    _
  $region3: #{coop_forward.30} parent=0 // pred_check_branch
    %11 = sbr.rel (0) target = $region5
  $region4: #{coop_forward.30} parent=0 // pred_region
    _
  $region5: #{coop_forward.30} parent=0 // pred_fallthru
    _
  // Predicated region
  $region6: #{coop_forward.30} parent=0 // pred_check
    _
  $region7: #{coop_forward.30} parent=0 // pred_check_branch
    %13 = sbr.rel (0) target = $region9
  $region8: #{coop_forward.30} parent=0 // pred_region
    _
  $region9: #{coop_forward.30} parent=0 // pred_fallthru
    _
  // Predicated region
  $region10: #{coop_forward.30} parent=0 // pred_check
    _
  $region11: #{coop_forward.30} parent=0 // pred_check_branch
    %15 = sbr.rel (0) target = $region13
  $region12: #{coop_forward.30} parent=0 // pred_region
    _
  $region13: #{coop_forward.30} parent=0 // pred_fallthru
    _
  // Predicated region
  $region14: #{coop_forward.30} parent=0 // pred_check
    _
  $region15: #{coop_forward.30} parent=0 // pred_check_branch
    %17 = sbr.rel (0) target = $region17
  $region16: #{coop_forward.30} parent=0 // pred_region
    _
  $region17: #{coop_forward.30} parent=0 // pred_fallthru
    _
  // Predicated region
  $region18: #{coop_forward.30} parent=0 // pred_check
    _
  $region19: #{coop_forward.30} parent=0 // pred_check_branch
    %19 = sbr.rel (0) target = $region21
  $region20: #{coop_forward.30} parent=0 // pred_region
    _
  $region21: #{coop_forward.30} parent=0 // pred_fallthru
    _
  %p21 = scmp.eq.s32.totalorder 0, 0
  // Predicated region
  $region22: #{coop_forward.30} parent=0 // pred_check
    %p22 = pneg %p21
  $region23: #{coop_forward.30} parent=0 // pred_check_branch
    %24 = sbr.rel (%p22) target = $region25
  $region24: #{coop_forward.30} parent=0 // pred_region
    %v25 = vld [vmem:[%s0] sm:$0xf]
    %v26 = vld [vmem:[%s0 + $0x4] sm:$0xf]
    %v27 = vunpack.c.l.bf16 %v25
    %v28 = vunpack.c.l.bf16 %v26
    %29 = vadd.xlane.f32.xlu0 %v27
    %v30 = vpop.xlane.xlu0 %29
    %31 = vadd.xlane.f32.xlu0 %v28
    %v32 = vpop.xlane.xlu0 %31
    %v33 = vrcp.pop 128.0
    %v34 = vmul.f32 %v30, %v33
    %v35 = vmul.f32 %v32, %v33
    %v36 = vsub.f32 %v27, %v34
    %v37 = vsub.f32 %v28, %v35
    %v38 = vmul.f32 %v36, %v36
    %v39 = vmul.f32 %v37, %v37
    %40 = vadd.xlane.f32.xlu0 %v38
    %v41 = vpop.xlane.xlu0 %40
    %42 = vadd.xlane.f32.xlu0 %v39
    %v43 = vpop.xlane.xlu0 %42
    %v44 = vmul.f32 %v41, %v33
    %v45 = vmul.f32 %v43, %v33
    %v46 = vadd.f32 %v44, 1e-05
    %v47 = vadd.f32 %v45, 1e-05
    %v48 = vrsqrt.pop %v46
    %v49 = vrsqrt.pop %v47
    %v50 = vmul.f32 %v36, %v48
    %v51 = vmul.f32 %v37, %v49
    %v52 = vld [vmem:[%s1] sm:$0x1]
    %v54 = vlaneseq
    %v55 = vshrl.u32 %v54, 7
    %v56 = vsub.s32 0, %v55
    %v57 = vrot.slane %v52, %v56
    %v59 = vmul.f32 %v50, %v57
    %v60 = vmul.f32 %v51, %v57
    %v61 = vld [vmem:[%s2] sm:$0x1]
    %v63 = vlaneseq
    %v64 = vshrl.u32 %v63, 7
    %v65 = vsub.s32 0, %v64
    %v66 = vrot.slane %v61, %v65
    %v68 = vadd.f32 %v59, %v66
    %v69 = vadd.f32 %v60, %v66
    %v70 = vpack.c.bf16 %v69, %v68
    %71 = vst [vmem:[#allocation2] sm:$0xff] %v70
  $region25: #{coop_forward.30} parent=0 // pred_fallthru
    _
  %v72 = vld [vmem:[#allocation2] sm:$0xff]
  %v73 = vld [vmem:[%s3] sm:$0xff]
  %v74 = vld [vmem:[%s3 + $0x8] sm:$0xff]
  %v75 = vld [vmem:[%s3 + $0x10] sm:$0xff]
  %v76 = vld [vmem:[%s3 + $0x18] sm:$0xff]
  %v77 = vld [vmem:[%s3 + $0x20] sm:$0xff]
  %v78 = vld [vmem:[%s3 + $0x28] sm:$0xff]
  %v79 = vld [vmem:[%s3 + $0x30] sm:$0xff]
  %v80 = vld [vmem:[%s3 + $0x38] sm:$0xff]
  %v81 = vld [vmem:[%s3 + $0x40] sm:$0xff]
  %v82 = vld [vmem:[%s3 + $0x48] sm:$0xff]
  %v83 = vld [vmem:[%s3 + $0x50] sm:$0xff]
  %v84 = vld [vmem:[%s3 + $0x58] sm:$0xff]
  %v85 = vld [vmem:[%s3 + $0x60] sm:$0xff]
  %v86 = vld [vmem:[%s3 + $0x68] sm:$0xff]
  %v87 = vld [vmem:[%s3 + $0x70] sm:$0xff]
  %v88 = vld [vmem:[%s3 + $0x78] sm:$0xff]
  %v89 = vld [vmem:[%s3 + $0x80] sm:$0xff]
  %v90 = vld [vmem:[%s3 + $0x88] sm:$0xff]
  %v91 = vld [vmem:[%s3 + $0x90] sm:$0xff]
  %v92 = vld [vmem:[%s3 + $0x98] sm:$0xff]
  %v93 = vld [vmem:[%s3 + $0xa0] sm:$0xff]
  %v94 = vld [vmem:[%s3 + $0xa8] sm:$0xff]
  %v95 = vld [vmem:[%s3 + $0xb0] sm:$0xff]
  %v96 = vld [vmem:[%s3 + $0xb8] sm:$0xff]
  %v97 = vld [vmem:[%s3 + $0xc0] sm:$0xff]
  %v98 = vld [vmem:[%s3 + $0xc8] sm:$0xff]
  %v99 = vld [vmem:[%s3 + $0xd0] sm:$0xff]
  %v100 = vld [vmem:[%s3 + $0xd8] sm:$0xff]
  %v101 = vld [vmem:[%s3 + $0xe0] sm:$0xff]
  %v102 = vld [vmem:[%s3 + $0xe8] sm:$0xff]
  %v103 = vld [vmem:[%s3 + $0xf0] sm:$0xff]
  %v104 = vld [vmem:[%s3 + $0xf8] sm:$0xff]
  %v105 = vld [vmem:[%s4] sm:$0xf]
  %v107 = vlaneseq
  %v108 = vshrl.u32 %v107, 7
  %v109 = vsub.s32 0, %v108
  %v110 = vrot.slane %v105, %v109
  %v111 = vlaneseq
  %v112 = vshrl.u32 %v111, 7
  %v113 = vsub.s32 1, %v112
  %v114 = vrot.slane %v105, %v113
  %v115 = vlaneseq
  %v116 = vshrl.u32 %v115, 7
  %v117 = vsub.s32 2, %v116
  %v118 = vrot.slane %v105, %v117
  %v119 = vlaneseq
  %v120 = vshrl.u32 %v119, 7
  %v121 = vsub.s32 3, %v120
  %v122 = vrot.slane %v105, %v121
  %v159 = vunpack.c.l.b16 %v73
  %v160 = vunpack.c.h.b16 %v73
  %v161 = vunpack.c.l.b16 %v74
  %v162 = vunpack.c.h.b16 %v74
  %v163 = vunpack.c.l.b16 %v75
  %v164 = vunpack.c.h.b16 %v75
  %v165 = vunpack.c.l.b16 %v76
  %v166 = vunpack.c.h.b16 %v76
  %v167 = vunpack.c.l.b16 %v77
  %v168 = vunpack.c.h.b16 %v77
  %v169 = vunpack.c.l.b16 %v78
  %v170 = vunpack.c.h.b16 %v78
  %v171 = vunpack.c.l.b16 %v79
  %v172 = vunpack.c.h.b16 %v79
  %v173 = vunpack.c.l.b16 %v80
  %v174 = vunpack.c.h.b16 %v80
  %v175 = vunpack.c.l.b16 %v81
  %v176 = vunpack.c.h.b16 %v81
  %v177 = vunpack.c.l.b16 %v82
  %v178 = vunpack.c.h.b16 %v82
  %v179 = vunpack.c.l.b16 %v83
  %v180 = vunpack.c.h.b16 %v83
  %v181 = vunpack.c.l.b16 %v84
  %v182 = vunpack.c.h.b16 %v84
  %v183 = vunpack.c.l.b16 %v85
  %v184 = vunpack.c.h.b16 %v85
  %v185 = vunpack.c.l.b16 %v86
  %v186 = vunpack.c.h.b16 %v86
  %v187 = vunpack.c.l.b16 %v87
  %v188 = vunpack.c.h.b16 %v87
  %v189 = vunpack.c.l.b16 %v88
  %v190 = vunpack.c.h.b16 %v88
  %v191 = vunpack.c.l.b16 %v89
  %v192 = vunpack.c.h.b16 %v89
  %v193 = vunpack.c.l.b16 %v90
  %v194 = vunpack.c.h.b16 %v90
  %v195 = vunpack.c.l.b16 %v91
  %v196 = vunpack.c.h.b16 %v91
  %v197 = vunpack.c.l.b16 %v92
  %v198 = vunpack.c.h.b16 %v92
  %v199 = vunpack.c.l.b16 %v93
  %v200 = vunpack.c.h.b16 %v93
  %v201 = vunpack.c.l.b16 %v94
  %v202 = vunpack.c.h.b16 %v94
  %v203 = vunpack.c.l.b16 %v95
  %v204 = vunpack.c.h.b16 %v95
  %v205 = vunpack.c.l.b16 %v96
  %v206 = vunpack.c.h.b16 %v96
  %v207 = vunpack.c.l.b16 %v97
  %v208 = vunpack.c.h.b16 %v97
  %v209 = vunpack.c.l.b16 %v98
  %v210 = vunpack.c.h.b16 %v98
  %v211 = vunpack.c.l.b16 %v99
  %v212 = vunpack.c.h.b16 %v99
  %v213 = vunpack.c.l.b16 %v100
  %v214 = vunpack.c.h.b16 %v100
  %v215 = vunpack.c.l.b16 %v101
  %v216 = vunpack.c.h.b16 %v101
  %v217 = vunpack.c.l.b16 %v102
  %v218 = vunpack.c.h.b16 %v102
  %v219 = vunpack.c.l.b16 %v103
  %v220 = vunpack.c.h.b16 %v103
  %v221 = vunpack.c.l.b16 %v104
  %v222 = vunpack.c.h.b16 %v104
  %v223 = vpack.c.b16 %v163, %v159
  %v224 = vpack.c.b16 %v164, %v160
  %v225 = vpack.c.b16 %v165, %v161
  %v226 = vpack.c.b16 %v166, %v162
  %v227 = vpack.c.b16 %v171, %v167
  %v228 = vpack.c.b16 %v172, %v168
  %v229 = vpack.c.b16 %v173, %v169
  %v230 = vpack.c.b16 %v174, %v170
  %v231 = vpack.c.b16 %v179, %v175
  %v232 = vpack.c.b16 %v180, %v176
  %v233 = vpack.c.b16 %v181, %v177
  %v234 = vpack.c.b16 %v182, %v178
  %v235 = vpack.c.b16 %v187, %v183
  %v236 = vpack.c.b16 %v188, %v184
  %v237 = vpack.c.b16 %v189, %v185
  %v238 = vpack.c.b16 %v190, %v186
  %v239 = vpack.c.b16 %v195, %v191
  %v240 = vpack.c.b16 %v196, %v192
  %v241 = vpack.c.b16 %v197, %v193
  %v242 = vpack.c.b16 %v198, %v194
  %v243 = vpack.c.b16 %v203, %v199
  %v244 = vpack.c.b16 %v204, %v200
  %v245 = vpack.c.b16 %v205, %v201
  %v246 = vpack.c.b16 %v206, %v202
  %v247 = vpack.c.b16 %v211, %v207
  %v248 = vpack.c.b16 %v212, %v208
  %v249 = vpack.c.b16 %v213, %v209
  %v250 = vpack.c.b16 %v214, %v210
  %v251 = vpack.c.b16 %v219, %v215
  %v252 = vpack.c.b16 %v220, %v216
  %v253 = vpack.c.b16 %v221, %v217
  %v254 = vpack.c.b16 %v222, %v218
  %287 = vmatprep.subr.bf16.mxu0 %v224
  %288 = vmatpush1.bf16.msra.mxu0 %v223
  %289 = vmatprep.subr.bf16.mxu0 %v228
  %290 = vmatpush1.bf16.msra.mxu0 %v227
  %291 = vmatprep.subr.bf16.mxu0 %v232
  %292 = vmatpush1.bf16.msra.mxu0 %v231
  %293 = vmatprep.subr.bf16.mxu0 %v236
  %294 = vmatpush1.bf16.msra.mxu0 %v235
  %295 = vmatprep.subr.bf16.mxu0 %v240
  %296 = vmatpush1.bf16.msra.mxu0 %v239
  %297 = vmatprep.subr.bf16.mxu0 %v244
  %298 = vmatpush1.bf16.msra.mxu0 %v243
  %299 = vmatprep.subr.bf16.mxu0 %v248
  %300 = vmatpush1.bf16.msra.mxu0 %v247
  %301 = vmatprep.subr.bf16.mxu0 %v252
  %302 = vmatpush1.bf16.msra.mxu0 %v251
  %303 = vmatprep.subr.bf16.mxu0 0
  %304 = vmatpush1.bf16.msra.mxu0 0
  %305 = vmatprep.subr.bf16.mxu0 0
  %306 = vmatpush1.bf16.msra.mxu0 0
  %307 = vmatprep.subr.bf16.mxu0 0
  %308 = vmatpush1.bf16.msra.mxu0 0
  %309 = vmatprep.subr.bf16.mxu0 0
  %310 = vmatpush1.bf16.msra.mxu0 0
  %311 = vmatprep.subr.bf16.mxu0 0
  %312 = vmatpush1.bf16.msra.mxu0 0
  %313 = vmatprep.subr.bf16.mxu0 0
  %314 = vmatpush1.bf16.msra.mxu0 0
  %315 = vmatprep.subr.bf16.mxu0 0
  %316 = vmatpush1.bf16.msra.mxu0 0
  %317 = vmatprep.subr.bf16.mxu0 0
  %318 = vmatpush1.bf16.msra.mxu0 0
  %319 = vmatprep.mubr.bf16.mxu0 0
  %320 = vmatmul.mubr.bf16.gmra.mrb[0].mxu0 %v72
  %v321 = vpop.f32.mrb[0].mxu0
  %v322 = vadd.f32 %v110, %v321
  %v323 = vpop.f32.mrb[0].mxu0
  %v324 = vadd.f32 %v114, %v323
  %v325 = vpop.f32.mrb[0].mxu0
  %v326 = vadd.f32 %v110, %v325
  %v327 = vpop.f32.mrb[0].mxu0
  %v328 = vadd.f32 %v114, %v327
  %329 = vdwg.mxu0
  %330 = vmatprep.subr.bf16.mxu0 %v226
  %331 = vmatpush1.bf16.msra.mxu0 %v225
  %332 = vmatprep.subr.bf16.mxu0 %v230
  %333 = vmatpush1.bf16.msra.mxu0 %v229
  %334 = vmatprep.subr.bf16.mxu0 %v234
  %335 = vmatpush1.bf16.msra.mxu0 %v233
  %336 = vmatprep.subr.bf16.mxu0 %v238
  %337 = vmatpush1.bf16.msra.mxu0 %v237
  %338 = vmatprep.subr.bf16.mxu0 %v242
  %339 = vmatpush1.bf16.msra.mxu0 %v241
  %340 = vmatprep.subr.bf16.mxu0 %v246
  %341 = vmatpush1.bf16.msra.mxu0 %v245
  %342 = vmatprep.subr.bf16.mxu0 %v250
  %343 = vmatpush1.bf16.msra.mxu0 %v249
  %344 = vmatprep.subr.bf16.mxu0 %v254
  %345 = vmatpush1.bf16.msra.mxu0 %v253
  %346 = vmatprep.subr.bf16.mxu0 0
  %347 = vmatpush1.bf16.msra.mxu0 0
  %348 = vmatprep.subr.bf16.mxu0 0
  %349 = vmatpush1.bf16.msra.mxu0 0
  %350 = vmatprep.subr.bf16.mxu0 0
  %351 = vmatpush1.bf16.msra.mxu0 0
  %352 = vmatprep.subr.bf16.mxu0 0
  %353 = vmatpush1.bf16.msra.mxu0 0
  %354 = vmatprep.subr.bf16.mxu0 0
  %355 = vmatpush1.bf16.msra.mxu0 0
  %356 = vmatprep.subr.bf16.mxu0 0
  %357 = vmatpush1.bf16.msra.mxu0 0
  %358 = vmatprep.subr.bf16.mxu0 0
  %359 = vmatpush1.bf16.msra.mxu0 0
  %360 = vmatprep.subr.bf16.mxu0 0
  %361 = vmatpush1.bf16.msra.mxu0 0
  %362 = vmatprep.mubr.bf16.mxu0 0
  %363 = vmatmul.mubr.bf16.gmra.mrb[0].mxu0 %v72
  %v364 = vpop.f32.mrb[0].mxu0
  %v365 = vadd.f32 %v118, %v364
  %v366 = vpop.f32.mrb[0].mxu0
  %v367 = vadd.f32 %v122, %v366
  %v368 = vpop.f32.mrb[0].mxu0
  %v369 = vadd.f32 %v118, %v368
  %v370 = vpop.f32.mrb[0].mxu0
  %v371 = vadd.f32 %v122, %v370
  %372 = vdwg.mxu0
  %v373 = vmul.f32 %v322, 1.702
  %v374 = vmul.f32 %v324, 1.702
  %v375 = vmul.f32 %v365, 1.702
  %v376 = vmul.f32 %v367, 1.702
  %v377 = vmul.f32 %v326, 1.702
  %v378 = vmul.f32 %v328, 1.702
  %v379 = vmul.f32 %v369, 1.702
  %v380 = vmul.f32 %v371, 1.702
  %v381 = vxor.u32 %v373, 2147483648
  %v382 = vxor.u32 %v374, 2147483648
  %v383 = vxor.u32 %v375, 2147483648
  %v384 = vxor.u32 %v376, 2147483648
  %v385 = vxor.u32 %v377, 2147483648
  %v386 = vxor.u32 %v378, 2147483648
  %v387 = vxor.u32 %v379, 2147483648
  %v388 = vxor.u32 %v380, 2147483648
  %v389 = vmul.f32 %v381, 1.442695
  %v390 = vpow.pop %v389
  %v391 = vmul.f32 %v382, 1.442695
  %v392 = vpow.pop %v391
  %v393 = vmul.f32 %v383, 1.442695
  %v394 = vpow.pop %v393
  %v395 = vmul.f32 %v384, 1.442695
  %v396 = vpow.pop %v395
  %v397 = vmul.f32 %v385, 1.442695
  %v398 = vpow.pop %v397
  %v399 = vmul.f32 %v386, 1.442695
  %v400 = vpow.pop %v399
  %v401 = vmul.f32 %v387, 1.442695
  %v402 = vpow.pop %v401
  %v403 = vmul.f32 %v388, 1.442695
  %v404 = vpow.pop %v403
  %v405 = vadd.f32 %v390, 1.0
  %v406 = vadd.f32 %v392, 1.0
  %v407 = vadd.f32 %v394, 1.0
  %v408 = vadd.f32 %v396, 1.0
  %v409 = vadd.f32 %v398, 1.0
  %v410 = vadd.f32 %v400, 1.0
  %v411 = vadd.f32 %v402, 1.0
  %v412 = vadd.f32 %v404, 1.0
  %v413 = vrcp.pop %v405
  %v414 = vmul.f32 1.0, %v413
  %v415 = vrcp.pop %v406
  %v416 = vmul.f32 1.0, %v415
  %v417 = vrcp.pop %v407
  %v418 = vmul.f32 1.0, %v417
  %v419 = vrcp.pop %v408
  %v420 = vmul.f32 1.0, %v419
  %v421 = vrcp.pop %v409
  %v422 = vmul.f32 1.0, %v421
  %v423 = vrcp.pop %v410
  %v424 = vmul.f32 1.0, %v423
  %v425 = vrcp.pop %v411
  %v426 = vmul.f32 1.0, %v425
  %v427 = vrcp.pop %v412
  %v428 = vmul.f32 1.0, %v427
  %v429 = vmul.f32 %v322, %v414
  %v430 = vmul.f32 %v324, %v416
  %v431 = vmul.f32 %v365, %v418
  %v432 = vmul.f32 %v367, %v420
  %v433 = vmul.f32 %v326, %v422
  %v434 = vmul.f32 %v328, %v424
  %v435 = vmul.f32 %v369, %v426
  %v436 = vmul.f32 %v371, %v428
  %v437 = vpack.c.bf16 %v433, %v429
  %v438 = vpack.c.bf16 %v434, %v430
  %v439 = vpack.c.bf16 %v435, %v431
  %v440 = vpack.c.bf16 %v436, %v432
  %v445 = vunpack.c.l.b16 %v437
  %v446 = vunpack.c.l.b16 %v438
  %v447 = vunpack.c.l.b16 %v439
  %v448 = vunpack.c.l.b16 %v440
  %v449 = vunpack.c.h.b16 %v437
  %v450 = vunpack.c.h.b16 %v438
  %v451 = vunpack.c.h.b16 %v439
  %v452 = vunpack.c.h.b16 %v440
  %v453 = vpack.c.b16 %v446, %v445
  %v454 = vpack.c.b16 %v448, %v447
  %v455 = vpack.c.b16 %v450, %v449
  %v456 = vpack.c.b16 %v452, %v451
  %461 = vst [vmem:[%s5] sm:$0xff] %v453
  %462 = vst [vmem:[%s5 + $0x8] sm:$0xff] %v454
  %463 = vst [vmem:[%s5 + $0x10] sm:$0xff] %v455
  %464 = vst [vmem:[%s5 + $0x18] sm:$0xff] %v456
  // Predicated region
  $region26: #{coop_forward.30} parent=0 // pred_check
    _
  $region27: #{coop_forward.30} parent=0 // pred_check_branch
    %466 = sbr.rel (0) target = $region29
  $region28: #{coop_forward.30} parent=0 // pred_region
    _
  $region29: #{coop_forward.30} parent=0 // pred_fallthru
    _
  // Predicated region
  $region30: #{coop_forward.30} parent=0 // pred_check
    _
  $region31: #{coop_forward.30} parent=0 // pred_check_branch
    %468 = sbr.rel (0) target = $region33
  $region32: #{coop_forward.30} parent=0 // pred_region
    _
  $region33: #{coop_forward.30} parent=0 // pred_fallthru
    _

// kernel: coop_forward.49
$region0: #{coop_forward.49}
  #allocation0 [shape = 'u32[]', space=smem, size = 0x4, offset = 0x4, fixed_abs, tag = 'smem constant byte address 0x4 - core index']
  #allocation1 [shape = 'u32[144,128]{1,0:T(1,128)}', space=vmem, size = 0x12000, scoped, tag = 'internal scratch']
  #allocation2 [shape = 'f32[1,1]{1,0:T(1,128)S(6)}', space=smem, size = 0x200, scoped, tag = 'scoped memory for coop_forward.49']
  %s0 = inlined_call_operand.vmem [shape: bf16[2,128], index: 0, kind: input, shape index: {}]
  %s1 = inlined_call_operand.vmem [shape: bf16[8,128], index: 1, kind: input, shape index: {}]
  %s2 = inlined_call_operand.<no memory space> [shape: f32[1,1], index: 2, kind: input, shape index: {}]
  %s3 = inlined_call_operand.hbm [shape: f32[2,8], index: 3, kind: output, shape index: {}]
  %s4 = sld [smem:[#allocation0]]
  $region22: #{coop_forward.49} parent=0
    _
  %s6 = ssub.s32 1, %s4
  %s7 = scalar_select 0, %s6, %s4
  %8 = sst [smem:[#allocation2]] %s2
  $region1: #{coop_forward.49} parent=0
    #allocation3 [shape = 'u8[1024]{0}', space=vmem, size = 0x400, scoped, tag = 'output window, operand 0, single buffered']
    #allocation4 [shape = 's32[1]{0}', space=sflag, size = 0x4, scoped, tag = 'scoped memory for coop_forward.49']
    %9 = vsyncpa [#allocation4], 0
    // Predicated region
    $region2: #{coop_forward.49} parent=1 // pred_check
      _
    $region3: #{coop_forward.49} parent=1 // pred_check_branch
      %11 = sbr.rel (0) target = $region5
    $region4: #{coop_forward.49} parent=1 // pred_region
      _
    $region5: #{coop_forward.49} parent=1 // pred_fallthru
      _
    // Predicated region
    $region6: #{coop_forward.49} parent=1 // pred_check
      _
    $region7: #{coop_forward.49} parent=1 // pred_check_branch
      %13 = sbr.rel (0) target = $region9
    $region8: #{coop_forward.49} parent=1 // pred_region
      _
    $region9: #{coop_forward.49} parent=1 // pred_fallthru
      _
    // Predicated region
    $region10: #{coop_forward.49} parent=1 // pred_check
      _
    $region11: #{coop_forward.49} parent=1 // pred_check_branch
      %15 = sbr.rel (0) target = $region13
    $region12: #{coop_forward.49} parent=1 // pred_region
      _
    $region13: #{coop_forward.49} parent=1 // pred_fallthru
      _
    %v16 = vld [vmem:[%s0] sm:$0x1]
    %v17 = vunpack.c.l.bf16 %v16
    %v18 = vld [vmem:[%s1] sm:$0xf]
    %v19 = vunpack.c.l.bf16 %v18
    %v20 = vmul.f32 %v17, %v17
    %vm21 = vcmask 1041408
    %v22 = vsel %vm21, %v20, 0.0
    %23 = vadd.xlane.f32.xlu0 %v22
    %v24 = vpop.xlane.xlu0 %23
    %v25 = vrsqrt.pop %v24
    %v26 = vmul.f32 %v17, %v25
    %v27 = vmul.f32 %v19, %v19
    %28 = vadd.xlane.f32.xlu0 %v27
    %v29 = vpop.xlane.xlu0 %28
    %v30 = vrsqrt.pop %v29
    %v31 = vmul.f32 %v19, %v30
    %32 = vmatprep.subr.mxu0 0.0
    %33 = vmatpush1.xpose.msra.mxu0 %v31
    %34 = vmatprep.subr.mxu0 0.0
    %35 = vmatpush1.xpose.msra.mxu0 0.0
    %36 = vmatprep.subr.mxu0 0.0
    %37 = vmatpush1.xpose.msra.mxu0 0.0
    %38 = vmatprep.subr.mxu0 0.0
    %39 = vmatpush1.xpose.msra.mxu0 0.0
    %40 = vmatprep.subr.mxu0 0.0
    %41 = vmatpush1.xpose.msra.mxu0 0.0
    %42 = vmatprep.subr.mxu0 0.0
    %43 = vmatpush1.xpose.msra.mxu0 0.0
    %44 = vmatprep.subr.mxu0 0.0
    %45 = vmatpush1.xpose.msra.mxu0 0.0
    %46 = vmatprep.subr.mxu0 0.0
    %47 = vmatpush1.xpose.msra.mxu0 0.0
    %48 = vmatprep.subr.mxu0 0.0
    %49 = vmatpush1.xpose.msra.mxu0 0.0
    %50 = vmatprep.subr.mxu0 0.0
    %51 = vmatpush1.xpose.msra.mxu0 0.0
    %52 = vmatprep.subr.mxu0 0.0
    %53 = vmatpush1.xpose.msra.mxu0 0.0
    %54 = vmatprep.subr.mxu0 0.0
    %55 = vmatpush1.xpose.msra.mxu0 0.0
    %56 = vmatprep.subr.mxu0 0.0
    %57 = vmatpush1.xpose.msra.mxu0 0.0
    %58 = vmatprep.subr.mxu0 0.0
    %59 = vmatpush1.xpose.msra.mxu0 0.0
    %60 = vmatprep.subr.mxu0 0.0
    %61 = vmatpush1.xpose.msra.mxu0 0.0
    %62 = vmatprep.subr.mxu0 0.0
    %63 = vmatpush1.xpose.msra.mxu0 0.0
    %64 = vmatprep.subr.mxu0 0.0
    %65 = vmatpush1.xpose.msra.mxu0 0.0
    %66 = vmatprep.subr.mxu0 0.0
    %67 = vmatpush1.xpose.msra.mxu0 0.0
    %68 = vmatprep.subr.mxu0 0.0
    %69 = vmatpush1.xpose.msra.mxu0 0.0
    %70 = vmatprep.subr.mxu0 0.0
    %71 = vmatpush1.xpose.msra.mxu0 0.0
    %72 = vmatprep.subr.mxu0 0.0
    %73 = vmatpush1.xpose.msra.mxu0 0.0
    %74 = vmatprep.subr.mxu0 0.0
    %75 = vmatpush1.xpose.msra.mxu0 0.0
    %76 = vmatprep.subr.mxu0 0.0
    %77 = vmatpush1.xpose.msra.mxu0 0.0
    %78 = vmatprep.subr.mxu0 0.0
    %79 = vmatpush1.xpose.msra.mxu0 0.0
    %80 = vmatprep.subr.mxu0 0.0
    %81 = vmatpush1.xpose.msra.mxu0 0.0
    %82 = vmatprep.subr.mxu0 0.0
    %83 = vmatpush1.xpose.msra.mxu0 0.0
    %84 = vmatprep.subr.mxu0 0.0
    %85 = vmatpush1.xpose.msra.mxu0 0.0
    %86 = vmatprep.subr.mxu0 0.0
    %87 = vmatpush1.xpose.msra.mxu0 0.0
    %88 = vmatprep.subr.mxu0 0.0
    %89 = vmatpush1.xpose.msra.mxu0 0.0
    %90 = vmatprep.subr.mxu0 0.0
    %91 = vmatpush1.xpose.msra.mxu0 0.0
    %92 = vmatprep.subr.mxu0 0.0
    %93 = vmatpush1.xpose.msra.mxu0 0.0
    %94 = vmatprep.subr.mxu0 0.0
    %95 = vmatpush1.xpose.msra.mxu0 0.0
    %96 = vmatprep.mubr.f32.mxu0 0.0
    %97 = vmatmul.mubr.f32.gmra.mrb[0].mxu0 %v26
    %v98 = vpop.f32.mrb[0].mxu0
    %v99 = vadd.f32 0.0, %v98
    %v100 = vpop.f32.mrb[0].mxu0
    %101 = vdwg.mxu0
    %s102 = sld [smem:[#allocation2]]
    %v103 = vstv %s102
    %v104 = vmul.f32 %v103, 1.442695
    %v105 = vpow.pop %v104
    %v106 = vmul.f32 %v99, %v105
    %vm107 = vcmask 58368
    %108 = vst.msk [vmem:[#allocation3] sm:$0x3] %vm107, %v106
    // Predicated region
    $region14: #{coop_forward.49} parent=1 // pred_check
      _
    $region15: #{coop_forward.49} parent=1 // pred_check_branch
      %110 = sbr.rel (0) target = $region17
    $region16: #{coop_forward.49} parent=1 // pred_region
      %s112 = ssub.s32 32, 32
      %113 = vsyncadd [#allocation4], %s112
      %s115 = sshll.u32 [#allocation3], 4
      %s116 = int_to_ptr.vmem [resolvable:$true] %s115
      %118 = dma.vmem_to_hbm [thread:$0]  %s116, 32, %s3, [#allocation4]
    $region17: #{coop_forward.49} parent=1 // pred_fallthru
      _
    // Predicated region
    $region18: #{coop_forward.49} parent=1 // pred_check
      _
    $region19: #{coop_forward.49} parent=1 // pred_check_branch
      %120 = sbr.rel (0) target = $region21
    $region20: #{coop_forward.49} parent=1 // pred_region
      %121 = dma.done [#allocation4], 32
    $region21: #{coop_forward.49} parent=1 // pred_fallthru
      _
    %122 = vsyncpa [#allocation4], 1

// kernel: coop_forward.31
$region0: #{coop_forward.31}
  #allocation0 [shape = 'u32[]', space=smem, size = 0x4, offset = 0x4, fixed_abs, tag = 'smem constant byte address 0x4 - core index']
  #allocation1 [shape = 'u32[144,128]{1,0:T(1,128)}', space=vmem, size = 0x12000, scoped, tag = 'internal scratch']
  %s0 = inlined_call_operand.vmem [shape: bf16[16,512], index: 0, kind: input, shape index: {}]
  %s1 = inlined_call_operand.vmem [shape: bf16[512,128], index: 1, kind: input, shape index: {}]
  %s2 = inlined_call_operand.vmem [shape: f32[1,128], index: 2, kind: input, shape index: {}]
  %s3 = inlined_call_operand.vmem [shape: bf16[16,128], index: 3, kind: input, shape index: {}]
  %s4 = inlined_call_operand.vmem [shape: bf16[16,128], index: 4, kind: output, shape index: {}]
  %s5 = sld [smem:[#allocation0]]
  $region26: #{coop_forward.31} parent=0
    _
  %s7 = ssub.s32 1, %s5
  %s8 = scalar_select 0, %s7, %s5
  // Predicated region
  $region2: #{coop_forward.31} parent=0 // pred_check
    _
  $region3: #{coop_forward.31} parent=0 // pred_check_branch
    %10 = sbr.rel (0) target = $region5
  $region4: #{coop_forward.31} parent=0 // pred_region
    _
  $region5: #{coop_forward.31} parent=0 // pred_fallthru
    _
  // Predicated region
  $region6: #{coop_forward.31} parent=0 // pred_check
    _
  $region7: #{coop_forward.31} parent=0 // pred_check_branch
    %12 = sbr.rel (0) target = $region9
  $region8: #{coop_forward.31} parent=0 // pred_region
    _
  $region9: #{coop_forward.31} parent=0 // pred_fallthru
    _
  // Predicated region
  $region10: #{coop_forward.31} parent=0 // pred_check
    _
  $region11: #{coop_forward.31} parent=0 // pred_check_branch
    %14 = sbr.rel (0) target = $region13
  $region12: #{coop_forward.31} parent=0 // pred_region
    _
  $region13: #{coop_forward.31} parent=0 // pred_fallthru
    _
  // Predicated region
  $region14: #{coop_forward.31} parent=0 // pred_check
    _
  $region15: #{coop_forward.31} parent=0 // pred_check_branch
    %16 = sbr.rel (0) target = $region17
  $region16: #{coop_forward.31} parent=0 // pred_region
    _
  $region17: #{coop_forward.31} parent=0 // pred_fallthru
    _
  %v18 = vld [vmem:[%s0] sm:$0xff]
  %v19 = vld [vmem:[%s0 + $0x8] sm:$0xff]
  %v20 = vld [vmem:[%s0 + $0x10] sm:$0xff]
  %v21 = vld [vmem:[%s0 + $0x18] sm:$0xff]
  %v22 = vld [vmem:[%s1] sm:$0xf]
  %v23 = vld [vmem:[%s1 + $0x4] sm:$0xf]
  %v24 = vld [vmem:[%s1 + $0x8] sm:$0xf]
  %v25 = vld [vmem:[%s1 + $0xc] sm:$0xf]
  %v26 = vld [vmem:[%s1 + $0x10] sm:$0xf]
  %v27 = vld [vmem:[%s1 + $0x14] sm:$0xf]
  %v28 = vld [vmem:[%s1 + $0x18] sm:$0xf]
  %v29 = vld [vmem:[%s1 + $0x1c] sm:$0xf]
  %v30 = vld [vmem:[%s1 + $0x20] sm:$0xf]
  %v31 = vld [vmem:[%s1 + $0x24] sm:$0xf]
  %v32 = vld [vmem:[%s1 + $0x28] sm:$0xf]
  %v33 = vld [vmem:[%s1 + $0x2c] sm:$0xf]
  %v34 = vld [vmem:[%s1 + $0x30] sm:$0xf]
  %v35 = vld [vmem:[%s1 + $0x34] sm:$0xf]
  %v36 = vld [vmem:[%s1 + $0x38] sm:$0xf]
  %v37 = vld [vmem:[%s1 + $0x3c] sm:$0xf]
  %v38 = vld [vmem:[%s1 + $0x40] sm:$0xf]
  %v39 = vld [vmem:[%s1 + $0x44] sm:$0xf]
  %v40 = vld [vmem:[%s1 + $0x48] sm:$0xf]
  %v41 = vld [vmem:[%s1 + $0x4c] sm:$0xf]
  %v42 = vld [vmem:[%s1 + $0x50] sm:$0xf]
  %v43 = vld [vmem:[%s1 + $0x54] sm:$0xf]
  %v44 = vld [vmem:[%s1 + $0x58] sm:$0xf]
  %v45 = vld [vmem:[%s1 + $0x5c] sm:$0xf]
  %v46 = vld [vmem:[%s1 + $0x60] sm:$0xf]
  %v47 = vld [vmem:[%s1 + $0x64] sm:$0xf]
  %v48 = vld [vmem:[%s1 + $0x68] sm:$0xf]
  %v49 = vld [vmem:[%s1 + $0x6c] sm:$0xf]
  %v50 = vld [vmem:[%s1 + $0x70] sm:$0xf]
  %v51 = vld [vmem:[%s1 + $0x74] sm:$0xf]
  %v52 = vld [vmem:[%s1 + $0x78] sm:$0xf]
  %v53 = vld [vmem:[%s1 + $0x7c] sm:$0xf]
  %v54 = vld [vmem:[%s1 + $0x80] sm:$0xf]
  %v55 = vld [vmem:[%s1 + $0x84] sm:$0xf]
  %v56 = vld [vmem:[%s1 + $0x88] sm:$0xf]
  %v57 = vld [vmem:[%s1 + $0x8c] sm:$0xf]
  %v58 = vld [vmem:[%s1 + $0x90] sm:$0xf]
  %v59 = vld [vmem:[%s1 + $0x94] sm:$0xf]
  %v60 = vld [vmem:[%s1 + $0x98] sm:$0xf]
  %v61 = vld [vmem:[%s1 + $0x9c] sm:$0xf]
  %v62 = vld [vmem:[%s1 + $0xa0] sm:$0xf]
  %v63 = vld [vmem:[%s1 + $0xa4] sm:$0xf]
  %v64 = vld [vmem:[%s1 + $0xa8] sm:$0xf]
  %v65 = vld [vmem:[%s1 + $0xac] sm:$0xf]
  %v66 = vld [vmem:[%s1 + $0xb0] sm:$0xf]
  %v67 = vld [vmem:[%s1 + $0xb4] sm:$0xf]
  %v68 = vld [vmem:[%s1 + $0xb8] sm:$0xf]
  %v69 = vld [vmem:[%s1 + $0xbc] sm:$0xf]
  %v70 = vld [vmem:[%s1 + $0xc0] sm:$0xf]
  %v71 = vld [vmem:[%s1 + $0xc4] sm:$0xf]
  %v72 = vld [vmem:[%s1 + $0xc8] sm:$0xf]
  %v73 = vld [vmem:[%s1 + $0xcc] sm:$0xf]
  %v74 = vld [vmem:[%s1 + $0xd0] sm:$0xf]
  %v75 = vld [vmem:[%s1 + $0xd4] sm:$0xf]
  %v76 = vld [vmem:[%s1 + $0xd8] sm:$0xf]
  %v77 = vld [vmem:[%s1 + $0xdc] sm:$0xf]
  %v78 = vld [vmem:[%s1 + $0xe0] sm:$0xf]
  %v79 = vld [vmem:[%s1 + $0xe4] sm:$0xf]
  %v80 = vld [vmem:[%s1 + $0xe8] sm:$0xf]
  %v81 = vld [vmem:[%s1 + $0xec] sm:$0xf]
  %v82 = vld [vmem:[%s1 + $0xf0] sm:$0xf]
  %v83 = vld [vmem:[%s1 + $0xf4] sm:$0xf]
  %v84 = vld [vmem:[%s1 + $0xf8] sm:$0xf]
  %v85 = vld [vmem:[%s1 + $0xfc] sm:$0xf]
  %v86 = vld [vmem:[%s2] sm:$0x1]
  %v88 = vlaneseq
  %v89 = vshrl.u32 %v88, 7
  %v90 = vsub.s32 0, %v89
  %v91 = vrot.slane %v86, %v90
  %v97 = vunpack.c.l.b16 %v18
  %v98 = vunpack.c.h.b16 %v18
  %v99 = vunpack.c.l.b16 %v19
  %v100 = vunpack.c.h.b16 %v19
  %v101 = vunpack.c.l.b16 %v20
  %v102 = vunpack.c.h.b16 %v20
  %v103 = vunpack.c.l.b16 %v21
  %v104 = vunpack.c.h.b16 %v21
  %v105 = vpack.c.b16 %v101, %v97
  %v106 = vpack.c.b16 %v102, %v98
  %v107 = vpack.c.b16 %v103, %v99
  %v108 = vpack.c.b16 %v104, %v100
  %v177 = vunpack.c.l.b16 %v22
  %v178 = vunpack.c.l.b16 %v23
  %v179 = vunpack.c.l.b16 %v24
  %v180 = vunpack.c.l.b16 %v25
  %v181 = vunpack.c.l.b16 %v26
  %v182 = vunpack.c.l.b16 %v27
  %v183 = vunpack.c.l.b16 %v28
  %v184 = vunpack.c.l.b16 %v29
  %v185 = vunpack.c.l.b16 %v30
  %v186 = vunpack.c.l.b16 %v31
  %v187 = vunpack.c.l.b16 %v32
  %v188 = vunpack.c.l.b16 %v33
  %v189 = vunpack.c.l.b16 %v34
  %v190 = vunpack.c.l.b16 %v35
  %v191 = vunpack.c.l.b16 %v36
  %v192 = vunpack.c.l.b16 %v37
  %v193 = vunpack.c.l.b16 %v38
  %v194 = vunpack.c.l.b16 %v39
  %v195 = vunpack.c.l.b16 %v40
  %v196 = vunpack.c.l.b16 %v41
  %v197 = vunpack.c.l.b16 %v42
  %v198 = vunpack.c.l.b16 %v43
  %v199 = vunpack.c.l.b16 %v44
  %v200 = vunpack.c.l.b16 %v45
  %v201 = vunpack.c.l.b16 %v46
  %v202 = vunpack.c.l.b16 %v47
  %v203 = vunpack.c.l.b16 %v48
  %v204 = vunpack.c.l.b16 %v49
  %v205 = vunpack.c.l.b16 %v50
  %v206 = vunpack.c.l.b16 %v51
  %v207 = vunpack.c.l.b16 %v52
  %v208 = vunpack.c.l.b16 %v53
  %v209 = vunpack.c.l.b16 %v54
  %v210 = vunpack.c.l.b16 %v55
  %v211 = vunpack.c.l.b16 %v56
  %v212 = vunpack.c.l.b16 %v57
  %v213 = vunpack.c.l.b16 %v58
  %v214 = vunpack.c.l.b16 %v59
  %v215 = vunpack.c.l.b16 %v60
  %v216 = vunpack.c.l.b16 %v61
  %v217 = vunpack.c.l.b16 %v62
  %v218 = vunpack.c.l.b16 %v63
  %v219 = vunpack.c.l.b16 %v64
  %v220 = vunpack.c.l.b16 %v65
  %v221 = vunpack.c.l.b16 %v66
  %v222 = vunpack.c.l.b16 %v67
  %v223 = vunpack.c.l.b16 %v68
  %v224 = vunpack.c.l.b16 %v69
  %v225 = vunpack.c.l.b16 %v70
  %v226 = vunpack.c.l.b16 %v71
  %v227 = vunpack.c.l.b16 %v72
  %v228 = vunpack.c.l.b16 %v73
  %v229 = vunpack.c.l.b16 %v74
  %v230 = vunpack.c.l.b16 %v75
  %v231 = vunpack.c.l.b16 %v76
  %v232 = vunpack.c.l.b16 %v77
  %v233 = vunpack.c.l.b16 %v78
  %v234 = vunpack.c.l.b16 %v79
  %v235 = vunpack.c.l.b16 %v80
  %v236 = vunpack.c.l.b16 %v81
  %v237 = vunpack.c.l.b16 %v82
  %v238 = vunpack.c.l.b16 %v83
  %v239 = vunpack.c.l.b16 %v84
  %v240 = vunpack.c.l.b16 %v85
  %v241 = vpack.c.b16 %v178, %v177
  %v242 = vpack.c.b16 %v180, %v179
  %v243 = vpack.c.b16 %v182, %v181
  %v244 = vpack.c.b16 %v184, %v183
  %v245 = vpack.c.b16 %v186, %v185
  %v246 = vpack.c.b16 %v188, %v187
  %v247 = vpack.c.b16 %v190, %v189
  %v248 = vpack.c.b16 %v192, %v191
  %v249 = vpack.c.b16 %v194, %v193
  %v250 = vpack.c.b16 %v196, %v195
  %v251 = vpack.c.b16 %v198, %v197
  %v252 = vpack.c.b16 %v200, %v199
  %v253 = vpack.c.b16 %v202, %v201
  %v254 = vpack.c.b16 %v204, %v203
  %v255 = vpack.c.b16 %v206, %v205
  %v256 = vpack.c.b16 %v208, %v207
  %v257 = vpack.c.b16 %v210, %v209
  %v258 = vpack.c.b16 %v212, %v211
  %v259 = vpack.c.b16 %v214, %v213
  %v260 = vpack.c.b16 %v216, %v215
  %v261 = vpack.c.b16 %v218, %v217
  %v262 = vpack.c.b16 %v220, %v219
  %v263 = vpack.c.b16 %v222, %v221
  %v264 = vpack.c.b16 %v224, %v223
  %v265 = vpack.c.b16 %v226, %v225
  %v266 = vpack.c.b16 %v228, %v227
  %v267 = vpack.c.b16 %v230, %v229
  %v268 = vpack.c.b16 %v232, %v231
  %v269 = vpack.c.b16 %v234, %v233
  %v270 = vpack.c.b16 %v236, %v235
  %v271 = vpack.c.b16 %v238, %v237
  %v272 = vpack.c.b16 %v240, %v239
  %305 = vmatprep.subr.bf16.mxu0 0
  %306 = vmatpush1.bf16.msra.mxu0 %v241
  %307 = vmatprep.subr.bf16.mxu0 0
  %308 = vmatpush1.bf16.msra.mxu0 %v242
  %309 = vmatprep.subr.bf16.mxu0 0
  %310 = vmatpush1.bf16.msra.mxu0 %v243
  %311 = vmatprep.subr.bf16.mxu0 0
  %312 = vmatpush1.bf16.msra.mxu0 %v244
  %313 = vmatprep.subr.bf16.mxu0 0
  %314 = vmatpush1.bf16.msra.mxu0 %v245
  %315 = vmatprep.subr.bf16.mxu0 0
  %316 = vmatpush1.bf16.msra.mxu0 %v246
  %317 = vmatprep.subr.bf16.mxu0 0
  %318 = vmatpush1.bf16.msra.mxu0 %v247
  %319 = vmatprep.subr.bf16.mxu0 0
  %320 = vmatpush1.bf16.msra.mxu0 %v248
  %321 = vmatprep.subr.bf16.mxu0 0
  %322 = vmatpush1.bf16.msra.mxu0 %v249
  %323 = vmatprep.subr.bf16.mxu0 0
  %324 = vmatpush1.bf16.msra.mxu0 %v250
  %325 = vmatprep.subr.bf16.mxu0 0
  %326 = vmatpush1.bf16.msra.mxu0 %v251
  %327 = vmatprep.subr.bf16.mxu0 0
  %328 = vmatpush1.bf16.msra.mxu0 %v252
  %329 = vmatprep.subr.bf16.mxu0 0
  %330 = vmatpush1.bf16.msra.mxu0 %v253
  %331 = vmatprep.subr.bf16.mxu0 0
  %332 = vmatpush1.bf16.msra.mxu0 %v254
  %333 = vmatprep.subr.bf16.mxu0 0
  %334 = vmatpush1.bf16.msra.mxu0 %v255
  %335 = vmatprep.subr.bf16.mxu0 0
  %336 = vmatpush1.bf16.msra.mxu0 %v256
  %337 = vmatprep.mubr.bf16.mxu0 %v106
  %338 = vmatmul.mubr.bf16.gmra.mrb[0].mxu0 %v105
  %v339 = vpop.f32.mrb[0].mxu0
  %v340 = vadd.f32 %v91, %v339
  %v341 = vpop.f32.mrb[0].mxu0
  %v342 = vpop.f32.mrb[0].mxu0
  %v343 = vadd.f32 %v91, %v342
  %v344 = vpop.f32.mrb[0].mxu0
  %345 = vdwg.mxu0
  %346 = vmatprep.subr.bf16.mxu0 0
  %347 = vmatpush1.bf16.msra.mxu0 %v257
  %348 = vmatprep.subr.bf16.mxu0 0
  %349 = vmatpush1.bf16.msra.mxu0 %v258
  %350 = vmatprep.subr.bf16.mxu0 0
  %351 = vmatpush1.bf16.msra.mxu0 %v259
  %352 = vmatprep.subr.bf16.mxu0 0
  %353 = vmatpush1.bf16.msra.mxu0 %v260
  %354 = vmatprep.subr.bf16.mxu0 0
  %355 = vmatpush1.bf16.msra.mxu0 %v261
  %356 = vmatprep.subr.bf16.mxu0 0
  %357 = vmatpush1.bf16.msra.mxu0 %v262
  %358 = vmatprep.subr.bf16.mxu0 0
  %359 = vmatpush1.bf16.msra.mxu0 %v263
  %360 = vmatprep.subr.bf16.mxu0 0
  %361 = vmatpush1.bf16.msra.mxu0 %v264
  %362 = vmatprep.subr.bf16.mxu0 0
  %363 = vmatpush1.bf16.msra.mxu0 %v265
  %364 = vmatprep.subr.bf16.mxu0 0
  %365 = vmatpush1.bf16.msra.mxu0 %v266
  %366 = vmatprep.subr.bf16.mxu0 0
  %367 = vmatpush1.bf16.msra.mxu0 %v267
  %368 = vmatprep.subr.bf16.mxu0 0
  %369 = vmatpush1.bf16.msra.mxu0 %v268
  %370 = vmatprep.subr.bf16.mxu0 0
  %371 = vmatpush1.bf16.msra.mxu0 %v269
  %372 = vmatprep.subr.bf16.mxu0 0
  %373 = vmatpush1.bf16.msra.mxu0 %v270
  %374 = vmatprep.subr.bf16.mxu0 0
  %375 = vmatpush1.bf16.msra.mxu0 %v271
  %376 = vmatprep.subr.bf16.mxu0 0
  %377 = vmatpush1.bf16.msra.mxu0 %v272
  %378 = vmatprep.mubr.bf16.mxu0 %v108
  %379 = vmatmul.mubr.bf16.gmra.mrb[0].mxu0 %v107
  %v380 = vpop.f32.mrb[0].mxu0
  %v381 = vadd.f32 %v340, %v380
  %v382 = vpop.f32.mrb[0].mxu0
  %v383 = vpop.f32.mrb[0].mxu0
  %v384 = vadd.f32 %v343, %v383
  %v385 = vpop.f32.mrb[0].mxu0
  %386 = vdwg.mxu0
  %v387 = vld [vmem:[%s3] sm:$0xf]
  %v388 = vld [vmem:[%s3 + $0x4] sm:$0xf]
  %v389 = vunpack.c.l.bf16 %v387
  %v390 = vunpack.c.l.bf16 %v388
  %v391 = vadd.f32 %v381, %v389
  %v392 = vadd.f32 %v384, %v390
  %v393 = vpack.c.bf16 %v392, %v391
  %v395 = vunpack.c.l.b16 %v393
  %v396 = vunpack.c.h.b16 %v393
  %v397 = vpack.c.b16 %v395, %v395
  %v398 = vpack.c.b16 %v396, %v396
  %401 = vst [vmem:[%s4] sm:$0xf] %v397
  %402 = vst [vmem:[%s4 + $0x4] sm:$0xf] %v398
  // Predicated region
  $region18: #{coop_forward.31} parent=0 // pred_check
    _
  $region19: #{coop_forward.31} parent=0 // pred_check_branch
    %404 = sbr.rel (0) target = $region21
  $region20: #{coop_forward.31} parent=0 // pred_region
    _
  $region21: #{coop_forward.31} parent=0 // pred_fallthru
    _
  // Predicated region
  $region22: #{coop_forward.31} parent=0 // pred_check
    _
  $region23: #{coop_forward.31} parent=0 // pred_check_branch
    %406 = sbr.rel (0) target = $region25
  $region24: #{coop_forward.31} parent=0 // pred_region
    _
  $region25: #{coop_forward.31} parent=0 // pred_fallthru
    _

</llo_original>
